<compile_context>
chip_gen: v6e
topology: v6e:2x2x1
jax: 0.10.0
libtpu: 0.0.40
codegen_flags: <defaults>
</compile_context>

<pallas_src>
import jax
import jax.numpy as jnp
from jax import lax
import numpy as np
from jax.experimental import pallas as pl
from jax.experimental.pallas import tpu as pltpu

N_RK4_STEPS = 20


def _ode_rnn_kernel(tp_ref,                       # SMEM (T,)       observation time points
                    x_ref,                        # VMEM (T,B,O)    raw observations
                    w_emb_ref, b_emb_ref,         # (O,R), (1,R)    input embedding
                    w_ih_ref, b_ih_ref,           # (R,3R), (1,3R)  GRU input-gate weights (r|z|n)
                    w_hh_ref, b_hh_ref,           # (R,3R), (1,3R)  GRU hidden-gate weights (fused)
                    w1_ref, b1_ref,               # (R,2R), (1,2R)  ODEFunc fc1
                    wfw1_ref, bfw1_ref,           # (2R,2R), (1,2R) Wf@W1, bf@W1 (re-associated chain)
                    wf_ref, bf_ref,               # (2R,R), (1,R)   ODEFunc fc_final
                    wp_ref, bp_ref,               # (R,2L), (1,2L)  latent projection (mean|logvar)
                    z0_ref,                       # out (B,2L)
                    h_scr):                       # VMEM (B,R) persistent hidden state
    T = x_ref.shape[0]
    R = h_scr.shape[1]
    inv_n = 1.0 / float(N_RK4_STEPS)

    # Only the hot RK4 weights stay live in vregs across the whole recurrence;
    # everything else is loaded from VMEM at its point of use to keep vreg
    # pressure low inside the fully-unrolled RK4 body.
    wfw1 = wfw1_ref[...]
    bfw1 = bfw1_ref[...]

    h_scr[...] = jnp.zeros_like(h_scr)

    @pl.loop(0, T)
    def _(t):
        # ---- h-independent input path (issued first; overlaps the RK4 chain):
        #      x_emb = x_t@W_emb + b_emb ; gi = x_emb@W_ih + b_ih (gates r|z|n) ----
        x_t = x_ref[t]                                                        # (B, O)
        x_emb = (jnp.dot(x_t, w_emb_ref[...], preferred_element_type=jnp.float32)
                 + b_emb_ref[...])                                            # (B, R)
        gi = (jnp.dot(x_emb, w_ih_ref[...], preferred_element_type=jnp.float32)
              + b_ih_ref[...])                                                # (B, 3R)

        # ---- per-timestep RK4 step size from SMEM scalars: (t_k - t_{k-1})/20 ----
        t_prev = jnp.maximum(t - 1, 0)
        dt = jnp.where(t > 0, tp_ref[t] - tp_ref[t_prev], 0.0)
        step = jnp.where(dt > 0.0, dt * inv_n, 0.0)

        # ---- ODE evolution of the hidden state (fixed-step RK4, re-associated) ----
        # f(h) = relu(h@W1 + b1) @ Wf + bf.  Carry u = h@W1 + b1; each stage needs
        # exactly one dependent matmul with WfW1; Wf is applied once per solve via
        # the accumulated stage sum sacc.
        @pl.when(step > 0.0)
        def _():
            h0 = h_scr[...]
            u0 = (jnp.dot(h0, w1_ref[...], preferred_element_type=jnp.float32)
                  + b1_ref[...])
            sixth = step * (1.0 / 6.0)
            # Loop-invariant scalar->vector work hoisted out of the unrolled body.
            step_bfw1 = step * bfw1
            half_v = jnp.full_like(u0, 0.5 * step)
            step_v = jnp.full_like(u0, step)
            sixth_v = jnp.full_like(u0, sixth)

            def rk4_body(i, carry):
                u, sacc = carry
                z1 = jnp.maximum(u, 0.0)
                g1 = jnp.dot(z1, wfw1, preferred_element_type=jnp.float32) + bfw1
                z2 = jnp.maximum(u + half_v * g1, 0.0)
                g2 = jnp.dot(z2, wfw1, preferred_element_type=jnp.float32) + bfw1
                z3 = jnp.maximum(u + half_v * g2, 0.0)
                g3 = jnp.dot(z3, wfw1, preferred_element_type=jnp.float32) + bfw1
                z4 = jnp.maximum(u + step_v * g3, 0.0)
                s = z1 + 2.0 * (z2 + z3) + z4
                u_next = (u + sixth_v * jnp.dot(s, wfw1, preferred_element_type=jnp.float32)
                          + step_bfw1)
                return u_next, sacc + s

            _, sacc = lax.fori_loop(0, N_RK4_STEPS, rk4_body,
                                    (u0, jnp.zeros_like(u0)), unroll=True)
            h_scr[...] = (h0
                          + sixth * jnp.dot(sacc, wf_ref[...],
                                            preferred_element_type=jnp.float32)
                          + (float(N_RK4_STEPS) * step) * bf_ref[...])

        # ---- GRU cell (PyTorch gate order r,z,n) — single fused hidden matmul ----
        h = h_scr[...]
        gh = (jnp.dot(h, w_hh_ref[...], preferred_element_type=jnp.float32)
              + b_hh_ref[...])                                                # (B, 3R)
        r = jax.nn.sigmoid(gi[:, :R] + gh[:, :R])
        z = jax.nn.sigmoid(gi[:, R:2 * R] + gh[:, R:2 * R])
        n = jnp.tanh(gi[:, 2 * R:] + r * gh[:, 2 * R:])
        h_scr[...] = (1.0 - z) * n + z * h

    # ---- final latent projection, fused (mean|logvar); split happens in the wrapper ----
    h = h_scr[...]
    z0_ref[...] = (jnp.dot(h, wp_ref[...], preferred_element_type=jnp.float32)
                   + bp_ref[...])


def prepare_params(params):
    """One-time parameter preparation (kept out of the per-call dispatch path)."""
    f32 = jnp.float32
    p = {k: jnp.asarray(v, f32) for k, v in params.items()}
    wfw1 = p["wf"] @ p["w1"]          # (2R, 2R): Wf@W1 for the u-space RK4 chain
    bfw1 = p["bf"] @ p["w1"]          # (1, 2R)
    return (p["w_emb"], p["b_emb"], p["w_ih"], p["b_ih"],
            p["w_hh"], p["b_hh"], p["w1"], p["b1"],
            wfw1, bfw1, p["wf"], p["bf"], p["wp"], p["bp"])


def ode_rnn_encoder(obs_traj, time_points, prepared):
    """obs_traj: (B, T, obs_dim), time_points: (T,). Returns (z0_mean, z0_logvar)."""
    B, T, _ = obs_traj.shape
    R = prepared[0].shape[1]          # w_emb: (obs, R)
    two_l = prepared[-2].shape[1]     # wp:    (R, 2L)
    f32 = jnp.float32

    x_tbd = jnp.transpose(obs_traj.astype(f32), (1, 0, 2))   # (T, B, obs)
    tp = time_points.astype(f32)

    f = pl.pallas_call(
        _ode_rnn_kernel,
        in_specs=[pl.BlockSpec(memory_space=pltpu.MemorySpace.SMEM)]
                 + [pl.BlockSpec(memory_space=pltpu.MemorySpace.VMEM)] * (1 + len(prepared)),
        out_specs=pl.BlockSpec(memory_space=pltpu.MemorySpace.VMEM),
        out_shape=jax.ShapeDtypeStruct((B, two_l), f32),
        scratch_shapes=[pltpu.VMEM((B, R), jnp.float32)],
    )
    z0 = f(tp, x_tbd, *prepared)
    L = two_l // 2
    return z0[:, :L], z0[:, L:]


def ref_forward(obs_traj, time_points, p):
    """Pure-JAX reference using the ORIGINAL (non-reassociated) formulation."""
    B, T, _ = obs_traj.shape
    R = p["w_emb"].shape[1]
    L = p["wp"].shape[1] // 2
    h = jnp.zeros((B, R), jnp.float32)

    def odef(hh):
        z = jnp.maximum(hh @ p["w1"] + p["b1"], 0.0)
        return z @ p["wf"] + p["bf"]

    for t in range(T):
        x_emb = obs_traj[:, t, :] @ p["w_emb"] + p["b_emb"]
        if t > 0:
            dt = time_points[t] - time_points[t - 1]
            step = dt / float(N_RK4_STEPS)

            def body(i, hh):
                k1 = odef(hh)
                k2 = odef(hh + 0.5 * step * k1)
                k3 = odef(hh + 0.5 * step * k2)
                k4 = odef(hh + step * k3)
                return hh + (step / 6.0) * (k1 + 2.0 * k2 + 2.0 * k3 + k4)

            h = jnp.where(dt > 0, lax.fori_loop(0, N_RK4_STEPS, body, h), h)
        gi = x_emb @ p["w_ih"] + p["b_ih"]
        gh = h @ p["w_hh"] + p["b_hh"]
        r = jax.nn.sigmoid(gi[:, :R] + gh[:, :R])
        z = jax.nn.sigmoid(gi[:, R:2 * R] + gh[:, R:2 * R])
        n = jnp.tanh(gi[:, 2 * R:] + r * gh[:, 2 * R:])
        h = (1.0 - z) * n + z * h
    z0 = h @ p["wp"] + p["bp"]
    return z0[:, :L], z0[:, L:]


if __name__ == "__main__":
    # Module config: obs_dim=4, rec_dim=32, latent_dim=4, variational_inference=True
    B, T, OBS, R, L = 2, 8, 4, 32, 4

    key = jax.random.PRNGKey(0)
    k_obs, k_params = jax.random.split(key)
    obs_traj = jax.random.normal(k_obs, (B, T, OBS), dtype=jnp.float32)
    time_points = jnp.linspace(0.0, 1.0, T, dtype=jnp.float32)

    keys = jax.random.split(k_params, 12)

    def init(k, shape, scale=0.2):
        return (scale * jax.random.normal(k, shape)).astype(jnp.float32)

    params = {
        "w_emb": init(keys[0], (OBS, R)),       # input_embedding.weight.T
        "b_emb": init(keys[1], (1, R)),
        "w_ih":  init(keys[2], (R, 3 * R)),     # gru_cell.weight_ih.T (gates r,z,n)
        "b_ih":  init(keys[3], (1, 3 * R)),
        "w_hh":  init(keys[4], (R, 3 * R)),     # gru_cell.weight_hh.T
        "b_hh":  init(keys[5], (1, 3 * R)),
        "w1":    init(keys[6], (R, 2 * R)),     # ode_func.fc1.weight.T
        "b1":    init(keys[7], (1, 2 * R)),
        "wf":    init(keys[8], (2 * R, R)),     # ode_func.fc_final.weight.T
        "bf":    init(keys[9], (1, R)),
        "wp":    init(keys[10], (R, 2 * L)),    # latent_projection.weight.T
        "bp":    init(keys[11], (1, 2 * L)),
    }

    prepared = prepare_params(params)           # one-time setup, not per call
    encode = jax.jit(ode_rnn_encoder)

    z0_mean, z0_logvar = encode(obs_traj, time_points, prepared)
    jax.block_until_ready((z0_mean, z0_logvar))

    ref_mean, ref_logvar = ref_forward(obs_traj, time_points, params)
    np.testing.assert_allclose(np.asarray(z0_mean), np.asarray(ref_mean), rtol=2e-3, atol=2e-3)
    np.testing.assert_allclose(np.asarray(z0_logvar), np.asarray(ref_logvar), rtol=2e-3, atol=2e-3)

    print("KERNEL_OK")
</pallas_src>

<mosaic_0001>
module attributes {stable_mosaic.version = 11 : i64} {
  func.func @_ode_rnn_kernel(%arg0: memref<8xf32, #tpu.memory_space<smem>>, %arg1: memref<8x2x4xf32, #tpu.memory_space<vmem>>, %arg2: memref<4x32xf32, #tpu.memory_space<vmem>>, %arg3: memref<1x32xf32, #tpu.memory_space<vmem>>, %arg4: memref<32x96xf32, #tpu.memory_space<vmem>>, %arg5: memref<1x96xf32, #tpu.memory_space<vmem>>, %arg6: memref<32x96xf32, #tpu.memory_space<vmem>>, %arg7: memref<1x96xf32, #tpu.memory_space<vmem>>, %arg8: memref<32x64xf32, #tpu.memory_space<vmem>>, %arg9: memref<1x64xf32, #tpu.memory_space<vmem>>, %arg10: memref<64x64xf32, #tpu.memory_space<vmem>>, %arg11: memref<1x64xf32, #tpu.memory_space<vmem>>, %arg12: memref<64x32xf32, #tpu.memory_space<vmem>>, %arg13: memref<1x32xf32, #tpu.memory_space<vmem>>, %arg14: memref<32x8xf32, #tpu.memory_space<vmem>>, %arg15: memref<1x8xf32, #tpu.memory_space<vmem>>, %arg16: memref<2x8xf32, #tpu.memory_space<vmem>>, %arg17: memref<2x32xf32, #tpu.memory_space<vmem>>) attributes {dimension_semantics = [], scalar_prefetch = 0 : i64, scratch_operands = 1 : i64, tpu.core_type = #tpu.core_type<tc>} {
    %c0 = arith.constant 0 : index
    %c0_0 = arith.constant 0 : index
    %0 = vector.load %arg10[%c0, %c0_0] : memref<64x64xf32, #tpu.memory_space<vmem>>, vector<64x64xf32>
    %c0_1 = arith.constant 0 : index
    %c0_2 = arith.constant 0 : index
    %1 = vector.load %arg11[%c0_1, %c0_2] : memref<1x64xf32, #tpu.memory_space<vmem>>, vector<1x64xf32>
    %cst = arith.constant 0.000000e+00 : f32
    %2 = vector.broadcast %cst : f32 to vector<2x32xf32>
    %c0_3 = arith.constant 0 : index
    %c0_4 = arith.constant 0 : index
    %3 = vector.load %arg17[%c0_3, %c0_4] : memref<2x32xf32, #tpu.memory_space<vmem>>, vector<2x32xf32>
    tpu.vector_store %arg17[%c0_3, %c0_4], %2 {strides = array<i32>} : memref<2x32xf32, #tpu.memory_space<vmem>>, vector<2x32xf32>,
    %c0_i32 = arith.constant 0 : i32
    %c8_i32 = arith.constant 8 : i32
    %4 = arith.addi %c0_i32, %c8_i32 : i32
    %c1_i32 = arith.constant 1 : i32
    scf.for %arg18 = %c0_i32 to %4 step %c1_i32  : i32 {
      %c1_i32_15 = arith.constant 1 : i32
      %12 = arith.muli %arg18, %c1_i32_15 : i32
      %c0_i32_16 = arith.constant 0 : i32
      %13 = arith.addi %c0_i32_16, %12 : i32
      %14 = arith.index_cast %13 : i32 to index
      %c0_17 = arith.constant 0 : index
      %c0_18 = arith.constant 0 : index
      %15 = vector.load %arg1[%14, %c0_17, %c0_18] : memref<8x2x4xf32, #tpu.memory_space<vmem>>, vector<1x2x4xf32>
      %16 = vector.shape_cast %15 : vector<1x2x4xf32> to vector<2x4xf32>
      %c0_19 = arith.constant 0 : index
      %c0_20 = arith.constant 0 : index
      %17 = vector.load %arg2[%c0_19, %c0_20] : memref<4x32xf32, #tpu.memory_space<vmem>>, vector<4x32xf32>
      %cst_21 = arith.constant dense<0.000000e+00> : vector<2x32xf32>
      %18 = tpu.matmul %16, %17, %cst_21 {dimension_numbers = #tpu.dot_dimension_numbers<[1], [0], [0], [1], [0, 0, 1, 1], [], []>} : vector<2x4xf32>, vector<4x32xf32>, vector<2x32xf32> -> vector<2x32xf32>
      %c0_22 = arith.constant 0 : index
      %c0_23 = arith.constant 0 : index
      %19 = vector.load %arg3[%c0_22, %c0_23] : memref<1x32xf32, #tpu.memory_space<vmem>>, vector<1x32xf32>
      %20 = vector.broadcast %19 : vector<1x32xf32> to vector<2x32xf32>
      %21 = arith.addf %18, %20 : vector<2x32xf32>
      %c0_24 = arith.constant 0 : index
      %c0_25 = arith.constant 0 : index
      %22 = vector.load %arg4[%c0_24, %c0_25] : memref<32x96xf32, #tpu.memory_space<vmem>>, vector<32x96xf32>
      %cst_26 = arith.constant dense<0.000000e+00> : vector<2x96xf32>
      %23 = tpu.matmul %21, %22, %cst_26 {dimension_numbers = #tpu.dot_dimension_numbers<[1], [0], [0], [1], [0, 0, 1, 1], [], []>} : vector<2x32xf32>, vector<32x96xf32>, vector<2x96xf32> -> vector<2x96xf32>
      %c0_27 = arith.constant 0 : index
      %c0_28 = arith.constant 0 : index
      %24 = vector.load %arg5[%c0_27, %c0_28] : memref<1x96xf32, #tpu.memory_space<vmem>>, vector<1x96xf32>
      %25 = vector.broadcast %24 : vector<1x96xf32> to vector<2x96xf32>
      %26 = arith.addf %23, %25 : vector<2x96xf32>
      %c1_i32_29 = arith.constant 1 : i32
      %27 = arith.subi %13, %c1_i32_29 : i32
      %c0_i32_30 = arith.constant 0 : i32
      %28 = arith.maxsi %27, %c0_i32_30 : i32
      %c0_i32_31 = arith.constant 0 : i32
      %29 = arith.cmpi sgt, %13, %c0_i32_31 : i32
      %30 = arith.index_cast %13 : i32 to index
      %31 = memref.load %arg0[%30] : memref<8xf32, #tpu.memory_space<smem>>
      %32 = arith.index_cast %28 : i32 to index
      %33 = memref.load %arg0[%32] : memref<8xf32, #tpu.memory_space<smem>>
      %34 = arith.subf %31, %33 : f32
      %cst_32 = arith.constant 0.000000e+00 : f32
      %35 = arith.select %29, %34, %cst_32 : f32
      %cst_33 = arith.constant 0.000000e+00 : f32
      %36 = arith.cmpf ogt, %35, %cst_33 : f32
      %cst_34 = arith.constant 5.000000e-02 : f32
      %37 = arith.mulf %35, %cst_34 : f32
      %cst_35 = arith.constant 0.000000e+00 : f32
      %38 = arith.select %36, %37, %cst_35 : f32
      %cst_36 = arith.constant 0.000000e+00 : f32
      %39 = arith.cmpf ogt, %38, %cst_36 : f32
      %40 = arith.extui %39 : i1 to i32
      %c0_i32_37 = arith.constant 0 : i32
      %41 = arith.cmpi ne, %40, %c0_i32_37 : i32
      scf.if %41 {
        %c0_50 = arith.constant 0 : index
        %c0_51 = arith.constant 0 : index
        %75 = vector.load %arg17[%c0_50, %c0_51] : memref<2x32xf32, #tpu.memory_space<vmem>>, vector<2x32xf32>
        %c0_52 = arith.constant 0 : index
        %c0_53 = arith.constant 0 : index
        %76 = vector.load %arg8[%c0_52, %c0_53] : memref<32x64xf32, #tpu.memory_space<vmem>>, vector<32x64xf32>
        %cst_54 = arith.constant dense<0.000000e+00> : vector<2x64xf32>
        %77 = tpu.matmul %75, %76, %cst_54 {dimension_numbers = #tpu.dot_dimension_numbers<[1], [0], [0], [1], [0, 0, 1, 1], [], []>} : vector<2x32xf32>, vector<32x64xf32>, vector<2x64xf32> -> vector<2x64xf32>
        %c0_55 = arith.constant 0 : index
        %c0_56 = arith.constant 0 : index
        %78 = vector.load %arg9[%c0_55, %c0_56] : memref<1x64xf32, #tpu.memory_space<vmem>>, vector<1x64xf32>
        %79 = vector.broadcast %78 : vector<1x64xf32> to vector<2x64xf32>
        %80 = arith.addf %77, %79 : vector<2x64xf32>
        %cst_57 = arith.constant 0.166666672 : f32
        %81 = arith.mulf %38, %cst_57 : f32
        %82 = vector.broadcast %38 : f32 to vector<1x64xf32>
        %83 = arith.mulf %82, %1 : vector<1x64xf32>
        %cst_58 = arith.constant 5.000000e-01 : f32
        %84 = arith.mulf %cst_58, %38 : f32
        %85 = vector.broadcast %84 : f32 to vector<2x64xf32>
        %86 = vector.broadcast %38 : f32 to vector<2x64xf32>
        %87 = vector.broadcast %81 : f32 to vector<2x64xf32>
        %cst_59 = arith.constant 0.000000e+00 : f32
        %88 = vector.broadcast %cst_59 : f32 to vector<2x64xf32>
        %c0_i32_60 = arith.constant 0 : i32
        %cst_61 = arith.constant 0.000000e+00 : f32
        %89 = vector.broadcast %cst_61 : f32 to vector<2x64xf32>
        %90 = arith.maximumf %80, %89 : vector<2x64xf32>
        %cst_62 = arith.constant dense<0.000000e+00> : vector<2x64xf32>
        %91 = tpu.matmul %90, %0, %cst_62 {dimension_numbers = #tpu.dot_dimension_numbers<[1], [0], [0], [1], [0, 0, 1, 1], [], []>} : vector<2x64xf32>, vector<64x64xf32>, vector<2x64xf32> -> vector<2x64xf32>
        %92 = vector.broadcast %1 : vector<1x64xf32> to vector<2x64xf32>
        %93 = arith.addf %91, %92 : vector<2x64xf32>
        %94 = arith.mulf %85, %93 : vector<2x64xf32>
        %95 = arith.addf %80, %94 : vector<2x64xf32>
        %cst_63 = arith.constant 0.000000e+00 : f32
        %96 = vector.broadcast %cst_63 : f32 to vector<2x64xf32>
        %97 = arith.maximumf %95, %96 : vector<2x64xf32>
        %cst_64 = arith.constant dense<0.000000e+00> : vector<2x64xf32>
        %98 = tpu.matmul %97, %0, %cst_64 {dimension_numbers = #tpu.dot_dimension_numbers<[1], [0], [0], [1], [0, 0, 1, 1], [], []>} : vector<2x64xf32>, vector<64x64xf32>, vector<2x64xf32> -> vector<2x64xf32>
        %99 = vector.broadcast %1 : vector<1x64xf32> to vector<2x64xf32>
        %100 = arith.addf %98, %99 : vector<2x64xf32>
        %101 = arith.mulf %85, %100 : vector<2x64xf32>
        %102 = arith.addf %80, %101 : vector<2x64xf32>
        %cst_65 = arith.constant 0.000000e+00 : f32
        %103 = vector.broadcast %cst_65 : f32 to vector<2x64xf32>
        %104 = arith.maximumf %102, %103 : vector<2x64xf32>
        %cst_66 = arith.constant dense<0.000000e+00> : vector<2x64xf32>
        %105 = tpu.matmul %104, %0, %cst_66 {dimension_numbers = #tpu.dot_dimension_numbers<[1], [0], [0], [1], [0, 0, 1, 1], [], []>} : vector<2x64xf32>, vector<64x64xf32>, vector<2x64xf32> -> vector<2x64xf32>
        %106 = vector.broadcast %1 : vector<1x64xf32> to vector<2x64xf32>
        %107 = arith.addf %105, %106 : vector<2x64xf32>
        %108 = arith.mulf %86, %107 : vector<2x64xf32>
        %109 = arith.addf %80, %108 : vector<2x64xf32>
        %cst_67 = arith.constant 0.000000e+00 : f32
        %110 = vector.broadcast %cst_67 : f32 to vector<2x64xf32>
        %111 = arith.maximumf %109, %110 : vector<2x64xf32>
        %112 = arith.addf %97, %104 : vector<2x64xf32>
        %cst_68 = arith.constant 2.000000e+00 : f32
        %113 = vector.broadcast %cst_68 : f32 to vector<2x64xf32>
        %114 = arith.mulf %113, %112 : vector<2x64xf32>
        %115 = arith.addf %90, %114 : vector<2x64xf32>
        %116 = arith.addf %115, %111 : vector<2x64xf32>
        %cst_69 = arith.constant dense<0.000000e+00> : vector<2x64xf32>
        %117 = tpu.matmul %116, %0, %cst_69 {dimension_numbers = #tpu.dot_dimension_numbers<[1], [0], [0], [1], [0, 0, 1, 1], [], []>} : vector<2x64xf32>, vector<64x64xf32>, vector<2x64xf32> -> vector<2x64xf32>
        %118 = arith.mulf %87, %117 : vector<2x64xf32>
        %119 = arith.addf %80, %118 : vector<2x64xf32>
        %120 = vector.broadcast %83 : vector<1x64xf32> to vector<2x64xf32>
        %121 = arith.addf %119, %120 : vector<2x64xf32>
        %122 = arith.addf %88, %116 : vector<2x64xf32>
        %c1_i32_70 = arith.constant 1 : i32
        %cst_71 = arith.constant 0.000000e+00 : f32
        %123 = vector.broadcast %cst_71 : f32 to vector<2x64xf32>
        %124 = arith.maximumf %121, %123 : vector<2x64xf32>
        %cst_72 = arith.constant dense<0.000000e+00> : vector<2x64xf32>
        %125 = tpu.matmul %124, %0, %cst_72 {dimension_numbers = #tpu.dot_dimension_numbers<[1], [0], [0], [1], [0, 0, 1, 1], [], []>} : vector<2x64xf32>, vector<64x64xf32>, vector<2x64xf32> -> vector<2x64xf32>
        %126 = vector.broadcast %1 : vector<1x64xf32> to vector<2x64xf32>
        %127 = arith.addf %125, %126 : vector<2x64xf32>
        %128 = arith.mulf %85, %127 : vector<2x64xf32>
        %129 = arith.addf %121, %128 : vector<2x64xf32>
        %cst_73 = arith.constant 0.000000e+00 : f32
        %130 = vector.broadcast %cst_73 : f32 to vector<2x64xf32>
        %131 = arith.maximumf %129, %130 : vector<2x64xf32>
        %cst_74 = arith.constant dense<0.000000e+00> : vector<2x64xf32>
        %132 = tpu.matmul %131, %0, %cst_74 {dimension_numbers = #tpu.dot_dimension_numbers<[1], [0], [0], [1], [0, 0, 1, 1], [], []>} : vector<2x64xf32>, vector<64x64xf32>, vector<2x64xf32> -> vector<2x64xf32>
        %133 = vector.broadcast %1 : vector<1x64xf32> to vector<2x64xf32>
        %134 = arith.addf %132, %133 : vector<2x64xf32>
        %135 = arith.mulf %85, %134 : vector<2x64xf32>
        %136 = arith.addf %121, %135 : vector<2x64xf32>
        %cst_75 = arith.constant 0.000000e+00 : f32
        %137 = vector.broadcast %cst_75 : f32 to vector<2x64xf32>
        %138 = arith.maximumf %136, %137 : vector<2x64xf32>
        %cst_76 = arith.constant dense<0.000000e+00> : vector<2x64xf32>
        %139 = tpu.matmul %138, %0, %cst_76 {dimension_numbers = #tpu.dot_dimension_numbers<[1], [0], [0], [1], [0, 0, 1, 1], [], []>} : vector<2x64xf32>, vector<64x64xf32>, vector<2x64xf32> -> vector<2x64xf32>
        %140 = vector.broadcast %1 : vector<1x64xf32> to vector<2x64xf32>
        %141 = arith.addf %139, %140 : vector<2x64xf32>
        %142 = arith.mulf %86, %141 : vector<2x64xf32>
        %143 = arith.addf %121, %142 : vector<2x64xf32>
        %cst_77 = arith.constant 0.000000e+00 : f32
        %144 = vector.broadcast %cst_77 : f32 to vector<2x64xf32>
        %145 = arith.maximumf %143, %144 : vector<2x64xf32>
        %146 = arith.addf %131, %138 : vector<2x64xf32>
        %cst_78 = arith.constant 2.000000e+00 : f32
        %147 = vector.broadcast %cst_78 : f32 to vector<2x64xf32>
        %148 = arith.mulf %147, %146 : vector<2x64xf32>
        %149 = arith.addf %124, %148 : vector<2x64xf32>
        %150 = arith.addf %149, %145 : vector<2x64xf32>
        %cst_79 = arith.constant dense<0.000000e+00> : vector<2x64xf32>
        %151 = tpu.matmul %150, %0, %cst_79 {dimension_numbers = #tpu.dot_dimension_numbers<[1], [0], [0], [1], [0, 0, 1, 1], [], []>} : vector<2x64xf32>, vector<64x64xf32>, vector<2x64xf32> -> vector<2x64xf32>
        %152 = arith.mulf %87, %151 : vector<2x64xf32>
        %153 = arith.addf %121, %152 : vector<2x64xf32>
        %154 = vector.broadcast %83 : vector<1x64xf32> to vector<2x64xf32>
        %155 = arith.addf %153, %154 : vector<2x64xf32>
        %156 = arith.addf %122, %150 : vector<2x64xf32>
        %c2_i32 = arith.constant 2 : i32
        %cst_80 = arith.constant 0.000000e+00 : f32
        %157 = vector.broadcast %cst_80 : f32 to vector<2x64xf32>
        %158 = arith.maximumf %155, %157 : vector<2x64xf32>
        %cst_81 = arith.constant dense<0.000000e+00> : vector<2x64xf32>
        %159 = tpu.matmul %158, %0, %cst_81 {dimension_numbers = #tpu.dot_dimension_numbers<[1], [0], [0], [1], [0, 0, 1, 1], [], []>} : vector<2x64xf32>, vector<64x64xf32>, vector<2x64xf32> -> vector<2x64xf32>
        %160 = vector.broadcast %1 : vector<1x64xf32> to vector<2x64xf32>
        %161 = arith.addf %159, %160 : vector<2x64xf32>
        %162 = arith.mulf %85, %161 : vector<2x64xf32>
        %163 = arith.addf %155, %162 : vector<2x64xf32>
        %cst_82 = arith.constant 0.000000e+00 : f32
        %164 = vector.broadcast %cst_82 : f32 to vector<2x64xf32>
        %165 = arith.maximumf %163, %164 : vector<2x64xf32>
        %cst_83 = arith.constant dense<0.000000e+00> : vector<2x64xf32>
        %166 = tpu.matmul %165, %0, %cst_83 {dimension_numbers = #tpu.dot_dimension_numbers<[1], [0], [0], [1], [0, 0, 1, 1], [], []>} : vector<2x64xf32>, vector<64x64xf32>, vector<2x64xf32> -> vector<2x64xf32>
        %167 = vector.broadcast %1 : vector<1x64xf32> to vector<2x64xf32>
        %168 = arith.addf %166, %167 : vector<2x64xf32>
        %169 = arith.mulf %85, %168 : vector<2x64xf32>
        %170 = arith.addf %155, %169 : vector<2x64xf32>
        %cst_84 = arith.constant 0.000000e+00 : f32
        %171 = vector.broadcast %cst_84 : f32 to vector<2x64xf32>
        %172 = arith.maximumf %170, %171 : vector<2x64xf32>
        %cst_85 = arith.constant dense<0.000000e+00> : vector<2x64xf32>
        %173 = tpu.matmul %172, %0, %cst_85 {dimension_numbers = #tpu.dot_dimension_numbers<[1], [0], [0], [1], [0, 0, 1, 1], [], []>} : vector<2x64xf32>, vector<64x64xf32>, vector<2x64xf32> -> vector<2x64xf32>
        %174 = vector.broadcast %1 : vector<1x64xf32> to vector<2x64xf32>
        %175 = arith.addf %173, %174 : vector<2x64xf32>
        %176 = arith.mulf %86, %175 : vector<2x64xf32>
        %177 = arith.addf %155, %176 : vector<2x64xf32>
        %cst_86 = arith.constant 0.000000e+00 : f32
        %178 = vector.broadcast %cst_86 : f32 to vector<2x64xf32>
        %179 = arith.maximumf %177, %178 : vector<2x64xf32>
        %180 = arith.addf %165, %172 : vector<2x64xf32>
        %cst_87 = arith.constant 2.000000e+00 : f32
        %181 = vector.broadcast %cst_87 : f32 to vector<2x64xf32>
        %182 = arith.mulf %181, %180 : vector<2x64xf32>
        %183 = arith.addf %158, %182 : vector<2x64xf32>
        %184 = arith.addf %183, %179 : vector<2x64xf32>
        %cst_88 = arith.constant dense<0.000000e+00> : vector<2x64xf32>
        %185 = tpu.matmul %184, %0, %cst_88 {dimension_numbers = #tpu.dot_dimension_numbers<[1], [0], [0], [1], [0, 0, 1, 1], [], []>} : vector<2x64xf32>, vector<64x64xf32>, vector<2x64xf32> -> vector<2x64xf32>
        %186 = arith.mulf %87, %185 : vector<2x64xf32>
        %187 = arith.addf %155, %186 : vector<2x64xf32>
        %188 = vector.broadcast %83 : vector<1x64xf32> to vector<2x64xf32>
        %189 = arith.addf %187, %188 : vector<2x64xf32>
        %190 = arith.addf %156, %184 : vector<2x64xf32>
        %c3_i32 = arith.constant 3 : i32
        %cst_89 = arith.constant 0.000000e+00 : f32
        %191 = vector.broadcast %cst_89 : f32 to vector<2x64xf32>
        %192 = arith.maximumf %189, %191 : vector<2x64xf32>
        %cst_90 = arith.constant dense<0.000000e+00> : vector<2x64xf32>
        %193 = tpu.matmul %192, %0, %cst_90 {dimension_numbers = #tpu.dot_dimension_numbers<[1], [0], [0], [1], [0, 0, 1, 1], [], []>} : vector<2x64xf32>, vector<64x64xf32>, vector<2x64xf32> -> vector<2x64xf32>
        %194 = vector.broadcast %1 : vector<1x64xf32> to vector<2x64xf32>
        %195 = arith.addf %193, %194 : vector<2x64xf32>
        %196 = arith.mulf %85, %195 : vector<2x64xf32>
        %197 = arith.addf %189, %196 : vector<2x64xf32>
        %cst_91 = arith.constant 0.000000e+00 : f32
        %198 = vector.broadcast %cst_91 : f32 to vector<2x64xf32>
        %199 = arith.maximumf %197, %198 : vector<2x64xf32>
        %cst_92 = arith.constant dense<0.000000e+00> : vector<2x64xf32>
        %200 = tpu.matmul %199, %0, %cst_92 {dimension_numbers = #tpu.dot_dimension_numbers<[1], [0], [0], [1], [0, 0, 1, 1], [], []>} : vector<2x64xf32>, vector<64x64xf32>, vector<2x64xf32> -> vector<2x64xf32>
        %201 = vector.broadcast %1 : vector<1x64xf32> to vector<2x64xf32>
        %202 = arith.addf %200, %201 : vector<2x64xf32>
        %203 = arith.mulf %85, %202 : vector<2x64xf32>
        %204 = arith.addf %189, %203 : vector<2x64xf32>
        %cst_93 = arith.constant 0.000000e+00 : f32
        %205 = vector.broadcast %cst_93 : f32 to vector<2x64xf32>
        %206 = arith.maximumf %204, %205 : vector<2x64xf32>
        %cst_94 = arith.constant dense<0.000000e+00> : vector<2x64xf32>
        %207 = tpu.matmul %206, %0, %cst_94 {dimension_numbers = #tpu.dot_dimension_numbers<[1], [0], [0], [1], [0, 0, 1, 1], [], []>} : vector<2x64xf32>, vector<64x64xf32>, vector<2x64xf32> -> vector<2x64xf32>
        %208 = vector.broadcast %1 : vector<1x64xf32> to vector<2x64xf32>
        %209 = arith.addf %207, %208 : vector<2x64xf32>
        %210 = arith.mulf %86, %209 : vector<2x64xf32>
        %211 = arith.addf %189, %210 : vector<2x64xf32>
        %cst_95 = arith.constant 0.000000e+00 : f32
        %212 = vector.broadcast %cst_95 : f32 to vector<2x64xf32>
        %213 = arith.maximumf %211, %212 : vector<2x64xf32>
        %214 = arith.addf %199, %206 : vector<2x64xf32>
        %cst_96 = arith.constant 2.000000e+00 : f32
        %215 = vector.broadcast %cst_96 : f32 to vector<2x64xf32>
        %216 = arith.mulf %215, %214 : vector<2x64xf32>
        %217 = arith.addf %192, %216 : vector<2x64xf32>
        %218 = arith.addf %217, %213 : vector<2x64xf32>
        %cst_97 = arith.constant dense<0.000000e+00> : vector<2x64xf32>
        %219 = tpu.matmul %218, %0, %cst_97 {dimension_numbers = #tpu.dot_dimension_numbers<[1], [0], [0], [1], [0, 0, 1, 1], [], []>} : vector<2x64xf32>, vector<64x64xf32>, vector<2x64xf32> -> vector<2x64xf32>
        %220 = arith.mulf %87, %219 : vector<2x64xf32>
        %221 = arith.addf %189, %220 : vector<2x64xf32>
        %222 = vector.broadcast %83 : vector<1x64xf32> to vector<2x64xf32>
        %223 = arith.addf %221, %222 : vector<2x64xf32>
        %224 = arith.addf %190, %218 : vector<2x64xf32>
        %c4_i32 = arith.constant 4 : i32
        %cst_98 = arith.constant 0.000000e+00 : f32
        %225 = vector.broadcast %cst_98 : f32 to vector<2x64xf32>
        %226 = arith.maximumf %223, %225 : vector<2x64xf32>
        %cst_99 = arith.constant dense<0.000000e+00> : vector<2x64xf32>
        %227 = tpu.matmul %226, %0, %cst_99 {dimension_numbers = #tpu.dot_dimension_numbers<[1], [0], [0], [1], [0, 0, 1, 1], [], []>} : vector<2x64xf32>, vector<64x64xf32>, vector<2x64xf32> -> vector<2x64xf32>
        %228 = vector.broadcast %1 : vector<1x64xf32> to vector<2x64xf32>
        %229 = arith.addf %227, %228 : vector<2x64xf32>
        %230 = arith.mulf %85, %229 : vector<2x64xf32>
        %231 = arith.addf %223, %230 : vector<2x64xf32>
        %cst_100 = arith.constant 0.000000e+00 : f32
        %232 = vector.broadcast %cst_100 : f32 to vector<2x64xf32>
        %233 = arith.maximumf %231, %232 : vector<2x64xf32>
        %cst_101 = arith.constant dense<0.000000e+00> : vector<2x64xf32>
        %234 = tpu.matmul %233, %0, %cst_101 {dimension_numbers = #tpu.dot_dimension_numbers<[1], [0], [0], [1], [0, 0, 1, 1], [], []>} : vector<2x64xf32>, vector<64x64xf32>, vector<2x64xf32> -> vector<2x64xf32>
        %235 = vector.broadcast %1 : vector<1x64xf32> to vector<2x64xf32>
        %236 = arith.addf %234, %235 : vector<2x64xf32>
        %237 = arith.mulf %85, %236 : vector<2x64xf32>
        %238 = arith.addf %223, %237 : vector<2x64xf32>
        %cst_102 = arith.constant 0.000000e+00 : f32
        %239 = vector.broadcast %cst_102 : f32 to vector<2x64xf32>
        %240 = arith.maximumf %238, %239 : vector<2x64xf32>
        %cst_103 = arith.constant dense<0.000000e+00> : vector<2x64xf32>
        %241 = tpu.matmul %240, %0, %cst_103 {dimension_numbers = #tpu.dot_dimension_numbers<[1], [0], [0], [1], [0, 0, 1, 1], [], []>} : vector<2x64xf32>, vector<64x64xf32>, vector<2x64xf32> -> vector<2x64xf32>
        %242 = vector.broadcast %1 : vector<1x64xf32> to vector<2x64xf32>
        %243 = arith.addf %241, %242 : vector<2x64xf32>
        %244 = arith.mulf %86, %243 : vector<2x64xf32>
        %245 = arith.addf %223, %244 : vector<2x64xf32>
        %cst_104 = arith.constant 0.000000e+00 : f32
        %246 = vector.broadcast %cst_104 : f32 to vector<2x64xf32>
        %247 = arith.maximumf %245, %246 : vector<2x64xf32>
        %248 = arith.addf %233, %240 : vector<2x64xf32>
        %cst_105 = arith.constant 2.000000e+00 : f32
        %249 = vector.broadcast %cst_105 : f32 to vector<2x64xf32>
        %250 = arith.mulf %249, %248 : vector<2x64xf32>
        %251 = arith.addf %226, %250 : vector<2x64xf32>
        %252 = arith.addf %251, %247 : vector<2x64xf32>
        %cst_106 = arith.constant dense<0.000000e+00> : vector<2x64xf32>
        %253 = tpu.matmul %252, %0, %cst_106 {dimension_numbers = #tpu.dot_dimension_numbers<[1], [0], [0], [1], [0, 0, 1, 1], [], []>} : vector<2x64xf32>, vector<64x64xf32>, vector<2x64xf32> -> vector<2x64xf32>
        %254 = arith.mulf %87, %253 : vector<2x64xf32>
        %255 = arith.addf %223, %254 : vector<2x64xf32>
        %256 = vector.broadcast %83 : vector<1x64xf32> to vector<2x64xf32>
        %257 = arith.addf %255, %256 : vector<2x64xf32>
        %258 = arith.addf %224, %252 : vector<2x64xf32>
        %c5_i32 = arith.constant 5 : i32
        %cst_107 = arith.constant 0.000000e+00 : f32
        %259 = vector.broadcast %cst_107 : f32 to vector<2x64xf32>
        %260 = arith.maximumf %257, %259 : vector<2x64xf32>
        %cst_108 = arith.constant dense<0.000000e+00> : vector<2x64xf32>
        %261 = tpu.matmul %260, %0, %cst_108 {dimension_numbers = #tpu.dot_dimension_numbers<[1], [0], [0], [1], [0, 0, 1, 1], [], []>} : vector<2x64xf32>, vector<64x64xf32>, vector<2x64xf32> -> vector<2x64xf32>
        %262 = vector.broadcast %1 : vector<1x64xf32> to vector<2x64xf32>
        %263 = arith.addf %261, %262 : vector<2x64xf32>
        %264 = arith.mulf %85, %263 : vector<2x64xf32>
        %265 = arith.addf %257, %264 : vector<2x64xf32>
        %cst_109 = arith.constant 0.000000e+00 : f32
        %266 = vector.broadcast %cst_109 : f32 to vector<2x64xf32>
        %267 = arith.maximumf %265, %266 : vector<2x64xf32>
        %cst_110 = arith.constant dense<0.000000e+00> : vector<2x64xf32>
        %268 = tpu.matmul %267, %0, %cst_110 {dimension_numbers = #tpu.dot_dimension_numbers<[1], [0], [0], [1], [0, 0, 1, 1], [], []>} : vector<2x64xf32>, vector<64x64xf32>, vector<2x64xf32> -> vector<2x64xf32>
        %269 = vector.broadcast %1 : vector<1x64xf32> to vector<2x64xf32>
        %270 = arith.addf %268, %269 : vector<2x64xf32>
        %271 = arith.mulf %85, %270 : vector<2x64xf32>
        %272 = arith.addf %257, %271 : vector<2x64xf32>
        %cst_111 = arith.constant 0.000000e+00 : f32
        %273 = vector.broadcast %cst_111 : f32 to vector<2x64xf32>
        %274 = arith.maximumf %272, %273 : vector<2x64xf32>
        %cst_112 = arith.constant dense<0.000000e+00> : vector<2x64xf32>
        %275 = tpu.matmul %274, %0, %cst_112 {dimension_numbers = #tpu.dot_dimension_numbers<[1], [0], [0], [1], [0, 0, 1, 1], [], []>} : vector<2x64xf32>, vector<64x64xf32>, vector<2x64xf32> -> vector<2x64xf32>
        %276 = vector.broadcast %1 : vector<1x64xf32> to vector<2x64xf32>
        %277 = arith.addf %275, %276 : vector<2x64xf32>
        %278 = arith.mulf %86, %277 : vector<2x64xf32>
        %279 = arith.addf %257, %278 : vector<2x64xf32>
        %cst_113 = arith.constant 0.000000e+00 : f32
        %280 = vector.broadcast %cst_113 : f32 to vector<2x64xf32>
        %281 = arith.maximumf %279, %280 : vector<2x64xf32>
        %282 = arith.addf %267, %274 : vector<2x64xf32>
        %cst_114 = arith.constant 2.000000e+00 : f32
        %283 = vector.broadcast %cst_114 : f32 to vector<2x64xf32>
        %284 = arith.mulf %283, %282 : vector<2x64xf32>
        %285 = arith.addf %260, %284 : vector<2x64xf32>
        %286 = arith.addf %285, %281 : vector<2x64xf32>
        %cst_115 = arith.constant dense<0.000000e+00> : vector<2x64xf32>
        %287 = tpu.matmul %286, %0, %cst_115 {dimension_numbers = #tpu.dot_dimension_numbers<[1], [0], [0], [1], [0, 0, 1, 1], [], []>} : vector<2x64xf32>, vector<64x64xf32>, vector<2x64xf32> -> vector<2x64xf32>
        %288 = arith.mulf %87, %287 : vector<2x64xf32>
        %289 = arith.addf %257, %288 : vector<2x64xf32>
        %290 = vector.broadcast %83 : vector<1x64xf32> to vector<2x64xf32>
        %291 = arith.addf %289, %290 : vector<2x64xf32>
        %292 = arith.addf %258, %286 : vector<2x64xf32>
        %c6_i32 = arith.constant 6 : i32
        %cst_116 = arith.constant 0.000000e+00 : f32
        %293 = vector.broadcast %cst_116 : f32 to vector<2x64xf32>
        %294 = arith.maximumf %291, %293 : vector<2x64xf32>
        %cst_117 = arith.constant dense<0.000000e+00> : vector<2x64xf32>
        %295 = tpu.matmul %294, %0, %cst_117 {dimension_numbers = #tpu.dot_dimension_numbers<[1], [0], [0], [1], [0, 0, 1, 1], [], []>} : vector<2x64xf32>, vector<64x64xf32>, vector<2x64xf32> -> vector<2x64xf32>
        %296 = vector.broadcast %1 : vector<1x64xf32> to vector<2x64xf32>
        %297 = arith.addf %295, %296 : vector<2x64xf32>
        %298 = arith.mulf %85, %297 : vector<2x64xf32>
        %299 = arith.addf %291, %298 : vector<2x64xf32>
        %cst_118 = arith.constant 0.000000e+00 : f32
        %300 = vector.broadcast %cst_118 : f32 to vector<2x64xf32>
        %301 = arith.maximumf %299, %300 : vector<2x64xf32>
        %cst_119 = arith.constant dense<0.000000e+00> : vector<2x64xf32>
        %302 = tpu.matmul %301, %0, %cst_119 {dimension_numbers = #tpu.dot_dimension_numbers<[1], [0], [0], [1], [0, 0, 1, 1], [], []>} : vector<2x64xf32>, vector<64x64xf32>, vector<2x64xf32> -> vector<2x64xf32>
        %303 = vector.broadcast %1 : vector<1x64xf32> to vector<2x64xf32>
        %304 = arith.addf %302, %303 : vector<2x64xf32>
        %305 = arith.mulf %85, %304 : vector<2x64xf32>
        %306 = arith.addf %291, %305 : vector<2x64xf32>
        %cst_120 = arith.constant 0.000000e+00 : f32
        %307 = vector.broadcast %cst_120 : f32 to vector<2x64xf32>
        %308 = arith.maximumf %306, %307 : vector<2x64xf32>
        %cst_121 = arith.constant dense<0.000000e+00> : vector<2x64xf32>
        %309 = tpu.matmul %308, %0, %cst_121 {dimension_numbers = #tpu.dot_dimension_numbers<[1], [0], [0], [1], [0, 0, 1, 1], [], []>} : vector<2x64xf32>, vector<64x64xf32>, vector<2x64xf32> -> vector<2x64xf32>
        %310 = vector.broadcast %1 : vector<1x64xf32> to vector<2x64xf32>
        %311 = arith.addf %309, %310 : vector<2x64xf32>
        %312 = arith.mulf %86, %311 : vector<2x64xf32>
        %313 = arith.addf %291, %312 : vector<2x64xf32>
        %cst_122 = arith.constant 0.000000e+00 : f32
        %314 = vector.broadcast %cst_122 : f32 to vector<2x64xf32>
        %315 = arith.maximumf %313, %314 : vector<2x64xf32>
        %316 = arith.addf %301, %308 : vector<2x64xf32>
        %cst_123 = arith.constant 2.000000e+00 : f32
        %317 = vector.broadcast %cst_123 : f32 to vector<2x64xf32>
        %318 = arith.mulf %317, %316 : vector<2x64xf32>
        %319 = arith.addf %294, %318 : vector<2x64xf32>
        %320 = arith.addf %319, %315 : vector<2x64xf32>
        %cst_124 = arith.constant dense<0.000000e+00> : vector<2x64xf32>
        %321 = tpu.matmul %320, %0, %cst_124 {dimension_numbers = #tpu.dot_dimension_numbers<[1], [0], [0], [1], [0, 0, 1, 1], [], []>} : vector<2x64xf32>, vector<64x64xf32>, vector<2x64xf32> -> vector<2x64xf32>
        %322 = arith.mulf %87, %321 : vector<2x64xf32>
        %323 = arith.addf %291, %322 : vector<2x64xf32>
        %324 = vector.broadcast %83 : vector<1x64xf32> to vector<2x64xf32>
        %325 = arith.addf %323, %324 : vector<2x64xf32>
        %326 = arith.addf %292, %320 : vector<2x64xf32>
        %c7_i32 = arith.constant 7 : i32
        %cst_125 = arith.constant 0.000000e+00 : f32
        %327 = vector.broadcast %cst_125 : f32 to vector<2x64xf32>
        %328 = arith.maximumf %325, %327 : vector<2x64xf32>
        %cst_126 = arith.constant dense<0.000000e+00> : vector<2x64xf32>
        %329 = tpu.matmul %328, %0, %cst_126 {dimension_numbers = #tpu.dot_dimension_numbers<[1], [0], [0], [1], [0, 0, 1, 1], [], []>} : vector<2x64xf32>, vector<64x64xf32>, vector<2x64xf32> -> vector<2x64xf32>
        %330 = vector.broadcast %1 : vector<1x64xf32> to vector<2x64xf32>
        %331 = arith.addf %329, %330 : vector<2x64xf32>
        %332 = arith.mulf %85, %331 : vector<2x64xf32>
        %333 = arith.addf %325, %332 : vector<2x64xf32>
        %cst_127 = arith.constant 0.000000e+00 : f32
        %334 = vector.broadcast %cst_127 : f32 to vector<2x64xf32>
        %335 = arith.maximumf %333, %334 : vector<2x64xf32>
        %cst_128 = arith.constant dense<0.000000e+00> : vector<2x64xf32>
        %336 = tpu.matmul %335, %0, %cst_128 {dimension_numbers = #tpu.dot_dimension_numbers<[1], [0], [0], [1], [0, 0, 1, 1], [], []>} : vector<2x64xf32>, vector<64x64xf32>, vector<2x64xf32> -> vector<2x64xf32>
        %337 = vector.broadcast %1 : vector<1x64xf32> to vector<2x64xf32>
        %338 = arith.addf %336, %337 : vector<2x64xf32>
        %339 = arith.mulf %85, %338 : vector<2x64xf32>
        %340 = arith.addf %325, %339 : vector<2x64xf32>
        %cst_129 = arith.constant 0.000000e+00 : f32
        %341 = vector.broadcast %cst_129 : f32 to vector<2x64xf32>
        %342 = arith.maximumf %340, %341 : vector<2x64xf32>
        %cst_130 = arith.constant dense<0.000000e+00> : vector<2x64xf32>
        %343 = tpu.matmul %342, %0, %cst_130 {dimension_numbers = #tpu.dot_dimension_numbers<[1], [0], [0], [1], [0, 0, 1, 1], [], []>} : vector<2x64xf32>, vector<64x64xf32>, vector<2x64xf32> -> vector<2x64xf32>
        %344 = vector.broadcast %1 : vector<1x64xf32> to vector<2x64xf32>
        %345 = arith.addf %343, %344 : vector<2x64xf32>
        %346 = arith.mulf %86, %345 : vector<2x64xf32>
        %347 = arith.addf %325, %346 : vector<2x64xf32>
        %cst_131 = arith.constant 0.000000e+00 : f32
        %348 = vector.broadcast %cst_131 : f32 to vector<2x64xf32>
        %349 = arith.maximumf %347, %348 : vector<2x64xf32>
        %350 = arith.addf %335, %342 : vector<2x64xf32>
        %cst_132 = arith.constant 2.000000e+00 : f32
        %351 = vector.broadcast %cst_132 : f32 to vector<2x64xf32>
        %352 = arith.mulf %351, %350 : vector<2x64xf32>
        %353 = arith.addf %328, %352 : vector<2x64xf32>
        %354 = arith.addf %353, %349 : vector<2x64xf32>
        %cst_133 = arith.constant dense<0.000000e+00> : vector<2x64xf32>
        %355 = tpu.matmul %354, %0, %cst_133 {dimension_numbers = #tpu.dot_dimension_numbers<[1], [0], [0], [1], [0, 0, 1, 1], [], []>} : vector<2x64xf32>, vector<64x64xf32>, vector<2x64xf32> -> vector<2x64xf32>
        %356 = arith.mulf %87, %355 : vector<2x64xf32>
        %357 = arith.addf %325, %356 : vector<2x64xf32>
        %358 = vector.broadcast %83 : vector<1x64xf32> to vector<2x64xf32>
        %359 = arith.addf %357, %358 : vector<2x64xf32>
        %360 = arith.addf %326, %354 : vector<2x64xf32>
        %c8_i32_134 = arith.constant 8 : i32
        %cst_135 = arith.constant 0.000000e+00 : f32
        %361 = vector.broadcast %cst_135 : f32 to vector<2x64xf32>
        %362 = arith.maximumf %359, %361 : vector<2x64xf32>
        %cst_136 = arith.constant dense<0.000000e+00> : vector<2x64xf32>
        %363 = tpu.matmul %362, %0, %cst_136 {dimension_numbers = #tpu.dot_dimension_numbers<[1], [0], [0], [1], [0, 0, 1, 1], [], []>} : vector<2x64xf32>, vector<64x64xf32>, vector<2x64xf32> -> vector<2x64xf32>
        %364 = vector.broadcast %1 : vector<1x64xf32> to vector<2x64xf32>
        %365 = arith.addf %363, %364 : vector<2x64xf32>
        %366 = arith.mulf %85, %365 : vector<2x64xf32>
        %367 = arith.addf %359, %366 : vector<2x64xf32>
        %cst_137 = arith.constant 0.000000e+00 : f32
        %368 = vector.broadcast %cst_137 : f32 to vector<2x64xf32>
        %369 = arith.maximumf %367, %368 : vector<2x64xf32>
        %cst_138 = arith.constant dense<0.000000e+00> : vector<2x64xf32>
        %370 = tpu.matmul %369, %0, %cst_138 {dimension_numbers = #tpu.dot_dimension_numbers<[1], [0], [0], [1], [0, 0, 1, 1], [], []>} : vector<2x64xf32>, vector<64x64xf32>, vector<2x64xf32> -> vector<2x64xf32>
        %371 = vector.broadcast %1 : vector<1x64xf32> to vector<2x64xf32>
        %372 = arith.addf %370, %371 : vector<2x64xf32>
        %373 = arith.mulf %85, %372 : vector<2x64xf32>
        %374 = arith.addf %359, %373 : vector<2x64xf32>
        %cst_139 = arith.constant 0.000000e+00 : f32
        %375 = vector.broadcast %cst_139 : f32 to vector<2x64xf32>
        %376 = arith.maximumf %374, %375 : vector<2x64xf32>
        %cst_140 = arith.constant dense<0.000000e+00> : vector<2x64xf32>
        %377 = tpu.matmul %376, %0, %cst_140 {dimension_numbers = #tpu.dot_dimension_numbers<[1], [0], [0], [1], [0, 0, 1, 1], [], []>} : vector<2x64xf32>, vector<64x64xf32>, vector<2x64xf32> -> vector<2x64xf32>
        %378 = vector.broadcast %1 : vector<1x64xf32> to vector<2x64xf32>
        %379 = arith.addf %377, %378 : vector<2x64xf32>
        %380 = arith.mulf %86, %379 : vector<2x64xf32>
        %381 = arith.addf %359, %380 : vector<2x64xf32>
        %cst_141 = arith.constant 0.000000e+00 : f32
        %382 = vector.broadcast %cst_141 : f32 to vector<2x64xf32>
        %383 = arith.maximumf %381, %382 : vector<2x64xf32>
        %384 = arith.addf %369, %376 : vector<2x64xf32>
        %cst_142 = arith.constant 2.000000e+00 : f32
        %385 = vector.broadcast %cst_142 : f32 to vector<2x64xf32>
        %386 = arith.mulf %385, %384 : vector<2x64xf32>
        %387 = arith.addf %362, %386 : vector<2x64xf32>
        %388 = arith.addf %387, %383 : vector<2x64xf32>
        %cst_143 = arith.constant dense<0.000000e+00> : vector<2x64xf32>
        %389 = tpu.matmul %388, %0, %cst_143 {dimension_numbers = #tpu.dot_dimension_numbers<[1], [0], [0], [1], [0, 0, 1, 1], [], []>} : vector<2x64xf32>, vector<64x64xf32>, vector<2x64xf32> -> vector<2x64xf32>
        %390 = arith.mulf %87, %389 : vector<2x64xf32>
        %391 = arith.addf %359, %390 : vector<2x64xf32>
        %392 = vector.broadcast %83 : vector<1x64xf32> to vector<2x64xf32>
        %393 = arith.addf %391, %392 : vector<2x64xf32>
        %394 = arith.addf %360, %388 : vector<2x64xf32>
        %c9_i32 = arith.constant 9 : i32
        %cst_144 = arith.constant 0.000000e+00 : f32
        %395 = vector.broadcast %cst_144 : f32 to vector<2x64xf32>
        %396 = arith.maximumf %393, %395 : vector<2x64xf32>
        %cst_145 = arith.constant dense<0.000000e+00> : vector<2x64xf32>
        %397 = tpu.matmul %396, %0, %cst_145 {dimension_numbers = #tpu.dot_dimension_numbers<[1], [0], [0], [1], [0, 0, 1, 1], [], []>} : vector<2x64xf32>, vector<64x64xf32>, vector<2x64xf32> -> vector<2x64xf32>
        %398 = vector.broadcast %1 : vector<1x64xf32> to vector<2x64xf32>
        %399 = arith.addf %397, %398 : vector<2x64xf32>
        %400 = arith.mulf %85, %399 : vector<2x64xf32>
        %401 = arith.addf %393, %400 : vector<2x64xf32>
        %cst_146 = arith.constant 0.000000e+00 : f32
        %402 = vector.broadcast %cst_146 : f32 to vector<2x64xf32>
        %403 = arith.maximumf %401, %402 : vector<2x64xf32>
        %cst_147 = arith.constant dense<0.000000e+00> : vector<2x64xf32>
        %404 = tpu.matmul %403, %0, %cst_147 {dimension_numbers = #tpu.dot_dimension_numbers<[1], [0], [0], [1], [0, 0, 1, 1], [], []>} : vector<2x64xf32>, vector<64x64xf32>, vector<2x64xf32> -> vector<2x64xf32>
        %405 = vector.broadcast %1 : vector<1x64xf32> to vector<2x64xf32>
        %406 = arith.addf %404, %405 : vector<2x64xf32>
        %407 = arith.mulf %85, %406 : vector<2x64xf32>
        %408 = arith.addf %393, %407 : vector<2x64xf32>
        %cst_148 = arith.constant 0.000000e+00 : f32
        %409 = vector.broadcast %cst_148 : f32 to vector<2x64xf32>
        %410 = arith.maximumf %408, %409 : vector<2x64xf32>
        %cst_149 = arith.constant dense<0.000000e+00> : vector<2x64xf32>
        %411 = tpu.matmul %410, %0, %cst_149 {dimension_numbers = #tpu.dot_dimension_numbers<[1], [0], [0], [1], [0, 0, 1, 1], [], []>} : vector<2x64xf32>, vector<64x64xf32>, vector<2x64xf32> -> vector<2x64xf32>
        %412 = vector.broadcast %1 : vector<1x64xf32> to vector<2x64xf32>
        %413 = arith.addf %411, %412 : vector<2x64xf32>
        %414 = arith.mulf %86, %413 : vector<2x64xf32>
        %415 = arith.addf %393, %414 : vector<2x64xf32>
        %cst_150 = arith.constant 0.000000e+00 : f32
        %416 = vector.broadcast %cst_150 : f32 to vector<2x64xf32>
        %417 = arith.maximumf %415, %416 : vector<2x64xf32>
        %418 = arith.addf %403, %410 : vector<2x64xf32>
        %cst_151 = arith.constant 2.000000e+00 : f32
        %419 = vector.broadcast %cst_151 : f32 to vector<2x64xf32>
        %420 = arith.mulf %419, %418 : vector<2x64xf32>
        %421 = arith.addf %396, %420 : vector<2x64xf32>
        %422 = arith.addf %421, %417 : vector<2x64xf32>
        %cst_152 = arith.constant dense<0.000000e+00> : vector<2x64xf32>
        %423 = tpu.matmul %422, %0, %cst_152 {dimension_numbers = #tpu.dot_dimension_numbers<[1], [0], [0], [1], [0, 0, 1, 1], [], []>} : vector<2x64xf32>, vector<64x64xf32>, vector<2x64xf32> -> vector<2x64xf32>
        %424 = arith.mulf %87, %423 : vector<2x64xf32>
        %425 = arith.addf %393, %424 : vector<2x64xf32>
        %426 = vector.broadcast %83 : vector<1x64xf32> to vector<2x64xf32>
        %427 = arith.addf %425, %426 : vector<2x64xf32>
        %428 = arith.addf %394, %422 : vector<2x64xf32>
        %c10_i32 = arith.constant 10 : i32
        %cst_153 = arith.constant 0.000000e+00 : f32
        %429 = vector.broadcast %cst_153 : f32 to vector<2x64xf32>
        %430 = arith.maximumf %427, %429 : vector<2x64xf32>
        %cst_154 = arith.constant dense<0.000000e+00> : vector<2x64xf32>
        %431 = tpu.matmul %430, %0, %cst_154 {dimension_numbers = #tpu.dot_dimension_numbers<[1], [0], [0], [1], [0, 0, 1, 1], [], []>} : vector<2x64xf32>, vector<64x64xf32>, vector<2x64xf32> -> vector<2x64xf32>
        %432 = vector.broadcast %1 : vector<1x64xf32> to vector<2x64xf32>
        %433 = arith.addf %431, %432 : vector<2x64xf32>
        %434 = arith.mulf %85, %433 : vector<2x64xf32>
        %435 = arith.addf %427, %434 : vector<2x64xf32>
        %cst_155 = arith.constant 0.000000e+00 : f32
        %436 = vector.broadcast %cst_155 : f32 to vector<2x64xf32>
        %437 = arith.maximumf %435, %436 : vector<2x64xf32>
        %cst_156 = arith.constant dense<0.000000e+00> : vector<2x64xf32>
        %438 = tpu.matmul %437, %0, %cst_156 {dimension_numbers = #tpu.dot_dimension_numbers<[1], [0], [0], [1], [0, 0, 1, 1], [], []>} : vector<2x64xf32>, vector<64x64xf32>, vector<2x64xf32> -> vector<2x64xf32>
        %439 = vector.broadcast %1 : vector<1x64xf32> to vector<2x64xf32>
        %440 = arith.addf %438, %439 : vector<2x64xf32>
        %441 = arith.mulf %85, %440 : vector<2x64xf32>
        %442 = arith.addf %427, %441 : vector<2x64xf32>
        %cst_157 = arith.constant 0.000000e+00 : f32
        %443 = vector.broadcast %cst_157 : f32 to vector<2x64xf32>
        %444 = arith.maximumf %442, %443 : vector<2x64xf32>
        %cst_158 = arith.constant dense<0.000000e+00> : vector<2x64xf32>
        %445 = tpu.matmul %444, %0, %cst_158 {dimension_numbers = #tpu.dot_dimension_numbers<[1], [0], [0], [1], [0, 0, 1, 1], [], []>} : vector<2x64xf32>, vector<64x64xf32>, vector<2x64xf32> -> vector<2x64xf32>
        %446 = vector.broadcast %1 : vector<1x64xf32> to vector<2x64xf32>
        %447 = arith.addf %445, %446 : vector<2x64xf32>
        %448 = arith.mulf %86, %447 : vector<2x64xf32>
        %449 = arith.addf %427, %448 : vector<2x64xf32>
        %cst_159 = arith.constant 0.000000e+00 : f32
        %450 = vector.broadcast %cst_159 : f32 to vector<2x64xf32>
        %451 = arith.maximumf %449, %450 : vector<2x64xf32>
        %452 = arith.addf %437, %444 : vector<2x64xf32>
        %cst_160 = arith.constant 2.000000e+00 : f32
        %453 = vector.broadcast %cst_160 : f32 to vector<2x64xf32>
        %454 = arith.mulf %453, %452 : vector<2x64xf32>
        %455 = arith.addf %430, %454 : vector<2x64xf32>
        %456 = arith.addf %455, %451 : vector<2x64xf32>
        %cst_161 = arith.constant dense<0.000000e+00> : vector<2x64xf32>
        %457 = tpu.matmul %456, %0, %cst_161 {dimension_numbers = #tpu.dot_dimension_numbers<[1], [0], [0], [1], [0, 0, 1, 1], [], []>} : vector<2x64xf32>, vector<64x64xf32>, vector<2x64xf32> -> vector<2x64xf32>
        %458 = arith.mulf %87, %457 : vector<2x64xf32>
        %459 = arith.addf %427, %458 : vector<2x64xf32>
        %460 = vector.broadcast %83 : vector<1x64xf32> to vector<2x64xf32>
        %461 = arith.addf %459, %460 : vector<2x64xf32>
        %462 = arith.addf %428, %456 : vector<2x64xf32>
        %c11_i32 = arith.constant 11 : i32
        %cst_162 = arith.constant 0.000000e+00 : f32
        %463 = vector.broadcast %cst_162 : f32 to vector<2x64xf32>
        %464 = arith.maximumf %461, %463 : vector<2x64xf32>
        %cst_163 = arith.constant dense<0.000000e+00> : vector<2x64xf32>
        %465 = tpu.matmul %464, %0, %cst_163 {dimension_numbers = #tpu.dot_dimension_numbers<[1], [0], [0], [1], [0, 0, 1, 1], [], []>} : vector<2x64xf32>, vector<64x64xf32>, vector<2x64xf32> -> vector<2x64xf32>
        %466 = vector.broadcast %1 : vector<1x64xf32> to vector<2x64xf32>
        %467 = arith.addf %465, %466 : vector<2x64xf32>
        %468 = arith.mulf %85, %467 : vector<2x64xf32>
        %469 = arith.addf %461, %468 : vector<2x64xf32>
        %cst_164 = arith.constant 0.000000e+00 : f32
        %470 = vector.broadcast %cst_164 : f32 to vector<2x64xf32>
        %471 = arith.maximumf %469, %470 : vector<2x64xf32>
        %cst_165 = arith.constant dense<0.000000e+00> : vector<2x64xf32>
        %472 = tpu.matmul %471, %0, %cst_165 {dimension_numbers = #tpu.dot_dimension_numbers<[1], [0], [0], [1], [0, 0, 1, 1], [], []>} : vector<2x64xf32>, vector<64x64xf32>, vector<2x64xf32> -> vector<2x64xf32>
        %473 = vector.broadcast %1 : vector<1x64xf32> to vector<2x64xf32>
        %474 = arith.addf %472, %473 : vector<2x64xf32>
        %475 = arith.mulf %85, %474 : vector<2x64xf32>
        %476 = arith.addf %461, %475 : vector<2x64xf32>
        %cst_166 = arith.constant 0.000000e+00 : f32
        %477 = vector.broadcast %cst_166 : f32 to vector<2x64xf32>
        %478 = arith.maximumf %476, %477 : vector<2x64xf32>
        %cst_167 = arith.constant dense<0.000000e+00> : vector<2x64xf32>
        %479 = tpu.matmul %478, %0, %cst_167 {dimension_numbers = #tpu.dot_dimension_numbers<[1], [0], [0], [1], [0, 0, 1, 1], [], []>} : vector<2x64xf32>, vector<64x64xf32>, vector<2x64xf32> -> vector<2x64xf32>
        %480 = vector.broadcast %1 : vector<1x64xf32> to vector<2x64xf32>
        %481 = arith.addf %479, %480 : vector<2x64xf32>
        %482 = arith.mulf %86, %481 : vector<2x64xf32>
        %483 = arith.addf %461, %482 : vector<2x64xf32>
        %cst_168 = arith.constant 0.000000e+00 : f32
        %484 = vector.broadcast %cst_168 : f32 to vector<2x64xf32>
        %485 = arith.maximumf %483, %484 : vector<2x64xf32>
        %486 = arith.addf %471, %478 : vector<2x64xf32>
        %cst_169 = arith.constant 2.000000e+00 : f32
        %487 = vector.broadcast %cst_169 : f32 to vector<2x64xf32>
        %488 = arith.mulf %487, %486 : vector<2x64xf32>
        %489 = arith.addf %464, %488 : vector<2x64xf32>
        %490 = arith.addf %489, %485 : vector<2x64xf32>
        %cst_170 = arith.constant dense<0.000000e+00> : vector<2x64xf32>
        %491 = tpu.matmul %490, %0, %cst_170 {dimension_numbers = #tpu.dot_dimension_numbers<[1], [0], [0], [1], [0, 0, 1, 1], [], []>} : vector<2x64xf32>, vector<64x64xf32>, vector<2x64xf32> -> vector<2x64xf32>
        %492 = arith.mulf %87, %491 : vector<2x64xf32>
        %493 = arith.addf %461, %492 : vector<2x64xf32>
        %494 = vector.broadcast %83 : vector<1x64xf32> to vector<2x64xf32>
        %495 = arith.addf %493, %494 : vector<2x64xf32>
        %496 = arith.addf %462, %490 : vector<2x64xf32>
        %c12_i32 = arith.constant 12 : i32
        %cst_171 = arith.constant 0.000000e+00 : f32
        %497 = vector.broadcast %cst_171 : f32 to vector<2x64xf32>
        %498 = arith.maximumf %495, %497 : vector<2x64xf32>
        %cst_172 = arith.constant dense<0.000000e+00> : vector<2x64xf32>
        %499 = tpu.matmul %498, %0, %cst_172 {dimension_numbers = #tpu.dot_dimension_numbers<[1], [0], [0], [1], [0, 0, 1, 1], [], []>} : vector<2x64xf32>, vector<64x64xf32>, vector<2x64xf32> -> vector<2x64xf32>
        %500 = vector.broadcast %1 : vector<1x64xf32> to vector<2x64xf32>
        %501 = arith.addf %499, %500 : vector<2x64xf32>
        %502 = arith.mulf %85, %501 : vector<2x64xf32>
        %503 = arith.addf %495, %502 : vector<2x64xf32>
        %cst_173 = arith.constant 0.000000e+00 : f32
        %504 = vector.broadcast %cst_173 : f32 to vector<2x64xf32>
        %505 = arith.maximumf %503, %504 : vector<2x64xf32>
        %cst_174 = arith.constant dense<0.000000e+00> : vector<2x64xf32>
        %506 = tpu.matmul %505, %0, %cst_174 {dimension_numbers = #tpu.dot_dimension_numbers<[1], [0], [0], [1], [0, 0, 1, 1], [], []>} : vector<2x64xf32>, vector<64x64xf32>, vector<2x64xf32> -> vector<2x64xf32>
        %507 = vector.broadcast %1 : vector<1x64xf32> to vector<2x64xf32>
        %508 = arith.addf %506, %507 : vector<2x64xf32>
        %509 = arith.mulf %85, %508 : vector<2x64xf32>
        %510 = arith.addf %495, %509 : vector<2x64xf32>
        %cst_175 = arith.constant 0.000000e+00 : f32
        %511 = vector.broadcast %cst_175 : f32 to vector<2x64xf32>
        %512 = arith.maximumf %510, %511 : vector<2x64xf32>
        %cst_176 = arith.constant dense<0.000000e+00> : vector<2x64xf32>
        %513 = tpu.matmul %512, %0, %cst_176 {dimension_numbers = #tpu.dot_dimension_numbers<[1], [0], [0], [1], [0, 0, 1, 1], [], []>} : vector<2x64xf32>, vector<64x64xf32>, vector<2x64xf32> -> vector<2x64xf32>
        %514 = vector.broadcast %1 : vector<1x64xf32> to vector<2x64xf32>
        %515 = arith.addf %513, %514 : vector<2x64xf32>
        %516 = arith.mulf %86, %515 : vector<2x64xf32>
        %517 = arith.addf %495, %516 : vector<2x64xf32>
        %cst_177 = arith.constant 0.000000e+00 : f32
        %518 = vector.broadcast %cst_177 : f32 to vector<2x64xf32>
        %519 = arith.maximumf %517, %518 : vector<2x64xf32>
        %520 = arith.addf %505, %512 : vector<2x64xf32>
        %cst_178 = arith.constant 2.000000e+00 : f32
        %521 = vector.broadcast %cst_178 : f32 to vector<2x64xf32>
        %522 = arith.mulf %521, %520 : vector<2x64xf32>
        %523 = arith.addf %498, %522 : vector<2x64xf32>
        %524 = arith.addf %523, %519 : vector<2x64xf32>
        %cst_179 = arith.constant dense<0.000000e+00> : vector<2x64xf32>
        %525 = tpu.matmul %524, %0, %cst_179 {dimension_numbers = #tpu.dot_dimension_numbers<[1], [0], [0], [1], [0, 0, 1, 1], [], []>} : vector<2x64xf32>, vector<64x64xf32>, vector<2x64xf32> -> vector<2x64xf32>
        %526 = arith.mulf %87, %525 : vector<2x64xf32>
        %527 = arith.addf %495, %526 : vector<2x64xf32>
        %528 = vector.broadcast %83 : vector<1x64xf32> to vector<2x64xf32>
        %529 = arith.addf %527, %528 : vector<2x64xf32>
        %530 = arith.addf %496, %524 : vector<2x64xf32>
        %c13_i32 = arith.constant 13 : i32
        %cst_180 = arith.constant 0.000000e+00 : f32
        %531 = vector.broadcast %cst_180 : f32 to vector<2x64xf32>
        %532 = arith.maximumf %529, %531 : vector<2x64xf32>
        %cst_181 = arith.constant dense<0.000000e+00> : vector<2x64xf32>
        %533 = tpu.matmul %532, %0, %cst_181 {dimension_numbers = #tpu.dot_dimension_numbers<[1], [0], [0], [1], [0, 0, 1, 1], [], []>} : vector<2x64xf32>, vector<64x64xf32>, vector<2x64xf32> -> vector<2x64xf32>
        %534 = vector.broadcast %1 : vector<1x64xf32> to vector<2x64xf32>
        %535 = arith.addf %533, %534 : vector<2x64xf32>
        %536 = arith.mulf %85, %535 : vector<2x64xf32>
        %537 = arith.addf %529, %536 : vector<2x64xf32>
        %cst_182 = arith.constant 0.000000e+00 : f32
        %538 = vector.broadcast %cst_182 : f32 to vector<2x64xf32>
        %539 = arith.maximumf %537, %538 : vector<2x64xf32>
        %cst_183 = arith.constant dense<0.000000e+00> : vector<2x64xf32>
        %540 = tpu.matmul %539, %0, %cst_183 {dimension_numbers = #tpu.dot_dimension_numbers<[1], [0], [0], [1], [0, 0, 1, 1], [], []>} : vector<2x64xf32>, vector<64x64xf32>, vector<2x64xf32> -> vector<2x64xf32>
        %541 = vector.broadcast %1 : vector<1x64xf32> to vector<2x64xf32>
        %542 = arith.addf %540, %541 : vector<2x64xf32>
        %543 = arith.mulf %85, %542 : vector<2x64xf32>
        %544 = arith.addf %529, %543 : vector<2x64xf32>
        %cst_184 = arith.constant 0.000000e+00 : f32
        %545 = vector.broadcast %cst_184 : f32 to vector<2x64xf32>
        %546 = arith.maximumf %544, %545 : vector<2x64xf32>
        %cst_185 = arith.constant dense<0.000000e+00> : vector<2x64xf32>
        %547 = tpu.matmul %546, %0, %cst_185 {dimension_numbers = #tpu.dot_dimension_numbers<[1], [0], [0], [1], [0, 0, 1, 1], [], []>} : vector<2x64xf32>, vector<64x64xf32>, vector<2x64xf32> -> vector<2x64xf32>
        %548 = vector.broadcast %1 : vector<1x64xf32> to vector<2x64xf32>
        %549 = arith.addf %547, %548 : vector<2x64xf32>
        %550 = arith.mulf %86, %549 : vector<2x64xf32>
        %551 = arith.addf %529, %550 : vector<2x64xf32>
        %cst_186 = arith.constant 0.000000e+00 : f32
        %552 = vector.broadcast %cst_186 : f32 to vector<2x64xf32>
        %553 = arith.maximumf %551, %552 : vector<2x64xf32>
        %554 = arith.addf %539, %546 : vector<2x64xf32>
        %cst_187 = arith.constant 2.000000e+00 : f32
        %555 = vector.broadcast %cst_187 : f32 to vector<2x64xf32>
        %556 = arith.mulf %555, %554 : vector<2x64xf32>
        %557 = arith.addf %532, %556 : vector<2x64xf32>
        %558 = arith.addf %557, %553 : vector<2x64xf32>
        %cst_188 = arith.constant dense<0.000000e+00> : vector<2x64xf32>
        %559 = tpu.matmul %558, %0, %cst_188 {dimension_numbers = #tpu.dot_dimension_numbers<[1], [0], [0], [1], [0, 0, 1, 1], [], []>} : vector<2x64xf32>, vector<64x64xf32>, vector<2x64xf32> -> vector<2x64xf32>
        %560 = arith.mulf %87, %559 : vector<2x64xf32>
        %561 = arith.addf %529, %560 : vector<2x64xf32>
        %562 = vector.broadcast %83 : vector<1x64xf32> to vector<2x64xf32>
        %563 = arith.addf %561, %562 : vector<2x64xf32>
        %564 = arith.addf %530, %558 : vector<2x64xf32>
        %c14_i32 = arith.constant 14 : i32
        %cst_189 = arith.constant 0.000000e+00 : f32
        %565 = vector.broadcast %cst_189 : f32 to vector<2x64xf32>
        %566 = arith.maximumf %563, %565 : vector<2x64xf32>
        %cst_190 = arith.constant dense<0.000000e+00> : vector<2x64xf32>
        %567 = tpu.matmul %566, %0, %cst_190 {dimension_numbers = #tpu.dot_dimension_numbers<[1], [0], [0], [1], [0, 0, 1, 1], [], []>} : vector<2x64xf32>, vector<64x64xf32>, vector<2x64xf32> -> vector<2x64xf32>
        %568 = vector.broadcast %1 : vector<1x64xf32> to vector<2x64xf32>
        %569 = arith.addf %567, %568 : vector<2x64xf32>
        %570 = arith.mulf %85, %569 : vector<2x64xf32>
        %571 = arith.addf %563, %570 : vector<2x64xf32>
        %cst_191 = arith.constant 0.000000e+00 : f32
        %572 = vector.broadcast %cst_191 : f32 to vector<2x64xf32>
        %573 = arith.maximumf %571, %572 : vector<2x64xf32>
        %cst_192 = arith.constant dense<0.000000e+00> : vector<2x64xf32>
        %574 = tpu.matmul %573, %0, %cst_192 {dimension_numbers = #tpu.dot_dimension_numbers<[1], [0], [0], [1], [0, 0, 1, 1], [], []>} : vector<2x64xf32>, vector<64x64xf32>, vector<2x64xf32> -> vector<2x64xf32>
        %575 = vector.broadcast %1 : vector<1x64xf32> to vector<2x64xf32>
        %576 = arith.addf %574, %575 : vector<2x64xf32>
        %577 = arith.mulf %85, %576 : vector<2x64xf32>
        %578 = arith.addf %563, %577 : vector<2x64xf32>
        %cst_193 = arith.constant 0.000000e+00 : f32
        %579 = vector.broadcast %cst_193 : f32 to vector<2x64xf32>
        %580 = arith.maximumf %578, %579 : vector<2x64xf32>
        %cst_194 = arith.constant dense<0.000000e+00> : vector<2x64xf32>
        %581 = tpu.matmul %580, %0, %cst_194 {dimension_numbers = #tpu.dot_dimension_numbers<[1], [0], [0], [1], [0, 0, 1, 1], [], []>} : vector<2x64xf32>, vector<64x64xf32>, vector<2x64xf32> -> vector<2x64xf32>
        %582 = vector.broadcast %1 : vector<1x64xf32> to vector<2x64xf32>
        %583 = arith.addf %581, %582 : vector<2x64xf32>
        %584 = arith.mulf %86, %583 : vector<2x64xf32>
        %585 = arith.addf %563, %584 : vector<2x64xf32>
        %cst_195 = arith.constant 0.000000e+00 : f32
        %586 = vector.broadcast %cst_195 : f32 to vector<2x64xf32>
        %587 = arith.maximumf %585, %586 : vector<2x64xf32>
        %588 = arith.addf %573, %580 : vector<2x64xf32>
        %cst_196 = arith.constant 2.000000e+00 : f32
        %589 = vector.broadcast %cst_196 : f32 to vector<2x64xf32>
        %590 = arith.mulf %589, %588 : vector<2x64xf32>
        %591 = arith.addf %566, %590 : vector<2x64xf32>
        %592 = arith.addf %591, %587 : vector<2x64xf32>
        %cst_197 = arith.constant dense<0.000000e+00> : vector<2x64xf32>
        %593 = tpu.matmul %592, %0, %cst_197 {dimension_numbers = #tpu.dot_dimension_numbers<[1], [0], [0], [1], [0, 0, 1, 1], [], []>} : vector<2x64xf32>, vector<64x64xf32>, vector<2x64xf32> -> vector<2x64xf32>
        %594 = arith.mulf %87, %593 : vector<2x64xf32>
        %595 = arith.addf %563, %594 : vector<2x64xf32>
        %596 = vector.broadcast %83 : vector<1x64xf32> to vector<2x64xf32>
        %597 = arith.addf %595, %596 : vector<2x64xf32>
        %598 = arith.addf %564, %592 : vector<2x64xf32>
        %c15_i32 = arith.constant 15 : i32
        %cst_198 = arith.constant 0.000000e+00 : f32
        %599 = vector.broadcast %cst_198 : f32 to vector<2x64xf32>
        %600 = arith.maximumf %597, %599 : vector<2x64xf32>
        %cst_199 = arith.constant dense<0.000000e+00> : vector<2x64xf32>
        %601 = tpu.matmul %600, %0, %cst_199 {dimension_numbers = #tpu.dot_dimension_numbers<[1], [0], [0], [1], [0, 0, 1, 1], [], []>} : vector<2x64xf32>, vector<64x64xf32>, vector<2x64xf32> -> vector<2x64xf32>
        %602 = vector.broadcast %1 : vector<1x64xf32> to vector<2x64xf32>
        %603 = arith.addf %601, %602 : vector<2x64xf32>
        %604 = arith.mulf %85, %603 : vector<2x64xf32>
        %605 = arith.addf %597, %604 : vector<2x64xf32>
        %cst_200 = arith.constant 0.000000e+00 : f32
        %606 = vector.broadcast %cst_200 : f32 to vector<2x64xf32>
        %607 = arith.maximumf %605, %606 : vector<2x64xf32>
        %cst_201 = arith.constant dense<0.000000e+00> : vector<2x64xf32>
        %608 = tpu.matmul %607, %0, %cst_201 {dimension_numbers = #tpu.dot_dimension_numbers<[1], [0], [0], [1], [0, 0, 1, 1], [], []>} : vector<2x64xf32>, vector<64x64xf32>, vector<2x64xf32> -> vector<2x64xf32>
        %609 = vector.broadcast %1 : vector<1x64xf32> to vector<2x64xf32>
        %610 = arith.addf %608, %609 : vector<2x64xf32>
        %611 = arith.mulf %85, %610 : vector<2x64xf32>
        %612 = arith.addf %597, %611 : vector<2x64xf32>
        %cst_202 = arith.constant 0.000000e+00 : f32
        %613 = vector.broadcast %cst_202 : f32 to vector<2x64xf32>
        %614 = arith.maximumf %612, %613 : vector<2x64xf32>
        %cst_203 = arith.constant dense<0.000000e+00> : vector<2x64xf32>
        %615 = tpu.matmul %614, %0, %cst_203 {dimension_numbers = #tpu.dot_dimension_numbers<[1], [0], [0], [1], [0, 0, 1, 1], [], []>} : vector<2x64xf32>, vector<64x64xf32>, vector<2x64xf32> -> vector<2x64xf32>
        %616 = vector.broadcast %1 : vector<1x64xf32> to vector<2x64xf32>
        %617 = arith.addf %615, %616 : vector<2x64xf32>
        %618 = arith.mulf %86, %617 : vector<2x64xf32>
        %619 = arith.addf %597, %618 : vector<2x64xf32>
        %cst_204 = arith.constant 0.000000e+00 : f32
        %620 = vector.broadcast %cst_204 : f32 to vector<2x64xf32>
        %621 = arith.maximumf %619, %620 : vector<2x64xf32>
        %622 = arith.addf %607, %614 : vector<2x64xf32>
        %cst_205 = arith.constant 2.000000e+00 : f32
        %623 = vector.broadcast %cst_205 : f32 to vector<2x64xf32>
        %624 = arith.mulf %623, %622 : vector<2x64xf32>
        %625 = arith.addf %600, %624 : vector<2x64xf32>
        %626 = arith.addf %625, %621 : vector<2x64xf32>
        %cst_206 = arith.constant dense<0.000000e+00> : vector<2x64xf32>
        %627 = tpu.matmul %626, %0, %cst_206 {dimension_numbers = #tpu.dot_dimension_numbers<[1], [0], [0], [1], [0, 0, 1, 1], [], []>} : vector<2x64xf32>, vector<64x64xf32>, vector<2x64xf32> -> vector<2x64xf32>
        %628 = arith.mulf %87, %627 : vector<2x64xf32>
        %629 = arith.addf %597, %628 : vector<2x64xf32>
        %630 = vector.broadcast %83 : vector<1x64xf32> to vector<2x64xf32>
        %631 = arith.addf %629, %630 : vector<2x64xf32>
        %632 = arith.addf %598, %626 : vector<2x64xf32>
        %c16_i32 = arith.constant 16 : i32
        %cst_207 = arith.constant 0.000000e+00 : f32
        %633 = vector.broadcast %cst_207 : f32 to vector<2x64xf32>
        %634 = arith.maximumf %631, %633 : vector<2x64xf32>
        %cst_208 = arith.constant dense<0.000000e+00> : vector<2x64xf32>
        %635 = tpu.matmul %634, %0, %cst_208 {dimension_numbers = #tpu.dot_dimension_numbers<[1], [0], [0], [1], [0, 0, 1, 1], [], []>} : vector<2x64xf32>, vector<64x64xf32>, vector<2x64xf32> -> vector<2x64xf32>
        %636 = vector.broadcast %1 : vector<1x64xf32> to vector<2x64xf32>
        %637 = arith.addf %635, %636 : vector<2x64xf32>
        %638 = arith.mulf %85, %637 : vector<2x64xf32>
        %639 = arith.addf %631, %638 : vector<2x64xf32>
        %cst_209 = arith.constant 0.000000e+00 : f32
        %640 = vector.broadcast %cst_209 : f32 to vector<2x64xf32>
        %641 = arith.maximumf %639, %640 : vector<2x64xf32>
        %cst_210 = arith.constant dense<0.000000e+00> : vector<2x64xf32>
        %642 = tpu.matmul %641, %0, %cst_210 {dimension_numbers = #tpu.dot_dimension_numbers<[1], [0], [0], [1], [0, 0, 1, 1], [], []>} : vector<2x64xf32>, vector<64x64xf32>, vector<2x64xf32> -> vector<2x64xf32>
        %643 = vector.broadcast %1 : vector<1x64xf32> to vector<2x64xf32>
        %644 = arith.addf %642, %643 : vector<2x64xf32>
        %645 = arith.mulf %85, %644 : vector<2x64xf32>
        %646 = arith.addf %631, %645 : vector<2x64xf32>
        %cst_211 = arith.constant 0.000000e+00 : f32
        %647 = vector.broadcast %cst_211 : f32 to vector<2x64xf32>
        %648 = arith.maximumf %646, %647 : vector<2x64xf32>
        %cst_212 = arith.constant dense<0.000000e+00> : vector<2x64xf32>
        %649 = tpu.matmul %648, %0, %cst_212 {dimension_numbers = #tpu.dot_dimension_numbers<[1], [0], [0], [1], [0, 0, 1, 1], [], []>} : vector<2x64xf32>, vector<64x64xf32>, vector<2x64xf32> -> vector<2x64xf32>
        %650 = vector.broadcast %1 : vector<1x64xf32> to vector<2x64xf32>
        %651 = arith.addf %649, %650 : vector<2x64xf32>
        %652 = arith.mulf %86, %651 : vector<2x64xf32>
        %653 = arith.addf %631, %652 : vector<2x64xf32>
        %cst_213 = arith.constant 0.000000e+00 : f32
        %654 = vector.broadcast %cst_213 : f32 to vector<2x64xf32>
        %655 = arith.maximumf %653, %654 : vector<2x64xf32>
        %656 = arith.addf %641, %648 : vector<2x64xf32>
        %cst_214 = arith.constant 2.000000e+00 : f32
        %657 = vector.broadcast %cst_214 : f32 to vector<2x64xf32>
        %658 = arith.mulf %657, %656 : vector<2x64xf32>
        %659 = arith.addf %634, %658 : vector<2x64xf32>
        %660 = arith.addf %659, %655 : vector<2x64xf32>
        %cst_215 = arith.constant dense<0.000000e+00> : vector<2x64xf32>
        %661 = tpu.matmul %660, %0, %cst_215 {dimension_numbers = #tpu.dot_dimension_numbers<[1], [0], [0], [1], [0, 0, 1, 1], [], []>} : vector<2x64xf32>, vector<64x64xf32>, vector<2x64xf32> -> vector<2x64xf32>
        %662 = arith.mulf %87, %661 : vector<2x64xf32>
        %663 = arith.addf %631, %662 : vector<2x64xf32>
        %664 = vector.broadcast %83 : vector<1x64xf32> to vector<2x64xf32>
        %665 = arith.addf %663, %664 : vector<2x64xf32>
        %666 = arith.addf %632, %660 : vector<2x64xf32>
        %c17_i32 = arith.constant 17 : i32
        %cst_216 = arith.constant 0.000000e+00 : f32
        %667 = vector.broadcast %cst_216 : f32 to vector<2x64xf32>
        %668 = arith.maximumf %665, %667 : vector<2x64xf32>
        %cst_217 = arith.constant dense<0.000000e+00> : vector<2x64xf32>
        %669 = tpu.matmul %668, %0, %cst_217 {dimension_numbers = #tpu.dot_dimension_numbers<[1], [0], [0], [1], [0, 0, 1, 1], [], []>} : vector<2x64xf32>, vector<64x64xf32>, vector<2x64xf32> -> vector<2x64xf32>
        %670 = vector.broadcast %1 : vector<1x64xf32> to vector<2x64xf32>
        %671 = arith.addf %669, %670 : vector<2x64xf32>
        %672 = arith.mulf %85, %671 : vector<2x64xf32>
        %673 = arith.addf %665, %672 : vector<2x64xf32>
        %cst_218 = arith.constant 0.000000e+00 : f32
        %674 = vector.broadcast %cst_218 : f32 to vector<2x64xf32>
        %675 = arith.maximumf %673, %674 : vector<2x64xf32>
        %cst_219 = arith.constant dense<0.000000e+00> : vector<2x64xf32>
        %676 = tpu.matmul %675, %0, %cst_219 {dimension_numbers = #tpu.dot_dimension_numbers<[1], [0], [0], [1], [0, 0, 1, 1], [], []>} : vector<2x64xf32>, vector<64x64xf32>, vector<2x64xf32> -> vector<2x64xf32>
        %677 = vector.broadcast %1 : vector<1x64xf32> to vector<2x64xf32>
        %678 = arith.addf %676, %677 : vector<2x64xf32>
        %679 = arith.mulf %85, %678 : vector<2x64xf32>
        %680 = arith.addf %665, %679 : vector<2x64xf32>
        %cst_220 = arith.constant 0.000000e+00 : f32
        %681 = vector.broadcast %cst_220 : f32 to vector<2x64xf32>
        %682 = arith.maximumf %680, %681 : vector<2x64xf32>
        %cst_221 = arith.constant dense<0.000000e+00> : vector<2x64xf32>
        %683 = tpu.matmul %682, %0, %cst_221 {dimension_numbers = #tpu.dot_dimension_numbers<[1], [0], [0], [1], [0, 0, 1, 1], [], []>} : vector<2x64xf32>, vector<64x64xf32>, vector<2x64xf32> -> vector<2x64xf32>
        %684 = vector.broadcast %1 : vector<1x64xf32> to vector<2x64xf32>
        %685 = arith.addf %683, %684 : vector<2x64xf32>
        %686 = arith.mulf %86, %685 : vector<2x64xf32>
        %687 = arith.addf %665, %686 : vector<2x64xf32>
        %cst_222 = arith.constant 0.000000e+00 : f32
        %688 = vector.broadcast %cst_222 : f32 to vector<2x64xf32>
        %689 = arith.maximumf %687, %688 : vector<2x64xf32>
        %690 = arith.addf %675, %682 : vector<2x64xf32>
        %cst_223 = arith.constant 2.000000e+00 : f32
        %691 = vector.broadcast %cst_223 : f32 to vector<2x64xf32>
        %692 = arith.mulf %691, %690 : vector<2x64xf32>
        %693 = arith.addf %668, %692 : vector<2x64xf32>
        %694 = arith.addf %693, %689 : vector<2x64xf32>
        %cst_224 = arith.constant dense<0.000000e+00> : vector<2x64xf32>
        %695 = tpu.matmul %694, %0, %cst_224 {dimension_numbers = #tpu.dot_dimension_numbers<[1], [0], [0], [1], [0, 0, 1, 1], [], []>} : vector<2x64xf32>, vector<64x64xf32>, vector<2x64xf32> -> vector<2x64xf32>
        %696 = arith.mulf %87, %695 : vector<2x64xf32>
        %697 = arith.addf %665, %696 : vector<2x64xf32>
        %698 = vector.broadcast %83 : vector<1x64xf32> to vector<2x64xf32>
        %699 = arith.addf %697, %698 : vector<2x64xf32>
        %700 = arith.addf %666, %694 : vector<2x64xf32>
        %c18_i32 = arith.constant 18 : i32
        %cst_225 = arith.constant 0.000000e+00 : f32
        %701 = vector.broadcast %cst_225 : f32 to vector<2x64xf32>
        %702 = arith.maximumf %699, %701 : vector<2x64xf32>
        %cst_226 = arith.constant dense<0.000000e+00> : vector<2x64xf32>
        %703 = tpu.matmul %702, %0, %cst_226 {dimension_numbers = #tpu.dot_dimension_numbers<[1], [0], [0], [1], [0, 0, 1, 1], [], []>} : vector<2x64xf32>, vector<64x64xf32>, vector<2x64xf32> -> vector<2x64xf32>
        %704 = vector.broadcast %1 : vector<1x64xf32> to vector<2x64xf32>
        %705 = arith.addf %703, %704 : vector<2x64xf32>
        %706 = arith.mulf %85, %705 : vector<2x64xf32>
        %707 = arith.addf %699, %706 : vector<2x64xf32>
        %cst_227 = arith.constant 0.000000e+00 : f32
        %708 = vector.broadcast %cst_227 : f32 to vector<2x64xf32>
        %709 = arith.maximumf %707, %708 : vector<2x64xf32>
        %cst_228 = arith.constant dense<0.000000e+00> : vector<2x64xf32>
        %710 = tpu.matmul %709, %0, %cst_228 {dimension_numbers = #tpu.dot_dimension_numbers<[1], [0], [0], [1], [0, 0, 1, 1], [], []>} : vector<2x64xf32>, vector<64x64xf32>, vector<2x64xf32> -> vector<2x64xf32>
        %711 = vector.broadcast %1 : vector<1x64xf32> to vector<2x64xf32>
        %712 = arith.addf %710, %711 : vector<2x64xf32>
        %713 = arith.mulf %85, %712 : vector<2x64xf32>
        %714 = arith.addf %699, %713 : vector<2x64xf32>
        %cst_229 = arith.constant 0.000000e+00 : f32
        %715 = vector.broadcast %cst_229 : f32 to vector<2x64xf32>
        %716 = arith.maximumf %714, %715 : vector<2x64xf32>
        %cst_230 = arith.constant dense<0.000000e+00> : vector<2x64xf32>
        %717 = tpu.matmul %716, %0, %cst_230 {dimension_numbers = #tpu.dot_dimension_numbers<[1], [0], [0], [1], [0, 0, 1, 1], [], []>} : vector<2x64xf32>, vector<64x64xf32>, vector<2x64xf32> -> vector<2x64xf32>
        %718 = vector.broadcast %1 : vector<1x64xf32> to vector<2x64xf32>
        %719 = arith.addf %717, %718 : vector<2x64xf32>
        %720 = arith.mulf %86, %719 : vector<2x64xf32>
        %721 = arith.addf %699, %720 : vector<2x64xf32>
        %cst_231 = arith.constant 0.000000e+00 : f32
        %722 = vector.broadcast %cst_231 : f32 to vector<2x64xf32>
        %723 = arith.maximumf %721, %722 : vector<2x64xf32>
        %724 = arith.addf %709, %716 : vector<2x64xf32>
        %cst_232 = arith.constant 2.000000e+00 : f32
        %725 = vector.broadcast %cst_232 : f32 to vector<2x64xf32>
        %726 = arith.mulf %725, %724 : vector<2x64xf32>
        %727 = arith.addf %702, %726 : vector<2x64xf32>
        %728 = arith.addf %727, %723 : vector<2x64xf32>
        %cst_233 = arith.constant dense<0.000000e+00> : vector<2x64xf32>
        %729 = tpu.matmul %728, %0, %cst_233 {dimension_numbers = #tpu.dot_dimension_numbers<[1], [0], [0], [1], [0, 0, 1, 1], [], []>} : vector<2x64xf32>, vector<64x64xf32>, vector<2x64xf32> -> vector<2x64xf32>
        %730 = arith.mulf %87, %729 : vector<2x64xf32>
        %731 = arith.addf %699, %730 : vector<2x64xf32>
        %732 = vector.broadcast %83 : vector<1x64xf32> to vector<2x64xf32>
        %733 = arith.addf %731, %732 : vector<2x64xf32>
        %734 = arith.addf %700, %728 : vector<2x64xf32>
        %c19_i32 = arith.constant 19 : i32
        %cst_234 = arith.constant 0.000000e+00 : f32
        %735 = vector.broadcast %cst_234 : f32 to vector<2x64xf32>
        %736 = arith.maximumf %733, %735 : vector<2x64xf32>
        %cst_235 = arith.constant dense<0.000000e+00> : vector<2x64xf32>
        %737 = tpu.matmul %736, %0, %cst_235 {dimension_numbers = #tpu.dot_dimension_numbers<[1], [0], [0], [1], [0, 0, 1, 1], [], []>} : vector<2x64xf32>, vector<64x64xf32>, vector<2x64xf32> -> vector<2x64xf32>
        %738 = vector.broadcast %1 : vector<1x64xf32> to vector<2x64xf32>
        %739 = arith.addf %737, %738 : vector<2x64xf32>
        %740 = arith.mulf %85, %739 : vector<2x64xf32>
        %741 = arith.addf %733, %740 : vector<2x64xf32>
        %cst_236 = arith.constant 0.000000e+00 : f32
        %742 = vector.broadcast %cst_236 : f32 to vector<2x64xf32>
        %743 = arith.maximumf %741, %742 : vector<2x64xf32>
        %cst_237 = arith.constant dense<0.000000e+00> : vector<2x64xf32>
        %744 = tpu.matmul %743, %0, %cst_237 {dimension_numbers = #tpu.dot_dimension_numbers<[1], [0], [0], [1], [0, 0, 1, 1], [], []>} : vector<2x64xf32>, vector<64x64xf32>, vector<2x64xf32> -> vector<2x64xf32>
        %745 = vector.broadcast %1 : vector<1x64xf32> to vector<2x64xf32>
        %746 = arith.addf %744, %745 : vector<2x64xf32>
        %747 = arith.mulf %85, %746 : vector<2x64xf32>
        %748 = arith.addf %733, %747 : vector<2x64xf32>
        %cst_238 = arith.constant 0.000000e+00 : f32
        %749 = vector.broadcast %cst_238 : f32 to vector<2x64xf32>
        %750 = arith.maximumf %748, %749 : vector<2x64xf32>
        %cst_239 = arith.constant dense<0.000000e+00> : vector<2x64xf32>
        %751 = tpu.matmul %750, %0, %cst_239 {dimension_numbers = #tpu.dot_dimension_numbers<[1], [0], [0], [1], [0, 0, 1, 1], [], []>} : vector<2x64xf32>, vector<64x64xf32>, vector<2x64xf32> -> vector<2x64xf32>
        %752 = vector.broadcast %1 : vector<1x64xf32> to vector<2x64xf32>
        %753 = arith.addf %751, %752 : vector<2x64xf32>
        %754 = arith.mulf %86, %753 : vector<2x64xf32>
        %755 = arith.addf %733, %754 : vector<2x64xf32>
        %cst_240 = arith.constant 0.000000e+00 : f32
        %756 = vector.broadcast %cst_240 : f32 to vector<2x64xf32>
        %757 = arith.maximumf %755, %756 : vector<2x64xf32>
        %758 = arith.addf %743, %750 : vector<2x64xf32>
        %cst_241 = arith.constant 2.000000e+00 : f32
        %759 = vector.broadcast %cst_241 : f32 to vector<2x64xf32>
        %760 = arith.mulf %759, %758 : vector<2x64xf32>
        %761 = arith.addf %736, %760 : vector<2x64xf32>
        %762 = arith.addf %761, %757 : vector<2x64xf32>
        %cst_242 = arith.constant dense<0.000000e+00> : vector<2x64xf32>
        %763 = tpu.matmul %762, %0, %cst_242 {dimension_numbers = #tpu.dot_dimension_numbers<[1], [0], [0], [1], [0, 0, 1, 1], [], []>} : vector<2x64xf32>, vector<64x64xf32>, vector<2x64xf32> -> vector<2x64xf32>
        %764 = arith.mulf %87, %763 : vector<2x64xf32>
        %765 = arith.addf %733, %764 : vector<2x64xf32>
        %766 = vector.broadcast %83 : vector<1x64xf32> to vector<2x64xf32>
        %767 = arith.addf %765, %766 : vector<2x64xf32>
        %768 = arith.addf %734, %762 : vector<2x64xf32>
        %c0_243 = arith.constant 0 : index
        %c0_244 = arith.constant 0 : index
        %769 = vector.load %arg12[%c0_243, %c0_244] : memref<64x32xf32, #tpu.memory_space<vmem>>, vector<64x32xf32>
        %cst_245 = arith.constant dense<0.000000e+00> : vector<2x32xf32>
        %770 = tpu.matmul %768, %769, %cst_245 {dimension_numbers = #tpu.dot_dimension_numbers<[1], [0], [0], [1], [0, 0, 1, 1], [], []>} : vector<2x64xf32>, vector<64x32xf32>, vector<2x32xf32> -> vector<2x32xf32>
        %771 = vector.broadcast %81 : f32 to vector<2x32xf32>
        %772 = arith.mulf %771, %770 : vector<2x32xf32>
        %773 = arith.addf %75, %772 : vector<2x32xf32>
        %cst_246 = arith.constant 2.000000e+01 : f32
        %774 = arith.mulf %cst_246, %38 : f32
        %c0_247 = arith.constant 0 : index
        %c0_248 = arith.constant 0 : index
        %775 = vector.load %arg13[%c0_247, %c0_248] : memref<1x32xf32, #tpu.memory_space<vmem>>, vector<1x32xf32>
        %776 = vector.broadcast %774 : f32 to vector<1x32xf32>
        %777 = arith.mulf %776, %775 : vector<1x32xf32>
        %778 = vector.broadcast %777 : vector<1x32xf32> to vector<2x32xf32>
        %779 = arith.addf %773, %778 : vector<2x32xf32>
        %c0_249 = arith.constant 0 : index
        %c0_250 = arith.constant 0 : index
        %780 = vector.load %arg17[%c0_249, %c0_250] : memref<2x32xf32, #tpu.memory_space<vmem>>, vector<2x32xf32>
        tpu.vector_store %arg17[%c0_249, %c0_250], %779 {strides = array<i32>} : memref<2x32xf32, #tpu.memory_space<vmem>>, vector<2x32xf32>,
      } else {
      }
      %c0_38 = arith.constant 0 : index
      %c0_39 = arith.constant 0 : index
      %42 = vector.load %arg17[%c0_38, %c0_39] : memref<2x32xf32, #tpu.memory_space<vmem>>, vector<2x32xf32>
      %c0_40 = arith.constant 0 : index
      %c0_41 = arith.constant 0 : index
      %43 = vector.load %arg6[%c0_40, %c0_41] : memref<32x96xf32, #tpu.memory_space<vmem>>, vector<32x96xf32>
      %cst_42 = arith.constant dense<0.000000e+00> : vector<2x96xf32>
      %44 = tpu.matmul %42, %43, %cst_42 {dimension_numbers = #tpu.dot_dimension_numbers<[1], [0], [0], [1], [0, 0, 1, 1], [], []>} : vector<2x32xf32>, vector<32x96xf32>, vector<2x96xf32> -> vector<2x96xf32>
      %c0_43 = arith.constant 0 : index
      %c0_44 = arith.constant 0 : index
      %45 = vector.load %arg7[%c0_43, %c0_44] : memref<1x96xf32, #tpu.memory_space<vmem>>, vector<1x96xf32>
      %46 = vector.broadcast %45 : vector<1x96xf32> to vector<2x96xf32>
      %47 = arith.addf %44, %46 : vector<2x96xf32>
      %48 = vector.extract_strided_slice %26 {offsets = [0, 0], sizes = [2, 32], strides = [1, 1]} : vector<2x96xf32> to vector<2x32xf32>
      %49 = vector.extract_strided_slice %47 {offsets = [0, 0], sizes = [2, 32], strides = [1, 1]} : vector<2x96xf32> to vector<2x32xf32>
      %50 = arith.addf %48, %49 : vector<2x32xf32>
      %51 = arith.negf %50 : vector<2x32xf32>
      %52 = math.exp %51 : vector<2x32xf32>
      %cst_45 = arith.constant 1.000000e+00 : f32
      %53 = vector.broadcast %cst_45 : f32 to vector<2x32xf32>
      %54 = arith.addf %53, %52 : vector<2x32xf32>
      %55 = arith.divf %53, %54 : vector<2x32xf32>
      %56 = vector.extract_strided_slice %26 {offsets = [0, 32], sizes = [2, 32], strides = [1, 1]} : vector<2x96xf32> to vector<2x32xf32>
      %57 = vector.extract_strided_slice %47 {offsets = [0, 32], sizes = [2, 32], strides = [1, 1]} : vector<2x96xf32> to vector<2x32xf32>
      %58 = arith.addf %56, %57 : vector<2x32xf32>
      %59 = arith.negf %58 : vector<2x32xf32>
      %60 = math.exp %59 : vector<2x32xf32>
      %cst_46 = arith.constant 1.000000e+00 : f32
      %61 = vector.broadcast %cst_46 : f32 to vector<2x32xf32>
      %62 = arith.addf %61, %60 : vector<2x32xf32>
      %63 = arith.divf %61, %62 : vector<2x32xf32>
      %64 = vector.extract_strided_slice %26 {offsets = [0, 64], sizes = [2, 32], strides = [1, 1]} : vector<2x96xf32> to vector<2x32xf32>
      %65 = vector.extract_strided_slice %47 {offsets = [0, 64], sizes = [2, 32], strides = [1, 1]} : vector<2x96xf32> to vector<2x32xf32>
      %66 = arith.mulf %55, %65 : vector<2x32xf32>
      %67 = arith.addf %64, %66 : vector<2x32xf32>
      %68 = math.tanh %67 : vector<2x32xf32>
      %cst_47 = arith.constant 1.000000e+00 : f32
      %69 = vector.broadcast %cst_47 : f32 to vector<2x32xf32>
      %70 = arith.subf %69, %63 : vector<2x32xf32>
      %71 = arith.mulf %70, %68 : vector<2x32xf32>
      %72 = arith.mulf %63, %42 : vector<2x32xf32>
      %73 = arith.addf %71, %72 : vector<2x32xf32>
      %c0_48 = arith.constant 0 : index
      %c0_49 = arith.constant 0 : index
      %74 = vector.load %arg17[%c0_48, %c0_49] : memref<2x32xf32, #tpu.memory_space<vmem>>, vector<2x32xf32>
      tpu.vector_store %arg17[%c0_48, %c0_49], %73 {strides = array<i32>} : memref<2x32xf32, #tpu.memory_space<vmem>>, vector<2x32xf32>,
    }
    %c8_i32_5 = arith.constant 8 : i32
    %c0_6 = arith.constant 0 : index
    %c0_7 = arith.constant 0 : index
    %5 = vector.load %arg17[%c0_6, %c0_7] : memref<2x32xf32, #tpu.memory_space<vmem>>, vector<2x32xf32>
    %c0_8 = arith.constant 0 : index
    %c0_9 = arith.constant 0 : index
    %6 = vector.load %arg14[%c0_8, %c0_9] : memref<32x8xf32, #tpu.memory_space<vmem>>, vector<32x8xf32>
    %cst_10 = arith.constant dense<0.000000e+00> : vector<2x8xf32>
    %7 = tpu.matmul %5, %6, %cst_10 {dimension_numbers = #tpu.dot_dimension_numbers<[1], [0], [0], [1], [0, 0, 1, 1], [], []>} : vector<2x32xf32>, vector<32x8xf32>, vector<2x8xf32> -> vector<2x8xf32>
    %c0_11 = arith.constant 0 : index
    %c0_12 = arith.constant 0 : index
    %8 = vector.load %arg15[%c0_11, %c0_12] : memref<1x8xf32, #tpu.memory_space<vmem>>, vector<1x8xf32>
    %9 = vector.broadcast %8 : vector<1x8xf32> to vector<2x8xf32>
    %10 = arith.addf %7, %9 : vector<2x8xf32>
    %c0_13 = arith.constant 0 : index
    %c0_14 = arith.constant 0 : index
    %11 = vector.load %arg16[%c0_13, %c0_14] : memref<2x8xf32, #tpu.memory_space<vmem>>, vector<2x8xf32>
    tpu.vector_store %arg16[%c0_13, %c0_14], %10 {strides = array<i32>} : memref<2x8xf32, #tpu.memory_space<vmem>>, vector<2x8xf32>,
    return
  }
}

</mosaic_0001>

<llo_original>
// kernel: ode_rnn_encoder.1
$region0: #{ode_rnn_encoder.1}
  #allocation0 [shape = 'u32[]', space=smem, size = 0x4, offset = 0x4, fixed_abs, tag = 'smem constant byte address 0x4 - core index']
  #allocation1 [shape = 'u32[144,128]{1,0:T(1,128)}', space=vmem, size = 0x12000, scoped, tag = 'internal scratch']
  #allocation2 [shape = 'f32[2,32]{1,0:T(2,128)}', space=vmem, size = 0x400, scoped, tag = 'scratch operand']
  %s0 = inlined_call_operand.vmem [shape: f32[8], index: 0, kind: input, shape index: {}]
  %s1 = inlined_call_operand.vmem [shape: f32[8,2,4], index: 1, kind: input, shape index: {}]
  %s2 = inlined_call_operand.hbm [shape: f32[4,32], index: 2, kind: input, shape index: {}]
  %s3 = inlined_call_operand.hbm [shape: f32[1,32], index: 3, kind: input, shape index: {}]
  %s4 = inlined_call_operand.vmem [shape: f32[32,96], index: 4, kind: input, shape index: {}]
  %s5 = inlined_call_operand.vmem [shape: f32[1,96], index: 5, kind: input, shape index: {}]
  %s6 = inlined_call_operand.vmem [shape: f32[32,96], index: 6, kind: input, shape index: {}]
  %s7 = inlined_call_operand.vmem [shape: f32[1,96], index: 7, kind: input, shape index: {}]
  %s8 = inlined_call_operand.vmem [shape: f32[32,64], index: 8, kind: input, shape index: {}]
  %s9 = inlined_call_operand.vmem [shape: f32[1,64], index: 9, kind: input, shape index: {}]
  %s10 = inlined_call_operand.vmem [shape: f32[64,64], index: 10, kind: input, shape index: {}]
  %s11 = inlined_call_operand.vmem [shape: f32[1,64], index: 11, kind: input, shape index: {}]
  %s12 = inlined_call_operand.vmem [shape: f32[64,32], index: 12, kind: input, shape index: {}]
  %s13 = inlined_call_operand.vmem [shape: f32[1,32], index: 13, kind: input, shape index: {}]
  %s14 = inlined_call_operand.vmem [shape: f32[32,8], index: 14, kind: input, shape index: {}]
  %s15 = inlined_call_operand.vmem [shape: f32[1,8], index: 15, kind: input, shape index: {}]
  %s16 = inlined_call_operand.vmem [shape: f32[2,8], index: 16, kind: output, shape index: {}]
  %s17 = sld [smem:[#allocation0]]
  $region97: #{ode_rnn_encoder.1} parent=0
    _
  %s19 = ssub.s32 1, %s17
  %s20 = scalar_select 0, %s19, %s17
  $region1: #{ode_rnn_encoder.1} parent=0
    #allocation3 [shape = 'u8[512]{0}', space=smem, size = 0x200, scoped, tag = 'input window, operand 0, single buffered']
    #allocation4 [shape = 's32[1]{0}', space=sflag, size = 0x4, scoped, tag = 'scoped memory for ode_rnn_encoder.1']
    #allocation5 [shape = 's32[1]{0}', space=sflag, size = 0x4, scoped, tag = 'scoped memory for ode_rnn_encoder.1']
    #allocation6 [shape = 'u8[2048]{0}', space=vmem, size = 0x800, scoped, tag = 'input window, operand 2, single buffered']
    #allocation7 [shape = 'u8[512]{0}', space=vmem, size = 0x400, scoped, tag = 'input window, operand 3, single buffered']
    #allocation8 [shape = 's32[1]{0}', space=sflag, size = 0x4, scoped, tag = 'scoped memory for ode_rnn_encoder.1']
    %21 = vsyncpa [#allocation5], 0
    %22 = vsyncpa [#allocation4], 0
    %23 = vsyncpa [#allocation8], 0
    // Predicated region
    $region2: #{ode_rnn_encoder.1} parent=1 // pred_check
      _
    $region3: #{ode_rnn_encoder.1} parent=1 // pred_check_branch
      %25 = sbr.rel (0) target = $region5
    $region4: #{ode_rnn_encoder.1} parent=1 // pred_region
      %s27 = ssub.s32 16, 16
      %28 = vsyncadd [#allocation5], %s27
      %s30 = sshll.u32 %s0, 4
      %s31 = int_to_ptr.vmem [resolvable:$true] %s30
      %33 = dma.vmem_to_smem %s31, 16, [#allocation3], [#allocation5]
    $region5: #{ode_rnn_encoder.1} parent=1 // pred_fallthru
      _
    // Predicated region
    $region6: #{ode_rnn_encoder.1} parent=1 // pred_check
      _
    $region7: #{ode_rnn_encoder.1} parent=1 // pred_check_branch
      %35 = sbr.rel (0) target = $region9
    $region8: #{ode_rnn_encoder.1} parent=1 // pred_region
      _
    $region9: #{ode_rnn_encoder.1} parent=1 // pred_fallthru
      _
    // Predicated region
    $region10: #{ode_rnn_encoder.1} parent=1 // pred_check
      _
    $region11: #{ode_rnn_encoder.1} parent=1 // pred_check_branch
      %37 = sbr.rel (0) target = $region13
    $region12: #{ode_rnn_encoder.1} parent=1 // pred_region
      %s39 = ssub.s32 64, 64
      %40 = vsyncadd [#allocation4], %s39
      %s42 = sshll.u32 [#allocation6], 4
      %s43 = int_to_ptr.vmem [resolvable:$true] %s42
      %45 = dma.hbm_to_vmem [thread:$0]  %s2, 64, %s43, [#allocation4]
    $region13: #{ode_rnn_encoder.1} parent=1 // pred_fallthru
      _
    // Predicated region
    $region14: #{ode_rnn_encoder.1} parent=1 // pred_check
      _
    $region15: #{ode_rnn_encoder.1} parent=1 // pred_check_branch
      %47 = sbr.rel (0) target = $region17
    $region16: #{ode_rnn_encoder.1} parent=1 // pred_region
      %s49 = ssub.s32 16, 16
      %50 = vsyncadd [#allocation8], %s49
      %s52 = sshll.u32 [#allocation7], 4
      %s53 = int_to_ptr.vmem [resolvable:$true] %s52
      %55 = dma.hbm_to_vmem [thread:$0]  %s3, 16, %s53, [#allocation8]
    $region17: #{ode_rnn_encoder.1} parent=1 // pred_fallthru
      _
    // Predicated region
    $region18: #{ode_rnn_encoder.1} parent=1 // pred_check
      _
    $region19: #{ode_rnn_encoder.1} parent=1 // pred_check_branch
      %57 = sbr.rel (0) target = $region21
    $region20: #{ode_rnn_encoder.1} parent=1 // pred_region
      _
    $region21: #{ode_rnn_encoder.1} parent=1 // pred_fallthru
      _
    // Predicated region
    $region22: #{ode_rnn_encoder.1} parent=1 // pred_check
      _
    $region23: #{ode_rnn_encoder.1} parent=1 // pred_check_branch
      %59 = sbr.rel (0) target = $region25
    $region24: #{ode_rnn_encoder.1} parent=1 // pred_region
      _
    $region25: #{ode_rnn_encoder.1} parent=1 // pred_fallthru
      _
    // Predicated region
    $region26: #{ode_rnn_encoder.1} parent=1 // pred_check
      _
    $region27: #{ode_rnn_encoder.1} parent=1 // pred_check_branch
      %61 = sbr.rel (0) target = $region29
    $region28: #{ode_rnn_encoder.1} parent=1 // pred_region
      _
    $region29: #{ode_rnn_encoder.1} parent=1 // pred_fallthru
      _
    // Predicated region
    $region30: #{ode_rnn_encoder.1} parent=1 // pred_check
      _
    $region31: #{ode_rnn_encoder.1} parent=1 // pred_check_branch
      %63 = sbr.rel (0) target = $region33
    $region32: #{ode_rnn_encoder.1} parent=1 // pred_region
      _
    $region33: #{ode_rnn_encoder.1} parent=1 // pred_fallthru
      _
    // Predicated region
    $region34: #{ode_rnn_encoder.1} parent=1 // pred_check
      _
    $region35: #{ode_rnn_encoder.1} parent=1 // pred_check_branch
      %65 = sbr.rel (0) target = $region37
    $region36: #{ode_rnn_encoder.1} parent=1 // pred_region
      _
    $region37: #{ode_rnn_encoder.1} parent=1 // pred_fallthru
      _
    // Predicated region
    $region38: #{ode_rnn_encoder.1} parent=1 // pred_check
      _
    $region39: #{ode_rnn_encoder.1} parent=1 // pred_check_branch
      %67 = sbr.rel (0) target = $region41
    $region40: #{ode_rnn_encoder.1} parent=1 // pred_region
      _
    $region41: #{ode_rnn_encoder.1} parent=1 // pred_fallthru
      _
    // Predicated region
    $region42: #{ode_rnn_encoder.1} parent=1 // pred_check
      _
    $region43: #{ode_rnn_encoder.1} parent=1 // pred_check_branch
      %69 = sbr.rel (0) target = $region45
    $region44: #{ode_rnn_encoder.1} parent=1 // pred_region
      _
    $region45: #{ode_rnn_encoder.1} parent=1 // pred_fallthru
      _
    // Predicated region
    $region46: #{ode_rnn_encoder.1} parent=1 // pred_check
      _
    $region47: #{ode_rnn_encoder.1} parent=1 // pred_check_branch
      %71 = sbr.rel (0) target = $region49
    $region48: #{ode_rnn_encoder.1} parent=1 // pred_region
      _
    $region49: #{ode_rnn_encoder.1} parent=1 // pred_fallthru
      _
    // Predicated region
    $region50: #{ode_rnn_encoder.1} parent=1 // pred_check
      _
    $region51: #{ode_rnn_encoder.1} parent=1 // pred_check_branch
      %73 = sbr.rel (0) target = $region53
    $region52: #{ode_rnn_encoder.1} parent=1 // pred_region
      _
    $region53: #{ode_rnn_encoder.1} parent=1 // pred_fallthru
      _
    // Predicated region
    $region54: #{ode_rnn_encoder.1} parent=1 // pred_check
      _
    $region55: #{ode_rnn_encoder.1} parent=1 // pred_check_branch
      %75 = sbr.rel (0) target = $region57
    $region56: #{ode_rnn_encoder.1} parent=1 // pred_region
      _
    $region57: #{ode_rnn_encoder.1} parent=1 // pred_fallthru
      _
    // Predicated region
    $region58: #{ode_rnn_encoder.1} parent=1 // pred_check
      _
    $region59: #{ode_rnn_encoder.1} parent=1 // pred_check_branch
      %77 = sbr.rel (0) target = $region61
    $region60: #{ode_rnn_encoder.1} parent=1 // pred_region
      _
    $region61: #{ode_rnn_encoder.1} parent=1 // pred_fallthru
      _
    // Predicated region
    $region62: #{ode_rnn_encoder.1} parent=1 // pred_check
      _
    $region63: #{ode_rnn_encoder.1} parent=1 // pred_check_branch
      %79 = sbr.rel (0) target = $region65
    $region64: #{ode_rnn_encoder.1} parent=1 // pred_region
      _
    $region65: #{ode_rnn_encoder.1} parent=1 // pred_fallthru
      _
    // Predicated region
    $region66: #{ode_rnn_encoder.1} parent=1 // pred_check
      _
    $region67: #{ode_rnn_encoder.1} parent=1 // pred_check_branch
      %81 = sbr.rel (0) target = $region69
    $region68: #{ode_rnn_encoder.1} parent=1 // pred_region
      %82 = dma.done [#allocation5], 16
    $region69: #{ode_rnn_encoder.1} parent=1 // pred_fallthru
      _
    // Predicated region
    $region70: #{ode_rnn_encoder.1} parent=1 // pred_check
      _
    $region71: #{ode_rnn_encoder.1} parent=1 // pred_check_branch
      %84 = sbr.rel (0) target = $region73
    $region72: #{ode_rnn_encoder.1} parent=1 // pred_region
      %85 = dma.done [#allocation4], 64
    $region73: #{ode_rnn_encoder.1} parent=1 // pred_fallthru
      _
    // Predicated region
    $region74: #{ode_rnn_encoder.1} parent=1 // pred_check
      _
    $region75: #{ode_rnn_encoder.1} parent=1 // pred_check_branch
      %87 = sbr.rel (0) target = $region77
    $region76: #{ode_rnn_encoder.1} parent=1 // pred_region
      %88 = dma.done [#allocation8], 16
    $region77: #{ode_rnn_encoder.1} parent=1 // pred_fallthru
      _
    %89 = sfence
    %v90 = vld [vmem:[%s10] sm:$0xff]
    %v91 = vld [vmem:[%s10 + $0x8] sm:$0xff]
    %v92 = vld [vmem:[%s10 + $0x10] sm:$0xff]
    %v93 = vld [vmem:[%s10 + $0x18] sm:$0xff]
    %v94 = vld [vmem:[%s10 + $0x20] sm:$0xff]
    %v95 = vld [vmem:[%s10 + $0x28] sm:$0xff]
    %v96 = vld [vmem:[%s10 + $0x30] sm:$0xff]
    %v97 = vld [vmem:[%s10 + $0x38] sm:$0xff]
    %v98 = vld [vmem:[%s11] sm:$0x1]
    %vm99 = vcmask 254976
    %100 = vst.msk [vmem:[#allocation2] sm:$0x3] %vm99, 0.0
    loop: start=0, step=1, limit=8
    $region78: #{ode_rnn_encoder.1} parent=1 // loop_pre_header
      _
    $region79: #{ode_rnn_encoder.1} parent=1 // loop_header
      %s102 = sphi 0, %s106
      %p103 = scmp.ge.s32.totalorder %s102, 8
    $region80: #{ode_rnn_encoder.1} parent=1 // loop_header_branch
      %105 = sbr.rel (%p103) target = $region84
    $region81: #{ode_rnn_encoder.1} parent=1 // loop_body
      %s107 = smul.u32 %s102, 2
      %s108 = scalar_lea.vmem %s1, %s107
      %v109 = vld [vmem:[%s108] sm:$0x3]
      %v110 = vld [vmem:[#allocation6] sm:$0xf]
      %v111 = vld [vmem:[#allocation7] sm:$0x1]
      %v113 = vlaneseq
      %v114 = vshrl.u32 %v113, 7
      %v115 = vsub.s32 0, %v114
      %v116 = vrot.slane %v111, %v115
      %vm118 = vcmask 31744
      %v120 = vsel %vm118, %v109, 0
      %vm122 = vcmask 1043456
      %v124 = vsel %vm122, %v110, 0
      %126 = vmatprep.subr.mxu0 0.0
      %127 = vmatpush1.msra.mxu0 0.0
      %128 = vmatprep.subr.mxu0 0.0
      %129 = vmatpush1.msra.mxu0 0.0
      %130 = vmatprep.subr.mxu0 0.0
      %131 = vmatpush1.msra.mxu0 0.0
      %132 = vmatprep.subr.mxu0 0.0
      %133 = vmatpush1.msra.mxu0 0.0
      %134 = vmatprep.subr.mxu0 0.0
      %135 = vmatpush1.msra.mxu0 0.0
      %136 = vmatprep.subr.mxu0 0.0
      %137 = vmatpush1.msra.mxu0 0.0
      %138 = vmatprep.subr.mxu0 0.0
      %139 = vmatpush1.msra.mxu0 0.0
      %140 = vmatprep.subr.mxu0 0.0
      %141 = vmatpush1.msra.mxu0 0.0
      %142 = vmatprep.subr.mxu0 0.0
      %143 = vmatpush1.msra.mxu0 0.0
      %144 = vmatprep.subr.mxu0 0.0
      %145 = vmatpush1.msra.mxu0 0.0
      %146 = vmatprep.subr.mxu0 0.0
      %147 = vmatpush1.msra.mxu0 0.0
      %148 = vmatprep.subr.mxu0 0.0
      %149 = vmatpush1.msra.mxu0 0.0
      %150 = vmatprep.subr.mxu0 0.0
      %151 = vmatpush1.msra.mxu0 0.0
      %152 = vmatprep.subr.mxu0 0.0
      %153 = vmatpush1.msra.mxu0 0.0
      %154 = vmatprep.subr.mxu0 0.0
      %155 = vmatpush1.msra.mxu0 0.0
      %156 = vmatprep.subr.mxu0 0.0
      %157 = vmatpush1.msra.mxu0 %v124
      %158 = vmatprep.subr.mxu0 0.0
      %159 = vmatpush2.msra.mxu0 0.0
      %160 = vmatprep.subr.mxu0 0.0
      %161 = vmatpush2.msra.mxu0 0.0
      %162 = vmatprep.subr.mxu0 0.0
      %163 = vmatpush2.msra.mxu0 0.0
      %164 = vmatprep.subr.mxu0 0.0
      %165 = vmatpush2.msra.mxu0 0.0
      %166 = vmatprep.subr.mxu0 0.0
      %167 = vmatpush2.msra.mxu0 0.0
      %168 = vmatprep.subr.mxu0 0.0
      %169 = vmatpush2.msra.mxu0 0.0
      %170 = vmatprep.subr.mxu0 0.0
      %171 = vmatpush2.msra.mxu0 0.0
      %172 = vmatprep.subr.mxu0 0.0
      %173 = vmatpush2.msra.mxu0 0.0
      %174 = vmatprep.subr.mxu0 0.0
      %175 = vmatpush2.msra.mxu0 0.0
      %176 = vmatprep.subr.mxu0 0.0
      %177 = vmatpush2.msra.mxu0 0.0
      %178 = vmatprep.subr.mxu0 0.0
      %179 = vmatpush2.msra.mxu0 0.0
      %180 = vmatprep.subr.mxu0 0.0
      %181 = vmatpush2.msra.mxu0 0.0
      %182 = vmatprep.subr.mxu0 0.0
      %183 = vmatpush2.msra.mxu0 0.0
      %184 = vmatprep.subr.mxu0 0.0
      %185 = vmatpush2.msra.mxu0 0.0
      %186 = vmatprep.subr.mxu0 0.0
      %187 = vmatpush2.msra.mxu0 0.0
      %188 = vmatprep.subr.mxu0 0.0
      %189 = vmatpush2.msra.mxu0 0.0
      %190 = vmatprep.mubr.f32.mxu0 0.0
      %191 = vmatmul.mubr.f32.gmra.mxu0 %v120
      %v192 = vpop.f32.mrf.mxu0
      %v193 = vadd.f32 %v116, %v192
      %v194 = vpop.f32.mrf.mxu0
      %195 = vdwg.mxu0
      %v196 = vld [vmem:[%s4] sm:$0xff]
      %v197 = vld [vmem:[%s4 + $0x8] sm:$0xff]
      %v198 = vld [vmem:[%s4 + $0x10] sm:$0xff]
      %v199 = vld [vmem:[%s4 + $0x18] sm:$0xff]
      %v200 = vld [vmem:[%s5] sm:$0x1]
      %v202 = vlaneseq
      %v203 = vshrl.u32 %v202, 7
      %v204 = vsub.s32 0, %v203
      %v205 = vrot.slane %v200, %v204
      %vm207 = vcmask 261120
      %v209 = vsel %vm207, %v193, 0
      %211 = vmatprep.subr.mxu0 0.0
      %212 = vmatpush1.msra.mxu0 0.0
      %213 = vmatprep.subr.mxu0 0.0
      %214 = vmatpush1.msra.mxu0 0.0
      %215 = vmatprep.subr.mxu0 0.0
      %216 = vmatpush1.msra.mxu0 0.0
      %217 = vmatprep.subr.mxu0 0.0
      %218 = vmatpush1.msra.mxu0 0.0
      %219 = vmatprep.subr.mxu0 0.0
      %220 = vmatpush1.msra.mxu0 0.0
      %221 = vmatprep.subr.mxu0 0.0
      %222 = vmatpush1.msra.mxu0 0.0
      %223 = vmatprep.subr.mxu0 0.0
      %224 = vmatpush1.msra.mxu0 0.0
      %225 = vmatprep.subr.mxu0 0.0
      %226 = vmatpush1.msra.mxu0 0.0
      %227 = vmatprep.subr.mxu0 0.0
      %228 = vmatpush1.msra.mxu0 0.0
      %229 = vmatprep.subr.mxu0 0.0
      %230 = vmatpush1.msra.mxu0 0.0
      %231 = vmatprep.subr.mxu0 0.0
      %232 = vmatpush1.msra.mxu0 0.0
      %233 = vmatprep.subr.mxu0 0.0
      %234 = vmatpush1.msra.mxu0 0.0
      %235 = vmatprep.subr.mxu0 0.0
      %236 = vmatpush1.msra.mxu0 %v199
      %237 = vmatprep.subr.mxu0 0.0
      %238 = vmatpush1.msra.mxu0 %v198
      %239 = vmatprep.subr.mxu0 0.0
      %240 = vmatpush1.msra.mxu0 %v197
      %241 = vmatprep.subr.mxu0 0.0
      %242 = vmatpush1.msra.mxu0 %v196
      %243 = vmatprep.subr.mxu0 0.0
      %244 = vmatpush2.msra.mxu0 0.0
      %245 = vmatprep.subr.mxu0 0.0
      %246 = vmatpush2.msra.mxu0 0.0
      %247 = vmatprep.subr.mxu0 0.0
      %248 = vmatpush2.msra.mxu0 0.0
      %249 = vmatprep.subr.mxu0 0.0
      %250 = vmatpush2.msra.mxu0 0.0
      %251 = vmatprep.subr.mxu0 0.0
      %252 = vmatpush2.msra.mxu0 0.0
      %253 = vmatprep.subr.mxu0 0.0
      %254 = vmatpush2.msra.mxu0 0.0
      %255 = vmatprep.subr.mxu0 0.0
      %256 = vmatpush2.msra.mxu0 0.0
      %257 = vmatprep.subr.mxu0 0.0
      %258 = vmatpush2.msra.mxu0 0.0
      %259 = vmatprep.subr.mxu0 0.0
      %260 = vmatpush2.msra.mxu0 0.0
      %261 = vmatprep.subr.mxu0 0.0
      %262 = vmatpush2.msra.mxu0 0.0
      %263 = vmatprep.subr.mxu0 0.0
      %264 = vmatpush2.msra.mxu0 0.0
      %265 = vmatprep.subr.mxu0 0.0
      %266 = vmatpush2.msra.mxu0 0.0
      %267 = vmatprep.subr.mxu0 0.0
      %268 = vmatpush2.msra.mxu0 0.0
      %269 = vmatprep.subr.mxu0 0.0
      %270 = vmatpush2.msra.mxu0 0.0
      %271 = vmatprep.subr.mxu0 0.0
      %272 = vmatpush2.msra.mxu0 0.0
      %273 = vmatprep.subr.mxu0 0.0
      %274 = vmatpush2.msra.mxu0 0.0
      %275 = vmatprep.mubr.f32.mxu0 0.0
      %276 = vmatmul.mubr.f32.gmra.mxu0 %v209
      %v277 = vpop.f32.mrf.mxu0
      %v278 = vadd.f32 %v205, %v277
      %v279 = vpop.f32.mrf.mxu0
      %280 = vdwg.mxu0
      %s281 = ssub.s32 %s102, 1
      %p282 = scmp.gt.s32.totalorder %s281, 0
      %s283 = scalar_select %p282, %s281, 0
      %p284 = scmp.gt.s32.totalorder %s102, 0
      %s285 = sld [smem:[#allocation3 + %s102]]
      %s286 = sld [smem:[#allocation3 + %s283]]
      %s287 = ssub.f32 %s285, %s286
      %s288 = scalar_select %p284, %s287, 0.0
      %p289 = scmp.gt.f32.partialorder %s288, 0.0
      %s290 = smul.f32 %s288, 0.05
      %s291 = scalar_select %p289, %s290, 0.0
      %p292 = scmp.gt.f32.partialorder %s291, 0.0
      // Predicated region
      $region85: #{ode_rnn_encoder.1} parent=81 // pred_check
        %p293 = pneg %p292
      $region86: #{ode_rnn_encoder.1} parent=81 // pred_check_branch
        %295 = sbr.rel (%p293) target = $region88
      $region87: #{ode_rnn_encoder.1} parent=81 // pred_region
        %v296 = vld [vmem:[#allocation2] sm:$0x3]
        %v297 = vld [vmem:[%s8] sm:$0xff]
        %v298 = vld [vmem:[%s8 + $0x8] sm:$0xff]
        %v299 = vld [vmem:[%s8 + $0x10] sm:$0xff]
        %v300 = vld [vmem:[%s8 + $0x18] sm:$0xff]
        %v301 = vld [vmem:[%s9] sm:$0x1]
        %v303 = vlaneseq
        %v304 = vshrl.u32 %v303, 7
        %v305 = vsub.s32 0, %v304
        %v306 = vrot.slane %v301, %v305
        %v309 = vsel %vm207, %v296, 0
        %311 = vmatprep.subr.mxu0 0.0
        %312 = vmatpush1.msra.mxu0 0.0
        %313 = vmatprep.subr.mxu0 0.0
        %314 = vmatpush1.msra.mxu0 0.0
        %315 = vmatprep.subr.mxu0 0.0
        %316 = vmatpush1.msra.mxu0 0.0
        %317 = vmatprep.subr.mxu0 0.0
        %318 = vmatpush1.msra.mxu0 0.0
        %319 = vmatprep.subr.mxu0 0.0
        %320 = vmatpush1.msra.mxu0 0.0
        %321 = vmatprep.subr.mxu0 0.0
        %322 = vmatpush1.msra.mxu0 0.0
        %323 = vmatprep.subr.mxu0 0.0
        %324 = vmatpush1.msra.mxu0 0.0
        %325 = vmatprep.subr.mxu0 0.0
        %326 = vmatpush1.msra.mxu0 0.0
        %327 = vmatprep.subr.mxu0 0.0
        %328 = vmatpush1.msra.mxu0 0.0
        %329 = vmatprep.subr.mxu0 0.0
        %330 = vmatpush1.msra.mxu0 0.0
        %331 = vmatprep.subr.mxu0 0.0
        %332 = vmatpush1.msra.mxu0 0.0
        %333 = vmatprep.subr.mxu0 0.0
        %334 = vmatpush1.msra.mxu0 0.0
        %335 = vmatprep.subr.mxu0 0.0
        %336 = vmatpush1.msra.mxu0 %v300
        %337 = vmatprep.subr.mxu0 0.0
        %338 = vmatpush1.msra.mxu0 %v299
        %339 = vmatprep.subr.mxu0 0.0
        %340 = vmatpush1.msra.mxu0 %v298
        %341 = vmatprep.subr.mxu0 0.0
        %342 = vmatpush1.msra.mxu0 %v297
        %343 = vmatprep.subr.mxu0 0.0
        %344 = vmatpush2.msra.mxu0 0.0
        %345 = vmatprep.subr.mxu0 0.0
        %346 = vmatpush2.msra.mxu0 0.0
        %347 = vmatprep.subr.mxu0 0.0
        %348 = vmatpush2.msra.mxu0 0.0
        %349 = vmatprep.subr.mxu0 0.0
        %350 = vmatpush2.msra.mxu0 0.0
        %351 = vmatprep.subr.mxu0 0.0
        %352 = vmatpush2.msra.mxu0 0.0
        %353 = vmatprep.subr.mxu0 0.0
        %354 = vmatpush2.msra.mxu0 0.0
        %355 = vmatprep.subr.mxu0 0.0
        %356 = vmatpush2.msra.mxu0 0.0
        %357 = vmatprep.subr.mxu0 0.0
        %358 = vmatpush2.msra.mxu0 0.0
        %359 = vmatprep.subr.mxu0 0.0
        %360 = vmatpush2.msra.mxu0 0.0
        %361 = vmatprep.subr.mxu0 0.0
        %362 = vmatpush2.msra.mxu0 0.0
        %363 = vmatprep.subr.mxu0 0.0
        %364 = vmatpush2.msra.mxu0 0.0
        %365 = vmatprep.subr.mxu0 0.0
        %366 = vmatpush2.msra.mxu0 0.0
        %367 = vmatprep.subr.mxu0 0.0
        %368 = vmatpush2.msra.mxu0 0.0
        %369 = vmatprep.subr.mxu0 0.0
        %370 = vmatpush2.msra.mxu0 0.0
        %371 = vmatprep.subr.mxu0 0.0
        %372 = vmatpush2.msra.mxu0 0.0
        %373 = vmatprep.subr.mxu0 0.0
        %374 = vmatpush2.msra.mxu0 0.0
        %375 = vmatprep.mubr.f32.mxu0 0.0
        %376 = vmatmul.mubr.f32.gmra.mxu0 %v309
        %v377 = vpop.f32.mrf.mxu0
        %v378 = vadd.f32 %v306, %v377
        %v379 = vpop.f32.mrf.mxu0
        %380 = vdwg.mxu0
        %s381 = smul.f32 %s291, 0.16666667
        %v382 = vstv %s291
        %v383 = vmul.f32 %v382, %v98
        %s384 = smul.f32 %s291, 0.5
        %v385 = vstv %s384
        %v386 = vstv %s381
        %v387 = vmax.f32 %v378, 0.0
        %v389 = vlaneseq
        %v390 = vshrl.u32 %v389, 7
        %v391 = vsub.s32 0, %v390
        %v392 = vrot.slane %v98, %v391
        %vm394 = vcmask 523264
        %v396 = vsel %vm394, %v387, 0
        %398 = vmatprep.subr.mxu0 0.0
        %399 = vmatpush1.msra.mxu0 0.0
        %400 = vmatprep.subr.mxu0 0.0
        %401 = vmatpush1.msra.mxu0 0.0
        %402 = vmatprep.subr.mxu0 0.0
        %403 = vmatpush1.msra.mxu0 0.0
        %404 = vmatprep.subr.mxu0 0.0
        %405 = vmatpush1.msra.mxu0 0.0
        %406 = vmatprep.subr.mxu0 0.0
        %407 = vmatpush1.msra.mxu0 0.0
        %408 = vmatprep.subr.mxu0 0.0
        %409 = vmatpush1.msra.mxu0 0.0
        %410 = vmatprep.subr.mxu0 0.0
        %411 = vmatpush1.msra.mxu0 0.0
        %412 = vmatprep.subr.mxu0 0.0
        %413 = vmatpush1.msra.mxu0 0.0
        %414 = vmatprep.subr.mxu0 0.0
        %415 = vmatpush1.msra.mxu0 %v97
        %416 = vmatprep.subr.mxu0 0.0
        %417 = vmatpush1.msra.mxu0 %v96
        %418 = vmatprep.subr.mxu0 0.0
        %419 = vmatpush1.msra.mxu0 %v95
        %420 = vmatprep.subr.mxu0 0.0
        %421 = vmatpush1.msra.mxu0 %v94
        %422 = vmatprep.subr.mxu0 0.0
        %423 = vmatpush1.msra.mxu0 %v93
        %424 = vmatprep.subr.mxu0 0.0
        %425 = vmatpush1.msra.mxu0 %v92
        %426 = vmatprep.subr.mxu0 0.0
        %427 = vmatpush1.msra.mxu0 %v91
        %428 = vmatprep.subr.mxu0 0.0
        %429 = vmatpush1.msra.mxu0 %v90
        %430 = vmatprep.subr.mxu0 0.0
        %431 = vmatpush2.msra.mxu0 0.0
        %432 = vmatprep.subr.mxu0 0.0
        %433 = vmatpush2.msra.mxu0 0.0
        %434 = vmatprep.subr.mxu0 0.0
        %435 = vmatpush2.msra.mxu0 0.0
        %436 = vmatprep.subr.mxu0 0.0
        %437 = vmatpush2.msra.mxu0 0.0
        %438 = vmatprep.subr.mxu0 0.0
        %439 = vmatpush2.msra.mxu0 0.0
        %440 = vmatprep.subr.mxu0 0.0
        %441 = vmatpush2.msra.mxu0 0.0
        %442 = vmatprep.subr.mxu0 0.0
        %443 = vmatpush2.msra.mxu0 0.0
        %444 = vmatprep.subr.mxu0 0.0
        %445 = vmatpush2.msra.mxu0 0.0
        %446 = vmatprep.subr.mxu0 0.0
        %447 = vmatpush2.msra.mxu0 0.0
        %448 = vmatprep.subr.mxu0 0.0
        %449 = vmatpush2.msra.mxu0 0.0
        %450 = vmatprep.subr.mxu0 0.0
        %451 = vmatpush2.msra.mxu0 0.0
        %452 = vmatprep.subr.mxu0 0.0
        %453 = vmatpush2.msra.mxu0 0.0
        %454 = vmatprep.subr.mxu0 0.0
        %455 = vmatpush2.msra.mxu0 0.0
        %456 = vmatprep.subr.mxu0 0.0
        %457 = vmatpush2.msra.mxu0 0.0
        %458 = vmatprep.subr.mxu0 0.0
        %459 = vmatpush2.msra.mxu0 0.0
        %460 = vmatprep.subr.mxu0 0.0
        %461 = vmatpush2.msra.mxu0 0.0
        %462 = vmatprep.mubr.f32.mxu0 0.0
        %463 = vmatmul.mubr.f32.gmra.mxu0 %v396
        %v464 = vpop.f32.mrf.mxu0
        %v465 = vadd.f32 %v392, %v464
        %v466 = vpop.f32.mrf.mxu0
        %467 = vdwg.mxu0
        %v468 = vmul.f32 %v385, %v465
        %v469 = vadd.f32 %v378, %v468
        %v470 = vmax.f32 %v469, 0.0
        %v472 = vsel %vm394, %v470, 0
        %474 = vmatprep.subr.mxu0 0.0
        %475 = vmatpush1.msra.mxu0 0.0
        %476 = vmatprep.subr.mxu0 0.0
        %477 = vmatpush1.msra.mxu0 0.0
        %478 = vmatprep.subr.mxu0 0.0
        %479 = vmatpush1.msra.mxu0 0.0
        %480 = vmatprep.subr.mxu0 0.0
        %481 = vmatpush1.msra.mxu0 0.0
        %482 = vmatprep.subr.mxu0 0.0
        %483 = vmatpush1.msra.mxu0 0.0
        %484 = vmatprep.subr.mxu0 0.0
        %485 = vmatpush1.msra.mxu0 0.0
        %486 = vmatprep.subr.mxu0 0.0
        %487 = vmatpush1.msra.mxu0 0.0
        %488 = vmatprep.subr.mxu0 0.0
        %489 = vmatpush1.msra.mxu0 0.0
        %490 = vmatprep.subr.mxu0 0.0
        %491 = vmatpush1.msra.mxu0 %v97
        %492 = vmatprep.subr.mxu0 0.0
        %493 = vmatpush1.msra.mxu0 %v96
        %494 = vmatprep.subr.mxu0 0.0
        %495 = vmatpush1.msra.mxu0 %v95
        %496 = vmatprep.subr.mxu0 0.0
        %497 = vmatpush1.msra.mxu0 %v94
        %498 = vmatprep.subr.mxu0 0.0
        %499 = vmatpush1.msra.mxu0 %v93
        %500 = vmatprep.subr.mxu0 0.0
        %501 = vmatpush1.msra.mxu0 %v92
        %502 = vmatprep.subr.mxu0 0.0
        %503 = vmatpush1.msra.mxu0 %v91
        %504 = vmatprep.subr.mxu0 0.0
        %505 = vmatpush1.msra.mxu0 %v90
        %506 = vmatprep.subr.mxu0 0.0
        %507 = vmatpush2.msra.mxu0 0.0
        %508 = vmatprep.subr.mxu0 0.0
        %509 = vmatpush2.msra.mxu0 0.0
        %510 = vmatprep.subr.mxu0 0.0
        %511 = vmatpush2.msra.mxu0 0.0
        %512 = vmatprep.subr.mxu0 0.0
        %513 = vmatpush2.msra.mxu0 0.0
        %514 = vmatprep.subr.mxu0 0.0
        %515 = vmatpush2.msra.mxu0 0.0
        %516 = vmatprep.subr.mxu0 0.0
        %517 = vmatpush2.msra.mxu0 0.0
        %518 = vmatprep.subr.mxu0 0.0
        %519 = vmatpush2.msra.mxu0 0.0
        %520 = vmatprep.subr.mxu0 0.0
        %521 = vmatpush2.msra.mxu0 0.0
        %522 = vmatprep.subr.mxu0 0.0
        %523 = vmatpush2.msra.mxu0 0.0
        %524 = vmatprep.subr.mxu0 0.0
        %525 = vmatpush2.msra.mxu0 0.0
        %526 = vmatprep.subr.mxu0 0.0
        %527 = vmatpush2.msra.mxu0 0.0
        %528 = vmatprep.subr.mxu0 0.0
        %529 = vmatpush2.msra.mxu0 0.0
        %530 = vmatprep.subr.mxu0 0.0
        %531 = vmatpush2.msra.mxu0 0.0
        %532 = vmatprep.subr.mxu0 0.0
        %533 = vmatpush2.msra.mxu0 0.0
        %534 = vmatprep.subr.mxu0 0.0
        %535 = vmatpush2.msra.mxu0 0.0
        %536 = vmatprep.subr.mxu0 0.0
        %537 = vmatpush2.msra.mxu0 0.0
        %538 = vmatprep.mubr.f32.mxu0 0.0
        %539 = vmatmul.mubr.f32.gmra.mxu0 %v472
        %v540 = vpop.f32.mrf.mxu0
        %v541 = vadd.f32 %v392, %v540
        %v542 = vpop.f32.mrf.mxu0
        %543 = vdwg.mxu0
        %v544 = vmul.f32 %v385, %v541
        %v545 = vadd.f32 %v378, %v544
        %v546 = vmax.f32 %v545, 0.0
        %v548 = vsel %vm394, %v546, 0
        %550 = vmatprep.subr.mxu0 0.0
        %551 = vmatpush1.msra.mxu0 0.0
        %552 = vmatprep.subr.mxu0 0.0
        %553 = vmatpush1.msra.mxu0 0.0
        %554 = vmatprep.subr.mxu0 0.0
        %555 = vmatpush1.msra.mxu0 0.0
        %556 = vmatprep.subr.mxu0 0.0
        %557 = vmatpush1.msra.mxu0 0.0
        %558 = vmatprep.subr.mxu0 0.0
        %559 = vmatpush1.msra.mxu0 0.0
        %560 = vmatprep.subr.mxu0 0.0
        %561 = vmatpush1.msra.mxu0 0.0
        %562 = vmatprep.subr.mxu0 0.0
        %563 = vmatpush1.msra.mxu0 0.0
        %564 = vmatprep.subr.mxu0 0.0
        %565 = vmatpush1.msra.mxu0 0.0
        %566 = vmatprep.subr.mxu0 0.0
        %567 = vmatpush1.msra.mxu0 %v97
        %568 = vmatprep.subr.mxu0 0.0
        %569 = vmatpush1.msra.mxu0 %v96
        %570 = vmatprep.subr.mxu0 0.0
        %571 = vmatpush1.msra.mxu0 %v95
        %572 = vmatprep.subr.mxu0 0.0
        %573 = vmatpush1.msra.mxu0 %v94
        %574 = vmatprep.subr.mxu0 0.0
        %575 = vmatpush1.msra.mxu0 %v93
        %576 = vmatprep.subr.mxu0 0.0
        %577 = vmatpush1.msra.mxu0 %v92
        %578 = vmatprep.subr.mxu0 0.0
        %579 = vmatpush1.msra.mxu0 %v91
        %580 = vmatprep.subr.mxu0 0.0
        %581 = vmatpush1.msra.mxu0 %v90
        %582 = vmatprep.subr.mxu0 0.0
        %583 = vmatpush2.msra.mxu0 0.0
        %584 = vmatprep.subr.mxu0 0.0
        %585 = vmatpush2.msra.mxu0 0.0
        %586 = vmatprep.subr.mxu0 0.0
        %587 = vmatpush2.msra.mxu0 0.0
        %588 = vmatprep.subr.mxu0 0.0
        %589 = vmatpush2.msra.mxu0 0.0
        %590 = vmatprep.subr.mxu0 0.0
        %591 = vmatpush2.msra.mxu0 0.0
        %592 = vmatprep.subr.mxu0 0.0
        %593 = vmatpush2.msra.mxu0 0.0
        %594 = vmatprep.subr.mxu0 0.0
        %595 = vmatpush2.msra.mxu0 0.0
        %596 = vmatprep.subr.mxu0 0.0
        %597 = vmatpush2.msra.mxu0 0.0
        %598 = vmatprep.subr.mxu0 0.0
        %599 = vmatpush2.msra.mxu0 0.0
        %600 = vmatprep.subr.mxu0 0.0
        %601 = vmatpush2.msra.mxu0 0.0
        %602 = vmatprep.subr.mxu0 0.0
        %603 = vmatpush2.msra.mxu0 0.0
        %604 = vmatprep.subr.mxu0 0.0
        %605 = vmatpush2.msra.mxu0 0.0
        %606 = vmatprep.subr.mxu0 0.0
        %607 = vmatpush2.msra.mxu0 0.0
        %608 = vmatprep.subr.mxu0 0.0
        %609 = vmatpush2.msra.mxu0 0.0
        %610 = vmatprep.subr.mxu0 0.0
        %611 = vmatpush2.msra.mxu0 0.0
        %612 = vmatprep.subr.mxu0 0.0
        %613 = vmatpush2.msra.mxu0 0.0
        %614 = vmatprep.mubr.f32.mxu0 0.0
        %615 = vmatmul.mubr.f32.gmra.mxu0 %v548
        %v616 = vpop.f32.mrf.mxu0
        %v617 = vadd.f32 %v392, %v616
        %v618 = vpop.f32.mrf.mxu0
        %619 = vdwg.mxu0
        %v620 = vmul.f32 %v382, %v617
        %v621 = vadd.f32 %v378, %v620
        %v622 = vmax.f32 %v621, 0.0
        %v623 = vadd.f32 %v470, %v546
        %v624 = vmul.f32 %v623, 2.0
        %v625 = vadd.f32 %v387, %v624
        %v626 = vadd.f32 %v625, %v622
        %v628 = vsel %vm394, %v626, 0
        %630 = vmatprep.subr.mxu0 0.0
        %631 = vmatpush1.msra.mxu0 0.0
        %632 = vmatprep.subr.mxu0 0.0
        %633 = vmatpush1.msra.mxu0 0.0
        %634 = vmatprep.subr.mxu0 0.0
        %635 = vmatpush1.msra.mxu0 0.0
        %636 = vmatprep.subr.mxu0 0.0
        %637 = vmatpush1.msra.mxu0 0.0
        %638 = vmatprep.subr.mxu0 0.0
        %639 = vmatpush1.msra.mxu0 0.0
        %640 = vmatprep.subr.mxu0 0.0
        %641 = vmatpush1.msra.mxu0 0.0
        %642 = vmatprep.subr.mxu0 0.0
        %643 = vmatpush1.msra.mxu0 0.0
        %644 = vmatprep.subr.mxu0 0.0
        %645 = vmatpush1.msra.mxu0 0.0
        %646 = vmatprep.subr.mxu0 0.0
        %647 = vmatpush1.msra.mxu0 %v97
        %648 = vmatprep.subr.mxu0 0.0
        %649 = vmatpush1.msra.mxu0 %v96
        %650 = vmatprep.subr.mxu0 0.0
        %651 = vmatpush1.msra.mxu0 %v95
        %652 = vmatprep.subr.mxu0 0.0
        %653 = vmatpush1.msra.mxu0 %v94
        %654 = vmatprep.subr.mxu0 0.0
        %655 = vmatpush1.msra.mxu0 %v93
        %656 = vmatprep.subr.mxu0 0.0
        %657 = vmatpush1.msra.mxu0 %v92
        %658 = vmatprep.subr.mxu0 0.0
        %659 = vmatpush1.msra.mxu0 %v91
        %660 = vmatprep.subr.mxu0 0.0
        %661 = vmatpush1.msra.mxu0 %v90
        %662 = vmatprep.subr.mxu0 0.0
        %663 = vmatpush2.msra.mxu0 0.0
        %664 = vmatprep.subr.mxu0 0.0
        %665 = vmatpush2.msra.mxu0 0.0
        %666 = vmatprep.subr.mxu0 0.0
        %667 = vmatpush2.msra.mxu0 0.0
        %668 = vmatprep.subr.mxu0 0.0
        %669 = vmatpush2.msra.mxu0 0.0
        %670 = vmatprep.subr.mxu0 0.0
        %671 = vmatpush2.msra.mxu0 0.0
        %672 = vmatprep.subr.mxu0 0.0
        %673 = vmatpush2.msra.mxu0 0.0
        %674 = vmatprep.subr.mxu0 0.0
        %675 = vmatpush2.msra.mxu0 0.0
        %676 = vmatprep.subr.mxu0 0.0
        %677 = vmatpush2.msra.mxu0 0.0
        %678 = vmatprep.subr.mxu0 0.0
        %679 = vmatpush2.msra.mxu0 0.0
        %680 = vmatprep.subr.mxu0 0.0
        %681 = vmatpush2.msra.mxu0 0.0
        %682 = vmatprep.subr.mxu0 0.0
        %683 = vmatpush2.msra.mxu0 0.0
        %684 = vmatprep.subr.mxu0 0.0
        %685 = vmatpush2.msra.mxu0 0.0
        %686 = vmatprep.subr.mxu0 0.0
        %687 = vmatpush2.msra.mxu0 0.0
        %688 = vmatprep.subr.mxu0 0.0
        %689 = vmatpush2.msra.mxu0 0.0
        %690 = vmatprep.subr.mxu0 0.0
        %691 = vmatpush2.msra.mxu0 0.0
        %692 = vmatprep.subr.mxu0 0.0
        %693 = vmatpush2.msra.mxu0 0.0
        %694 = vmatprep.mubr.f32.mxu0 0.0
        %695 = vmatmul.mubr.f32.gmra.mxu0 %v628
        %v696 = vpop.f32.mrf.mxu0
        %v697 = vadd.f32 0.0, %v696
        %v698 = vpop.f32.mrf.mxu0
        %699 = vdwg.mxu0
        %v700 = vmul.f32 %v386, %v697
        %v701 = vadd.f32 %v378, %v700
        %v703 = vlaneseq
        %v704 = vshrl.u32 %v703, 7
        %v705 = vsub.s32 0, %v704
        %v706 = vrot.slane %v383, %v705
        %v708 = vadd.f32 %v701, %v706
        %v709 = vadd.f32 %v626, 0.0
        %v710 = vmax.f32 %v708, 0.0
        %v712 = vsel %vm394, %v710, 0
        %714 = vmatprep.subr.mxu0 0.0
        %715 = vmatpush1.msra.mxu0 0.0
        %716 = vmatprep.subr.mxu0 0.0
        %717 = vmatpush1.msra.mxu0 0.0
        %718 = vmatprep.subr.mxu0 0.0
        %719 = vmatpush1.msra.mxu0 0.0
        %720 = vmatprep.subr.mxu0 0.0
        %721 = vmatpush1.msra.mxu0 0.0
        %722 = vmatprep.subr.mxu0 0.0
        %723 = vmatpush1.msra.mxu0 0.0
        %724 = vmatprep.subr.mxu0 0.0
        %725 = vmatpush1.msra.mxu0 0.0
        %726 = vmatprep.subr.mxu0 0.0
        %727 = vmatpush1.msra.mxu0 0.0
        %728 = vmatprep.subr.mxu0 0.0
        %729 = vmatpush1.msra.mxu0 0.0
        %730 = vmatprep.subr.mxu0 0.0
        %731 = vmatpush1.msra.mxu0 %v97
        %732 = vmatprep.subr.mxu0 0.0
        %733 = vmatpush1.msra.mxu0 %v96
        %734 = vmatprep.subr.mxu0 0.0
        %735 = vmatpush1.msra.mxu0 %v95
        %736 = vmatprep.subr.mxu0 0.0
        %737 = vmatpush1.msra.mxu0 %v94
        %738 = vmatprep.subr.mxu0 0.0
        %739 = vmatpush1.msra.mxu0 %v93
        %740 = vmatprep.subr.mxu0 0.0
        %741 = vmatpush1.msra.mxu0 %v92
        %742 = vmatprep.subr.mxu0 0.0
        %743 = vmatpush1.msra.mxu0 %v91
        %744 = vmatprep.subr.mxu0 0.0
        %745 = vmatpush1.msra.mxu0 %v90
        %746 = vmatprep.subr.mxu0 0.0
        %747 = vmatpush2.msra.mxu0 0.0
        %748 = vmatprep.subr.mxu0 0.0
        %749 = vmatpush2.msra.mxu0 0.0
        %750 = vmatprep.subr.mxu0 0.0
        %751 = vmatpush2.msra.mxu0 0.0
        %752 = vmatprep.subr.mxu0 0.0
        %753 = vmatpush2.msra.mxu0 0.0
        %754 = vmatprep.subr.mxu0 0.0
        %755 = vmatpush2.msra.mxu0 0.0
        %756 = vmatprep.subr.mxu0 0.0
        %757 = vmatpush2.msra.mxu0 0.0
        %758 = vmatprep.subr.mxu0 0.0
        %759 = vmatpush2.msra.mxu0 0.0
        %760 = vmatprep.subr.mxu0 0.0
        %761 = vmatpush2.msra.mxu0 0.0
        %762 = vmatprep.subr.mxu0 0.0
        %763 = vmatpush2.msra.mxu0 0.0
        %764 = vmatprep.subr.mxu0 0.0
        %765 = vmatpush2.msra.mxu0 0.0
        %766 = vmatprep.subr.mxu0 0.0
        %767 = vmatpush2.msra.mxu0 0.0
        %768 = vmatprep.subr.mxu0 0.0
        %769 = vmatpush2.msra.mxu0 0.0
        %770 = vmatprep.subr.mxu0 0.0
        %771 = vmatpush2.msra.mxu0 0.0
        %772 = vmatprep.subr.mxu0 0.0
        %773 = vmatpush2.msra.mxu0 0.0
        %774 = vmatprep.subr.mxu0 0.0
        %775 = vmatpush2.msra.mxu0 0.0
        %776 = vmatprep.subr.mxu0 0.0
        %777 = vmatpush2.msra.mxu0 0.0
        %778 = vmatprep.mubr.f32.mxu0 0.0
        %779 = vmatmul.mubr.f32.gmra.mxu0 %v712
        %v780 = vpop.f32.mrf.mxu0
        %v781 = vadd.f32 %v392, %v780
        %v782 = vpop.f32.mrf.mxu0
        %783 = vdwg.mxu0
        %v784 = vmul.f32 %v385, %v781
        %v785 = vadd.f32 %v708, %v784
        %v786 = vmax.f32 %v785, 0.0
        %v788 = vsel %vm394, %v786, 0
        %790 = vmatprep.subr.mxu0 0.0
        %791 = vmatpush1.msra.mxu0 0.0
        %792 = vmatprep.subr.mxu0 0.0
        %793 = vmatpush1.msra.mxu0 0.0
        %794 = vmatprep.subr.mxu0 0.0
        %795 = vmatpush1.msra.mxu0 0.0
        %796 = vmatprep.subr.mxu0 0.0
        %797 = vmatpush1.msra.mxu0 0.0
        %798 = vmatprep.subr.mxu0 0.0
        %799 = vmatpush1.msra.mxu0 0.0
        %800 = vmatprep.subr.mxu0 0.0
        %801 = vmatpush1.msra.mxu0 0.0
        %802 = vmatprep.subr.mxu0 0.0
        %803 = vmatpush1.msra.mxu0 0.0
        %804 = vmatprep.subr.mxu0 0.0
        %805 = vmatpush1.msra.mxu0 0.0
        %806 = vmatprep.subr.mxu0 0.0
        %807 = vmatpush1.msra.mxu0 %v97
        %808 = vmatprep.subr.mxu0 0.0
        %809 = vmatpush1.msra.mxu0 %v96
        %810 = vmatprep.subr.mxu0 0.0
        %811 = vmatpush1.msra.mxu0 %v95
        %812 = vmatprep.subr.mxu0 0.0
        %813 = vmatpush1.msra.mxu0 %v94
        %814 = vmatprep.subr.mxu0 0.0
        %815 = vmatpush1.msra.mxu0 %v93
        %816 = vmatprep.subr.mxu0 0.0
        %817 = vmatpush1.msra.mxu0 %v92
        %818 = vmatprep.subr.mxu0 0.0
        %819 = vmatpush1.msra.mxu0 %v91
        %820 = vmatprep.subr.mxu0 0.0
        %821 = vmatpush1.msra.mxu0 %v90
        %822 = vmatprep.subr.mxu0 0.0
        %823 = vmatpush2.msra.mxu0 0.0
        %824 = vmatprep.subr.mxu0 0.0
        %825 = vmatpush2.msra.mxu0 0.0
        %826 = vmatprep.subr.mxu0 0.0
        %827 = vmatpush2.msra.mxu0 0.0
        %828 = vmatprep.subr.mxu0 0.0
        %829 = vmatpush2.msra.mxu0 0.0
        %830 = vmatprep.subr.mxu0 0.0
        %831 = vmatpush2.msra.mxu0 0.0
        %832 = vmatprep.subr.mxu0 0.0
        %833 = vmatpush2.msra.mxu0 0.0
        %834 = vmatprep.subr.mxu0 0.0
        %835 = vmatpush2.msra.mxu0 0.0
        %836 = vmatprep.subr.mxu0 0.0
        %837 = vmatpush2.msra.mxu0 0.0
        %838 = vmatprep.subr.mxu0 0.0
        %839 = vmatpush2.msra.mxu0 0.0
        %840 = vmatprep.subr.mxu0 0.0
        %841 = vmatpush2.msra.mxu0 0.0
        %842 = vmatprep.subr.mxu0 0.0
        %843 = vmatpush2.msra.mxu0 0.0
        %844 = vmatprep.subr.mxu0 0.0
        %845 = vmatpush2.msra.mxu0 0.0
        %846 = vmatprep.subr.mxu0 0.0
        %847 = vmatpush2.msra.mxu0 0.0
        %848 = vmatprep.subr.mxu0 0.0
        %849 = vmatpush2.msra.mxu0 0.0
        %850 = vmatprep.subr.mxu0 0.0
        %851 = vmatpush2.msra.mxu0 0.0
        %852 = vmatprep.subr.mxu0 0.0
        %853 = vmatpush2.msra.mxu0 0.0
        %854 = vmatprep.mubr.f32.mxu0 0.0
        %855 = vmatmul.mubr.f32.gmra.mxu0 %v788
        %v856 = vpop.f32.mrf.mxu0
        %v857 = vadd.f32 %v392, %v856
        %v858 = vpop.f32.mrf.mxu0
        %859 = vdwg.mxu0
        %v860 = vmul.f32 %v385, %v857
        %v861 = vadd.f32 %v708, %v860
        %v862 = vmax.f32 %v861, 0.0
        %v864 = vsel %vm394, %v862, 0
        %866 = vmatprep.subr.mxu0 0.0
        %867 = vmatpush1.msra.mxu0 0.0
        %868 = vmatprep.subr.mxu0 0.0
        %869 = vmatpush1.msra.mxu0 0.0
        %870 = vmatprep.subr.mxu0 0.0
        %871 = vmatpush1.msra.mxu0 0.0
        %872 = vmatprep.subr.mxu0 0.0
        %873 = vmatpush1.msra.mxu0 0.0
        %874 = vmatprep.subr.mxu0 0.0
        %875 = vmatpush1.msra.mxu0 0.0
        %876 = vmatprep.subr.mxu0 0.0
        %877 = vmatpush1.msra.mxu0 0.0
        %878 = vmatprep.subr.mxu0 0.0
        %879 = vmatpush1.msra.mxu0 0.0
        %880 = vmatprep.subr.mxu0 0.0
        %881 = vmatpush1.msra.mxu0 0.0
        %882 = vmatprep.subr.mxu0 0.0
        %883 = vmatpush1.msra.mxu0 %v97
        %884 = vmatprep.subr.mxu0 0.0
        %885 = vmatpush1.msra.mxu0 %v96
        %886 = vmatprep.subr.mxu0 0.0
        %887 = vmatpush1.msra.mxu0 %v95
        %888 = vmatprep.subr.mxu0 0.0
        %889 = vmatpush1.msra.mxu0 %v94
        %890 = vmatprep.subr.mxu0 0.0
        %891 = vmatpush1.msra.mxu0 %v93
        %892 = vmatprep.subr.mxu0 0.0
        %893 = vmatpush1.msra.mxu0 %v92
        %894 = vmatprep.subr.mxu0 0.0
        %895 = vmatpush1.msra.mxu0 %v91
        %896 = vmatprep.subr.mxu0 0.0
        %897 = vmatpush1.msra.mxu0 %v90
        %898 = vmatprep.subr.mxu0 0.0
        %899 = vmatpush2.msra.mxu0 0.0
        %900 = vmatprep.subr.mxu0 0.0
        %901 = vmatpush2.msra.mxu0 0.0
        %902 = vmatprep.subr.mxu0 0.0
        %903 = vmatpush2.msra.mxu0 0.0
        %904 = vmatprep.subr.mxu0 0.0
        %905 = vmatpush2.msra.mxu0 0.0
        %906 = vmatprep.subr.mxu0 0.0
        %907 = vmatpush2.msra.mxu0 0.0
        %908 = vmatprep.subr.mxu0 0.0
        %909 = vmatpush2.msra.mxu0 0.0
        %910 = vmatprep.subr.mxu0 0.0
        %911 = vmatpush2.msra.mxu0 0.0
        %912 = vmatprep.subr.mxu0 0.0
        %913 = vmatpush2.msra.mxu0 0.0
        %914 = vmatprep.subr.mxu0 0.0
        %915 = vmatpush2.msra.mxu0 0.0
        %916 = vmatprep.subr.mxu0 0.0
        %917 = vmatpush2.msra.mxu0 0.0
        %918 = vmatprep.subr.mxu0 0.0
        %919 = vmatpush2.msra.mxu0 0.0
        %920 = vmatprep.subr.mxu0 0.0
        %921 = vmatpush2.msra.mxu0 0.0
        %922 = vmatprep.subr.mxu0 0.0
        %923 = vmatpush2.msra.mxu0 0.0
        %924 = vmatprep.subr.mxu0 0.0
        %925 = vmatpush2.msra.mxu0 0.0
        %926 = vmatprep.subr.mxu0 0.0
        %927 = vmatpush2.msra.mxu0 0.0
        %928 = vmatprep.subr.mxu0 0.0
        %929 = vmatpush2.msra.mxu0 0.0
        %930 = vmatprep.mubr.f32.mxu0 0.0
        %931 = vmatmul.mubr.f32.gmra.mxu0 %v864
        %v932 = vpop.f32.mrf.mxu0
        %v933 = vadd.f32 %v392, %v932
        %v934 = vpop.f32.mrf.mxu0
        %935 = vdwg.mxu0
        %v936 = vmul.f32 %v382, %v933
        %v937 = vadd.f32 %v708, %v936
        %v938 = vmax.f32 %v937, 0.0
        %v939 = vadd.f32 %v786, %v862
        %v940 = vmul.f32 %v939, 2.0
        %v941 = vadd.f32 %v710, %v940
        %v942 = vadd.f32 %v941, %v938
        %v944 = vsel %vm394, %v942, 0
        %946 = vmatprep.subr.mxu0 0.0
        %947 = vmatpush1.msra.mxu0 0.0
        %948 = vmatprep.subr.mxu0 0.0
        %949 = vmatpush1.msra.mxu0 0.0
        %950 = vmatprep.subr.mxu0 0.0
        %951 = vmatpush1.msra.mxu0 0.0
        %952 = vmatprep.subr.mxu0 0.0
        %953 = vmatpush1.msra.mxu0 0.0
        %954 = vmatprep.subr.mxu0 0.0
        %955 = vmatpush1.msra.mxu0 0.0
        %956 = vmatprep.subr.mxu0 0.0
        %957 = vmatpush1.msra.mxu0 0.0
        %958 = vmatprep.subr.mxu0 0.0
        %959 = vmatpush1.msra.mxu0 0.0
        %960 = vmatprep.subr.mxu0 0.0
        %961 = vmatpush1.msra.mxu0 0.0
        %962 = vmatprep.subr.mxu0 0.0
        %963 = vmatpush1.msra.mxu0 %v97
        %964 = vmatprep.subr.mxu0 0.0
        %965 = vmatpush1.msra.mxu0 %v96
        %966 = vmatprep.subr.mxu0 0.0
        %967 = vmatpush1.msra.mxu0 %v95
        %968 = vmatprep.subr.mxu0 0.0
        %969 = vmatpush1.msra.mxu0 %v94
        %970 = vmatprep.subr.mxu0 0.0
        %971 = vmatpush1.msra.mxu0 %v93
        %972 = vmatprep.subr.mxu0 0.0
        %973 = vmatpush1.msra.mxu0 %v92
        %974 = vmatprep.subr.mxu0 0.0
        %975 = vmatpush1.msra.mxu0 %v91
        %976 = vmatprep.subr.mxu0 0.0
        %977 = vmatpush1.msra.mxu0 %v90
        %978 = vmatprep.subr.mxu0 0.0
        %979 = vmatpush2.msra.mxu0 0.0
        %980 = vmatprep.subr.mxu0 0.0
        %981 = vmatpush2.msra.mxu0 0.0
        %982 = vmatprep.subr.mxu0 0.0
        %983 = vmatpush2.msra.mxu0 0.0
        %984 = vmatprep.subr.mxu0 0.0
        %985 = vmatpush2.msra.mxu0 0.0
        %986 = vmatprep.subr.mxu0 0.0
        %987 = vmatpush2.msra.mxu0 0.0
        %988 = vmatprep.subr.mxu0 0.0
        %989 = vmatpush2.msra.mxu0 0.0
        %990 = vmatprep.subr.mxu0 0.0
        %991 = vmatpush2.msra.mxu0 0.0
        %992 = vmatprep.subr.mxu0 0.0
        %993 = vmatpush2.msra.mxu0 0.0
        %994 = vmatprep.subr.mxu0 0.0
        %995 = vmatpush2.msra.mxu0 0.0
        %996 = vmatprep.subr.mxu0 0.0
        %997 = vmatpush2.msra.mxu0 0.0
        %998 = vmatprep.subr.mxu0 0.0
        %999 = vmatpush2.msra.mxu0 0.0
        %1000 = vmatprep.subr.mxu0 0.0
        %1001 = vmatpush2.msra.mxu0 0.0
        %1002 = vmatprep.subr.mxu0 0.0
        %1003 = vmatpush2.msra.mxu0 0.0
        %1004 = vmatprep.subr.mxu0 0.0
        %1005 = vmatpush2.msra.mxu0 0.0
        %1006 = vmatprep.subr.mxu0 0.0
        %1007 = vmatpush2.msra.mxu0 0.0
        %1008 = vmatprep.subr.mxu0 0.0
        %1009 = vmatpush2.msra.mxu0 0.0
        %1010 = vmatprep.mubr.f32.mxu0 0.0
        %1011 = vmatmul.mubr.f32.gmra.mxu0 %v944
        %v1012 = vpop.f32.mrf.mxu0
        %v1013 = vadd.f32 0.0, %v1012
        %v1014 = vpop.f32.mrf.mxu0
        %1015 = vdwg.mxu0
        %v1016 = vmul.f32 %v386, %v1013
        %v1017 = vadd.f32 %v708, %v1016
        %v1018 = vadd.f32 %v1017, %v706
        %v1019 = vadd.f32 %v709, %v942
        %v1020 = vmax.f32 %v1018, 0.0
        %v1022 = vsel %vm394, %v1020, 0
        %1024 = vmatprep.subr.mxu0 0.0
        %1025 = vmatpush1.msra.mxu0 0.0
        %1026 = vmatprep.subr.mxu0 0.0
        %1027 = vmatpush1.msra.mxu0 0.0
        %1028 = vmatprep.subr.mxu0 0.0
        %1029 = vmatpush1.msra.mxu0 0.0
        %1030 = vmatprep.subr.mxu0 0.0
        %1031 = vmatpush1.msra.mxu0 0.0
        %1032 = vmatprep.subr.mxu0 0.0
        %1033 = vmatpush1.msra.mxu0 0.0
        %1034 = vmatprep.subr.mxu0 0.0
        %1035 = vmatpush1.msra.mxu0 0.0
        %1036 = vmatprep.subr.mxu0 0.0
        %1037 = vmatpush1.msra.mxu0 0.0
        %1038 = vmatprep.subr.mxu0 0.0
        %1039 = vmatpush1.msra.mxu0 0.0
        %1040 = vmatprep.subr.mxu0 0.0
        %1041 = vmatpush1.msra.mxu0 %v97
        %1042 = vmatprep.subr.mxu0 0.0
        %1043 = vmatpush1.msra.mxu0 %v96
        %1044 = vmatprep.subr.mxu0 0.0
        %1045 = vmatpush1.msra.mxu0 %v95
        %1046 = vmatprep.subr.mxu0 0.0
        %1047 = vmatpush1.msra.mxu0 %v94
        %1048 = vmatprep.subr.mxu0 0.0
        %1049 = vmatpush1.msra.mxu0 %v93
        %1050 = vmatprep.subr.mxu0 0.0
        %1051 = vmatpush1.msra.mxu0 %v92
        %1052 = vmatprep.subr.mxu0 0.0
        %1053 = vmatpush1.msra.mxu0 %v91
        %1054 = vmatprep.subr.mxu0 0.0
        %1055 = vmatpush1.msra.mxu0 %v90
        %1056 = vmatprep.subr.mxu0 0.0
        %1057 = vmatpush2.msra.mxu0 0.0
        %1058 = vmatprep.subr.mxu0 0.0
        %1059 = vmatpush2.msra.mxu0 0.0
        %1060 = vmatprep.subr.mxu0 0.0
        %1061 = vmatpush2.msra.mxu0 0.0
        %1062 = vmatprep.subr.mxu0 0.0
        %1063 = vmatpush2.msra.mxu0 0.0
        %1064 = vmatprep.subr.mxu0 0.0
        %1065 = vmatpush2.msra.mxu0 0.0
        %1066 = vmatprep.subr.mxu0 0.0
        %1067 = vmatpush2.msra.mxu0 0.0
        %1068 = vmatprep.subr.mxu0 0.0
        %1069 = vmatpush2.msra.mxu0 0.0
        %1070 = vmatprep.subr.mxu0 0.0
        %1071 = vmatpush2.msra.mxu0 0.0
        %1072 = vmatprep.subr.mxu0 0.0
        %1073 = vmatpush2.msra.mxu0 0.0
        %1074 = vmatprep.subr.mxu0 0.0
        %1075 = vmatpush2.msra.mxu0 0.0
        %1076 = vmatprep.subr.mxu0 0.0
        %1077 = vmatpush2.msra.mxu0 0.0
        %1078 = vmatprep.subr.mxu0 0.0
        %1079 = vmatpush2.msra.mxu0 0.0
        %1080 = vmatprep.subr.mxu0 0.0
        %1081 = vmatpush2.msra.mxu0 0.0
        %1082 = vmatprep.subr.mxu0 0.0
        %1083 = vmatpush2.msra.mxu0 0.0
        %1084 = vmatprep.subr.mxu0 0.0
        %1085 = vmatpush2.msra.mxu0 0.0
        %1086 = vmatprep.subr.mxu0 0.0
        %1087 = vmatpush2.msra.mxu0 0.0
        %1088 = vmatprep.mubr.f32.mxu0 0.0
        %1089 = vmatmul.mubr.f32.gmra.mxu0 %v1022
        %v1090 = vpop.f32.mrf.mxu0
        %v1091 = vadd.f32 %v392, %v1090
        %v1092 = vpop.f32.mrf.mxu0
        %1093 = vdwg.mxu0
        %v1094 = vmul.f32 %v385, %v1091
        %v1095 = vadd.f32 %v1018, %v1094
        %v1096 = vmax.f32 %v1095, 0.0
        %v1098 = vsel %vm394, %v1096, 0
        %1100 = vmatprep.subr.mxu0 0.0
        %1101 = vmatpush1.msra.mxu0 0.0
        %1102 = vmatprep.subr.mxu0 0.0
        %1103 = vmatpush1.msra.mxu0 0.0
        %1104 = vmatprep.subr.mxu0 0.0
        %1105 = vmatpush1.msra.mxu0 0.0
        %1106 = vmatprep.subr.mxu0 0.0
        %1107 = vmatpush1.msra.mxu0 0.0
        %1108 = vmatprep.subr.mxu0 0.0
        %1109 = vmatpush1.msra.mxu0 0.0
        %1110 = vmatprep.subr.mxu0 0.0
        %1111 = vmatpush1.msra.mxu0 0.0
        %1112 = vmatprep.subr.mxu0 0.0
        %1113 = vmatpush1.msra.mxu0 0.0
        %1114 = vmatprep.subr.mxu0 0.0
        %1115 = vmatpush1.msra.mxu0 0.0
        %1116 = vmatprep.subr.mxu0 0.0
        %1117 = vmatpush1.msra.mxu0 %v97
        %1118 = vmatprep.subr.mxu0 0.0
        %1119 = vmatpush1.msra.mxu0 %v96
        %1120 = vmatprep.subr.mxu0 0.0
        %1121 = vmatpush1.msra.mxu0 %v95
        %1122 = vmatprep.subr.mxu0 0.0
        %1123 = vmatpush1.msra.mxu0 %v94
        %1124 = vmatprep.subr.mxu0 0.0
        %1125 = vmatpush1.msra.mxu0 %v93
        %1126 = vmatprep.subr.mxu0 0.0
        %1127 = vmatpush1.msra.mxu0 %v92
        %1128 = vmatprep.subr.mxu0 0.0
        %1129 = vmatpush1.msra.mxu0 %v91
        %1130 = vmatprep.subr.mxu0 0.0
        %1131 = vmatpush1.msra.mxu0 %v90
        %1132 = vmatprep.subr.mxu0 0.0
        %1133 = vmatpush2.msra.mxu0 0.0
        %1134 = vmatprep.subr.mxu0 0.0
        %1135 = vmatpush2.msra.mxu0 0.0
        %1136 = vmatprep.subr.mxu0 0.0
        %1137 = vmatpush2.msra.mxu0 0.0
        %1138 = vmatprep.subr.mxu0 0.0
        %1139 = vmatpush2.msra.mxu0 0.0
        %1140 = vmatprep.subr.mxu0 0.0
        %1141 = vmatpush2.msra.mxu0 0.0
        %1142 = vmatprep.subr.mxu0 0.0
        %1143 = vmatpush2.msra.mxu0 0.0
        %1144 = vmatprep.subr.mxu0 0.0
        %1145 = vmatpush2.msra.mxu0 0.0
        %1146 = vmatprep.subr.mxu0 0.0
        %1147 = vmatpush2.msra.mxu0 0.0
        %1148 = vmatprep.subr.mxu0 0.0
        %1149 = vmatpush2.msra.mxu0 0.0
        %1150 = vmatprep.subr.mxu0 0.0
        %1151 = vmatpush2.msra.mxu0 0.0
        %1152 = vmatprep.subr.mxu0 0.0
        %1153 = vmatpush2.msra.mxu0 0.0
        %1154 = vmatprep.subr.mxu0 0.0
        %1155 = vmatpush2.msra.mxu0 0.0
        %1156 = vmatprep.subr.mxu0 0.0
        %1157 = vmatpush2.msra.mxu0 0.0
        %1158 = vmatprep.subr.mxu0 0.0
        %1159 = vmatpush2.msra.mxu0 0.0
        %1160 = vmatprep.subr.mxu0 0.0
        %1161 = vmatpush2.msra.mxu0 0.0
        %1162 = vmatprep.subr.mxu0 0.0
        %1163 = vmatpush2.msra.mxu0 0.0
        %1164 = vmatprep.mubr.f32.mxu0 0.0
        %1165 = vmatmul.mubr.f32.gmra.mxu0 %v1098
        %v1166 = vpop.f32.mrf.mxu0
        %v1167 = vadd.f32 %v392, %v1166
        %v1168 = vpop.f32.mrf.mxu0
        %1169 = vdwg.mxu0
        %v1170 = vmul.f32 %v385, %v1167
        %v1171 = vadd.f32 %v1018, %v1170
        %v1172 = vmax.f32 %v1171, 0.0
        %v1174 = vsel %vm394, %v1172, 0
        %1176 = vmatprep.subr.mxu0 0.0
        %1177 = vmatpush1.msra.mxu0 0.0
        %1178 = vmatprep.subr.mxu0 0.0
        %1179 = vmatpush1.msra.mxu0 0.0
        %1180 = vmatprep.subr.mxu0 0.0
        %1181 = vmatpush1.msra.mxu0 0.0
        %1182 = vmatprep.subr.mxu0 0.0
        %1183 = vmatpush1.msra.mxu0 0.0
        %1184 = vmatprep.subr.mxu0 0.0
        %1185 = vmatpush1.msra.mxu0 0.0
        %1186 = vmatprep.subr.mxu0 0.0
        %1187 = vmatpush1.msra.mxu0 0.0
        %1188 = vmatprep.subr.mxu0 0.0
        %1189 = vmatpush1.msra.mxu0 0.0
        %1190 = vmatprep.subr.mxu0 0.0
        %1191 = vmatpush1.msra.mxu0 0.0
        %1192 = vmatprep.subr.mxu0 0.0
        %1193 = vmatpush1.msra.mxu0 %v97
        %1194 = vmatprep.subr.mxu0 0.0
        %1195 = vmatpush1.msra.mxu0 %v96
        %1196 = vmatprep.subr.mxu0 0.0
        %1197 = vmatpush1.msra.mxu0 %v95
        %1198 = vmatprep.subr.mxu0 0.0
        %1199 = vmatpush1.msra.mxu0 %v94
        %1200 = vmatprep.subr.mxu0 0.0
        %1201 = vmatpush1.msra.mxu0 %v93
        %1202 = vmatprep.subr.mxu0 0.0
        %1203 = vmatpush1.msra.mxu0 %v92
        %1204 = vmatprep.subr.mxu0 0.0
        %1205 = vmatpush1.msra.mxu0 %v91
        %1206 = vmatprep.subr.mxu0 0.0
        %1207 = vmatpush1.msra.mxu0 %v90
        %1208 = vmatprep.subr.mxu0 0.0
        %1209 = vmatpush2.msra.mxu0 0.0
        %1210 = vmatprep.subr.mxu0 0.0
        %1211 = vmatpush2.msra.mxu0 0.0
        %1212 = vmatprep.subr.mxu0 0.0
        %1213 = vmatpush2.msra.mxu0 0.0
        %1214 = vmatprep.subr.mxu0 0.0
        %1215 = vmatpush2.msra.mxu0 0.0
        %1216 = vmatprep.subr.mxu0 0.0
        %1217 = vmatpush2.msra.mxu0 0.0
        %1218 = vmatprep.subr.mxu0 0.0
        %1219 = vmatpush2.msra.mxu0 0.0
        %1220 = vmatprep.subr.mxu0 0.0
        %1221 = vmatpush2.msra.mxu0 0.0
        %1222 = vmatprep.subr.mxu0 0.0
        %1223 = vmatpush2.msra.mxu0 0.0
        %1224 = vmatprep.subr.mxu0 0.0
        %1225 = vmatpush2.msra.mxu0 0.0
        %1226 = vmatprep.subr.mxu0 0.0
        %1227 = vmatpush2.msra.mxu0 0.0
        %1228 = vmatprep.subr.mxu0 0.0
        %1229 = vmatpush2.msra.mxu0 0.0
        %1230 = vmatprep.subr.mxu0 0.0
        %1231 = vmatpush2.msra.mxu0 0.0
        %1232 = vmatprep.subr.mxu0 0.0
        %1233 = vmatpush2.msra.mxu0 0.0
        %1234 = vmatprep.subr.mxu0 0.0
        %1235 = vmatpush2.msra.mxu0 0.0
        %1236 = vmatprep.subr.mxu0 0.0
        %1237 = vmatpush2.msra.mxu0 0.0
        %1238 = vmatprep.subr.mxu0 0.0
        %1239 = vmatpush2.msra.mxu0 0.0
        %1240 = vmatprep.mubr.f32.mxu0 0.0
        %1241 = vmatmul.mubr.f32.gmra.mxu0 %v1174
        %v1242 = vpop.f32.mrf.mxu0
        %v1243 = vadd.f32 %v392, %v1242
        %v1244 = vpop.f32.mrf.mxu0
        %1245 = vdwg.mxu0
        %v1246 = vmul.f32 %v382, %v1243
        %v1247 = vadd.f32 %v1018, %v1246
        %v1248 = vmax.f32 %v1247, 0.0
        %v1249 = vadd.f32 %v1096, %v1172
        %v1250 = vmul.f32 %v1249, 2.0
        %v1251 = vadd.f32 %v1020, %v1250
        %v1252 = vadd.f32 %v1251, %v1248
        %v1254 = vsel %vm394, %v1252, 0
        %1256 = vmatprep.subr.mxu0 0.0
        %1257 = vmatpush1.msra.mxu0 0.0
        %1258 = vmatprep.subr.mxu0 0.0
        %1259 = vmatpush1.msra.mxu0 0.0
        %1260 = vmatprep.subr.mxu0 0.0
        %1261 = vmatpush1.msra.mxu0 0.0
        %1262 = vmatprep.subr.mxu0 0.0
        %1263 = vmatpush1.msra.mxu0 0.0
        %1264 = vmatprep.subr.mxu0 0.0
        %1265 = vmatpush1.msra.mxu0 0.0
        %1266 = vmatprep.subr.mxu0 0.0
        %1267 = vmatpush1.msra.mxu0 0.0
        %1268 = vmatprep.subr.mxu0 0.0
        %1269 = vmatpush1.msra.mxu0 0.0
        %1270 = vmatprep.subr.mxu0 0.0
        %1271 = vmatpush1.msra.mxu0 0.0
        %1272 = vmatprep.subr.mxu0 0.0
        %1273 = vmatpush1.msra.mxu0 %v97
        %1274 = vmatprep.subr.mxu0 0.0
        %1275 = vmatpush1.msra.mxu0 %v96
        %1276 = vmatprep.subr.mxu0 0.0
        %1277 = vmatpush1.msra.mxu0 %v95
        %1278 = vmatprep.subr.mxu0 0.0
        %1279 = vmatpush1.msra.mxu0 %v94
        %1280 = vmatprep.subr.mxu0 0.0
        %1281 = vmatpush1.msra.mxu0 %v93
        %1282 = vmatprep.subr.mxu0 0.0
        %1283 = vmatpush1.msra.mxu0 %v92
        %1284 = vmatprep.subr.mxu0 0.0
        %1285 = vmatpush1.msra.mxu0 %v91
        %1286 = vmatprep.subr.mxu0 0.0
        %1287 = vmatpush1.msra.mxu0 %v90
        %1288 = vmatprep.subr.mxu0 0.0
        %1289 = vmatpush2.msra.mxu0 0.0
        %1290 = vmatprep.subr.mxu0 0.0
        %1291 = vmatpush2.msra.mxu0 0.0
        %1292 = vmatprep.subr.mxu0 0.0
        %1293 = vmatpush2.msra.mxu0 0.0
        %1294 = vmatprep.subr.mxu0 0.0
        %1295 = vmatpush2.msra.mxu0 0.0
        %1296 = vmatprep.subr.mxu0 0.0
        %1297 = vmatpush2.msra.mxu0 0.0
        %1298 = vmatprep.subr.mxu0 0.0
        %1299 = vmatpush2.msra.mxu0 0.0
        %1300 = vmatprep.subr.mxu0 0.0
        %1301 = vmatpush2.msra.mxu0 0.0
        %1302 = vmatprep.subr.mxu0 0.0
        %1303 = vmatpush2.msra.mxu0 0.0
        %1304 = vmatprep.subr.mxu0 0.0
        %1305 = vmatpush2.msra.mxu0 0.0
        %1306 = vmatprep.subr.mxu0 0.0
        %1307 = vmatpush2.msra.mxu0 0.0
        %1308 = vmatprep.subr.mxu0 0.0
        %1309 = vmatpush2.msra.mxu0 0.0
        %1310 = vmatprep.subr.mxu0 0.0
        %1311 = vmatpush2.msra.mxu0 0.0
        %1312 = vmatprep.subr.mxu0 0.0
        %1313 = vmatpush2.msra.mxu0 0.0
        %1314 = vmatprep.subr.mxu0 0.0
        %1315 = vmatpush2.msra.mxu0 0.0
        %1316 = vmatprep.subr.mxu0 0.0
        %1317 = vmatpush2.msra.mxu0 0.0
        %1318 = vmatprep.subr.mxu0 0.0
        %1319 = vmatpush2.msra.mxu0 0.0
        %1320 = vmatprep.mubr.f32.mxu0 0.0
        %1321 = vmatmul.mubr.f32.gmra.mxu0 %v1254
        %v1322 = vpop.f32.mrf.mxu0
        %v1323 = vadd.f32 0.0, %v1322
        %v1324 = vpop.f32.mrf.mxu0
        %1325 = vdwg.mxu0
        %v1326 = vmul.f32 %v386, %v1323
        %v1327 = vadd.f32 %v1018, %v1326
        %v1328 = vadd.f32 %v1327, %v706
        %v1329 = vadd.f32 %v1019, %v1252
        %v1330 = vmax.f32 %v1328, 0.0
        %v1332 = vsel %vm394, %v1330, 0
        %1334 = vmatprep.subr.mxu0 0.0
        %1335 = vmatpush1.msra.mxu0 0.0
        %1336 = vmatprep.subr.mxu0 0.0
        %1337 = vmatpush1.msra.mxu0 0.0
        %1338 = vmatprep.subr.mxu0 0.0
        %1339 = vmatpush1.msra.mxu0 0.0
        %1340 = vmatprep.subr.mxu0 0.0
        %1341 = vmatpush1.msra.mxu0 0.0
        %1342 = vmatprep.subr.mxu0 0.0
        %1343 = vmatpush1.msra.mxu0 0.0
        %1344 = vmatprep.subr.mxu0 0.0
        %1345 = vmatpush1.msra.mxu0 0.0
        %1346 = vmatprep.subr.mxu0 0.0
        %1347 = vmatpush1.msra.mxu0 0.0
        %1348 = vmatprep.subr.mxu0 0.0
        %1349 = vmatpush1.msra.mxu0 0.0
        %1350 = vmatprep.subr.mxu0 0.0
        %1351 = vmatpush1.msra.mxu0 %v97
        %1352 = vmatprep.subr.mxu0 0.0
        %1353 = vmatpush1.msra.mxu0 %v96
        %1354 = vmatprep.subr.mxu0 0.0
        %1355 = vmatpush1.msra.mxu0 %v95
        %1356 = vmatprep.subr.mxu0 0.0
        %1357 = vmatpush1.msra.mxu0 %v94
        %1358 = vmatprep.subr.mxu0 0.0
        %1359 = vmatpush1.msra.mxu0 %v93
        %1360 = vmatprep.subr.mxu0 0.0
        %1361 = vmatpush1.msra.mxu0 %v92
        %1362 = vmatprep.subr.mxu0 0.0
        %1363 = vmatpush1.msra.mxu0 %v91
        %1364 = vmatprep.subr.mxu0 0.0
        %1365 = vmatpush1.msra.mxu0 %v90
        %1366 = vmatprep.subr.mxu0 0.0
        %1367 = vmatpush2.msra.mxu0 0.0
        %1368 = vmatprep.subr.mxu0 0.0
        %1369 = vmatpush2.msra.mxu0 0.0
        %1370 = vmatprep.subr.mxu0 0.0
        %1371 = vmatpush2.msra.mxu0 0.0
        %1372 = vmatprep.subr.mxu0 0.0
        %1373 = vmatpush2.msra.mxu0 0.0
        %1374 = vmatprep.subr.mxu0 0.0
        %1375 = vmatpush2.msra.mxu0 0.0
        %1376 = vmatprep.subr.mxu0 0.0
        %1377 = vmatpush2.msra.mxu0 0.0
        %1378 = vmatprep.subr.mxu0 0.0
        %1379 = vmatpush2.msra.mxu0 0.0
        %1380 = vmatprep.subr.mxu0 0.0
        %1381 = vmatpush2.msra.mxu0 0.0
        %1382 = vmatprep.subr.mxu0 0.0
        %1383 = vmatpush2.msra.mxu0 0.0
        %1384 = vmatprep.subr.mxu0 0.0
        %1385 = vmatpush2.msra.mxu0 0.0
        %1386 = vmatprep.subr.mxu0 0.0
        %1387 = vmatpush2.msra.mxu0 0.0
        %1388 = vmatprep.subr.mxu0 0.0
        %1389 = vmatpush2.msra.mxu0 0.0
        %1390 = vmatprep.subr.mxu0 0.0
        %1391 = vmatpush2.msra.mxu0 0.0
        %1392 = vmatprep.subr.mxu0 0.0
        %1393 = vmatpush2.msra.mxu0 0.0
        %1394 = vmatprep.subr.mxu0 0.0
        %1395 = vmatpush2.msra.mxu0 0.0
        %1396 = vmatprep.subr.mxu0 0.0
        %1397 = vmatpush2.msra.mxu0 0.0
        %1398 = vmatprep.mubr.f32.mxu0 0.0
        %1399 = vmatmul.mubr.f32.gmra.mxu0 %v1332
        %v1400 = vpop.f32.mrf.mxu0
        %v1401 = vadd.f32 %v392, %v1400
        %v1402 = vpop.f32.mrf.mxu0
        %1403 = vdwg.mxu0
        %v1404 = vmul.f32 %v385, %v1401
        %v1405 = vadd.f32 %v1328, %v1404
        %v1406 = vmax.f32 %v1405, 0.0
        %v1408 = vsel %vm394, %v1406, 0
        %1410 = vmatprep.subr.mxu0 0.0
        %1411 = vmatpush1.msra.mxu0 0.0
        %1412 = vmatprep.subr.mxu0 0.0
        %1413 = vmatpush1.msra.mxu0 0.0
        %1414 = vmatprep.subr.mxu0 0.0
        %1415 = vmatpush1.msra.mxu0 0.0
        %1416 = vmatprep.subr.mxu0 0.0
        %1417 = vmatpush1.msra.mxu0 0.0
        %1418 = vmatprep.subr.mxu0 0.0
        %1419 = vmatpush1.msra.mxu0 0.0
        %1420 = vmatprep.subr.mxu0 0.0
        %1421 = vmatpush1.msra.mxu0 0.0
        %1422 = vmatprep.subr.mxu0 0.0
        %1423 = vmatpush1.msra.mxu0 0.0
        %1424 = vmatprep.subr.mxu0 0.0
        %1425 = vmatpush1.msra.mxu0 0.0
        %1426 = vmatprep.subr.mxu0 0.0
        %1427 = vmatpush1.msra.mxu0 %v97
        %1428 = vmatprep.subr.mxu0 0.0
        %1429 = vmatpush1.msra.mxu0 %v96
        %1430 = vmatprep.subr.mxu0 0.0
        %1431 = vmatpush1.msra.mxu0 %v95
        %1432 = vmatprep.subr.mxu0 0.0
        %1433 = vmatpush1.msra.mxu0 %v94
        %1434 = vmatprep.subr.mxu0 0.0
        %1435 = vmatpush1.msra.mxu0 %v93
        %1436 = vmatprep.subr.mxu0 0.0
        %1437 = vmatpush1.msra.mxu0 %v92
        %1438 = vmatprep.subr.mxu0 0.0
        %1439 = vmatpush1.msra.mxu0 %v91
        %1440 = vmatprep.subr.mxu0 0.0
        %1441 = vmatpush1.msra.mxu0 %v90
        %1442 = vmatprep.subr.mxu0 0.0
        %1443 = vmatpush2.msra.mxu0 0.0
        %1444 = vmatprep.subr.mxu0 0.0
        %1445 = vmatpush2.msra.mxu0 0.0
        %1446 = vmatprep.subr.mxu0 0.0
        %1447 = vmatpush2.msra.mxu0 0.0
        %1448 = vmatprep.subr.mxu0 0.0
        %1449 = vmatpush2.msra.mxu0 0.0
        %1450 = vmatprep.subr.mxu0 0.0
        %1451 = vmatpush2.msra.mxu0 0.0
        %1452 = vmatprep.subr.mxu0 0.0
        %1453 = vmatpush2.msra.mxu0 0.0
        %1454 = vmatprep.subr.mxu0 0.0
        %1455 = vmatpush2.msra.mxu0 0.0
        %1456 = vmatprep.subr.mxu0 0.0
        %1457 = vmatpush2.msra.mxu0 0.0
        %1458 = vmatprep.subr.mxu0 0.0
        %1459 = vmatpush2.msra.mxu0 0.0
        %1460 = vmatprep.subr.mxu0 0.0
        %1461 = vmatpush2.msra.mxu0 0.0
        %1462 = vmatprep.subr.mxu0 0.0
        %1463 = vmatpush2.msra.mxu0 0.0
        %1464 = vmatprep.subr.mxu0 0.0
        %1465 = vmatpush2.msra.mxu0 0.0
        %1466 = vmatprep.subr.mxu0 0.0
        %1467 = vmatpush2.msra.mxu0 0.0
        %1468 = vmatprep.subr.mxu0 0.0
        %1469 = vmatpush2.msra.mxu0 0.0
        %1470 = vmatprep.subr.mxu0 0.0
        %1471 = vmatpush2.msra.mxu0 0.0
        %1472 = vmatprep.subr.mxu0 0.0
        %1473 = vmatpush2.msra.mxu0 0.0
        %1474 = vmatprep.mubr.f32.mxu0 0.0
        %1475 = vmatmul.mubr.f32.gmra.mxu0 %v1408
        %v1476 = vpop.f32.mrf.mxu0
        %v1477 = vadd.f32 %v392, %v1476
        %v1478 = vpop.f32.mrf.mxu0
        %1479 = vdwg.mxu0
        %v1480 = vmul.f32 %v385, %v1477
        %v1481 = vadd.f32 %v1328, %v1480
        %v1482 = vmax.f32 %v1481, 0.0
        %v1484 = vsel %vm394, %v1482, 0
        %1486 = vmatprep.subr.mxu0 0.0
        %1487 = vmatpush1.msra.mxu0 0.0
        %1488 = vmatprep.subr.mxu0 0.0
        %1489 = vmatpush1.msra.mxu0 0.0
        %1490 = vmatprep.subr.mxu0 0.0
        %1491 = vmatpush1.msra.mxu0 0.0
        %1492 = vmatprep.subr.mxu0 0.0
        %1493 = vmatpush1.msra.mxu0 0.0
        %1494 = vmatprep.subr.mxu0 0.0
        %1495 = vmatpush1.msra.mxu0 0.0
        %1496 = vmatprep.subr.mxu0 0.0
        %1497 = vmatpush1.msra.mxu0 0.0
        %1498 = vmatprep.subr.mxu0 0.0
        %1499 = vmatpush1.msra.mxu0 0.0
        %1500 = vmatprep.subr.mxu0 0.0
        %1501 = vmatpush1.msra.mxu0 0.0
        %1502 = vmatprep.subr.mxu0 0.0
        %1503 = vmatpush1.msra.mxu0 %v97
        %1504 = vmatprep.subr.mxu0 0.0
        %1505 = vmatpush1.msra.mxu0 %v96
        %1506 = vmatprep.subr.mxu0 0.0
        %1507 = vmatpush1.msra.mxu0 %v95
        %1508 = vmatprep.subr.mxu0 0.0
        %1509 = vmatpush1.msra.mxu0 %v94
        %1510 = vmatprep.subr.mxu0 0.0
        %1511 = vmatpush1.msra.mxu0 %v93
        %1512 = vmatprep.subr.mxu0 0.0
        %1513 = vmatpush1.msra.mxu0 %v92
        %1514 = vmatprep.subr.mxu0 0.0
        %1515 = vmatpush1.msra.mxu0 %v91
        %1516 = vmatprep.subr.mxu0 0.0
        %1517 = vmatpush1.msra.mxu0 %v90
        %1518 = vmatprep.subr.mxu0 0.0
        %1519 = vmatpush2.msra.mxu0 0.0
        %1520 = vmatprep.subr.mxu0 0.0
        %1521 = vmatpush2.msra.mxu0 0.0
        %1522 = vmatprep.subr.mxu0 0.0
        %1523 = vmatpush2.msra.mxu0 0.0
        %1524 = vmatprep.subr.mxu0 0.0
        %1525 = vmatpush2.msra.mxu0 0.0
        %1526 = vmatprep.subr.mxu0 0.0
        %1527 = vmatpush2.msra.mxu0 0.0
        %1528 = vmatprep.subr.mxu0 0.0
        %1529 = vmatpush2.msra.mxu0 0.0
        %1530 = vmatprep.subr.mxu0 0.0
        %1531 = vmatpush2.msra.mxu0 0.0
        %1532 = vmatprep.subr.mxu0 0.0
        %1533 = vmatpush2.msra.mxu0 0.0
        %1534 = vmatprep.subr.mxu0 0.0
        %1535 = vmatpush2.msra.mxu0 0.0
        %1536 = vmatprep.subr.mxu0 0.0
        %1537 = vmatpush2.msra.mxu0 0.0
        %1538 = vmatprep.subr.mxu0 0.0
        %1539 = vmatpush2.msra.mxu0 0.0
        %1540 = vmatprep.subr.mxu0 0.0
        %1541 = vmatpush2.msra.mxu0 0.0
        %1542 = vmatprep.subr.mxu0 0.0
        %1543 = vmatpush2.msra.mxu0 0.0
        %1544 = vmatprep.subr.mxu0 0.0
        %1545 = vmatpush2.msra.mxu0 0.0
        %1546 = vmatprep.subr.mxu0 0.0
        %1547 = vmatpush2.msra.mxu0 0.0
        %1548 = vmatprep.subr.mxu0 0.0
        %1549 = vmatpush2.msra.mxu0 0.0
        %1550 = vmatprep.mubr.f32.mxu0 0.0
        %1551 = vmatmul.mubr.f32.gmra.mxu0 %v1484
        %v1552 = vpop.f32.mrf.mxu0
        %v1553 = vadd.f32 %v392, %v1552
        %v1554 = vpop.f32.mrf.mxu0
        %1555 = vdwg.mxu0
        %v1556 = vmul.f32 %v382, %v1553
        %v1557 = vadd.f32 %v1328, %v1556
        %v1558 = vmax.f32 %v1557, 0.0
        %v1559 = vadd.f32 %v1406, %v1482
        %v1560 = vmul.f32 %v1559, 2.0
        %v1561 = vadd.f32 %v1330, %v1560
        %v1562 = vadd.f32 %v1561, %v1558
        %v1564 = vsel %vm394, %v1562, 0
        %1566 = vmatprep.subr.mxu0 0.0
        %1567 = vmatpush1.msra.mxu0 0.0
        %1568 = vmatprep.subr.mxu0 0.0
        %1569 = vmatpush1.msra.mxu0 0.0
        %1570 = vmatprep.subr.mxu0 0.0
        %1571 = vmatpush1.msra.mxu0 0.0
        %1572 = vmatprep.subr.mxu0 0.0
        %1573 = vmatpush1.msra.mxu0 0.0
        %1574 = vmatprep.subr.mxu0 0.0
        %1575 = vmatpush1.msra.mxu0 0.0
        %1576 = vmatprep.subr.mxu0 0.0
        %1577 = vmatpush1.msra.mxu0 0.0
        %1578 = vmatprep.subr.mxu0 0.0
        %1579 = vmatpush1.msra.mxu0 0.0
        %1580 = vmatprep.subr.mxu0 0.0
        %1581 = vmatpush1.msra.mxu0 0.0
        %1582 = vmatprep.subr.mxu0 0.0
        %1583 = vmatpush1.msra.mxu0 %v97
        %1584 = vmatprep.subr.mxu0 0.0
        %1585 = vmatpush1.msra.mxu0 %v96
        %1586 = vmatprep.subr.mxu0 0.0
        %1587 = vmatpush1.msra.mxu0 %v95
        %1588 = vmatprep.subr.mxu0 0.0
        %1589 = vmatpush1.msra.mxu0 %v94
        %1590 = vmatprep.subr.mxu0 0.0
        %1591 = vmatpush1.msra.mxu0 %v93
        %1592 = vmatprep.subr.mxu0 0.0
        %1593 = vmatpush1.msra.mxu0 %v92
        %1594 = vmatprep.subr.mxu0 0.0
        %1595 = vmatpush1.msra.mxu0 %v91
        %1596 = vmatprep.subr.mxu0 0.0
        %1597 = vmatpush1.msra.mxu0 %v90
        %1598 = vmatprep.subr.mxu0 0.0
        %1599 = vmatpush2.msra.mxu0 0.0
        %1600 = vmatprep.subr.mxu0 0.0
        %1601 = vmatpush2.msra.mxu0 0.0
        %1602 = vmatprep.subr.mxu0 0.0
        %1603 = vmatpush2.msra.mxu0 0.0
        %1604 = vmatprep.subr.mxu0 0.0
        %1605 = vmatpush2.msra.mxu0 0.0
        %1606 = vmatprep.subr.mxu0 0.0
        %1607 = vmatpush2.msra.mxu0 0.0
        %1608 = vmatprep.subr.mxu0 0.0
        %1609 = vmatpush2.msra.mxu0 0.0
        %1610 = vmatprep.subr.mxu0 0.0
        %1611 = vmatpush2.msra.mxu0 0.0
        %1612 = vmatprep.subr.mxu0 0.0
        %1613 = vmatpush2.msra.mxu0 0.0
        %1614 = vmatprep.subr.mxu0 0.0
        %1615 = vmatpush2.msra.mxu0 0.0
        %1616 = vmatprep.subr.mxu0 0.0
        %1617 = vmatpush2.msra.mxu0 0.0
        %1618 = vmatprep.subr.mxu0 0.0
        %1619 = vmatpush2.msra.mxu0 0.0
        %1620 = vmatprep.subr.mxu0 0.0
        %1621 = vmatpush2.msra.mxu0 0.0
        %1622 = vmatprep.subr.mxu0 0.0
        %1623 = vmatpush2.msra.mxu0 0.0
        %1624 = vmatprep.subr.mxu0 0.0
        %1625 = vmatpush2.msra.mxu0 0.0
        %1626 = vmatprep.subr.mxu0 0.0
        %1627 = vmatpush2.msra.mxu0 0.0
        %1628 = vmatprep.subr.mxu0 0.0
        %1629 = vmatpush2.msra.mxu0 0.0
        %1630 = vmatprep.mubr.f32.mxu0 0.0
        %1631 = vmatmul.mubr.f32.gmra.mxu0 %v1564
        %v1632 = vpop.f32.mrf.mxu0
        %v1633 = vadd.f32 0.0, %v1632
        %v1634 = vpop.f32.mrf.mxu0
        %1635 = vdwg.mxu0
        %v1636 = vmul.f32 %v386, %v1633
        %v1637 = vadd.f32 %v1328, %v1636
        %v1638 = vadd.f32 %v1637, %v706
        %v1639 = vadd.f32 %v1329, %v1562
        %v1640 = vmax.f32 %v1638, 0.0
        %v1642 = vsel %vm394, %v1640, 0
        %1644 = vmatprep.subr.mxu0 0.0
        %1645 = vmatpush1.msra.mxu0 0.0
        %1646 = vmatprep.subr.mxu0 0.0
        %1647 = vmatpush1.msra.mxu0 0.0
        %1648 = vmatprep.subr.mxu0 0.0
        %1649 = vmatpush1.msra.mxu0 0.0
        %1650 = vmatprep.subr.mxu0 0.0
        %1651 = vmatpush1.msra.mxu0 0.0
        %1652 = vmatprep.subr.mxu0 0.0
        %1653 = vmatpush1.msra.mxu0 0.0
        %1654 = vmatprep.subr.mxu0 0.0
        %1655 = vmatpush1.msra.mxu0 0.0
        %1656 = vmatprep.subr.mxu0 0.0
        %1657 = vmatpush1.msra.mxu0 0.0
        %1658 = vmatprep.subr.mxu0 0.0
        %1659 = vmatpush1.msra.mxu0 0.0
        %1660 = vmatprep.subr.mxu0 0.0
        %1661 = vmatpush1.msra.mxu0 %v97
        %1662 = vmatprep.subr.mxu0 0.0
        %1663 = vmatpush1.msra.mxu0 %v96
        %1664 = vmatprep.subr.mxu0 0.0
        %1665 = vmatpush1.msra.mxu0 %v95
        %1666 = vmatprep.subr.mxu0 0.0
        %1667 = vmatpush1.msra.mxu0 %v94
        %1668 = vmatprep.subr.mxu0 0.0
        %1669 = vmatpush1.msra.mxu0 %v93
        %1670 = vmatprep.subr.mxu0 0.0
        %1671 = vmatpush1.msra.mxu0 %v92
        %1672 = vmatprep.subr.mxu0 0.0
        %1673 = vmatpush1.msra.mxu0 %v91
        %1674 = vmatprep.subr.mxu0 0.0
        %1675 = vmatpush1.msra.mxu0 %v90
        %1676 = vmatprep.subr.mxu0 0.0
        %1677 = vmatpush2.msra.mxu0 0.0
        %1678 = vmatprep.subr.mxu0 0.0
        %1679 = vmatpush2.msra.mxu0 0.0
        %1680 = vmatprep.subr.mxu0 0.0
        %1681 = vmatpush2.msra.mxu0 0.0
        %1682 = vmatprep.subr.mxu0 0.0
        %1683 = vmatpush2.msra.mxu0 0.0
        %1684 = vmatprep.subr.mxu0 0.0
        %1685 = vmatpush2.msra.mxu0 0.0
        %1686 = vmatprep.subr.mxu0 0.0
        %1687 = vmatpush2.msra.mxu0 0.0
        %1688 = vmatprep.subr.mxu0 0.0
        %1689 = vmatpush2.msra.mxu0 0.0
        %1690 = vmatprep.subr.mxu0 0.0
        %1691 = vmatpush2.msra.mxu0 0.0
        %1692 = vmatprep.subr.mxu0 0.0
        %1693 = vmatpush2.msra.mxu0 0.0
        %1694 = vmatprep.subr.mxu0 0.0
        %1695 = vmatpush2.msra.mxu0 0.0
        %1696 = vmatprep.subr.mxu0 0.0
        %1697 = vmatpush2.msra.mxu0 0.0
        %1698 = vmatprep.subr.mxu0 0.0
        %1699 = vmatpush2.msra.mxu0 0.0
        %1700 = vmatprep.subr.mxu0 0.0
        %1701 = vmatpush2.msra.mxu0 0.0
        %1702 = vmatprep.subr.mxu0 0.0
        %1703 = vmatpush2.msra.mxu0 0.0
        %1704 = vmatprep.subr.mxu0 0.0
        %1705 = vmatpush2.msra.mxu0 0.0
        %1706 = vmatprep.subr.mxu0 0.0
        %1707 = vmatpush2.msra.mxu0 0.0
        %1708 = vmatprep.mubr.f32.mxu0 0.0
        %1709 = vmatmul.mubr.f32.gmra.mxu0 %v1642
        %v1710 = vpop.f32.mrf.mxu0
        %v1711 = vadd.f32 %v392, %v1710
        %v1712 = vpop.f32.mrf.mxu0
        %1713 = vdwg.mxu0
        %v1714 = vmul.f32 %v385, %v1711
        %v1715 = vadd.f32 %v1638, %v1714
        %v1716 = vmax.f32 %v1715, 0.0
        %v1718 = vsel %vm394, %v1716, 0
        %1720 = vmatprep.subr.mxu0 0.0
        %1721 = vmatpush1.msra.mxu0 0.0
        %1722 = vmatprep.subr.mxu0 0.0
        %1723 = vmatpush1.msra.mxu0 0.0
        %1724 = vmatprep.subr.mxu0 0.0
        %1725 = vmatpush1.msra.mxu0 0.0
        %1726 = vmatprep.subr.mxu0 0.0
        %1727 = vmatpush1.msra.mxu0 0.0
        %1728 = vmatprep.subr.mxu0 0.0
        %1729 = vmatpush1.msra.mxu0 0.0
        %1730 = vmatprep.subr.mxu0 0.0
        %1731 = vmatpush1.msra.mxu0 0.0
        %1732 = vmatprep.subr.mxu0 0.0
        %1733 = vmatpush1.msra.mxu0 0.0
        %1734 = vmatprep.subr.mxu0 0.0
        %1735 = vmatpush1.msra.mxu0 0.0
        %1736 = vmatprep.subr.mxu0 0.0
        %1737 = vmatpush1.msra.mxu0 %v97
        %1738 = vmatprep.subr.mxu0 0.0
        %1739 = vmatpush1.msra.mxu0 %v96
        %1740 = vmatprep.subr.mxu0 0.0
        %1741 = vmatpush1.msra.mxu0 %v95
        %1742 = vmatprep.subr.mxu0 0.0
        %1743 = vmatpush1.msra.mxu0 %v94
        %1744 = vmatprep.subr.mxu0 0.0
        %1745 = vmatpush1.msra.mxu0 %v93
        %1746 = vmatprep.subr.mxu0 0.0
        %1747 = vmatpush1.msra.mxu0 %v92
        %1748 = vmatprep.subr.mxu0 0.0
        %1749 = vmatpush1.msra.mxu0 %v91
        %1750 = vmatprep.subr.mxu0 0.0
        %1751 = vmatpush1.msra.mxu0 %v90
        %1752 = vmatprep.subr.mxu0 0.0
        %1753 = vmatpush2.msra.mxu0 0.0
        %1754 = vmatprep.subr.mxu0 0.0
        %1755 = vmatpush2.msra.mxu0 0.0
        %1756 = vmatprep.subr.mxu0 0.0
        %1757 = vmatpush2.msra.mxu0 0.0
        %1758 = vmatprep.subr.mxu0 0.0
        %1759 = vmatpush2.msra.mxu0 0.0
        %1760 = vmatprep.subr.mxu0 0.0
        %1761 = vmatpush2.msra.mxu0 0.0
        %1762 = vmatprep.subr.mxu0 0.0
        %1763 = vmatpush2.msra.mxu0 0.0
        %1764 = vmatprep.subr.mxu0 0.0
        %1765 = vmatpush2.msra.mxu0 0.0
        %1766 = vmatprep.subr.mxu0 0.0
        %1767 = vmatpush2.msra.mxu0 0.0
        %1768 = vmatprep.subr.mxu0 0.0
        %1769 = vmatpush2.msra.mxu0 0.0
        %1770 = vmatprep.subr.mxu0 0.0
        %1771 = vmatpush2.msra.mxu0 0.0
        %1772 = vmatprep.subr.mxu0 0.0
        %1773 = vmatpush2.msra.mxu0 0.0
        %1774 = vmatprep.subr.mxu0 0.0
        %1775 = vmatpush2.msra.mxu0 0.0
        %1776 = vmatprep.subr.mxu0 0.0
        %1777 = vmatpush2.msra.mxu0 0.0
        %1778 = vmatprep.subr.mxu0 0.0
        %1779 = vmatpush2.msra.mxu0 0.0
        %1780 = vmatprep.subr.mxu0 0.0
        %1781 = vmatpush2.msra.mxu0 0.0
        %1782 = vmatprep.subr.mxu0 0.0
        %1783 = vmatpush2.msra.mxu0 0.0
        %1784 = vmatprep.mubr.f32.mxu0 0.0
        %1785 = vmatmul.mubr.f32.gmra.mxu0 %v1718
        %v1786 = vpop.f32.mrf.mxu0
        %v1787 = vadd.f32 %v392, %v1786
        %v1788 = vpop.f32.mrf.mxu0
        %1789 = vdwg.mxu0
        %v1790 = vmul.f32 %v385, %v1787
        %v1791 = vadd.f32 %v1638, %v1790
        %v1792 = vmax.f32 %v1791, 0.0
        %v1794 = vsel %vm394, %v1792, 0
        %1796 = vmatprep.subr.mxu0 0.0
        %1797 = vmatpush1.msra.mxu0 0.0
        %1798 = vmatprep.subr.mxu0 0.0
        %1799 = vmatpush1.msra.mxu0 0.0
        %1800 = vmatprep.subr.mxu0 0.0
        %1801 = vmatpush1.msra.mxu0 0.0
        %1802 = vmatprep.subr.mxu0 0.0
        %1803 = vmatpush1.msra.mxu0 0.0
        %1804 = vmatprep.subr.mxu0 0.0
        %1805 = vmatpush1.msra.mxu0 0.0
        %1806 = vmatprep.subr.mxu0 0.0
        %1807 = vmatpush1.msra.mxu0 0.0
        %1808 = vmatprep.subr.mxu0 0.0
        %1809 = vmatpush1.msra.mxu0 0.0
        %1810 = vmatprep.subr.mxu0 0.0
        %1811 = vmatpush1.msra.mxu0 0.0
        %1812 = vmatprep.subr.mxu0 0.0
        %1813 = vmatpush1.msra.mxu0 %v97
        %1814 = vmatprep.subr.mxu0 0.0
        %1815 = vmatpush1.msra.mxu0 %v96
        %1816 = vmatprep.subr.mxu0 0.0
        %1817 = vmatpush1.msra.mxu0 %v95
        %1818 = vmatprep.subr.mxu0 0.0
        %1819 = vmatpush1.msra.mxu0 %v94
        %1820 = vmatprep.subr.mxu0 0.0
        %1821 = vmatpush1.msra.mxu0 %v93
        %1822 = vmatprep.subr.mxu0 0.0
        %1823 = vmatpush1.msra.mxu0 %v92
        %1824 = vmatprep.subr.mxu0 0.0
        %1825 = vmatpush1.msra.mxu0 %v91
        %1826 = vmatprep.subr.mxu0 0.0
        %1827 = vmatpush1.msra.mxu0 %v90
        %1828 = vmatprep.subr.mxu0 0.0
        %1829 = vmatpush2.msra.mxu0 0.0
        %1830 = vmatprep.subr.mxu0 0.0
        %1831 = vmatpush2.msra.mxu0 0.0
        %1832 = vmatprep.subr.mxu0 0.0
        %1833 = vmatpush2.msra.mxu0 0.0
        %1834 = vmatprep.subr.mxu0 0.0
        %1835 = vmatpush2.msra.mxu0 0.0
        %1836 = vmatprep.subr.mxu0 0.0
        %1837 = vmatpush2.msra.mxu0 0.0
        %1838 = vmatprep.subr.mxu0 0.0
        %1839 = vmatpush2.msra.mxu0 0.0
        %1840 = vmatprep.subr.mxu0 0.0
        %1841 = vmatpush2.msra.mxu0 0.0
        %1842 = vmatprep.subr.mxu0 0.0
        %1843 = vmatpush2.msra.mxu0 0.0
        %1844 = vmatprep.subr.mxu0 0.0
        %1845 = vmatpush2.msra.mxu0 0.0
        %1846 = vmatprep.subr.mxu0 0.0
        %1847 = vmatpush2.msra.mxu0 0.0
        %1848 = vmatprep.subr.mxu0 0.0
        %1849 = vmatpush2.msra.mxu0 0.0
        %1850 = vmatprep.subr.mxu0 0.0
        %1851 = vmatpush2.msra.mxu0 0.0
        %1852 = vmatprep.subr.mxu0 0.0
        %1853 = vmatpush2.msra.mxu0 0.0
        %1854 = vmatprep.subr.mxu0 0.0
        %1855 = vmatpush2.msra.mxu0 0.0
        %1856 = vmatprep.subr.mxu0 0.0
        %1857 = vmatpush2.msra.mxu0 0.0
        %1858 = vmatprep.subr.mxu0 0.0
        %1859 = vmatpush2.msra.mxu0 0.0
        %1860 = vmatprep.mubr.f32.mxu0 0.0
        %1861 = vmatmul.mubr.f32.gmra.mxu0 %v1794
        %v1862 = vpop.f32.mrf.mxu0
        %v1863 = vadd.f32 %v392, %v1862
        %v1864 = vpop.f32.mrf.mxu0
        %1865 = vdwg.mxu0
        %v1866 = vmul.f32 %v382, %v1863
        %v1867 = vadd.f32 %v1638, %v1866
        %v1868 = vmax.f32 %v1867, 0.0
        %v1869 = vadd.f32 %v1716, %v1792
        %v1870 = vmul.f32 %v1869, 2.0
        %v1871 = vadd.f32 %v1640, %v1870
        %v1872 = vadd.f32 %v1871, %v1868
        %v1874 = vsel %vm394, %v1872, 0
        %1876 = vmatprep.subr.mxu0 0.0
        %1877 = vmatpush1.msra.mxu0 0.0
        %1878 = vmatprep.subr.mxu0 0.0
        %1879 = vmatpush1.msra.mxu0 0.0
        %1880 = vmatprep.subr.mxu0 0.0
        %1881 = vmatpush1.msra.mxu0 0.0
        %1882 = vmatprep.subr.mxu0 0.0
        %1883 = vmatpush1.msra.mxu0 0.0
        %1884 = vmatprep.subr.mxu0 0.0
        %1885 = vmatpush1.msra.mxu0 0.0
        %1886 = vmatprep.subr.mxu0 0.0
        %1887 = vmatpush1.msra.mxu0 0.0
        %1888 = vmatprep.subr.mxu0 0.0
        %1889 = vmatpush1.msra.mxu0 0.0
        %1890 = vmatprep.subr.mxu0 0.0
        %1891 = vmatpush1.msra.mxu0 0.0
        %1892 = vmatprep.subr.mxu0 0.0
        %1893 = vmatpush1.msra.mxu0 %v97
        %1894 = vmatprep.subr.mxu0 0.0
        %1895 = vmatpush1.msra.mxu0 %v96
        %1896 = vmatprep.subr.mxu0 0.0
        %1897 = vmatpush1.msra.mxu0 %v95
        %1898 = vmatprep.subr.mxu0 0.0
        %1899 = vmatpush1.msra.mxu0 %v94
        %1900 = vmatprep.subr.mxu0 0.0
        %1901 = vmatpush1.msra.mxu0 %v93
        %1902 = vmatprep.subr.mxu0 0.0
        %1903 = vmatpush1.msra.mxu0 %v92
        %1904 = vmatprep.subr.mxu0 0.0
        %1905 = vmatpush1.msra.mxu0 %v91
        %1906 = vmatprep.subr.mxu0 0.0
        %1907 = vmatpush1.msra.mxu0 %v90
        %1908 = vmatprep.subr.mxu0 0.0
        %1909 = vmatpush2.msra.mxu0 0.0
        %1910 = vmatprep.subr.mxu0 0.0
        %1911 = vmatpush2.msra.mxu0 0.0
        %1912 = vmatprep.subr.mxu0 0.0
        %1913 = vmatpush2.msra.mxu0 0.0
        %1914 = vmatprep.subr.mxu0 0.0
        %1915 = vmatpush2.msra.mxu0 0.0
        %1916 = vmatprep.subr.mxu0 0.0
        %1917 = vmatpush2.msra.mxu0 0.0
        %1918 = vmatprep.subr.mxu0 0.0
        %1919 = vmatpush2.msra.mxu0 0.0
        %1920 = vmatprep.subr.mxu0 0.0
        %1921 = vmatpush2.msra.mxu0 0.0
        %1922 = vmatprep.subr.mxu0 0.0
        %1923 = vmatpush2.msra.mxu0 0.0
        %1924 = vmatprep.subr.mxu0 0.0
        %1925 = vmatpush2.msra.mxu0 0.0
        %1926 = vmatprep.subr.mxu0 0.0
        %1927 = vmatpush2.msra.mxu0 0.0
        %1928 = vmatprep.subr.mxu0 0.0
        %1929 = vmatpush2.msra.mxu0 0.0
        %1930 = vmatprep.subr.mxu0 0.0
        %1931 = vmatpush2.msra.mxu0 0.0
        %1932 = vmatprep.subr.mxu0 0.0
        %1933 = vmatpush2.msra.mxu0 0.0
        %1934 = vmatprep.subr.mxu0 0.0
        %1935 = vmatpush2.msra.mxu0 0.0
        %1936 = vmatprep.subr.mxu0 0.0
        %1937 = vmatpush2.msra.mxu0 0.0
        %1938 = vmatprep.subr.mxu0 0.0
        %1939 = vmatpush2.msra.mxu0 0.0
        %1940 = vmatprep.mubr.f32.mxu0 0.0
        %1941 = vmatmul.mubr.f32.gmra.mxu0 %v1874
        %v1942 = vpop.f32.mrf.mxu0
        %v1943 = vadd.f32 0.0, %v1942
        %v1944 = vpop.f32.mrf.mxu0
        %1945 = vdwg.mxu0
        %v1946 = vmul.f32 %v386, %v1943
        %v1947 = vadd.f32 %v1638, %v1946
        %v1948 = vadd.f32 %v1947, %v706
        %v1949 = vadd.f32 %v1639, %v1872
        %v1950 = vmax.f32 %v1948, 0.0
        %v1952 = vsel %vm394, %v1950, 0
        %1954 = vmatprep.subr.mxu0 0.0
        %1955 = vmatpush1.msra.mxu0 0.0
        %1956 = vmatprep.subr.mxu0 0.0
        %1957 = vmatpush1.msra.mxu0 0.0
        %1958 = vmatprep.subr.mxu0 0.0
        %1959 = vmatpush1.msra.mxu0 0.0
        %1960 = vmatprep.subr.mxu0 0.0
        %1961 = vmatpush1.msra.mxu0 0.0
        %1962 = vmatprep.subr.mxu0 0.0
        %1963 = vmatpush1.msra.mxu0 0.0
        %1964 = vmatprep.subr.mxu0 0.0
        %1965 = vmatpush1.msra.mxu0 0.0
        %1966 = vmatprep.subr.mxu0 0.0
        %1967 = vmatpush1.msra.mxu0 0.0
        %1968 = vmatprep.subr.mxu0 0.0
        %1969 = vmatpush1.msra.mxu0 0.0
        %1970 = vmatprep.subr.mxu0 0.0
        %1971 = vmatpush1.msra.mxu0 %v97
        %1972 = vmatprep.subr.mxu0 0.0
        %1973 = vmatpush1.msra.mxu0 %v96
        %1974 = vmatprep.subr.mxu0 0.0
        %1975 = vmatpush1.msra.mxu0 %v95
        %1976 = vmatprep.subr.mxu0 0.0
        %1977 = vmatpush1.msra.mxu0 %v94
        %1978 = vmatprep.subr.mxu0 0.0
        %1979 = vmatpush1.msra.mxu0 %v93
        %1980 = vmatprep.subr.mxu0 0.0
        %1981 = vmatpush1.msra.mxu0 %v92
        %1982 = vmatprep.subr.mxu0 0.0
        %1983 = vmatpush1.msra.mxu0 %v91
        %1984 = vmatprep.subr.mxu0 0.0
        %1985 = vmatpush1.msra.mxu0 %v90
        %1986 = vmatprep.subr.mxu0 0.0
        %1987 = vmatpush2.msra.mxu0 0.0
        %1988 = vmatprep.subr.mxu0 0.0
        %1989 = vmatpush2.msra.mxu0 0.0
        %1990 = vmatprep.subr.mxu0 0.0
        %1991 = vmatpush2.msra.mxu0 0.0
        %1992 = vmatprep.subr.mxu0 0.0
        %1993 = vmatpush2.msra.mxu0 0.0
        %1994 = vmatprep.subr.mxu0 0.0
        %1995 = vmatpush2.msra.mxu0 0.0
        %1996 = vmatprep.subr.mxu0 0.0
        %1997 = vmatpush2.msra.mxu0 0.0
        %1998 = vmatprep.subr.mxu0 0.0
        %1999 = vmatpush2.msra.mxu0 0.0
        %2000 = vmatprep.subr.mxu0 0.0
        %2001 = vmatpush2.msra.mxu0 0.0
        %2002 = vmatprep.subr.mxu0 0.0
        %2003 = vmatpush2.msra.mxu0 0.0
        %2004 = vmatprep.subr.mxu0 0.0
        %2005 = vmatpush2.msra.mxu0 0.0
        %2006 = vmatprep.subr.mxu0 0.0
        %2007 = vmatpush2.msra.mxu0 0.0
        %2008 = vmatprep.subr.mxu0 0.0
        %2009 = vmatpush2.msra.mxu0 0.0
        %2010 = vmatprep.subr.mxu0 0.0
        %2011 = vmatpush2.msra.mxu0 0.0
        %2012 = vmatprep.subr.mxu0 0.0
        %2013 = vmatpush2.msra.mxu0 0.0
        %2014 = vmatprep.subr.mxu0 0.0
        %2015 = vmatpush2.msra.mxu0 0.0
        %2016 = vmatprep.subr.mxu0 0.0
        %2017 = vmatpush2.msra.mxu0 0.0
        %2018 = vmatprep.mubr.f32.mxu0 0.0
        %2019 = vmatmul.mubr.f32.gmra.mxu0 %v1952
        %v2020 = vpop.f32.mrf.mxu0
        %v2021 = vadd.f32 %v392, %v2020
        %v2022 = vpop.f32.mrf.mxu0
        %2023 = vdwg.mxu0
        %v2024 = vmul.f32 %v385, %v2021
        %v2025 = vadd.f32 %v1948, %v2024
        %v2026 = vmax.f32 %v2025, 0.0
        %v2028 = vsel %vm394, %v2026, 0
        %2030 = vmatprep.subr.mxu0 0.0
        %2031 = vmatpush1.msra.mxu0 0.0
        %2032 = vmatprep.subr.mxu0 0.0
        %2033 = vmatpush1.msra.mxu0 0.0
        %2034 = vmatprep.subr.mxu0 0.0
        %2035 = vmatpush1.msra.mxu0 0.0
        %2036 = vmatprep.subr.mxu0 0.0
        %2037 = vmatpush1.msra.mxu0 0.0
        %2038 = vmatprep.subr.mxu0 0.0
        %2039 = vmatpush1.msra.mxu0 0.0
        %2040 = vmatprep.subr.mxu0 0.0
        %2041 = vmatpush1.msra.mxu0 0.0
        %2042 = vmatprep.subr.mxu0 0.0
        %2043 = vmatpush1.msra.mxu0 0.0
        %2044 = vmatprep.subr.mxu0 0.0
        %2045 = vmatpush1.msra.mxu0 0.0
        %2046 = vmatprep.subr.mxu0 0.0
        %2047 = vmatpush1.msra.mxu0 %v97
        %2048 = vmatprep.subr.mxu0 0.0
        %2049 = vmatpush1.msra.mxu0 %v96
        %2050 = vmatprep.subr.mxu0 0.0
        %2051 = vmatpush1.msra.mxu0 %v95
        %2052 = vmatprep.subr.mxu0 0.0
        %2053 = vmatpush1.msra.mxu0 %v94
        %2054 = vmatprep.subr.mxu0 0.0
        %2055 = vmatpush1.msra.mxu0 %v93
        %2056 = vmatprep.subr.mxu0 0.0
        %2057 = vmatpush1.msra.mxu0 %v92
        %2058 = vmatprep.subr.mxu0 0.0
        %2059 = vmatpush1.msra.mxu0 %v91
        %2060 = vmatprep.subr.mxu0 0.0
        %2061 = vmatpush1.msra.mxu0 %v90
        %2062 = vmatprep.subr.mxu0 0.0
        %2063 = vmatpush2.msra.mxu0 0.0
        %2064 = vmatprep.subr.mxu0 0.0
        %2065 = vmatpush2.msra.mxu0 0.0
        %2066 = vmatprep.subr.mxu0 0.0
        %2067 = vmatpush2.msra.mxu0 0.0
        %2068 = vmatprep.subr.mxu0 0.0
        %2069 = vmatpush2.msra.mxu0 0.0
        %2070 = vmatprep.subr.mxu0 0.0
        %2071 = vmatpush2.msra.mxu0 0.0
        %2072 = vmatprep.subr.mxu0 0.0
        %2073 = vmatpush2.msra.mxu0 0.0
        %2074 = vmatprep.subr.mxu0 0.0
        %2075 = vmatpush2.msra.mxu0 0.0
        %2076 = vmatprep.subr.mxu0 0.0
        %2077 = vmatpush2.msra.mxu0 0.0
        %2078 = vmatprep.subr.mxu0 0.0
        %2079 = vmatpush2.msra.mxu0 0.0
        %2080 = vmatprep.subr.mxu0 0.0
        %2081 = vmatpush2.msra.mxu0 0.0
        %2082 = vmatprep.subr.mxu0 0.0
        %2083 = vmatpush2.msra.mxu0 0.0
        %2084 = vmatprep.subr.mxu0 0.0
        %2085 = vmatpush2.msra.mxu0 0.0
        %2086 = vmatprep.subr.mxu0 0.0
        %2087 = vmatpush2.msra.mxu0 0.0
        %2088 = vmatprep.subr.mxu0 0.0
        %2089 = vmatpush2.msra.mxu0 0.0
        %2090 = vmatprep.subr.mxu0 0.0
        %2091 = vmatpush2.msra.mxu0 0.0
        %2092 = vmatprep.subr.mxu0 0.0
        %2093 = vmatpush2.msra.mxu0 0.0
        %2094 = vmatprep.mubr.f32.mxu0 0.0
        %2095 = vmatmul.mubr.f32.gmra.mxu0 %v2028
        %v2096 = vpop.f32.mrf.mxu0
        %v2097 = vadd.f32 %v392, %v2096
        %v2098 = vpop.f32.mrf.mxu0
        %2099 = vdwg.mxu0
        %v2100 = vmul.f32 %v385, %v2097
        %v2101 = vadd.f32 %v1948, %v2100
        %v2102 = vmax.f32 %v2101, 0.0
        %v2104 = vsel %vm394, %v2102, 0
        %2106 = vmatprep.subr.mxu0 0.0
        %2107 = vmatpush1.msra.mxu0 0.0
        %2108 = vmatprep.subr.mxu0 0.0
        %2109 = vmatpush1.msra.mxu0 0.0
        %2110 = vmatprep.subr.mxu0 0.0
        %2111 = vmatpush1.msra.mxu0 0.0
        %2112 = vmatprep.subr.mxu0 0.0
        %2113 = vmatpush1.msra.mxu0 0.0
        %2114 = vmatprep.subr.mxu0 0.0
        %2115 = vmatpush1.msra.mxu0 0.0
        %2116 = vmatprep.subr.mxu0 0.0
        %2117 = vmatpush1.msra.mxu0 0.0
        %2118 = vmatprep.subr.mxu0 0.0
        %2119 = vmatpush1.msra.mxu0 0.0
        %2120 = vmatprep.subr.mxu0 0.0
        %2121 = vmatpush1.msra.mxu0 0.0
        %2122 = vmatprep.subr.mxu0 0.0
        %2123 = vmatpush1.msra.mxu0 %v97
        %2124 = vmatprep.subr.mxu0 0.0
        %2125 = vmatpush1.msra.mxu0 %v96
        %2126 = vmatprep.subr.mxu0 0.0
        %2127 = vmatpush1.msra.mxu0 %v95
        %2128 = vmatprep.subr.mxu0 0.0
        %2129 = vmatpush1.msra.mxu0 %v94
        %2130 = vmatprep.subr.mxu0 0.0
        %2131 = vmatpush1.msra.mxu0 %v93
        %2132 = vmatprep.subr.mxu0 0.0
        %2133 = vmatpush1.msra.mxu0 %v92
        %2134 = vmatprep.subr.mxu0 0.0
        %2135 = vmatpush1.msra.mxu0 %v91
        %2136 = vmatprep.subr.mxu0 0.0
        %2137 = vmatpush1.msra.mxu0 %v90
        %2138 = vmatprep.subr.mxu0 0.0
        %2139 = vmatpush2.msra.mxu0 0.0
        %2140 = vmatprep.subr.mxu0 0.0
        %2141 = vmatpush2.msra.mxu0 0.0
        %2142 = vmatprep.subr.mxu0 0.0
        %2143 = vmatpush2.msra.mxu0 0.0
        %2144 = vmatprep.subr.mxu0 0.0
        %2145 = vmatpush2.msra.mxu0 0.0
        %2146 = vmatprep.subr.mxu0 0.0
        %2147 = vmatpush2.msra.mxu0 0.0
        %2148 = vmatprep.subr.mxu0 0.0
        %2149 = vmatpush2.msra.mxu0 0.0
        %2150 = vmatprep.subr.mxu0 0.0
        %2151 = vmatpush2.msra.mxu0 0.0
        %2152 = vmatprep.subr.mxu0 0.0
        %2153 = vmatpush2.msra.mxu0 0.0
        %2154 = vmatprep.subr.mxu0 0.0
        %2155 = vmatpush2.msra.mxu0 0.0
        %2156 = vmatprep.subr.mxu0 0.0
        %2157 = vmatpush2.msra.mxu0 0.0
        %2158 = vmatprep.subr.mxu0 0.0
        %2159 = vmatpush2.msra.mxu0 0.0
        %2160 = vmatprep.subr.mxu0 0.0
        %2161 = vmatpush2.msra.mxu0 0.0
        %2162 = vmatprep.subr.mxu0 0.0
        %2163 = vmatpush2.msra.mxu0 0.0
        %2164 = vmatprep.subr.mxu0 0.0
        %2165 = vmatpush2.msra.mxu0 0.0
        %2166 = vmatprep.subr.mxu0 0.0
        %2167 = vmatpush2.msra.mxu0 0.0
        %2168 = vmatprep.subr.mxu0 0.0
        %2169 = vmatpush2.msra.mxu0 0.0
        %2170 = vmatprep.mubr.f32.mxu0 0.0
        %2171 = vmatmul.mubr.f32.gmra.mxu0 %v2104
        %v2172 = vpop.f32.mrf.mxu0
        %v2173 = vadd.f32 %v392, %v2172
        %v2174 = vpop.f32.mrf.mxu0
        %2175 = vdwg.mxu0
        %v2176 = vmul.f32 %v382, %v2173
        %v2177 = vadd.f32 %v1948, %v2176
        %v2178 = vmax.f32 %v2177, 0.0
        %v2179 = vadd.f32 %v2026, %v2102
        %v2180 = vmul.f32 %v2179, 2.0
        %v2181 = vadd.f32 %v1950, %v2180
        %v2182 = vadd.f32 %v2181, %v2178
        %v2184 = vsel %vm394, %v2182, 0
        %2186 = vmatprep.subr.mxu0 0.0
        %2187 = vmatpush1.msra.mxu0 0.0
        %2188 = vmatprep.subr.mxu0 0.0
        %2189 = vmatpush1.msra.mxu0 0.0
        %2190 = vmatprep.subr.mxu0 0.0
        %2191 = vmatpush1.msra.mxu0 0.0
        %2192 = vmatprep.subr.mxu0 0.0
        %2193 = vmatpush1.msra.mxu0 0.0
        %2194 = vmatprep.subr.mxu0 0.0
        %2195 = vmatpush1.msra.mxu0 0.0
        %2196 = vmatprep.subr.mxu0 0.0
        %2197 = vmatpush1.msra.mxu0 0.0
        %2198 = vmatprep.subr.mxu0 0.0
        %2199 = vmatpush1.msra.mxu0 0.0
        %2200 = vmatprep.subr.mxu0 0.0
        %2201 = vmatpush1.msra.mxu0 0.0
        %2202 = vmatprep.subr.mxu0 0.0
        %2203 = vmatpush1.msra.mxu0 %v97
        %2204 = vmatprep.subr.mxu0 0.0
        %2205 = vmatpush1.msra.mxu0 %v96
        %2206 = vmatprep.subr.mxu0 0.0
        %2207 = vmatpush1.msra.mxu0 %v95
        %2208 = vmatprep.subr.mxu0 0.0
        %2209 = vmatpush1.msra.mxu0 %v94
        %2210 = vmatprep.subr.mxu0 0.0
        %2211 = vmatpush1.msra.mxu0 %v93
        %2212 = vmatprep.subr.mxu0 0.0
        %2213 = vmatpush1.msra.mxu0 %v92
        %2214 = vmatprep.subr.mxu0 0.0
        %2215 = vmatpush1.msra.mxu0 %v91
        %2216 = vmatprep.subr.mxu0 0.0
        %2217 = vmatpush1.msra.mxu0 %v90
        %2218 = vmatprep.subr.mxu0 0.0
        %2219 = vmatpush2.msra.mxu0 0.0
        %2220 = vmatprep.subr.mxu0 0.0
        %2221 = vmatpush2.msra.mxu0 0.0
        %2222 = vmatprep.subr.mxu0 0.0
        %2223 = vmatpush2.msra.mxu0 0.0
        %2224 = vmatprep.subr.mxu0 0.0
        %2225 = vmatpush2.msra.mxu0 0.0
        %2226 = vmatprep.subr.mxu0 0.0
        %2227 = vmatpush2.msra.mxu0 0.0
        %2228 = vmatprep.subr.mxu0 0.0
        %2229 = vmatpush2.msra.mxu0 0.0
        %2230 = vmatprep.subr.mxu0 0.0
        %2231 = vmatpush2.msra.mxu0 0.0
        %2232 = vmatprep.subr.mxu0 0.0
        %2233 = vmatpush2.msra.mxu0 0.0
        %2234 = vmatprep.subr.mxu0 0.0
        %2235 = vmatpush2.msra.mxu0 0.0
        %2236 = vmatprep.subr.mxu0 0.0
        %2237 = vmatpush2.msra.mxu0 0.0
        %2238 = vmatprep.subr.mxu0 0.0
        %2239 = vmatpush2.msra.mxu0 0.0
        %2240 = vmatprep.subr.mxu0 0.0
        %2241 = vmatpush2.msra.mxu0 0.0
        %2242 = vmatprep.subr.mxu0 0.0
        %2243 = vmatpush2.msra.mxu0 0.0
        %2244 = vmatprep.subr.mxu0 0.0
        %2245 = vmatpush2.msra.mxu0 0.0
        %2246 = vmatprep.subr.mxu0 0.0
        %2247 = vmatpush2.msra.mxu0 0.0
        %2248 = vmatprep.subr.mxu0 0.0
        %2249 = vmatpush2.msra.mxu0 0.0
        %2250 = vmatprep.mubr.f32.mxu0 0.0
        %2251 = vmatmul.mubr.f32.gmra.mxu0 %v2184
        %v2252 = vpop.f32.mrf.mxu0
        %v2253 = vadd.f32 0.0, %v2252
        %v2254 = vpop.f32.mrf.mxu0
        %2255 = vdwg.mxu0
        %v2256 = vmul.f32 %v386, %v2253
        %v2257 = vadd.f32 %v1948, %v2256
        %v2258 = vadd.f32 %v2257, %v706
        %v2259 = vadd.f32 %v1949, %v2182
        %v2260 = vmax.f32 %v2258, 0.0
        %v2262 = vsel %vm394, %v2260, 0
        %2264 = vmatprep.subr.mxu0 0.0
        %2265 = vmatpush1.msra.mxu0 0.0
        %2266 = vmatprep.subr.mxu0 0.0
        %2267 = vmatpush1.msra.mxu0 0.0
        %2268 = vmatprep.subr.mxu0 0.0
        %2269 = vmatpush1.msra.mxu0 0.0
        %2270 = vmatprep.subr.mxu0 0.0
        %2271 = vmatpush1.msra.mxu0 0.0
        %2272 = vmatprep.subr.mxu0 0.0
        %2273 = vmatpush1.msra.mxu0 0.0
        %2274 = vmatprep.subr.mxu0 0.0
        %2275 = vmatpush1.msra.mxu0 0.0
        %2276 = vmatprep.subr.mxu0 0.0
        %2277 = vmatpush1.msra.mxu0 0.0
        %2278 = vmatprep.subr.mxu0 0.0
        %2279 = vmatpush1.msra.mxu0 0.0
        %2280 = vmatprep.subr.mxu0 0.0
        %2281 = vmatpush1.msra.mxu0 %v97
        %2282 = vmatprep.subr.mxu0 0.0
        %2283 = vmatpush1.msra.mxu0 %v96
        %2284 = vmatprep.subr.mxu0 0.0
        %2285 = vmatpush1.msra.mxu0 %v95
        %2286 = vmatprep.subr.mxu0 0.0
        %2287 = vmatpush1.msra.mxu0 %v94
        %2288 = vmatprep.subr.mxu0 0.0
        %2289 = vmatpush1.msra.mxu0 %v93
        %2290 = vmatprep.subr.mxu0 0.0
        %2291 = vmatpush1.msra.mxu0 %v92
        %2292 = vmatprep.subr.mxu0 0.0
        %2293 = vmatpush1.msra.mxu0 %v91
        %2294 = vmatprep.subr.mxu0 0.0
        %2295 = vmatpush1.msra.mxu0 %v90
        %2296 = vmatprep.subr.mxu0 0.0
        %2297 = vmatpush2.msra.mxu0 0.0
        %2298 = vmatprep.subr.mxu0 0.0
        %2299 = vmatpush2.msra.mxu0 0.0
        %2300 = vmatprep.subr.mxu0 0.0
        %2301 = vmatpush2.msra.mxu0 0.0
        %2302 = vmatprep.subr.mxu0 0.0
        %2303 = vmatpush2.msra.mxu0 0.0
        %2304 = vmatprep.subr.mxu0 0.0
        %2305 = vmatpush2.msra.mxu0 0.0
        %2306 = vmatprep.subr.mxu0 0.0
        %2307 = vmatpush2.msra.mxu0 0.0
        %2308 = vmatprep.subr.mxu0 0.0
        %2309 = vmatpush2.msra.mxu0 0.0
        %2310 = vmatprep.subr.mxu0 0.0
        %2311 = vmatpush2.msra.mxu0 0.0
        %2312 = vmatprep.subr.mxu0 0.0
        %2313 = vmatpush2.msra.mxu0 0.0
        %2314 = vmatprep.subr.mxu0 0.0
        %2315 = vmatpush2.msra.mxu0 0.0
        %2316 = vmatprep.subr.mxu0 0.0
        %2317 = vmatpush2.msra.mxu0 0.0
        %2318 = vmatprep.subr.mxu0 0.0
        %2319 = vmatpush2.msra.mxu0 0.0
        %2320 = vmatprep.subr.mxu0 0.0
        %2321 = vmatpush2.msra.mxu0 0.0
        %2322 = vmatprep.subr.mxu0 0.0
        %2323 = vmatpush2.msra.mxu0 0.0
        %2324 = vmatprep.subr.mxu0 0.0
        %2325 = vmatpush2.msra.mxu0 0.0
        %2326 = vmatprep.subr.mxu0 0.0
        %2327 = vmatpush2.msra.mxu0 0.0
        %2328 = vmatprep.mubr.f32.mxu0 0.0
        %2329 = vmatmul.mubr.f32.gmra.mxu0 %v2262
        %v2330 = vpop.f32.mrf.mxu0
        %v2331 = vadd.f32 %v392, %v2330
        %v2332 = vpop.f32.mrf.mxu0
        %2333 = vdwg.mxu0
        %v2334 = vmul.f32 %v385, %v2331
        %v2335 = vadd.f32 %v2258, %v2334
        %v2336 = vmax.f32 %v2335, 0.0
        %v2338 = vsel %vm394, %v2336, 0
        %2340 = vmatprep.subr.mxu0 0.0
        %2341 = vmatpush1.msra.mxu0 0.0
        %2342 = vmatprep.subr.mxu0 0.0
        %2343 = vmatpush1.msra.mxu0 0.0
        %2344 = vmatprep.subr.mxu0 0.0
        %2345 = vmatpush1.msra.mxu0 0.0
        %2346 = vmatprep.subr.mxu0 0.0
        %2347 = vmatpush1.msra.mxu0 0.0
        %2348 = vmatprep.subr.mxu0 0.0
        %2349 = vmatpush1.msra.mxu0 0.0
        %2350 = vmatprep.subr.mxu0 0.0
        %2351 = vmatpush1.msra.mxu0 0.0
        %2352 = vmatprep.subr.mxu0 0.0
        %2353 = vmatpush1.msra.mxu0 0.0
        %2354 = vmatprep.subr.mxu0 0.0
        %2355 = vmatpush1.msra.mxu0 0.0
        %2356 = vmatprep.subr.mxu0 0.0
        %2357 = vmatpush1.msra.mxu0 %v97
        %2358 = vmatprep.subr.mxu0 0.0
        %2359 = vmatpush1.msra.mxu0 %v96
        %2360 = vmatprep.subr.mxu0 0.0
        %2361 = vmatpush1.msra.mxu0 %v95
        %2362 = vmatprep.subr.mxu0 0.0
        %2363 = vmatpush1.msra.mxu0 %v94
        %2364 = vmatprep.subr.mxu0 0.0
        %2365 = vmatpush1.msra.mxu0 %v93
        %2366 = vmatprep.subr.mxu0 0.0
        %2367 = vmatpush1.msra.mxu0 %v92
        %2368 = vmatprep.subr.mxu0 0.0
        %2369 = vmatpush1.msra.mxu0 %v91
        %2370 = vmatprep.subr.mxu0 0.0
        %2371 = vmatpush1.msra.mxu0 %v90
        %2372 = vmatprep.subr.mxu0 0.0
        %2373 = vmatpush2.msra.mxu0 0.0
        %2374 = vmatprep.subr.mxu0 0.0
        %2375 = vmatpush2.msra.mxu0 0.0
        %2376 = vmatprep.subr.mxu0 0.0
        %2377 = vmatpush2.msra.mxu0 0.0
        %2378 = vmatprep.subr.mxu0 0.0
        %2379 = vmatpush2.msra.mxu0 0.0
        %2380 = vmatprep.subr.mxu0 0.0
        %2381 = vmatpush2.msra.mxu0 0.0
        %2382 = vmatprep.subr.mxu0 0.0
        %2383 = vmatpush2.msra.mxu0 0.0
        %2384 = vmatprep.subr.mxu0 0.0
        %2385 = vmatpush2.msra.mxu0 0.0
        %2386 = vmatprep.subr.mxu0 0.0
        %2387 = vmatpush2.msra.mxu0 0.0
        %2388 = vmatprep.subr.mxu0 0.0
        %2389 = vmatpush2.msra.mxu0 0.0
        %2390 = vmatprep.subr.mxu0 0.0
        %2391 = vmatpush2.msra.mxu0 0.0
        %2392 = vmatprep.subr.mxu0 0.0
        %2393 = vmatpush2.msra.mxu0 0.0
        %2394 = vmatprep.subr.mxu0 0.0
        %2395 = vmatpush2.msra.mxu0 0.0
        %2396 = vmatprep.subr.mxu0 0.0
        %2397 = vmatpush2.msra.mxu0 0.0
        %2398 = vmatprep.subr.mxu0 0.0
        %2399 = vmatpush2.msra.mxu0 0.0
        %2400 = vmatprep.subr.mxu0 0.0
        %2401 = vmatpush2.msra.mxu0 0.0
        %2402 = vmatprep.subr.mxu0 0.0
        %2403 = vmatpush2.msra.mxu0 0.0
        %2404 = vmatprep.mubr.f32.mxu0 0.0
        %2405 = vmatmul.mubr.f32.gmra.mxu0 %v2338
        %v2406 = vpop.f32.mrf.mxu0
        %v2407 = vadd.f32 %v392, %v2406
        %v2408 = vpop.f32.mrf.mxu0
        %2409 = vdwg.mxu0
        %v2410 = vmul.f32 %v385, %v2407
        %v2411 = vadd.f32 %v2258, %v2410
        %v2412 = vmax.f32 %v2411, 0.0
        %v2414 = vsel %vm394, %v2412, 0
        %2416 = vmatprep.subr.mxu0 0.0
        %2417 = vmatpush1.msra.mxu0 0.0
        %2418 = vmatprep.subr.mxu0 0.0
        %2419 = vmatpush1.msra.mxu0 0.0
        %2420 = vmatprep.subr.mxu0 0.0
        %2421 = vmatpush1.msra.mxu0 0.0
        %2422 = vmatprep.subr.mxu0 0.0
        %2423 = vmatpush1.msra.mxu0 0.0
        %2424 = vmatprep.subr.mxu0 0.0
        %2425 = vmatpush1.msra.mxu0 0.0
        %2426 = vmatprep.subr.mxu0 0.0
        %2427 = vmatpush1.msra.mxu0 0.0
        %2428 = vmatprep.subr.mxu0 0.0
        %2429 = vmatpush1.msra.mxu0 0.0
        %2430 = vmatprep.subr.mxu0 0.0
        %2431 = vmatpush1.msra.mxu0 0.0
        %2432 = vmatprep.subr.mxu0 0.0
        %2433 = vmatpush1.msra.mxu0 %v97
        %2434 = vmatprep.subr.mxu0 0.0
        %2435 = vmatpush1.msra.mxu0 %v96
        %2436 = vmatprep.subr.mxu0 0.0
        %2437 = vmatpush1.msra.mxu0 %v95
        %2438 = vmatprep.subr.mxu0 0.0
        %2439 = vmatpush1.msra.mxu0 %v94
        %2440 = vmatprep.subr.mxu0 0.0
        %2441 = vmatpush1.msra.mxu0 %v93
        %2442 = vmatprep.subr.mxu0 0.0
        %2443 = vmatpush1.msra.mxu0 %v92
        %2444 = vmatprep.subr.mxu0 0.0
        %2445 = vmatpush1.msra.mxu0 %v91
        %2446 = vmatprep.subr.mxu0 0.0
        %2447 = vmatpush1.msra.mxu0 %v90
        %2448 = vmatprep.subr.mxu0 0.0
        %2449 = vmatpush2.msra.mxu0 0.0
        %2450 = vmatprep.subr.mxu0 0.0
        %2451 = vmatpush2.msra.mxu0 0.0
        %2452 = vmatprep.subr.mxu0 0.0
        %2453 = vmatpush2.msra.mxu0 0.0
        %2454 = vmatprep.subr.mxu0 0.0
        %2455 = vmatpush2.msra.mxu0 0.0
        %2456 = vmatprep.subr.mxu0 0.0
        %2457 = vmatpush2.msra.mxu0 0.0
        %2458 = vmatprep.subr.mxu0 0.0
        %2459 = vmatpush2.msra.mxu0 0.0
        %2460 = vmatprep.subr.mxu0 0.0
        %2461 = vmatpush2.msra.mxu0 0.0
        %2462 = vmatprep.subr.mxu0 0.0
        %2463 = vmatpush2.msra.mxu0 0.0
        %2464 = vmatprep.subr.mxu0 0.0
        %2465 = vmatpush2.msra.mxu0 0.0
        %2466 = vmatprep.subr.mxu0 0.0
        %2467 = vmatpush2.msra.mxu0 0.0
        %2468 = vmatprep.subr.mxu0 0.0
        %2469 = vmatpush2.msra.mxu0 0.0
        %2470 = vmatprep.subr.mxu0 0.0
        %2471 = vmatpush2.msra.mxu0 0.0
        %2472 = vmatprep.subr.mxu0 0.0
        %2473 = vmatpush2.msra.mxu0 0.0
        %2474 = vmatprep.subr.mxu0 0.0
        %2475 = vmatpush2.msra.mxu0 0.0
        %2476 = vmatprep.subr.mxu0 0.0
        %2477 = vmatpush2.msra.mxu0 0.0
        %2478 = vmatprep.subr.mxu0 0.0
        %2479 = vmatpush2.msra.mxu0 0.0
        %2480 = vmatprep.mubr.f32.mxu0 0.0
        %2481 = vmatmul.mubr.f32.gmra.mxu0 %v2414
        %v2482 = vpop.f32.mrf.mxu0
        %v2483 = vadd.f32 %v392, %v2482
        %v2484 = vpop.f32.mrf.mxu0
        %2485 = vdwg.mxu0
        %v2486 = vmul.f32 %v382, %v2483
        %v2487 = vadd.f32 %v2258, %v2486
        %v2488 = vmax.f32 %v2487, 0.0
        %v2489 = vadd.f32 %v2336, %v2412
        %v2490 = vmul.f32 %v2489, 2.0
        %v2491 = vadd.f32 %v2260, %v2490
        %v2492 = vadd.f32 %v2491, %v2488
        %v2494 = vsel %vm394, %v2492, 0
        %2496 = vmatprep.subr.mxu0 0.0
        %2497 = vmatpush1.msra.mxu0 0.0
        %2498 = vmatprep.subr.mxu0 0.0
        %2499 = vmatpush1.msra.mxu0 0.0
        %2500 = vmatprep.subr.mxu0 0.0
        %2501 = vmatpush1.msra.mxu0 0.0
        %2502 = vmatprep.subr.mxu0 0.0
        %2503 = vmatpush1.msra.mxu0 0.0
        %2504 = vmatprep.subr.mxu0 0.0
        %2505 = vmatpush1.msra.mxu0 0.0
        %2506 = vmatprep.subr.mxu0 0.0
        %2507 = vmatpush1.msra.mxu0 0.0
        %2508 = vmatprep.subr.mxu0 0.0
        %2509 = vmatpush1.msra.mxu0 0.0
        %2510 = vmatprep.subr.mxu0 0.0
        %2511 = vmatpush1.msra.mxu0 0.0
        %2512 = vmatprep.subr.mxu0 0.0
        %2513 = vmatpush1.msra.mxu0 %v97
        %2514 = vmatprep.subr.mxu0 0.0
        %2515 = vmatpush1.msra.mxu0 %v96
        %2516 = vmatprep.subr.mxu0 0.0
        %2517 = vmatpush1.msra.mxu0 %v95
        %2518 = vmatprep.subr.mxu0 0.0
        %2519 = vmatpush1.msra.mxu0 %v94
        %2520 = vmatprep.subr.mxu0 0.0
        %2521 = vmatpush1.msra.mxu0 %v93
        %2522 = vmatprep.subr.mxu0 0.0
        %2523 = vmatpush1.msra.mxu0 %v92
        %2524 = vmatprep.subr.mxu0 0.0
        %2525 = vmatpush1.msra.mxu0 %v91
        %2526 = vmatprep.subr.mxu0 0.0
        %2527 = vmatpush1.msra.mxu0 %v90
        %2528 = vmatprep.subr.mxu0 0.0
        %2529 = vmatpush2.msra.mxu0 0.0
        %2530 = vmatprep.subr.mxu0 0.0
        %2531 = vmatpush2.msra.mxu0 0.0
        %2532 = vmatprep.subr.mxu0 0.0
        %2533 = vmatpush2.msra.mxu0 0.0
        %2534 = vmatprep.subr.mxu0 0.0
        %2535 = vmatpush2.msra.mxu0 0.0
        %2536 = vmatprep.subr.mxu0 0.0
        %2537 = vmatpush2.msra.mxu0 0.0
        %2538 = vmatprep.subr.mxu0 0.0
        %2539 = vmatpush2.msra.mxu0 0.0
        %2540 = vmatprep.subr.mxu0 0.0
        %2541 = vmatpush2.msra.mxu0 0.0
        %2542 = vmatprep.subr.mxu0 0.0
        %2543 = vmatpush2.msra.mxu0 0.0
        %2544 = vmatprep.subr.mxu0 0.0
        %2545 = vmatpush2.msra.mxu0 0.0
        %2546 = vmatprep.subr.mxu0 0.0
        %2547 = vmatpush2.msra.mxu0 0.0
        %2548 = vmatprep.subr.mxu0 0.0
        %2549 = vmatpush2.msra.mxu0 0.0
        %2550 = vmatprep.subr.mxu0 0.0
        %2551 = vmatpush2.msra.mxu0 0.0
        %2552 = vmatprep.subr.mxu0 0.0
        %2553 = vmatpush2.msra.mxu0 0.0
        %2554 = vmatprep.subr.mxu0 0.0
        %2555 = vmatpush2.msra.mxu0 0.0
        %2556 = vmatprep.subr.mxu0 0.0
        %2557 = vmatpush2.msra.mxu0 0.0
        %2558 = vmatprep.subr.mxu0 0.0
        %2559 = vmatpush2.msra.mxu0 0.0
        %2560 = vmatprep.mubr.f32.mxu0 0.0
        %2561 = vmatmul.mubr.f32.gmra.mxu0 %v2494
        %v2562 = vpop.f32.mrf.mxu0
        %v2563 = vadd.f32 0.0, %v2562
        %v2564 = vpop.f32.mrf.mxu0
        %2565 = vdwg.mxu0
        %v2566 = vmul.f32 %v386, %v2563
        %v2567 = vadd.f32 %v2258, %v2566
        %v2568 = vadd.f32 %v2567, %v706
        %v2569 = vadd.f32 %v2259, %v2492
        %v2570 = vmax.f32 %v2568, 0.0
        %v2572 = vsel %vm394, %v2570, 0
        %2574 = vmatprep.subr.mxu0 0.0
        %2575 = vmatpush1.msra.mxu0 0.0
        %2576 = vmatprep.subr.mxu0 0.0
        %2577 = vmatpush1.msra.mxu0 0.0
        %2578 = vmatprep.subr.mxu0 0.0
        %2579 = vmatpush1.msra.mxu0 0.0
        %2580 = vmatprep.subr.mxu0 0.0
        %2581 = vmatpush1.msra.mxu0 0.0
        %2582 = vmatprep.subr.mxu0 0.0
        %2583 = vmatpush1.msra.mxu0 0.0
        %2584 = vmatprep.subr.mxu0 0.0
        %2585 = vmatpush1.msra.mxu0 0.0
        %2586 = vmatprep.subr.mxu0 0.0
        %2587 = vmatpush1.msra.mxu0 0.0
        %2588 = vmatprep.subr.mxu0 0.0
        %2589 = vmatpush1.msra.mxu0 0.0
        %2590 = vmatprep.subr.mxu0 0.0
        %2591 = vmatpush1.msra.mxu0 %v97
        %2592 = vmatprep.subr.mxu0 0.0
        %2593 = vmatpush1.msra.mxu0 %v96
        %2594 = vmatprep.subr.mxu0 0.0
        %2595 = vmatpush1.msra.mxu0 %v95
        %2596 = vmatprep.subr.mxu0 0.0
        %2597 = vmatpush1.msra.mxu0 %v94
        %2598 = vmatprep.subr.mxu0 0.0
        %2599 = vmatpush1.msra.mxu0 %v93
        %2600 = vmatprep.subr.mxu0 0.0
        %2601 = vmatpush1.msra.mxu0 %v92
        %2602 = vmatprep.subr.mxu0 0.0
        %2603 = vmatpush1.msra.mxu0 %v91
        %2604 = vmatprep.subr.mxu0 0.0
        %2605 = vmatpush1.msra.mxu0 %v90
        %2606 = vmatprep.subr.mxu0 0.0
        %2607 = vmatpush2.msra.mxu0 0.0
        %2608 = vmatprep.subr.mxu0 0.0
        %2609 = vmatpush2.msra.mxu0 0.0
        %2610 = vmatprep.subr.mxu0 0.0
        %2611 = vmatpush2.msra.mxu0 0.0
        %2612 = vmatprep.subr.mxu0 0.0
        %2613 = vmatpush2.msra.mxu0 0.0
        %2614 = vmatprep.subr.mxu0 0.0
        %2615 = vmatpush2.msra.mxu0 0.0
        %2616 = vmatprep.subr.mxu0 0.0
        %2617 = vmatpush2.msra.mxu0 0.0
        %2618 = vmatprep.subr.mxu0 0.0
        %2619 = vmatpush2.msra.mxu0 0.0
        %2620 = vmatprep.subr.mxu0 0.0
        %2621 = vmatpush2.msra.mxu0 0.0
        %2622 = vmatprep.subr.mxu0 0.0
        %2623 = vmatpush2.msra.mxu0 0.0
        %2624 = vmatprep.subr.mxu0 0.0
        %2625 = vmatpush2.msra.mxu0 0.0
        %2626 = vmatprep.subr.mxu0 0.0
        %2627 = vmatpush2.msra.mxu0 0.0
        %2628 = vmatprep.subr.mxu0 0.0
        %2629 = vmatpush2.msra.mxu0 0.0
        %2630 = vmatprep.subr.mxu0 0.0
        %2631 = vmatpush2.msra.mxu0 0.0
        %2632 = vmatprep.subr.mxu0 0.0
        %2633 = vmatpush2.msra.mxu0 0.0
        %2634 = vmatprep.subr.mxu0 0.0
        %2635 = vmatpush2.msra.mxu0 0.0
        %2636 = vmatprep.subr.mxu0 0.0
        %2637 = vmatpush2.msra.mxu0 0.0
        %2638 = vmatprep.mubr.f32.mxu0 0.0
        %2639 = vmatmul.mubr.f32.gmra.mxu0 %v2572
        %v2640 = vpop.f32.mrf.mxu0
        %v2641 = vadd.f32 %v392, %v2640
        %v2642 = vpop.f32.mrf.mxu0
        %2643 = vdwg.mxu0
        %v2644 = vmul.f32 %v385, %v2641
        %v2645 = vadd.f32 %v2568, %v2644
        %v2646 = vmax.f32 %v2645, 0.0
        %v2648 = vsel %vm394, %v2646, 0
        %2650 = vmatprep.subr.mxu0 0.0
        %2651 = vmatpush1.msra.mxu0 0.0
        %2652 = vmatprep.subr.mxu0 0.0
        %2653 = vmatpush1.msra.mxu0 0.0
        %2654 = vmatprep.subr.mxu0 0.0
        %2655 = vmatpush1.msra.mxu0 0.0
        %2656 = vmatprep.subr.mxu0 0.0
        %2657 = vmatpush1.msra.mxu0 0.0
        %2658 = vmatprep.subr.mxu0 0.0
        %2659 = vmatpush1.msra.mxu0 0.0
        %2660 = vmatprep.subr.mxu0 0.0
        %2661 = vmatpush1.msra.mxu0 0.0
        %2662 = vmatprep.subr.mxu0 0.0
        %2663 = vmatpush1.msra.mxu0 0.0
        %2664 = vmatprep.subr.mxu0 0.0
        %2665 = vmatpush1.msra.mxu0 0.0
        %2666 = vmatprep.subr.mxu0 0.0
        %2667 = vmatpush1.msra.mxu0 %v97
        %2668 = vmatprep.subr.mxu0 0.0
        %2669 = vmatpush1.msra.mxu0 %v96
        %2670 = vmatprep.subr.mxu0 0.0
        %2671 = vmatpush1.msra.mxu0 %v95
        %2672 = vmatprep.subr.mxu0 0.0
        %2673 = vmatpush1.msra.mxu0 %v94
        %2674 = vmatprep.subr.mxu0 0.0
        %2675 = vmatpush1.msra.mxu0 %v93
        %2676 = vmatprep.subr.mxu0 0.0
        %2677 = vmatpush1.msra.mxu0 %v92
        %2678 = vmatprep.subr.mxu0 0.0
        %2679 = vmatpush1.msra.mxu0 %v91
        %2680 = vmatprep.subr.mxu0 0.0
        %2681 = vmatpush1.msra.mxu0 %v90
        %2682 = vmatprep.subr.mxu0 0.0
        %2683 = vmatpush2.msra.mxu0 0.0
        %2684 = vmatprep.subr.mxu0 0.0
        %2685 = vmatpush2.msra.mxu0 0.0
        %2686 = vmatprep.subr.mxu0 0.0
        %2687 = vmatpush2.msra.mxu0 0.0
        %2688 = vmatprep.subr.mxu0 0.0
        %2689 = vmatpush2.msra.mxu0 0.0
        %2690 = vmatprep.subr.mxu0 0.0
        %2691 = vmatpush2.msra.mxu0 0.0
        %2692 = vmatprep.subr.mxu0 0.0
        %2693 = vmatpush2.msra.mxu0 0.0
        %2694 = vmatprep.subr.mxu0 0.0
        %2695 = vmatpush2.msra.mxu0 0.0
        %2696 = vmatprep.subr.mxu0 0.0
        %2697 = vmatpush2.msra.mxu0 0.0
        %2698 = vmatprep.subr.mxu0 0.0
        %2699 = vmatpush2.msra.mxu0 0.0
        %2700 = vmatprep.subr.mxu0 0.0
        %2701 = vmatpush2.msra.mxu0 0.0
        %2702 = vmatprep.subr.mxu0 0.0
        %2703 = vmatpush2.msra.mxu0 0.0
        %2704 = vmatprep.subr.mxu0 0.0
        %2705 = vmatpush2.msra.mxu0 0.0
        %2706 = vmatprep.subr.mxu0 0.0
        %2707 = vmatpush2.msra.mxu0 0.0
        %2708 = vmatprep.subr.mxu0 0.0
        %2709 = vmatpush2.msra.mxu0 0.0
        %2710 = vmatprep.subr.mxu0 0.0
        %2711 = vmatpush2.msra.mxu0 0.0
        %2712 = vmatprep.subr.mxu0 0.0
        %2713 = vmatpush2.msra.mxu0 0.0
        %2714 = vmatprep.mubr.f32.mxu0 0.0
        %2715 = vmatmul.mubr.f32.gmra.mxu0 %v2648
        %v2716 = vpop.f32.mrf.mxu0
        %v2717 = vadd.f32 %v392, %v2716
        %v2718 = vpop.f32.mrf.mxu0
        %2719 = vdwg.mxu0
        %v2720 = vmul.f32 %v385, %v2717
        %v2721 = vadd.f32 %v2568, %v2720
        %v2722 = vmax.f32 %v2721, 0.0
        %v2724 = vsel %vm394, %v2722, 0
        %2726 = vmatprep.subr.mxu0 0.0
        %2727 = vmatpush1.msra.mxu0 0.0
        %2728 = vmatprep.subr.mxu0 0.0
        %2729 = vmatpush1.msra.mxu0 0.0
        %2730 = vmatprep.subr.mxu0 0.0
        %2731 = vmatpush1.msra.mxu0 0.0
        %2732 = vmatprep.subr.mxu0 0.0
        %2733 = vmatpush1.msra.mxu0 0.0
        %2734 = vmatprep.subr.mxu0 0.0
        %2735 = vmatpush1.msra.mxu0 0.0
        %2736 = vmatprep.subr.mxu0 0.0
        %2737 = vmatpush1.msra.mxu0 0.0
        %2738 = vmatprep.subr.mxu0 0.0
        %2739 = vmatpush1.msra.mxu0 0.0
        %2740 = vmatprep.subr.mxu0 0.0
        %2741 = vmatpush1.msra.mxu0 0.0
        %2742 = vmatprep.subr.mxu0 0.0
        %2743 = vmatpush1.msra.mxu0 %v97
        %2744 = vmatprep.subr.mxu0 0.0
        %2745 = vmatpush1.msra.mxu0 %v96
        %2746 = vmatprep.subr.mxu0 0.0
        %2747 = vmatpush1.msra.mxu0 %v95
        %2748 = vmatprep.subr.mxu0 0.0
        %2749 = vmatpush1.msra.mxu0 %v94
        %2750 = vmatprep.subr.mxu0 0.0
        %2751 = vmatpush1.msra.mxu0 %v93
        %2752 = vmatprep.subr.mxu0 0.0
        %2753 = vmatpush1.msra.mxu0 %v92
        %2754 = vmatprep.subr.mxu0 0.0
        %2755 = vmatpush1.msra.mxu0 %v91
        %2756 = vmatprep.subr.mxu0 0.0
        %2757 = vmatpush1.msra.mxu0 %v90
        %2758 = vmatprep.subr.mxu0 0.0
        %2759 = vmatpush2.msra.mxu0 0.0
        %2760 = vmatprep.subr.mxu0 0.0
        %2761 = vmatpush2.msra.mxu0 0.0
        %2762 = vmatprep.subr.mxu0 0.0
        %2763 = vmatpush2.msra.mxu0 0.0
        %2764 = vmatprep.subr.mxu0 0.0
        %2765 = vmatpush2.msra.mxu0 0.0
        %2766 = vmatprep.subr.mxu0 0.0
        %2767 = vmatpush2.msra.mxu0 0.0
        %2768 = vmatprep.subr.mxu0 0.0
        %2769 = vmatpush2.msra.mxu0 0.0
        %2770 = vmatprep.subr.mxu0 0.0
        %2771 = vmatpush2.msra.mxu0 0.0
        %2772 = vmatprep.subr.mxu0 0.0
        %2773 = vmatpush2.msra.mxu0 0.0
        %2774 = vmatprep.subr.mxu0 0.0
        %2775 = vmatpush2.msra.mxu0 0.0
        %2776 = vmatprep.subr.mxu0 0.0
        %2777 = vmatpush2.msra.mxu0 0.0
        %2778 = vmatprep.subr.mxu0 0.0
        %2779 = vmatpush2.msra.mxu0 0.0
        %2780 = vmatprep.subr.mxu0 0.0
        %2781 = vmatpush2.msra.mxu0 0.0
        %2782 = vmatprep.subr.mxu0 0.0
        %2783 = vmatpush2.msra.mxu0 0.0
        %2784 = vmatprep.subr.mxu0 0.0
        %2785 = vmatpush2.msra.mxu0 0.0
        %2786 = vmatprep.subr.mxu0 0.0
        %2787 = vmatpush2.msra.mxu0 0.0
        %2788 = vmatprep.subr.mxu0 0.0
        %2789 = vmatpush2.msra.mxu0 0.0
        %2790 = vmatprep.mubr.f32.mxu0 0.0
        %2791 = vmatmul.mubr.f32.gmra.mxu0 %v2724
        %v2792 = vpop.f32.mrf.mxu0
        %v2793 = vadd.f32 %v392, %v2792
        %v2794 = vpop.f32.mrf.mxu0
        %2795 = vdwg.mxu0
        %v2796 = vmul.f32 %v382, %v2793
        %v2797 = vadd.f32 %v2568, %v2796
        %v2798 = vmax.f32 %v2797, 0.0
        %v2799 = vadd.f32 %v2646, %v2722
        %v2800 = vmul.f32 %v2799, 2.0
        %v2801 = vadd.f32 %v2570, %v2800
        %v2802 = vadd.f32 %v2801, %v2798
        %v2804 = vsel %vm394, %v2802, 0
        %2806 = vmatprep.subr.mxu0 0.0
        %2807 = vmatpush1.msra.mxu0 0.0
        %2808 = vmatprep.subr.mxu0 0.0
        %2809 = vmatpush1.msra.mxu0 0.0
        %2810 = vmatprep.subr.mxu0 0.0
        %2811 = vmatpush1.msra.mxu0 0.0
        %2812 = vmatprep.subr.mxu0 0.0
        %2813 = vmatpush1.msra.mxu0 0.0
        %2814 = vmatprep.subr.mxu0 0.0
        %2815 = vmatpush1.msra.mxu0 0.0
        %2816 = vmatprep.subr.mxu0 0.0
        %2817 = vmatpush1.msra.mxu0 0.0
        %2818 = vmatprep.subr.mxu0 0.0
        %2819 = vmatpush1.msra.mxu0 0.0
        %2820 = vmatprep.subr.mxu0 0.0
        %2821 = vmatpush1.msra.mxu0 0.0
        %2822 = vmatprep.subr.mxu0 0.0
        %2823 = vmatpush1.msra.mxu0 %v97
        %2824 = vmatprep.subr.mxu0 0.0
        %2825 = vmatpush1.msra.mxu0 %v96
        %2826 = vmatprep.subr.mxu0 0.0
        %2827 = vmatpush1.msra.mxu0 %v95
        %2828 = vmatprep.subr.mxu0 0.0
        %2829 = vmatpush1.msra.mxu0 %v94
        %2830 = vmatprep.subr.mxu0 0.0
        %2831 = vmatpush1.msra.mxu0 %v93
        %2832 = vmatprep.subr.mxu0 0.0
        %2833 = vmatpush1.msra.mxu0 %v92
        %2834 = vmatprep.subr.mxu0 0.0
        %2835 = vmatpush1.msra.mxu0 %v91
        %2836 = vmatprep.subr.mxu0 0.0
        %2837 = vmatpush1.msra.mxu0 %v90
        %2838 = vmatprep.subr.mxu0 0.0
        %2839 = vmatpush2.msra.mxu0 0.0
        %2840 = vmatprep.subr.mxu0 0.0
        %2841 = vmatpush2.msra.mxu0 0.0
        %2842 = vmatprep.subr.mxu0 0.0
        %2843 = vmatpush2.msra.mxu0 0.0
        %2844 = vmatprep.subr.mxu0 0.0
        %2845 = vmatpush2.msra.mxu0 0.0
        %2846 = vmatprep.subr.mxu0 0.0
        %2847 = vmatpush2.msra.mxu0 0.0
        %2848 = vmatprep.subr.mxu0 0.0
        %2849 = vmatpush2.msra.mxu0 0.0
        %2850 = vmatprep.subr.mxu0 0.0
        %2851 = vmatpush2.msra.mxu0 0.0
        %2852 = vmatprep.subr.mxu0 0.0
        %2853 = vmatpush2.msra.mxu0 0.0
        %2854 = vmatprep.subr.mxu0 0.0
        %2855 = vmatpush2.msra.mxu0 0.0
        %2856 = vmatprep.subr.mxu0 0.0
        %2857 = vmatpush2.msra.mxu0 0.0
        %2858 = vmatprep.subr.mxu0 0.0
        %2859 = vmatpush2.msra.mxu0 0.0
        %2860 = vmatprep.subr.mxu0 0.0
        %2861 = vmatpush2.msra.mxu0 0.0
        %2862 = vmatprep.subr.mxu0 0.0
        %2863 = vmatpush2.msra.mxu0 0.0
        %2864 = vmatprep.subr.mxu0 0.0
        %2865 = vmatpush2.msra.mxu0 0.0
        %2866 = vmatprep.subr.mxu0 0.0
        %2867 = vmatpush2.msra.mxu0 0.0
        %2868 = vmatprep.subr.mxu0 0.0
        %2869 = vmatpush2.msra.mxu0 0.0
        %2870 = vmatprep.mubr.f32.mxu0 0.0
        %2871 = vmatmul.mubr.f32.gmra.mxu0 %v2804
        %v2872 = vpop.f32.mrf.mxu0
        %v2873 = vadd.f32 0.0, %v2872
        %v2874 = vpop.f32.mrf.mxu0
        %2875 = vdwg.mxu0
        %v2876 = vmul.f32 %v386, %v2873
        %v2877 = vadd.f32 %v2568, %v2876
        %v2878 = vadd.f32 %v2877, %v706
        %v2879 = vadd.f32 %v2569, %v2802
        %v2880 = vmax.f32 %v2878, 0.0
        %v2882 = vsel %vm394, %v2880, 0
        %2884 = vmatprep.subr.mxu0 0.0
        %2885 = vmatpush1.msra.mxu0 0.0
        %2886 = vmatprep.subr.mxu0 0.0
        %2887 = vmatpush1.msra.mxu0 0.0
        %2888 = vmatprep.subr.mxu0 0.0
        %2889 = vmatpush1.msra.mxu0 0.0
        %2890 = vmatprep.subr.mxu0 0.0
        %2891 = vmatpush1.msra.mxu0 0.0
        %2892 = vmatprep.subr.mxu0 0.0
        %2893 = vmatpush1.msra.mxu0 0.0
        %2894 = vmatprep.subr.mxu0 0.0
        %2895 = vmatpush1.msra.mxu0 0.0
        %2896 = vmatprep.subr.mxu0 0.0
        %2897 = vmatpush1.msra.mxu0 0.0
        %2898 = vmatprep.subr.mxu0 0.0
        %2899 = vmatpush1.msra.mxu0 0.0
        %2900 = vmatprep.subr.mxu0 0.0
        %2901 = vmatpush1.msra.mxu0 %v97
        %2902 = vmatprep.subr.mxu0 0.0
        %2903 = vmatpush1.msra.mxu0 %v96
        %2904 = vmatprep.subr.mxu0 0.0
        %2905 = vmatpush1.msra.mxu0 %v95
        %2906 = vmatprep.subr.mxu0 0.0
        %2907 = vmatpush1.msra.mxu0 %v94
        %2908 = vmatprep.subr.mxu0 0.0
        %2909 = vmatpush1.msra.mxu0 %v93
        %2910 = vmatprep.subr.mxu0 0.0
        %2911 = vmatpush1.msra.mxu0 %v92
        %2912 = vmatprep.subr.mxu0 0.0
        %2913 = vmatpush1.msra.mxu0 %v91
        %2914 = vmatprep.subr.mxu0 0.0
        %2915 = vmatpush1.msra.mxu0 %v90
        %2916 = vmatprep.subr.mxu0 0.0
        %2917 = vmatpush2.msra.mxu0 0.0
        %2918 = vmatprep.subr.mxu0 0.0
        %2919 = vmatpush2.msra.mxu0 0.0
        %2920 = vmatprep.subr.mxu0 0.0
        %2921 = vmatpush2.msra.mxu0 0.0
        %2922 = vmatprep.subr.mxu0 0.0
        %2923 = vmatpush2.msra.mxu0 0.0
        %2924 = vmatprep.subr.mxu0 0.0
        %2925 = vmatpush2.msra.mxu0 0.0
        %2926 = vmatprep.subr.mxu0 0.0
        %2927 = vmatpush2.msra.mxu0 0.0
        %2928 = vmatprep.subr.mxu0 0.0
        %2929 = vmatpush2.msra.mxu0 0.0
        %2930 = vmatprep.subr.mxu0 0.0
        %2931 = vmatpush2.msra.mxu0 0.0
        %2932 = vmatprep.subr.mxu0 0.0
        %2933 = vmatpush2.msra.mxu0 0.0
        %2934 = vmatprep.subr.mxu0 0.0
        %2935 = vmatpush2.msra.mxu0 0.0
        %2936 = vmatprep.subr.mxu0 0.0
        %2937 = vmatpush2.msra.mxu0 0.0
        %2938 = vmatprep.subr.mxu0 0.0
        %2939 = vmatpush2.msra.mxu0 0.0
        %2940 = vmatprep.subr.mxu0 0.0
        %2941 = vmatpush2.msra.mxu0 0.0
        %2942 = vmatprep.subr.mxu0 0.0
        %2943 = vmatpush2.msra.mxu0 0.0
        %2944 = vmatprep.subr.mxu0 0.0
        %2945 = vmatpush2.msra.mxu0 0.0
        %2946 = vmatprep.subr.mxu0 0.0
        %2947 = vmatpush2.msra.mxu0 0.0
        %2948 = vmatprep.mubr.f32.mxu0 0.0
        %2949 = vmatmul.mubr.f32.gmra.mxu0 %v2882
        %v2950 = vpop.f32.mrf.mxu0
        %v2951 = vadd.f32 %v392, %v2950
        %v2952 = vpop.f32.mrf.mxu0
        %2953 = vdwg.mxu0
        %v2954 = vmul.f32 %v385, %v2951
        %v2955 = vadd.f32 %v2878, %v2954
        %v2956 = vmax.f32 %v2955, 0.0
        %v2958 = vsel %vm394, %v2956, 0
        %2960 = vmatprep.subr.mxu0 0.0
        %2961 = vmatpush1.msra.mxu0 0.0
        %2962 = vmatprep.subr.mxu0 0.0
        %2963 = vmatpush1.msra.mxu0 0.0
        %2964 = vmatprep.subr.mxu0 0.0
        %2965 = vmatpush1.msra.mxu0 0.0
        %2966 = vmatprep.subr.mxu0 0.0
        %2967 = vmatpush1.msra.mxu0 0.0
        %2968 = vmatprep.subr.mxu0 0.0
        %2969 = vmatpush1.msra.mxu0 0.0
        %2970 = vmatprep.subr.mxu0 0.0
        %2971 = vmatpush1.msra.mxu0 0.0
        %2972 = vmatprep.subr.mxu0 0.0
        %2973 = vmatpush1.msra.mxu0 0.0
        %2974 = vmatprep.subr.mxu0 0.0
        %2975 = vmatpush1.msra.mxu0 0.0
        %2976 = vmatprep.subr.mxu0 0.0
        %2977 = vmatpush1.msra.mxu0 %v97
        %2978 = vmatprep.subr.mxu0 0.0
        %2979 = vmatpush1.msra.mxu0 %v96
        %2980 = vmatprep.subr.mxu0 0.0
        %2981 = vmatpush1.msra.mxu0 %v95
        %2982 = vmatprep.subr.mxu0 0.0
        %2983 = vmatpush1.msra.mxu0 %v94
        %2984 = vmatprep.subr.mxu0 0.0
        %2985 = vmatpush1.msra.mxu0 %v93
        %2986 = vmatprep.subr.mxu0 0.0
        %2987 = vmatpush1.msra.mxu0 %v92
        %2988 = vmatprep.subr.mxu0 0.0
        %2989 = vmatpush1.msra.mxu0 %v91
        %2990 = vmatprep.subr.mxu0 0.0
        %2991 = vmatpush1.msra.mxu0 %v90
        %2992 = vmatprep.subr.mxu0 0.0
        %2993 = vmatpush2.msra.mxu0 0.0
        %2994 = vmatprep.subr.mxu0 0.0
        %2995 = vmatpush2.msra.mxu0 0.0
        %2996 = vmatprep.subr.mxu0 0.0
        %2997 = vmatpush2.msra.mxu0 0.0
        %2998 = vmatprep.subr.mxu0 0.0
        %2999 = vmatpush2.msra.mxu0 0.0
        %3000 = vmatprep.subr.mxu0 0.0
        %3001 = vmatpush2.msra.mxu0 0.0
        %3002 = vmatprep.subr.mxu0 0.0
        %3003 = vmatpush2.msra.mxu0 0.0
        %3004 = vmatprep.subr.mxu0 0.0
        %3005 = vmatpush2.msra.mxu0 0.0
        %3006 = vmatprep.subr.mxu0 0.0
        %3007 = vmatpush2.msra.mxu0 0.0
        %3008 = vmatprep.subr.mxu0 0.0
        %3009 = vmatpush2.msra.mxu0 0.0
        %3010 = vmatprep.subr.mxu0 0.0
        %3011 = vmatpush2.msra.mxu0 0.0
        %3012 = vmatprep.subr.mxu0 0.0
        %3013 = vmatpush2.msra.mxu0 0.0
        %3014 = vmatprep.subr.mxu0 0.0
        %3015 = vmatpush2.msra.mxu0 0.0
        %3016 = vmatprep.subr.mxu0 0.0
        %3017 = vmatpush2.msra.mxu0 0.0
        %3018 = vmatprep.subr.mxu0 0.0
        %3019 = vmatpush2.msra.mxu0 0.0
        %3020 = vmatprep.subr.mxu0 0.0
        %3021 = vmatpush2.msra.mxu0 0.0
        %3022 = vmatprep.subr.mxu0 0.0
        %3023 = vmatpush2.msra.mxu0 0.0
        %3024 = vmatprep.mubr.f32.mxu0 0.0
        %3025 = vmatmul.mubr.f32.gmra.mxu0 %v2958
        %v3026 = vpop.f32.mrf.mxu0
        %v3027 = vadd.f32 %v392, %v3026
        %v3028 = vpop.f32.mrf.mxu0
        %3029 = vdwg.mxu0
        %v3030 = vmul.f32 %v385, %v3027
        %v3031 = vadd.f32 %v2878, %v3030
        %v3032 = vmax.f32 %v3031, 0.0
        %v3034 = vsel %vm394, %v3032, 0
        %3036 = vmatprep.subr.mxu0 0.0
        %3037 = vmatpush1.msra.mxu0 0.0
        %3038 = vmatprep.subr.mxu0 0.0
        %3039 = vmatpush1.msra.mxu0 0.0
        %3040 = vmatprep.subr.mxu0 0.0
        %3041 = vmatpush1.msra.mxu0 0.0
        %3042 = vmatprep.subr.mxu0 0.0
        %3043 = vmatpush1.msra.mxu0 0.0
        %3044 = vmatprep.subr.mxu0 0.0
        %3045 = vmatpush1.msra.mxu0 0.0
        %3046 = vmatprep.subr.mxu0 0.0
        %3047 = vmatpush1.msra.mxu0 0.0
        %3048 = vmatprep.subr.mxu0 0.0
        %3049 = vmatpush1.msra.mxu0 0.0
        %3050 = vmatprep.subr.mxu0 0.0
        %3051 = vmatpush1.msra.mxu0 0.0
        %3052 = vmatprep.subr.mxu0 0.0
        %3053 = vmatpush1.msra.mxu0 %v97
        %3054 = vmatprep.subr.mxu0 0.0
        %3055 = vmatpush1.msra.mxu0 %v96
        %3056 = vmatprep.subr.mxu0 0.0
        %3057 = vmatpush1.msra.mxu0 %v95
        %3058 = vmatprep.subr.mxu0 0.0
        %3059 = vmatpush1.msra.mxu0 %v94
        %3060 = vmatprep.subr.mxu0 0.0
        %3061 = vmatpush1.msra.mxu0 %v93
        %3062 = vmatprep.subr.mxu0 0.0
        %3063 = vmatpush1.msra.mxu0 %v92
        %3064 = vmatprep.subr.mxu0 0.0
        %3065 = vmatpush1.msra.mxu0 %v91
        %3066 = vmatprep.subr.mxu0 0.0
        %3067 = vmatpush1.msra.mxu0 %v90
        %3068 = vmatprep.subr.mxu0 0.0
        %3069 = vmatpush2.msra.mxu0 0.0
        %3070 = vmatprep.subr.mxu0 0.0
        %3071 = vmatpush2.msra.mxu0 0.0
        %3072 = vmatprep.subr.mxu0 0.0
        %3073 = vmatpush2.msra.mxu0 0.0
        %3074 = vmatprep.subr.mxu0 0.0
        %3075 = vmatpush2.msra.mxu0 0.0
        %3076 = vmatprep.subr.mxu0 0.0
        %3077 = vmatpush2.msra.mxu0 0.0
        %3078 = vmatprep.subr.mxu0 0.0
        %3079 = vmatpush2.msra.mxu0 0.0
        %3080 = vmatprep.subr.mxu0 0.0
        %3081 = vmatpush2.msra.mxu0 0.0
        %3082 = vmatprep.subr.mxu0 0.0
        %3083 = vmatpush2.msra.mxu0 0.0
        %3084 = vmatprep.subr.mxu0 0.0
        %3085 = vmatpush2.msra.mxu0 0.0
        %3086 = vmatprep.subr.mxu0 0.0
        %3087 = vmatpush2.msra.mxu0 0.0
        %3088 = vmatprep.subr.mxu0 0.0
        %3089 = vmatpush2.msra.mxu0 0.0
        %3090 = vmatprep.subr.mxu0 0.0
        %3091 = vmatpush2.msra.mxu0 0.0
        %3092 = vmatprep.subr.mxu0 0.0
        %3093 = vmatpush2.msra.mxu0 0.0
        %3094 = vmatprep.subr.mxu0 0.0
        %3095 = vmatpush2.msra.mxu0 0.0
        %3096 = vmatprep.subr.mxu0 0.0
        %3097 = vmatpush2.msra.mxu0 0.0
        %3098 = vmatprep.subr.mxu0 0.0
        %3099 = vmatpush2.msra.mxu0 0.0
        %3100 = vmatprep.mubr.f32.mxu0 0.0
        %3101 = vmatmul.mubr.f32.gmra.mxu0 %v3034
        %v3102 = vpop.f32.mrf.mxu0
        %v3103 = vadd.f32 %v392, %v3102
        %v3104 = vpop.f32.mrf.mxu0
        %3105 = vdwg.mxu0
        %v3106 = vmul.f32 %v382, %v3103
        %v3107 = vadd.f32 %v2878, %v3106
        %v3108 = vmax.f32 %v3107, 0.0
        %v3109 = vadd.f32 %v2956, %v3032
        %v3110 = vmul.f32 %v3109, 2.0
        %v3111 = vadd.f32 %v2880, %v3110
        %v3112 = vadd.f32 %v3111, %v3108
        %v3114 = vsel %vm394, %v3112, 0
        %3116 = vmatprep.subr.mxu0 0.0
        %3117 = vmatpush1.msra.mxu0 0.0
        %3118 = vmatprep.subr.mxu0 0.0
        %3119 = vmatpush1.msra.mxu0 0.0
        %3120 = vmatprep.subr.mxu0 0.0
        %3121 = vmatpush1.msra.mxu0 0.0
        %3122 = vmatprep.subr.mxu0 0.0
        %3123 = vmatpush1.msra.mxu0 0.0
        %3124 = vmatprep.subr.mxu0 0.0
        %3125 = vmatpush1.msra.mxu0 0.0
        %3126 = vmatprep.subr.mxu0 0.0
        %3127 = vmatpush1.msra.mxu0 0.0
        %3128 = vmatprep.subr.mxu0 0.0
        %3129 = vmatpush1.msra.mxu0 0.0
        %3130 = vmatprep.subr.mxu0 0.0
        %3131 = vmatpush1.msra.mxu0 0.0
        %3132 = vmatprep.subr.mxu0 0.0
        %3133 = vmatpush1.msra.mxu0 %v97
        %3134 = vmatprep.subr.mxu0 0.0
        %3135 = vmatpush1.msra.mxu0 %v96
        %3136 = vmatprep.subr.mxu0 0.0
        %3137 = vmatpush1.msra.mxu0 %v95
        %3138 = vmatprep.subr.mxu0 0.0
        %3139 = vmatpush1.msra.mxu0 %v94
        %3140 = vmatprep.subr.mxu0 0.0
        %3141 = vmatpush1.msra.mxu0 %v93
        %3142 = vmatprep.subr.mxu0 0.0
        %3143 = vmatpush1.msra.mxu0 %v92
        %3144 = vmatprep.subr.mxu0 0.0
        %3145 = vmatpush1.msra.mxu0 %v91
        %3146 = vmatprep.subr.mxu0 0.0
        %3147 = vmatpush1.msra.mxu0 %v90
        %3148 = vmatprep.subr.mxu0 0.0
        %3149 = vmatpush2.msra.mxu0 0.0
        %3150 = vmatprep.subr.mxu0 0.0
        %3151 = vmatpush2.msra.mxu0 0.0
        %3152 = vmatprep.subr.mxu0 0.0
        %3153 = vmatpush2.msra.mxu0 0.0
        %3154 = vmatprep.subr.mxu0 0.0
        %3155 = vmatpush2.msra.mxu0 0.0
        %3156 = vmatprep.subr.mxu0 0.0
        %3157 = vmatpush2.msra.mxu0 0.0
        %3158 = vmatprep.subr.mxu0 0.0
        %3159 = vmatpush2.msra.mxu0 0.0
        %3160 = vmatprep.subr.mxu0 0.0
        %3161 = vmatpush2.msra.mxu0 0.0
        %3162 = vmatprep.subr.mxu0 0.0
        %3163 = vmatpush2.msra.mxu0 0.0
        %3164 = vmatprep.subr.mxu0 0.0
        %3165 = vmatpush2.msra.mxu0 0.0
        %3166 = vmatprep.subr.mxu0 0.0
        %3167 = vmatpush2.msra.mxu0 0.0
        %3168 = vmatprep.subr.mxu0 0.0
        %3169 = vmatpush2.msra.mxu0 0.0
        %3170 = vmatprep.subr.mxu0 0.0
        %3171 = vmatpush2.msra.mxu0 0.0
        %3172 = vmatprep.subr.mxu0 0.0
        %3173 = vmatpush2.msra.mxu0 0.0
        %3174 = vmatprep.subr.mxu0 0.0
        %3175 = vmatpush2.msra.mxu0 0.0
        %3176 = vmatprep.subr.mxu0 0.0
        %3177 = vmatpush2.msra.mxu0 0.0
        %3178 = vmatprep.subr.mxu0 0.0
        %3179 = vmatpush2.msra.mxu0 0.0
        %3180 = vmatprep.mubr.f32.mxu0 0.0
        %3181 = vmatmul.mubr.f32.gmra.mxu0 %v3114
        %v3182 = vpop.f32.mrf.mxu0
        %v3183 = vadd.f32 0.0, %v3182
        %v3184 = vpop.f32.mrf.mxu0
        %3185 = vdwg.mxu0
        %v3186 = vmul.f32 %v386, %v3183
        %v3187 = vadd.f32 %v2878, %v3186
        %v3188 = vadd.f32 %v3187, %v706
        %v3189 = vadd.f32 %v2879, %v3112
        %v3190 = vmax.f32 %v3188, 0.0
        %v3192 = vsel %vm394, %v3190, 0
        %3194 = vmatprep.subr.mxu0 0.0
        %3195 = vmatpush1.msra.mxu0 0.0
        %3196 = vmatprep.subr.mxu0 0.0
        %3197 = vmatpush1.msra.mxu0 0.0
        %3198 = vmatprep.subr.mxu0 0.0
        %3199 = vmatpush1.msra.mxu0 0.0
        %3200 = vmatprep.subr.mxu0 0.0
        %3201 = vmatpush1.msra.mxu0 0.0
        %3202 = vmatprep.subr.mxu0 0.0
        %3203 = vmatpush1.msra.mxu0 0.0
        %3204 = vmatprep.subr.mxu0 0.0
        %3205 = vmatpush1.msra.mxu0 0.0
        %3206 = vmatprep.subr.mxu0 0.0
        %3207 = vmatpush1.msra.mxu0 0.0
        %3208 = vmatprep.subr.mxu0 0.0
        %3209 = vmatpush1.msra.mxu0 0.0
        %3210 = vmatprep.subr.mxu0 0.0
        %3211 = vmatpush1.msra.mxu0 %v97
        %3212 = vmatprep.subr.mxu0 0.0
        %3213 = vmatpush1.msra.mxu0 %v96
        %3214 = vmatprep.subr.mxu0 0.0
        %3215 = vmatpush1.msra.mxu0 %v95
        %3216 = vmatprep.subr.mxu0 0.0
        %3217 = vmatpush1.msra.mxu0 %v94
        %3218 = vmatprep.subr.mxu0 0.0
        %3219 = vmatpush1.msra.mxu0 %v93
        %3220 = vmatprep.subr.mxu0 0.0
        %3221 = vmatpush1.msra.mxu0 %v92
        %3222 = vmatprep.subr.mxu0 0.0
        %3223 = vmatpush1.msra.mxu0 %v91
        %3224 = vmatprep.subr.mxu0 0.0
        %3225 = vmatpush1.msra.mxu0 %v90
        %3226 = vmatprep.subr.mxu0 0.0
        %3227 = vmatpush2.msra.mxu0 0.0
        %3228 = vmatprep.subr.mxu0 0.0
        %3229 = vmatpush2.msra.mxu0 0.0
        %3230 = vmatprep.subr.mxu0 0.0
        %3231 = vmatpush2.msra.mxu0 0.0
        %3232 = vmatprep.subr.mxu0 0.0
        %3233 = vmatpush2.msra.mxu0 0.0
        %3234 = vmatprep.subr.mxu0 0.0
        %3235 = vmatpush2.msra.mxu0 0.0
        %3236 = vmatprep.subr.mxu0 0.0
        %3237 = vmatpush2.msra.mxu0 0.0
        %3238 = vmatprep.subr.mxu0 0.0
        %3239 = vmatpush2.msra.mxu0 0.0
        %3240 = vmatprep.subr.mxu0 0.0
        %3241 = vmatpush2.msra.mxu0 0.0
        %3242 = vmatprep.subr.mxu0 0.0
        %3243 = vmatpush2.msra.mxu0 0.0
        %3244 = vmatprep.subr.mxu0 0.0
        %3245 = vmatpush2.msra.mxu0 0.0
        %3246 = vmatprep.subr.mxu0 0.0
        %3247 = vmatpush2.msra.mxu0 0.0
        %3248 = vmatprep.subr.mxu0 0.0
        %3249 = vmatpush2.msra.mxu0 0.0
        %3250 = vmatprep.subr.mxu0 0.0
        %3251 = vmatpush2.msra.mxu0 0.0
        %3252 = vmatprep.subr.mxu0 0.0
        %3253 = vmatpush2.msra.mxu0 0.0
        %3254 = vmatprep.subr.mxu0 0.0
        %3255 = vmatpush2.msra.mxu0 0.0
        %3256 = vmatprep.subr.mxu0 0.0
        %3257 = vmatpush2.msra.mxu0 0.0
        %3258 = vmatprep.mubr.f32.mxu0 0.0
        %3259 = vmatmul.mubr.f32.gmra.mxu0 %v3192
        %v3260 = vpop.f32.mrf.mxu0
        %v3261 = vadd.f32 %v392, %v3260
        %v3262 = vpop.f32.mrf.mxu0
        %3263 = vdwg.mxu0
        %v3264 = vmul.f32 %v385, %v3261
        %v3265 = vadd.f32 %v3188, %v3264
        %v3266 = vmax.f32 %v3265, 0.0
        %v3268 = vsel %vm394, %v3266, 0
        %3270 = vmatprep.subr.mxu0 0.0
        %3271 = vmatpush1.msra.mxu0 0.0
        %3272 = vmatprep.subr.mxu0 0.0
        %3273 = vmatpush1.msra.mxu0 0.0
        %3274 = vmatprep.subr.mxu0 0.0
        %3275 = vmatpush1.msra.mxu0 0.0
        %3276 = vmatprep.subr.mxu0 0.0
        %3277 = vmatpush1.msra.mxu0 0.0
        %3278 = vmatprep.subr.mxu0 0.0
        %3279 = vmatpush1.msra.mxu0 0.0
        %3280 = vmatprep.subr.mxu0 0.0
        %3281 = vmatpush1.msra.mxu0 0.0
        %3282 = vmatprep.subr.mxu0 0.0
        %3283 = vmatpush1.msra.mxu0 0.0
        %3284 = vmatprep.subr.mxu0 0.0
        %3285 = vmatpush1.msra.mxu0 0.0
        %3286 = vmatprep.subr.mxu0 0.0
        %3287 = vmatpush1.msra.mxu0 %v97
        %3288 = vmatprep.subr.mxu0 0.0
        %3289 = vmatpush1.msra.mxu0 %v96
        %3290 = vmatprep.subr.mxu0 0.0
        %3291 = vmatpush1.msra.mxu0 %v95
        %3292 = vmatprep.subr.mxu0 0.0
        %3293 = vmatpush1.msra.mxu0 %v94
        %3294 = vmatprep.subr.mxu0 0.0
        %3295 = vmatpush1.msra.mxu0 %v93
        %3296 = vmatprep.subr.mxu0 0.0
        %3297 = vmatpush1.msra.mxu0 %v92
        %3298 = vmatprep.subr.mxu0 0.0
        %3299 = vmatpush1.msra.mxu0 %v91
        %3300 = vmatprep.subr.mxu0 0.0
        %3301 = vmatpush1.msra.mxu0 %v90
        %3302 = vmatprep.subr.mxu0 0.0
        %3303 = vmatpush2.msra.mxu0 0.0
        %3304 = vmatprep.subr.mxu0 0.0
        %3305 = vmatpush2.msra.mxu0 0.0
        %3306 = vmatprep.subr.mxu0 0.0
        %3307 = vmatpush2.msra.mxu0 0.0
        %3308 = vmatprep.subr.mxu0 0.0
        %3309 = vmatpush2.msra.mxu0 0.0
        %3310 = vmatprep.subr.mxu0 0.0
        %3311 = vmatpush2.msra.mxu0 0.0
        %3312 = vmatprep.subr.mxu0 0.0
        %3313 = vmatpush2.msra.mxu0 0.0
        %3314 = vmatprep.subr.mxu0 0.0
        %3315 = vmatpush2.msra.mxu0 0.0
        %3316 = vmatprep.subr.mxu0 0.0
        %3317 = vmatpush2.msra.mxu0 0.0
        %3318 = vmatprep.subr.mxu0 0.0
        %3319 = vmatpush2.msra.mxu0 0.0
        %3320 = vmatprep.subr.mxu0 0.0
        %3321 = vmatpush2.msra.mxu0 0.0
        %3322 = vmatprep.subr.mxu0 0.0
        %3323 = vmatpush2.msra.mxu0 0.0
        %3324 = vmatprep.subr.mxu0 0.0
        %3325 = vmatpush2.msra.mxu0 0.0
        %3326 = vmatprep.subr.mxu0 0.0
        %3327 = vmatpush2.msra.mxu0 0.0
        %3328 = vmatprep.subr.mxu0 0.0
        %3329 = vmatpush2.msra.mxu0 0.0
        %3330 = vmatprep.subr.mxu0 0.0
        %3331 = vmatpush2.msra.mxu0 0.0
        %3332 = vmatprep.subr.mxu0 0.0
        %3333 = vmatpush2.msra.mxu0 0.0
        %3334 = vmatprep.mubr.f32.mxu0 0.0
        %3335 = vmatmul.mubr.f32.gmra.mxu0 %v3268
        %v3336 = vpop.f32.mrf.mxu0
        %v3337 = vadd.f32 %v392, %v3336
        %v3338 = vpop.f32.mrf.mxu0
        %3339 = vdwg.mxu0
        %v3340 = vmul.f32 %v385, %v3337
        %v3341 = vadd.f32 %v3188, %v3340
        %v3342 = vmax.f32 %v3341, 0.0
        %v3344 = vsel %vm394, %v3342, 0
        %3346 = vmatprep.subr.mxu0 0.0
        %3347 = vmatpush1.msra.mxu0 0.0
        %3348 = vmatprep.subr.mxu0 0.0
        %3349 = vmatpush1.msra.mxu0 0.0
        %3350 = vmatprep.subr.mxu0 0.0
        %3351 = vmatpush1.msra.mxu0 0.0
        %3352 = vmatprep.subr.mxu0 0.0
        %3353 = vmatpush1.msra.mxu0 0.0
        %3354 = vmatprep.subr.mxu0 0.0
        %3355 = vmatpush1.msra.mxu0 0.0
        %3356 = vmatprep.subr.mxu0 0.0
        %3357 = vmatpush1.msra.mxu0 0.0
        %3358 = vmatprep.subr.mxu0 0.0
        %3359 = vmatpush1.msra.mxu0 0.0
        %3360 = vmatprep.subr.mxu0 0.0
        %3361 = vmatpush1.msra.mxu0 0.0
        %3362 = vmatprep.subr.mxu0 0.0
        %3363 = vmatpush1.msra.mxu0 %v97
        %3364 = vmatprep.subr.mxu0 0.0
        %3365 = vmatpush1.msra.mxu0 %v96
        %3366 = vmatprep.subr.mxu0 0.0
        %3367 = vmatpush1.msra.mxu0 %v95
        %3368 = vmatprep.subr.mxu0 0.0
        %3369 = vmatpush1.msra.mxu0 %v94
        %3370 = vmatprep.subr.mxu0 0.0
        %3371 = vmatpush1.msra.mxu0 %v93
        %3372 = vmatprep.subr.mxu0 0.0
        %3373 = vmatpush1.msra.mxu0 %v92
        %3374 = vmatprep.subr.mxu0 0.0
        %3375 = vmatpush1.msra.mxu0 %v91
        %3376 = vmatprep.subr.mxu0 0.0
        %3377 = vmatpush1.msra.mxu0 %v90
        %3378 = vmatprep.subr.mxu0 0.0
        %3379 = vmatpush2.msra.mxu0 0.0
        %3380 = vmatprep.subr.mxu0 0.0
        %3381 = vmatpush2.msra.mxu0 0.0
        %3382 = vmatprep.subr.mxu0 0.0
        %3383 = vmatpush2.msra.mxu0 0.0
        %3384 = vmatprep.subr.mxu0 0.0
        %3385 = vmatpush2.msra.mxu0 0.0
        %3386 = vmatprep.subr.mxu0 0.0
        %3387 = vmatpush2.msra.mxu0 0.0
        %3388 = vmatprep.subr.mxu0 0.0
        %3389 = vmatpush2.msra.mxu0 0.0
        %3390 = vmatprep.subr.mxu0 0.0
        %3391 = vmatpush2.msra.mxu0 0.0
        %3392 = vmatprep.subr.mxu0 0.0
        %3393 = vmatpush2.msra.mxu0 0.0
        %3394 = vmatprep.subr.mxu0 0.0
        %3395 = vmatpush2.msra.mxu0 0.0
        %3396 = vmatprep.subr.mxu0 0.0
        %3397 = vmatpush2.msra.mxu0 0.0
        %3398 = vmatprep.subr.mxu0 0.0
        %3399 = vmatpush2.msra.mxu0 0.0
        %3400 = vmatprep.subr.mxu0 0.0
        %3401 = vmatpush2.msra.mxu0 0.0
        %3402 = vmatprep.subr.mxu0 0.0
        %3403 = vmatpush2.msra.mxu0 0.0
        %3404 = vmatprep.subr.mxu0 0.0
        %3405 = vmatpush2.msra.mxu0 0.0
        %3406 = vmatprep.subr.mxu0 0.0
        %3407 = vmatpush2.msra.mxu0 0.0
        %3408 = vmatprep.subr.mxu0 0.0
        %3409 = vmatpush2.msra.mxu0 0.0
        %3410 = vmatprep.mubr.f32.mxu0 0.0
        %3411 = vmatmul.mubr.f32.gmra.mxu0 %v3344
        %v3412 = vpop.f32.mrf.mxu0
        %v3413 = vadd.f32 %v392, %v3412
        %v3414 = vpop.f32.mrf.mxu0
        %3415 = vdwg.mxu0
        %v3416 = vmul.f32 %v382, %v3413
        %v3417 = vadd.f32 %v3188, %v3416
        %v3418 = vmax.f32 %v3417, 0.0
        %v3419 = vadd.f32 %v3266, %v3342
        %v3420 = vmul.f32 %v3419, 2.0
        %v3421 = vadd.f32 %v3190, %v3420
        %v3422 = vadd.f32 %v3421, %v3418
        %v3424 = vsel %vm394, %v3422, 0
        %3426 = vmatprep.subr.mxu0 0.0
        %3427 = vmatpush1.msra.mxu0 0.0
        %3428 = vmatprep.subr.mxu0 0.0
        %3429 = vmatpush1.msra.mxu0 0.0
        %3430 = vmatprep.subr.mxu0 0.0
        %3431 = vmatpush1.msra.mxu0 0.0
        %3432 = vmatprep.subr.mxu0 0.0
        %3433 = vmatpush1.msra.mxu0 0.0
        %3434 = vmatprep.subr.mxu0 0.0
        %3435 = vmatpush1.msra.mxu0 0.0
        %3436 = vmatprep.subr.mxu0 0.0
        %3437 = vmatpush1.msra.mxu0 0.0
        %3438 = vmatprep.subr.mxu0 0.0
        %3439 = vmatpush1.msra.mxu0 0.0
        %3440 = vmatprep.subr.mxu0 0.0
        %3441 = vmatpush1.msra.mxu0 0.0
        %3442 = vmatprep.subr.mxu0 0.0
        %3443 = vmatpush1.msra.mxu0 %v97
        %3444 = vmatprep.subr.mxu0 0.0
        %3445 = vmatpush1.msra.mxu0 %v96
        %3446 = vmatprep.subr.mxu0 0.0
        %3447 = vmatpush1.msra.mxu0 %v95
        %3448 = vmatprep.subr.mxu0 0.0
        %3449 = vmatpush1.msra.mxu0 %v94
        %3450 = vmatprep.subr.mxu0 0.0
        %3451 = vmatpush1.msra.mxu0 %v93
        %3452 = vmatprep.subr.mxu0 0.0
        %3453 = vmatpush1.msra.mxu0 %v92
        %3454 = vmatprep.subr.mxu0 0.0
        %3455 = vmatpush1.msra.mxu0 %v91
        %3456 = vmatprep.subr.mxu0 0.0
        %3457 = vmatpush1.msra.mxu0 %v90
        %3458 = vmatprep.subr.mxu0 0.0
        %3459 = vmatpush2.msra.mxu0 0.0
        %3460 = vmatprep.subr.mxu0 0.0
        %3461 = vmatpush2.msra.mxu0 0.0
        %3462 = vmatprep.subr.mxu0 0.0
        %3463 = vmatpush2.msra.mxu0 0.0
        %3464 = vmatprep.subr.mxu0 0.0
        %3465 = vmatpush2.msra.mxu0 0.0
        %3466 = vmatprep.subr.mxu0 0.0
        %3467 = vmatpush2.msra.mxu0 0.0
        %3468 = vmatprep.subr.mxu0 0.0
        %3469 = vmatpush2.msra.mxu0 0.0
        %3470 = vmatprep.subr.mxu0 0.0
        %3471 = vmatpush2.msra.mxu0 0.0
        %3472 = vmatprep.subr.mxu0 0.0
        %3473 = vmatpush2.msra.mxu0 0.0
        %3474 = vmatprep.subr.mxu0 0.0
        %3475 = vmatpush2.msra.mxu0 0.0
        %3476 = vmatprep.subr.mxu0 0.0
        %3477 = vmatpush2.msra.mxu0 0.0
        %3478 = vmatprep.subr.mxu0 0.0
        %3479 = vmatpush2.msra.mxu0 0.0
        %3480 = vmatprep.subr.mxu0 0.0
        %3481 = vmatpush2.msra.mxu0 0.0
        %3482 = vmatprep.subr.mxu0 0.0
        %3483 = vmatpush2.msra.mxu0 0.0
        %3484 = vmatprep.subr.mxu0 0.0
        %3485 = vmatpush2.msra.mxu0 0.0
        %3486 = vmatprep.subr.mxu0 0.0
        %3487 = vmatpush2.msra.mxu0 0.0
        %3488 = vmatprep.subr.mxu0 0.0
        %3489 = vmatpush2.msra.mxu0 0.0
        %3490 = vmatprep.mubr.f32.mxu0 0.0
        %3491 = vmatmul.mubr.f32.gmra.mxu0 %v3424
        %v3492 = vpop.f32.mrf.mxu0
        %v3493 = vadd.f32 0.0, %v3492
        %v3494 = vpop.f32.mrf.mxu0
        %3495 = vdwg.mxu0
        %v3496 = vmul.f32 %v386, %v3493
        %v3497 = vadd.f32 %v3188, %v3496
        %v3498 = vadd.f32 %v3497, %v706
        %v3499 = vadd.f32 %v3189, %v3422
        %v3500 = vmax.f32 %v3498, 0.0
        %v3502 = vsel %vm394, %v3500, 0
        %3504 = vmatprep.subr.mxu0 0.0
        %3505 = vmatpush1.msra.mxu0 0.0
        %3506 = vmatprep.subr.mxu0 0.0
        %3507 = vmatpush1.msra.mxu0 0.0
        %3508 = vmatprep.subr.mxu0 0.0
        %3509 = vmatpush1.msra.mxu0 0.0
        %3510 = vmatprep.subr.mxu0 0.0
        %3511 = vmatpush1.msra.mxu0 0.0
        %3512 = vmatprep.subr.mxu0 0.0
        %3513 = vmatpush1.msra.mxu0 0.0
        %3514 = vmatprep.subr.mxu0 0.0
        %3515 = vmatpush1.msra.mxu0 0.0
        %3516 = vmatprep.subr.mxu0 0.0
        %3517 = vmatpush1.msra.mxu0 0.0
        %3518 = vmatprep.subr.mxu0 0.0
        %3519 = vmatpush1.msra.mxu0 0.0
        %3520 = vmatprep.subr.mxu0 0.0
        %3521 = vmatpush1.msra.mxu0 %v97
        %3522 = vmatprep.subr.mxu0 0.0
        %3523 = vmatpush1.msra.mxu0 %v96
        %3524 = vmatprep.subr.mxu0 0.0
        %3525 = vmatpush1.msra.mxu0 %v95
        %3526 = vmatprep.subr.mxu0 0.0
        %3527 = vmatpush1.msra.mxu0 %v94
        %3528 = vmatprep.subr.mxu0 0.0
        %3529 = vmatpush1.msra.mxu0 %v93
        %3530 = vmatprep.subr.mxu0 0.0
        %3531 = vmatpush1.msra.mxu0 %v92
        %3532 = vmatprep.subr.mxu0 0.0
        %3533 = vmatpush1.msra.mxu0 %v91
        %3534 = vmatprep.subr.mxu0 0.0
        %3535 = vmatpush1.msra.mxu0 %v90
        %3536 = vmatprep.subr.mxu0 0.0
        %3537 = vmatpush2.msra.mxu0 0.0
        %3538 = vmatprep.subr.mxu0 0.0
        %3539 = vmatpush2.msra.mxu0 0.0
        %3540 = vmatprep.subr.mxu0 0.0
        %3541 = vmatpush2.msra.mxu0 0.0
        %3542 = vmatprep.subr.mxu0 0.0
        %3543 = vmatpush2.msra.mxu0 0.0
        %3544 = vmatprep.subr.mxu0 0.0
        %3545 = vmatpush2.msra.mxu0 0.0
        %3546 = vmatprep.subr.mxu0 0.0
        %3547 = vmatpush2.msra.mxu0 0.0
        %3548 = vmatprep.subr.mxu0 0.0
        %3549 = vmatpush2.msra.mxu0 0.0
        %3550 = vmatprep.subr.mxu0 0.0
        %3551 = vmatpush2.msra.mxu0 0.0
        %3552 = vmatprep.subr.mxu0 0.0
        %3553 = vmatpush2.msra.mxu0 0.0
        %3554 = vmatprep.subr.mxu0 0.0
        %3555 = vmatpush2.msra.mxu0 0.0
        %3556 = vmatprep.subr.mxu0 0.0
        %3557 = vmatpush2.msra.mxu0 0.0
        %3558 = vmatprep.subr.mxu0 0.0
        %3559 = vmatpush2.msra.mxu0 0.0
        %3560 = vmatprep.subr.mxu0 0.0
        %3561 = vmatpush2.msra.mxu0 0.0
        %3562 = vmatprep.subr.mxu0 0.0
        %3563 = vmatpush2.msra.mxu0 0.0
        %3564 = vmatprep.subr.mxu0 0.0
        %3565 = vmatpush2.msra.mxu0 0.0
        %3566 = vmatprep.subr.mxu0 0.0
        %3567 = vmatpush2.msra.mxu0 0.0
        %3568 = vmatprep.mubr.f32.mxu0 0.0
        %3569 = vmatmul.mubr.f32.gmra.mxu0 %v3502
        %v3570 = vpop.f32.mrf.mxu0
        %v3571 = vadd.f32 %v392, %v3570
        %v3572 = vpop.f32.mrf.mxu0
        %3573 = vdwg.mxu0
        %v3574 = vmul.f32 %v385, %v3571
        %v3575 = vadd.f32 %v3498, %v3574
        %v3576 = vmax.f32 %v3575, 0.0
        %v3578 = vsel %vm394, %v3576, 0
        %3580 = vmatprep.subr.mxu0 0.0
        %3581 = vmatpush1.msra.mxu0 0.0
        %3582 = vmatprep.subr.mxu0 0.0
        %3583 = vmatpush1.msra.mxu0 0.0
        %3584 = vmatprep.subr.mxu0 0.0
        %3585 = vmatpush1.msra.mxu0 0.0
        %3586 = vmatprep.subr.mxu0 0.0
        %3587 = vmatpush1.msra.mxu0 0.0
        %3588 = vmatprep.subr.mxu0 0.0
        %3589 = vmatpush1.msra.mxu0 0.0
        %3590 = vmatprep.subr.mxu0 0.0
        %3591 = vmatpush1.msra.mxu0 0.0
        %3592 = vmatprep.subr.mxu0 0.0
        %3593 = vmatpush1.msra.mxu0 0.0
        %3594 = vmatprep.subr.mxu0 0.0
        %3595 = vmatpush1.msra.mxu0 0.0
        %3596 = vmatprep.subr.mxu0 0.0
        %3597 = vmatpush1.msra.mxu0 %v97
        %3598 = vmatprep.subr.mxu0 0.0
        %3599 = vmatpush1.msra.mxu0 %v96
        %3600 = vmatprep.subr.mxu0 0.0
        %3601 = vmatpush1.msra.mxu0 %v95
        %3602 = vmatprep.subr.mxu0 0.0
        %3603 = vmatpush1.msra.mxu0 %v94
        %3604 = vmatprep.subr.mxu0 0.0
        %3605 = vmatpush1.msra.mxu0 %v93
        %3606 = vmatprep.subr.mxu0 0.0
        %3607 = vmatpush1.msra.mxu0 %v92
        %3608 = vmatprep.subr.mxu0 0.0
        %3609 = vmatpush1.msra.mxu0 %v91
        %3610 = vmatprep.subr.mxu0 0.0
        %3611 = vmatpush1.msra.mxu0 %v90
        %3612 = vmatprep.subr.mxu0 0.0
        %3613 = vmatpush2.msra.mxu0 0.0
        %3614 = vmatprep.subr.mxu0 0.0
        %3615 = vmatpush2.msra.mxu0 0.0
        %3616 = vmatprep.subr.mxu0 0.0
        %3617 = vmatpush2.msra.mxu0 0.0
        %3618 = vmatprep.subr.mxu0 0.0
        %3619 = vmatpush2.msra.mxu0 0.0
        %3620 = vmatprep.subr.mxu0 0.0
        %3621 = vmatpush2.msra.mxu0 0.0
        %3622 = vmatprep.subr.mxu0 0.0
        %3623 = vmatpush2.msra.mxu0 0.0
        %3624 = vmatprep.subr.mxu0 0.0
        %3625 = vmatpush2.msra.mxu0 0.0
        %3626 = vmatprep.subr.mxu0 0.0
        %3627 = vmatpush2.msra.mxu0 0.0
        %3628 = vmatprep.subr.mxu0 0.0
        %3629 = vmatpush2.msra.mxu0 0.0
        %3630 = vmatprep.subr.mxu0 0.0
        %3631 = vmatpush2.msra.mxu0 0.0
        %3632 = vmatprep.subr.mxu0 0.0
        %3633 = vmatpush2.msra.mxu0 0.0
        %3634 = vmatprep.subr.mxu0 0.0
        %3635 = vmatpush2.msra.mxu0 0.0
        %3636 = vmatprep.subr.mxu0 0.0
        %3637 = vmatpush2.msra.mxu0 0.0
        %3638 = vmatprep.subr.mxu0 0.0
        %3639 = vmatpush2.msra.mxu0 0.0
        %3640 = vmatprep.subr.mxu0 0.0
        %3641 = vmatpush2.msra.mxu0 0.0
        %3642 = vmatprep.subr.mxu0 0.0
        %3643 = vmatpush2.msra.mxu0 0.0
        %3644 = vmatprep.mubr.f32.mxu0 0.0
        %3645 = vmatmul.mubr.f32.gmra.mxu0 %v3578
        %v3646 = vpop.f32.mrf.mxu0
        %v3647 = vadd.f32 %v392, %v3646
        %v3648 = vpop.f32.mrf.mxu0
        %3649 = vdwg.mxu0
        %v3650 = vmul.f32 %v385, %v3647
        %v3651 = vadd.f32 %v3498, %v3650
        %v3652 = vmax.f32 %v3651, 0.0
        %v3654 = vsel %vm394, %v3652, 0
        %3656 = vmatprep.subr.mxu0 0.0
        %3657 = vmatpush1.msra.mxu0 0.0
        %3658 = vmatprep.subr.mxu0 0.0
        %3659 = vmatpush1.msra.mxu0 0.0
        %3660 = vmatprep.subr.mxu0 0.0
        %3661 = vmatpush1.msra.mxu0 0.0
        %3662 = vmatprep.subr.mxu0 0.0
        %3663 = vmatpush1.msra.mxu0 0.0
        %3664 = vmatprep.subr.mxu0 0.0
        %3665 = vmatpush1.msra.mxu0 0.0
        %3666 = vmatprep.subr.mxu0 0.0
        %3667 = vmatpush1.msra.mxu0 0.0
        %3668 = vmatprep.subr.mxu0 0.0
        %3669 = vmatpush1.msra.mxu0 0.0
        %3670 = vmatprep.subr.mxu0 0.0
        %3671 = vmatpush1.msra.mxu0 0.0
        %3672 = vmatprep.subr.mxu0 0.0
        %3673 = vmatpush1.msra.mxu0 %v97
        %3674 = vmatprep.subr.mxu0 0.0
        %3675 = vmatpush1.msra.mxu0 %v96
        %3676 = vmatprep.subr.mxu0 0.0
        %3677 = vmatpush1.msra.mxu0 %v95
        %3678 = vmatprep.subr.mxu0 0.0
        %3679 = vmatpush1.msra.mxu0 %v94
        %3680 = vmatprep.subr.mxu0 0.0
        %3681 = vmatpush1.msra.mxu0 %v93
        %3682 = vmatprep.subr.mxu0 0.0
        %3683 = vmatpush1.msra.mxu0 %v92
        %3684 = vmatprep.subr.mxu0 0.0
        %3685 = vmatpush1.msra.mxu0 %v91
        %3686 = vmatprep.subr.mxu0 0.0
        %3687 = vmatpush1.msra.mxu0 %v90
        %3688 = vmatprep.subr.mxu0 0.0
        %3689 = vmatpush2.msra.mxu0 0.0
        %3690 = vmatprep.subr.mxu0 0.0
        %3691 = vmatpush2.msra.mxu0 0.0
        %3692 = vmatprep.subr.mxu0 0.0
        %3693 = vmatpush2.msra.mxu0 0.0
        %3694 = vmatprep.subr.mxu0 0.0
        %3695 = vmatpush2.msra.mxu0 0.0
        %3696 = vmatprep.subr.mxu0 0.0
        %3697 = vmatpush2.msra.mxu0 0.0
        %3698 = vmatprep.subr.mxu0 0.0
        %3699 = vmatpush2.msra.mxu0 0.0
        %3700 = vmatprep.subr.mxu0 0.0
        %3701 = vmatpush2.msra.mxu0 0.0
        %3702 = vmatprep.subr.mxu0 0.0
        %3703 = vmatpush2.msra.mxu0 0.0
        %3704 = vmatprep.subr.mxu0 0.0
        %3705 = vmatpush2.msra.mxu0 0.0
        %3706 = vmatprep.subr.mxu0 0.0
        %3707 = vmatpush2.msra.mxu0 0.0
        %3708 = vmatprep.subr.mxu0 0.0
        %3709 = vmatpush2.msra.mxu0 0.0
        %3710 = vmatprep.subr.mxu0 0.0
        %3711 = vmatpush2.msra.mxu0 0.0
        %3712 = vmatprep.subr.mxu0 0.0
        %3713 = vmatpush2.msra.mxu0 0.0
        %3714 = vmatprep.subr.mxu0 0.0
        %3715 = vmatpush2.msra.mxu0 0.0
        %3716 = vmatprep.subr.mxu0 0.0
        %3717 = vmatpush2.msra.mxu0 0.0
        %3718 = vmatprep.subr.mxu0 0.0
        %3719 = vmatpush2.msra.mxu0 0.0
        %3720 = vmatprep.mubr.f32.mxu0 0.0
        %3721 = vmatmul.mubr.f32.gmra.mxu0 %v3654
        %v3722 = vpop.f32.mrf.mxu0
        %v3723 = vadd.f32 %v392, %v3722
        %v3724 = vpop.f32.mrf.mxu0
        %3725 = vdwg.mxu0
        %v3726 = vmul.f32 %v382, %v3723
        %v3727 = vadd.f32 %v3498, %v3726
        %v3728 = vmax.f32 %v3727, 0.0
        %v3729 = vadd.f32 %v3576, %v3652
        %v3730 = vmul.f32 %v3729, 2.0
        %v3731 = vadd.f32 %v3500, %v3730
        %v3732 = vadd.f32 %v3731, %v3728
        %v3734 = vsel %vm394, %v3732, 0
        %3736 = vmatprep.subr.mxu0 0.0
        %3737 = vmatpush1.msra.mxu0 0.0
        %3738 = vmatprep.subr.mxu0 0.0
        %3739 = vmatpush1.msra.mxu0 0.0
        %3740 = vmatprep.subr.mxu0 0.0
        %3741 = vmatpush1.msra.mxu0 0.0
        %3742 = vmatprep.subr.mxu0 0.0
        %3743 = vmatpush1.msra.mxu0 0.0
        %3744 = vmatprep.subr.mxu0 0.0
        %3745 = vmatpush1.msra.mxu0 0.0
        %3746 = vmatprep.subr.mxu0 0.0
        %3747 = vmatpush1.msra.mxu0 0.0
        %3748 = vmatprep.subr.mxu0 0.0
        %3749 = vmatpush1.msra.mxu0 0.0
        %3750 = vmatprep.subr.mxu0 0.0
        %3751 = vmatpush1.msra.mxu0 0.0
        %3752 = vmatprep.subr.mxu0 0.0
        %3753 = vmatpush1.msra.mxu0 %v97
        %3754 = vmatprep.subr.mxu0 0.0
        %3755 = vmatpush1.msra.mxu0 %v96
        %3756 = vmatprep.subr.mxu0 0.0
        %3757 = vmatpush1.msra.mxu0 %v95
        %3758 = vmatprep.subr.mxu0 0.0
        %3759 = vmatpush1.msra.mxu0 %v94
        %3760 = vmatprep.subr.mxu0 0.0
        %3761 = vmatpush1.msra.mxu0 %v93
        %3762 = vmatprep.subr.mxu0 0.0
        %3763 = vmatpush1.msra.mxu0 %v92
        %3764 = vmatprep.subr.mxu0 0.0
        %3765 = vmatpush1.msra.mxu0 %v91
        %3766 = vmatprep.subr.mxu0 0.0
        %3767 = vmatpush1.msra.mxu0 %v90
        %3768 = vmatprep.subr.mxu0 0.0
        %3769 = vmatpush2.msra.mxu0 0.0
        %3770 = vmatprep.subr.mxu0 0.0
        %3771 = vmatpush2.msra.mxu0 0.0
        %3772 = vmatprep.subr.mxu0 0.0
        %3773 = vmatpush2.msra.mxu0 0.0
        %3774 = vmatprep.subr.mxu0 0.0
        %3775 = vmatpush2.msra.mxu0 0.0
        %3776 = vmatprep.subr.mxu0 0.0
        %3777 = vmatpush2.msra.mxu0 0.0
        %3778 = vmatprep.subr.mxu0 0.0
        %3779 = vmatpush2.msra.mxu0 0.0
        %3780 = vmatprep.subr.mxu0 0.0
        %3781 = vmatpush2.msra.mxu0 0.0
        %3782 = vmatprep.subr.mxu0 0.0
        %3783 = vmatpush2.msra.mxu0 0.0
        %3784 = vmatprep.subr.mxu0 0.0
        %3785 = vmatpush2.msra.mxu0 0.0
        %3786 = vmatprep.subr.mxu0 0.0
        %3787 = vmatpush2.msra.mxu0 0.0
        %3788 = vmatprep.subr.mxu0 0.0
        %3789 = vmatpush2.msra.mxu0 0.0
        %3790 = vmatprep.subr.mxu0 0.0
        %3791 = vmatpush2.msra.mxu0 0.0
        %3792 = vmatprep.subr.mxu0 0.0
        %3793 = vmatpush2.msra.mxu0 0.0
        %3794 = vmatprep.subr.mxu0 0.0
        %3795 = vmatpush2.msra.mxu0 0.0
        %3796 = vmatprep.subr.mxu0 0.0
        %3797 = vmatpush2.msra.mxu0 0.0
        %3798 = vmatprep.subr.mxu0 0.0
        %3799 = vmatpush2.msra.mxu0 0.0
        %3800 = vmatprep.mubr.f32.mxu0 0.0
        %3801 = vmatmul.mubr.f32.gmra.mxu0 %v3734
        %v3802 = vpop.f32.mrf.mxu0
        %v3803 = vadd.f32 0.0, %v3802
        %v3804 = vpop.f32.mrf.mxu0
        %3805 = vdwg.mxu0
        %v3806 = vmul.f32 %v386, %v3803
        %v3807 = vadd.f32 %v3498, %v3806
        %v3808 = vadd.f32 %v3807, %v706
        %v3809 = vadd.f32 %v3499, %v3732
        %v3810 = vmax.f32 %v3808, 0.0
        %v3812 = vsel %vm394, %v3810, 0
        %3814 = vmatprep.subr.mxu0 0.0
        %3815 = vmatpush1.msra.mxu0 0.0
        %3816 = vmatprep.subr.mxu0 0.0
        %3817 = vmatpush1.msra.mxu0 0.0
        %3818 = vmatprep.subr.mxu0 0.0
        %3819 = vmatpush1.msra.mxu0 0.0
        %3820 = vmatprep.subr.mxu0 0.0
        %3821 = vmatpush1.msra.mxu0 0.0
        %3822 = vmatprep.subr.mxu0 0.0
        %3823 = vmatpush1.msra.mxu0 0.0
        %3824 = vmatprep.subr.mxu0 0.0
        %3825 = vmatpush1.msra.mxu0 0.0
        %3826 = vmatprep.subr.mxu0 0.0
        %3827 = vmatpush1.msra.mxu0 0.0
        %3828 = vmatprep.subr.mxu0 0.0
        %3829 = vmatpush1.msra.mxu0 0.0
        %3830 = vmatprep.subr.mxu0 0.0
        %3831 = vmatpush1.msra.mxu0 %v97
        %3832 = vmatprep.subr.mxu0 0.0
        %3833 = vmatpush1.msra.mxu0 %v96
        %3834 = vmatprep.subr.mxu0 0.0
        %3835 = vmatpush1.msra.mxu0 %v95
        %3836 = vmatprep.subr.mxu0 0.0
        %3837 = vmatpush1.msra.mxu0 %v94
        %3838 = vmatprep.subr.mxu0 0.0
        %3839 = vmatpush1.msra.mxu0 %v93
        %3840 = vmatprep.subr.mxu0 0.0
        %3841 = vmatpush1.msra.mxu0 %v92
        %3842 = vmatprep.subr.mxu0 0.0
        %3843 = vmatpush1.msra.mxu0 %v91
        %3844 = vmatprep.subr.mxu0 0.0
        %3845 = vmatpush1.msra.mxu0 %v90
        %3846 = vmatprep.subr.mxu0 0.0
        %3847 = vmatpush2.msra.mxu0 0.0
        %3848 = vmatprep.subr.mxu0 0.0
        %3849 = vmatpush2.msra.mxu0 0.0
        %3850 = vmatprep.subr.mxu0 0.0
        %3851 = vmatpush2.msra.mxu0 0.0
        %3852 = vmatprep.subr.mxu0 0.0
        %3853 = vmatpush2.msra.mxu0 0.0
        %3854 = vmatprep.subr.mxu0 0.0
        %3855 = vmatpush2.msra.mxu0 0.0
        %3856 = vmatprep.subr.mxu0 0.0
        %3857 = vmatpush2.msra.mxu0 0.0
        %3858 = vmatprep.subr.mxu0 0.0
        %3859 = vmatpush2.msra.mxu0 0.0
        %3860 = vmatprep.subr.mxu0 0.0
        %3861 = vmatpush2.msra.mxu0 0.0
        %3862 = vmatprep.subr.mxu0 0.0
        %3863 = vmatpush2.msra.mxu0 0.0
        %3864 = vmatprep.subr.mxu0 0.0
        %3865 = vmatpush2.msra.mxu0 0.0
        %3866 = vmatprep.subr.mxu0 0.0
        %3867 = vmatpush2.msra.mxu0 0.0
        %3868 = vmatprep.subr.mxu0 0.0
        %3869 = vmatpush2.msra.mxu0 0.0
        %3870 = vmatprep.subr.mxu0 0.0
        %3871 = vmatpush2.msra.mxu0 0.0
        %3872 = vmatprep.subr.mxu0 0.0
        %3873 = vmatpush2.msra.mxu0 0.0
        %3874 = vmatprep.subr.mxu0 0.0
        %3875 = vmatpush2.msra.mxu0 0.0
        %3876 = vmatprep.subr.mxu0 0.0
        %3877 = vmatpush2.msra.mxu0 0.0
        %3878 = vmatprep.mubr.f32.mxu0 0.0
        %3879 = vmatmul.mubr.f32.gmra.mxu0 %v3812
        %v3880 = vpop.f32.mrf.mxu0
        %v3881 = vadd.f32 %v392, %v3880
        %v3882 = vpop.f32.mrf.mxu0
        %3883 = vdwg.mxu0
        %v3884 = vmul.f32 %v385, %v3881
        %v3885 = vadd.f32 %v3808, %v3884
        %v3886 = vmax.f32 %v3885, 0.0
        %v3888 = vsel %vm394, %v3886, 0
        %3890 = vmatprep.subr.mxu0 0.0
        %3891 = vmatpush1.msra.mxu0 0.0
        %3892 = vmatprep.subr.mxu0 0.0
        %3893 = vmatpush1.msra.mxu0 0.0
        %3894 = vmatprep.subr.mxu0 0.0
        %3895 = vmatpush1.msra.mxu0 0.0
        %3896 = vmatprep.subr.mxu0 0.0
        %3897 = vmatpush1.msra.mxu0 0.0
        %3898 = vmatprep.subr.mxu0 0.0
        %3899 = vmatpush1.msra.mxu0 0.0
        %3900 = vmatprep.subr.mxu0 0.0
        %3901 = vmatpush1.msra.mxu0 0.0
        %3902 = vmatprep.subr.mxu0 0.0
        %3903 = vmatpush1.msra.mxu0 0.0
        %3904 = vmatprep.subr.mxu0 0.0
        %3905 = vmatpush1.msra.mxu0 0.0
        %3906 = vmatprep.subr.mxu0 0.0
        %3907 = vmatpush1.msra.mxu0 %v97
        %3908 = vmatprep.subr.mxu0 0.0
        %3909 = vmatpush1.msra.mxu0 %v96
        %3910 = vmatprep.subr.mxu0 0.0
        %3911 = vmatpush1.msra.mxu0 %v95
        %3912 = vmatprep.subr.mxu0 0.0
        %3913 = vmatpush1.msra.mxu0 %v94
        %3914 = vmatprep.subr.mxu0 0.0
        %3915 = vmatpush1.msra.mxu0 %v93
        %3916 = vmatprep.subr.mxu0 0.0
        %3917 = vmatpush1.msra.mxu0 %v92
        %3918 = vmatprep.subr.mxu0 0.0
        %3919 = vmatpush1.msra.mxu0 %v91
        %3920 = vmatprep.subr.mxu0 0.0
        %3921 = vmatpush1.msra.mxu0 %v90
        %3922 = vmatprep.subr.mxu0 0.0
        %3923 = vmatpush2.msra.mxu0 0.0
        %3924 = vmatprep.subr.mxu0 0.0
        %3925 = vmatpush2.msra.mxu0 0.0
        %3926 = vmatprep.subr.mxu0 0.0
        %3927 = vmatpush2.msra.mxu0 0.0
        %3928 = vmatprep.subr.mxu0 0.0
        %3929 = vmatpush2.msra.mxu0 0.0
        %3930 = vmatprep.subr.mxu0 0.0
        %3931 = vmatpush2.msra.mxu0 0.0
        %3932 = vmatprep.subr.mxu0 0.0
        %3933 = vmatpush2.msra.mxu0 0.0
        %3934 = vmatprep.subr.mxu0 0.0
        %3935 = vmatpush2.msra.mxu0 0.0
        %3936 = vmatprep.subr.mxu0 0.0
        %3937 = vmatpush2.msra.mxu0 0.0
        %3938 = vmatprep.subr.mxu0 0.0
        %3939 = vmatpush2.msra.mxu0 0.0
        %3940 = vmatprep.subr.mxu0 0.0
        %3941 = vmatpush2.msra.mxu0 0.0
        %3942 = vmatprep.subr.mxu0 0.0
        %3943 = vmatpush2.msra.mxu0 0.0
        %3944 = vmatprep.subr.mxu0 0.0
        %3945 = vmatpush2.msra.mxu0 0.0
        %3946 = vmatprep.subr.mxu0 0.0
        %3947 = vmatpush2.msra.mxu0 0.0
        %3948 = vmatprep.subr.mxu0 0.0
        %3949 = vmatpush2.msra.mxu0 0.0
        %3950 = vmatprep.subr.mxu0 0.0
        %3951 = vmatpush2.msra.mxu0 0.0
        %3952 = vmatprep.subr.mxu0 0.0
        %3953 = vmatpush2.msra.mxu0 0.0
        %3954 = vmatprep.mubr.f32.mxu0 0.0
        %3955 = vmatmul.mubr.f32.gmra.mxu0 %v3888
        %v3956 = vpop.f32.mrf.mxu0
        %v3957 = vadd.f32 %v392, %v3956
        %v3958 = vpop.f32.mrf.mxu0
        %3959 = vdwg.mxu0
        %v3960 = vmul.f32 %v385, %v3957
        %v3961 = vadd.f32 %v3808, %v3960
        %v3962 = vmax.f32 %v3961, 0.0
        %v3964 = vsel %vm394, %v3962, 0
        %3966 = vmatprep.subr.mxu0 0.0
        %3967 = vmatpush1.msra.mxu0 0.0
        %3968 = vmatprep.subr.mxu0 0.0
        %3969 = vmatpush1.msra.mxu0 0.0
        %3970 = vmatprep.subr.mxu0 0.0
        %3971 = vmatpush1.msra.mxu0 0.0
        %3972 = vmatprep.subr.mxu0 0.0
        %3973 = vmatpush1.msra.mxu0 0.0
        %3974 = vmatprep.subr.mxu0 0.0
        %3975 = vmatpush1.msra.mxu0 0.0
        %3976 = vmatprep.subr.mxu0 0.0
        %3977 = vmatpush1.msra.mxu0 0.0
        %3978 = vmatprep.subr.mxu0 0.0
        %3979 = vmatpush1.msra.mxu0 0.0
        %3980 = vmatprep.subr.mxu0 0.0
        %3981 = vmatpush1.msra.mxu0 0.0
        %3982 = vmatprep.subr.mxu0 0.0
        %3983 = vmatpush1.msra.mxu0 %v97
        %3984 = vmatprep.subr.mxu0 0.0
        %3985 = vmatpush1.msra.mxu0 %v96
        %3986 = vmatprep.subr.mxu0 0.0
        %3987 = vmatpush1.msra.mxu0 %v95
        %3988 = vmatprep.subr.mxu0 0.0
        %3989 = vmatpush1.msra.mxu0 %v94
        %3990 = vmatprep.subr.mxu0 0.0
        %3991 = vmatpush1.msra.mxu0 %v93
        %3992 = vmatprep.subr.mxu0 0.0
        %3993 = vmatpush1.msra.mxu0 %v92
        %3994 = vmatprep.subr.mxu0 0.0
        %3995 = vmatpush1.msra.mxu0 %v91
        %3996 = vmatprep.subr.mxu0 0.0
        %3997 = vmatpush1.msra.mxu0 %v90
        %3998 = vmatprep.subr.mxu0 0.0
        %3999 = vmatpush2.msra.mxu0 0.0
        %4000 = vmatprep.subr.mxu0 0.0
        %4001 = vmatpush2.msra.mxu0 0.0
        %4002 = vmatprep.subr.mxu0 0.0
        %4003 = vmatpush2.msra.mxu0 0.0
        %4004 = vmatprep.subr.mxu0 0.0
        %4005 = vmatpush2.msra.mxu0 0.0
        %4006 = vmatprep.subr.mxu0 0.0
        %4007 = vmatpush2.msra.mxu0 0.0
        %4008 = vmatprep.subr.mxu0 0.0
        %4009 = vmatpush2.msra.mxu0 0.0
        %4010 = vmatprep.subr.mxu0 0.0
        %4011 = vmatpush2.msra.mxu0 0.0
        %4012 = vmatprep.subr.mxu0 0.0
        %4013 = vmatpush2.msra.mxu0 0.0
        %4014 = vmatprep.subr.mxu0 0.0
        %4015 = vmatpush2.msra.mxu0 0.0
        %4016 = vmatprep.subr.mxu0 0.0
        %4017 = vmatpush2.msra.mxu0 0.0
        %4018 = vmatprep.subr.mxu0 0.0
        %4019 = vmatpush2.msra.mxu0 0.0
        %4020 = vmatprep.subr.mxu0 0.0
        %4021 = vmatpush2.msra.mxu0 0.0
        %4022 = vmatprep.subr.mxu0 0.0
        %4023 = vmatpush2.msra.mxu0 0.0
        %4024 = vmatprep.subr.mxu0 0.0
        %4025 = vmatpush2.msra.mxu0 0.0
        %4026 = vmatprep.subr.mxu0 0.0
        %4027 = vmatpush2.msra.mxu0 0.0
        %4028 = vmatprep.subr.mxu0 0.0
        %4029 = vmatpush2.msra.mxu0 0.0
        %4030 = vmatprep.mubr.f32.mxu0 0.0
        %4031 = vmatmul.mubr.f32.gmra.mxu0 %v3964
        %v4032 = vpop.f32.mrf.mxu0
        %v4033 = vadd.f32 %v392, %v4032
        %v4034 = vpop.f32.mrf.mxu0
        %4035 = vdwg.mxu0
        %v4036 = vmul.f32 %v382, %v4033
        %v4037 = vadd.f32 %v3808, %v4036
        %v4038 = vmax.f32 %v4037, 0.0
        %v4039 = vadd.f32 %v3886, %v3962
        %v4040 = vmul.f32 %v4039, 2.0
        %v4041 = vadd.f32 %v3810, %v4040
        %v4042 = vadd.f32 %v4041, %v4038
        %v4044 = vsel %vm394, %v4042, 0
        %4046 = vmatprep.subr.mxu0 0.0
        %4047 = vmatpush1.msra.mxu0 0.0
        %4048 = vmatprep.subr.mxu0 0.0
        %4049 = vmatpush1.msra.mxu0 0.0
        %4050 = vmatprep.subr.mxu0 0.0
        %4051 = vmatpush1.msra.mxu0 0.0
        %4052 = vmatprep.subr.mxu0 0.0
        %4053 = vmatpush1.msra.mxu0 0.0
        %4054 = vmatprep.subr.mxu0 0.0
        %4055 = vmatpush1.msra.mxu0 0.0
        %4056 = vmatprep.subr.mxu0 0.0
        %4057 = vmatpush1.msra.mxu0 0.0
        %4058 = vmatprep.subr.mxu0 0.0
        %4059 = vmatpush1.msra.mxu0 0.0
        %4060 = vmatprep.subr.mxu0 0.0
        %4061 = vmatpush1.msra.mxu0 0.0
        %4062 = vmatprep.subr.mxu0 0.0
        %4063 = vmatpush1.msra.mxu0 %v97
        %4064 = vmatprep.subr.mxu0 0.0
        %4065 = vmatpush1.msra.mxu0 %v96
        %4066 = vmatprep.subr.mxu0 0.0
        %4067 = vmatpush1.msra.mxu0 %v95
        %4068 = vmatprep.subr.mxu0 0.0
        %4069 = vmatpush1.msra.mxu0 %v94
        %4070 = vmatprep.subr.mxu0 0.0
        %4071 = vmatpush1.msra.mxu0 %v93
        %4072 = vmatprep.subr.mxu0 0.0
        %4073 = vmatpush1.msra.mxu0 %v92
        %4074 = vmatprep.subr.mxu0 0.0
        %4075 = vmatpush1.msra.mxu0 %v91
        %4076 = vmatprep.subr.mxu0 0.0
        %4077 = vmatpush1.msra.mxu0 %v90
        %4078 = vmatprep.subr.mxu0 0.0
        %4079 = vmatpush2.msra.mxu0 0.0
        %4080 = vmatprep.subr.mxu0 0.0
        %4081 = vmatpush2.msra.mxu0 0.0
        %4082 = vmatprep.subr.mxu0 0.0
        %4083 = vmatpush2.msra.mxu0 0.0
        %4084 = vmatprep.subr.mxu0 0.0
        %4085 = vmatpush2.msra.mxu0 0.0
        %4086 = vmatprep.subr.mxu0 0.0
        %4087 = vmatpush2.msra.mxu0 0.0
        %4088 = vmatprep.subr.mxu0 0.0
        %4089 = vmatpush2.msra.mxu0 0.0
        %4090 = vmatprep.subr.mxu0 0.0
        %4091 = vmatpush2.msra.mxu0 0.0
        %4092 = vmatprep.subr.mxu0 0.0
        %4093 = vmatpush2.msra.mxu0 0.0
        %4094 = vmatprep.subr.mxu0 0.0
        %4095 = vmatpush2.msra.mxu0 0.0
        %4096 = vmatprep.subr.mxu0 0.0
        %4097 = vmatpush2.msra.mxu0 0.0
        %4098 = vmatprep.subr.mxu0 0.0
        %4099 = vmatpush2.msra.mxu0 0.0
        %4100 = vmatprep.subr.mxu0 0.0
        %4101 = vmatpush2.msra.mxu0 0.0
        %4102 = vmatprep.subr.mxu0 0.0
        %4103 = vmatpush2.msra.mxu0 0.0
        %4104 = vmatprep.subr.mxu0 0.0
        %4105 = vmatpush2.msra.mxu0 0.0
        %4106 = vmatprep.subr.mxu0 0.0
        %4107 = vmatpush2.msra.mxu0 0.0
        %4108 = vmatprep.subr.mxu0 0.0
        %4109 = vmatpush2.msra.mxu0 0.0
        %4110 = vmatprep.mubr.f32.mxu0 0.0
        %4111 = vmatmul.mubr.f32.gmra.mxu0 %v4044
        %v4112 = vpop.f32.mrf.mxu0
        %v4113 = vadd.f32 0.0, %v4112
        %v4114 = vpop.f32.mrf.mxu0
        %4115 = vdwg.mxu0
        %v4116 = vmul.f32 %v386, %v4113
        %v4117 = vadd.f32 %v3808, %v4116
        %v4118 = vadd.f32 %v4117, %v706
        %v4119 = vadd.f32 %v3809, %v4042
        %v4120 = vmax.f32 %v4118, 0.0
        %v4122 = vsel %vm394, %v4120, 0
        %4124 = vmatprep.subr.mxu0 0.0
        %4125 = vmatpush1.msra.mxu0 0.0
        %4126 = vmatprep.subr.mxu0 0.0
        %4127 = vmatpush1.msra.mxu0 0.0
        %4128 = vmatprep.subr.mxu0 0.0
        %4129 = vmatpush1.msra.mxu0 0.0
        %4130 = vmatprep.subr.mxu0 0.0
        %4131 = vmatpush1.msra.mxu0 0.0
        %4132 = vmatprep.subr.mxu0 0.0
        %4133 = vmatpush1.msra.mxu0 0.0
        %4134 = vmatprep.subr.mxu0 0.0
        %4135 = vmatpush1.msra.mxu0 0.0
        %4136 = vmatprep.subr.mxu0 0.0
        %4137 = vmatpush1.msra.mxu0 0.0
        %4138 = vmatprep.subr.mxu0 0.0
        %4139 = vmatpush1.msra.mxu0 0.0
        %4140 = vmatprep.subr.mxu0 0.0
        %4141 = vmatpush1.msra.mxu0 %v97
        %4142 = vmatprep.subr.mxu0 0.0
        %4143 = vmatpush1.msra.mxu0 %v96
        %4144 = vmatprep.subr.mxu0 0.0
        %4145 = vmatpush1.msra.mxu0 %v95
        %4146 = vmatprep.subr.mxu0 0.0
        %4147 = vmatpush1.msra.mxu0 %v94
        %4148 = vmatprep.subr.mxu0 0.0
        %4149 = vmatpush1.msra.mxu0 %v93
        %4150 = vmatprep.subr.mxu0 0.0
        %4151 = vmatpush1.msra.mxu0 %v92
        %4152 = vmatprep.subr.mxu0 0.0
        %4153 = vmatpush1.msra.mxu0 %v91
        %4154 = vmatprep.subr.mxu0 0.0
        %4155 = vmatpush1.msra.mxu0 %v90
        %4156 = vmatprep.subr.mxu0 0.0
        %4157 = vmatpush2.msra.mxu0 0.0
        %4158 = vmatprep.subr.mxu0 0.0
        %4159 = vmatpush2.msra.mxu0 0.0
        %4160 = vmatprep.subr.mxu0 0.0
        %4161 = vmatpush2.msra.mxu0 0.0
        %4162 = vmatprep.subr.mxu0 0.0
        %4163 = vmatpush2.msra.mxu0 0.0
        %4164 = vmatprep.subr.mxu0 0.0
        %4165 = vmatpush2.msra.mxu0 0.0
        %4166 = vmatprep.subr.mxu0 0.0
        %4167 = vmatpush2.msra.mxu0 0.0
        %4168 = vmatprep.subr.mxu0 0.0
        %4169 = vmatpush2.msra.mxu0 0.0
        %4170 = vmatprep.subr.mxu0 0.0
        %4171 = vmatpush2.msra.mxu0 0.0
        %4172 = vmatprep.subr.mxu0 0.0
        %4173 = vmatpush2.msra.mxu0 0.0
        %4174 = vmatprep.subr.mxu0 0.0
        %4175 = vmatpush2.msra.mxu0 0.0
        %4176 = vmatprep.subr.mxu0 0.0
        %4177 = vmatpush2.msra.mxu0 0.0
        %4178 = vmatprep.subr.mxu0 0.0
        %4179 = vmatpush2.msra.mxu0 0.0
        %4180 = vmatprep.subr.mxu0 0.0
        %4181 = vmatpush2.msra.mxu0 0.0
        %4182 = vmatprep.subr.mxu0 0.0
        %4183 = vmatpush2.msra.mxu0 0.0
        %4184 = vmatprep.subr.mxu0 0.0
        %4185 = vmatpush2.msra.mxu0 0.0
        %4186 = vmatprep.subr.mxu0 0.0
        %4187 = vmatpush2.msra.mxu0 0.0
        %4188 = vmatprep.mubr.f32.mxu0 0.0
        %4189 = vmatmul.mubr.f32.gmra.mxu0 %v4122
        %v4190 = vpop.f32.mrf.mxu0
        %v4191 = vadd.f32 %v392, %v4190
        %v4192 = vpop.f32.mrf.mxu0
        %4193 = vdwg.mxu0
        %v4194 = vmul.f32 %v385, %v4191
        %v4195 = vadd.f32 %v4118, %v4194
        %v4196 = vmax.f32 %v4195, 0.0
        %v4198 = vsel %vm394, %v4196, 0
        %4200 = vmatprep.subr.mxu0 0.0
        %4201 = vmatpush1.msra.mxu0 0.0
        %4202 = vmatprep.subr.mxu0 0.0
        %4203 = vmatpush1.msra.mxu0 0.0
        %4204 = vmatprep.subr.mxu0 0.0
        %4205 = vmatpush1.msra.mxu0 0.0
        %4206 = vmatprep.subr.mxu0 0.0
        %4207 = vmatpush1.msra.mxu0 0.0
        %4208 = vmatprep.subr.mxu0 0.0
        %4209 = vmatpush1.msra.mxu0 0.0
        %4210 = vmatprep.subr.mxu0 0.0
        %4211 = vmatpush1.msra.mxu0 0.0
        %4212 = vmatprep.subr.mxu0 0.0
        %4213 = vmatpush1.msra.mxu0 0.0
        %4214 = vmatprep.subr.mxu0 0.0
        %4215 = vmatpush1.msra.mxu0 0.0
        %4216 = vmatprep.subr.mxu0 0.0
        %4217 = vmatpush1.msra.mxu0 %v97
        %4218 = vmatprep.subr.mxu0 0.0
        %4219 = vmatpush1.msra.mxu0 %v96
        %4220 = vmatprep.subr.mxu0 0.0
        %4221 = vmatpush1.msra.mxu0 %v95
        %4222 = vmatprep.subr.mxu0 0.0
        %4223 = vmatpush1.msra.mxu0 %v94
        %4224 = vmatprep.subr.mxu0 0.0
        %4225 = vmatpush1.msra.mxu0 %v93
        %4226 = vmatprep.subr.mxu0 0.0
        %4227 = vmatpush1.msra.mxu0 %v92
        %4228 = vmatprep.subr.mxu0 0.0
        %4229 = vmatpush1.msra.mxu0 %v91
        %4230 = vmatprep.subr.mxu0 0.0
        %4231 = vmatpush1.msra.mxu0 %v90
        %4232 = vmatprep.subr.mxu0 0.0
        %4233 = vmatpush2.msra.mxu0 0.0
        %4234 = vmatprep.subr.mxu0 0.0
        %4235 = vmatpush2.msra.mxu0 0.0
        %4236 = vmatprep.subr.mxu0 0.0
        %4237 = vmatpush2.msra.mxu0 0.0
        %4238 = vmatprep.subr.mxu0 0.0
        %4239 = vmatpush2.msra.mxu0 0.0
        %4240 = vmatprep.subr.mxu0 0.0
        %4241 = vmatpush2.msra.mxu0 0.0
        %4242 = vmatprep.subr.mxu0 0.0
        %4243 = vmatpush2.msra.mxu0 0.0
        %4244 = vmatprep.subr.mxu0 0.0
        %4245 = vmatpush2.msra.mxu0 0.0
        %4246 = vmatprep.subr.mxu0 0.0
        %4247 = vmatpush2.msra.mxu0 0.0
        %4248 = vmatprep.subr.mxu0 0.0
        %4249 = vmatpush2.msra.mxu0 0.0
        %4250 = vmatprep.subr.mxu0 0.0
        %4251 = vmatpush2.msra.mxu0 0.0
        %4252 = vmatprep.subr.mxu0 0.0
        %4253 = vmatpush2.msra.mxu0 0.0
        %4254 = vmatprep.subr.mxu0 0.0
        %4255 = vmatpush2.msra.mxu0 0.0
        %4256 = vmatprep.subr.mxu0 0.0
        %4257 = vmatpush2.msra.mxu0 0.0
        %4258 = vmatprep.subr.mxu0 0.0
        %4259 = vmatpush2.msra.mxu0 0.0
        %4260 = vmatprep.subr.mxu0 0.0
        %4261 = vmatpush2.msra.mxu0 0.0
        %4262 = vmatprep.subr.mxu0 0.0
        %4263 = vmatpush2.msra.mxu0 0.0
        %4264 = vmatprep.mubr.f32.mxu0 0.0
        %4265 = vmatmul.mubr.f32.gmra.mxu0 %v4198
        %v4266 = vpop.f32.mrf.mxu0
        %v4267 = vadd.f32 %v392, %v4266
        %v4268 = vpop.f32.mrf.mxu0
        %4269 = vdwg.mxu0
        %v4270 = vmul.f32 %v385, %v4267
        %v4271 = vadd.f32 %v4118, %v4270
        %v4272 = vmax.f32 %v4271, 0.0
        %v4274 = vsel %vm394, %v4272, 0
        %4276 = vmatprep.subr.mxu0 0.0
        %4277 = vmatpush1.msra.mxu0 0.0
        %4278 = vmatprep.subr.mxu0 0.0
        %4279 = vmatpush1.msra.mxu0 0.0
        %4280 = vmatprep.subr.mxu0 0.0
        %4281 = vmatpush1.msra.mxu0 0.0
        %4282 = vmatprep.subr.mxu0 0.0
        %4283 = vmatpush1.msra.mxu0 0.0
        %4284 = vmatprep.subr.mxu0 0.0
        %4285 = vmatpush1.msra.mxu0 0.0
        %4286 = vmatprep.subr.mxu0 0.0
        %4287 = vmatpush1.msra.mxu0 0.0
        %4288 = vmatprep.subr.mxu0 0.0
        %4289 = vmatpush1.msra.mxu0 0.0
        %4290 = vmatprep.subr.mxu0 0.0
        %4291 = vmatpush1.msra.mxu0 0.0
        %4292 = vmatprep.subr.mxu0 0.0
        %4293 = vmatpush1.msra.mxu0 %v97
        %4294 = vmatprep.subr.mxu0 0.0
        %4295 = vmatpush1.msra.mxu0 %v96
        %4296 = vmatprep.subr.mxu0 0.0
        %4297 = vmatpush1.msra.mxu0 %v95
        %4298 = vmatprep.subr.mxu0 0.0
        %4299 = vmatpush1.msra.mxu0 %v94
        %4300 = vmatprep.subr.mxu0 0.0
        %4301 = vmatpush1.msra.mxu0 %v93
        %4302 = vmatprep.subr.mxu0 0.0
        %4303 = vmatpush1.msra.mxu0 %v92
        %4304 = vmatprep.subr.mxu0 0.0
        %4305 = vmatpush1.msra.mxu0 %v91
        %4306 = vmatprep.subr.mxu0 0.0
        %4307 = vmatpush1.msra.mxu0 %v90
        %4308 = vmatprep.subr.mxu0 0.0
        %4309 = vmatpush2.msra.mxu0 0.0
        %4310 = vmatprep.subr.mxu0 0.0
        %4311 = vmatpush2.msra.mxu0 0.0
        %4312 = vmatprep.subr.mxu0 0.0
        %4313 = vmatpush2.msra.mxu0 0.0
        %4314 = vmatprep.subr.mxu0 0.0
        %4315 = vmatpush2.msra.mxu0 0.0
        %4316 = vmatprep.subr.mxu0 0.0
        %4317 = vmatpush2.msra.mxu0 0.0
        %4318 = vmatprep.subr.mxu0 0.0
        %4319 = vmatpush2.msra.mxu0 0.0
        %4320 = vmatprep.subr.mxu0 0.0
        %4321 = vmatpush2.msra.mxu0 0.0
        %4322 = vmatprep.subr.mxu0 0.0
        %4323 = vmatpush2.msra.mxu0 0.0
        %4324 = vmatprep.subr.mxu0 0.0
        %4325 = vmatpush2.msra.mxu0 0.0
        %4326 = vmatprep.subr.mxu0 0.0
        %4327 = vmatpush2.msra.mxu0 0.0
        %4328 = vmatprep.subr.mxu0 0.0
        %4329 = vmatpush2.msra.mxu0 0.0
        %4330 = vmatprep.subr.mxu0 0.0
        %4331 = vmatpush2.msra.mxu0 0.0
        %4332 = vmatprep.subr.mxu0 0.0
        %4333 = vmatpush2.msra.mxu0 0.0
        %4334 = vmatprep.subr.mxu0 0.0
        %4335 = vmatpush2.msra.mxu0 0.0
        %4336 = vmatprep.subr.mxu0 0.0
        %4337 = vmatpush2.msra.mxu0 0.0
        %4338 = vmatprep.subr.mxu0 0.0
        %4339 = vmatpush2.msra.mxu0 0.0
        %4340 = vmatprep.mubr.f32.mxu0 0.0
        %4341 = vmatmul.mubr.f32.gmra.mxu0 %v4274
        %v4342 = vpop.f32.mrf.mxu0
        %v4343 = vadd.f32 %v392, %v4342
        %v4344 = vpop.f32.mrf.mxu0
        %4345 = vdwg.mxu0
        %v4346 = vmul.f32 %v382, %v4343
        %v4347 = vadd.f32 %v4118, %v4346
        %v4348 = vmax.f32 %v4347, 0.0
        %v4349 = vadd.f32 %v4196, %v4272
        %v4350 = vmul.f32 %v4349, 2.0
        %v4351 = vadd.f32 %v4120, %v4350
        %v4352 = vadd.f32 %v4351, %v4348
        %v4354 = vsel %vm394, %v4352, 0
        %4356 = vmatprep.subr.mxu0 0.0
        %4357 = vmatpush1.msra.mxu0 0.0
        %4358 = vmatprep.subr.mxu0 0.0
        %4359 = vmatpush1.msra.mxu0 0.0
        %4360 = vmatprep.subr.mxu0 0.0
        %4361 = vmatpush1.msra.mxu0 0.0
        %4362 = vmatprep.subr.mxu0 0.0
        %4363 = vmatpush1.msra.mxu0 0.0
        %4364 = vmatprep.subr.mxu0 0.0
        %4365 = vmatpush1.msra.mxu0 0.0
        %4366 = vmatprep.subr.mxu0 0.0
        %4367 = vmatpush1.msra.mxu0 0.0
        %4368 = vmatprep.subr.mxu0 0.0
        %4369 = vmatpush1.msra.mxu0 0.0
        %4370 = vmatprep.subr.mxu0 0.0
        %4371 = vmatpush1.msra.mxu0 0.0
        %4372 = vmatprep.subr.mxu0 0.0
        %4373 = vmatpush1.msra.mxu0 %v97
        %4374 = vmatprep.subr.mxu0 0.0
        %4375 = vmatpush1.msra.mxu0 %v96
        %4376 = vmatprep.subr.mxu0 0.0
        %4377 = vmatpush1.msra.mxu0 %v95
        %4378 = vmatprep.subr.mxu0 0.0
        %4379 = vmatpush1.msra.mxu0 %v94
        %4380 = vmatprep.subr.mxu0 0.0
        %4381 = vmatpush1.msra.mxu0 %v93
        %4382 = vmatprep.subr.mxu0 0.0
        %4383 = vmatpush1.msra.mxu0 %v92
        %4384 = vmatprep.subr.mxu0 0.0
        %4385 = vmatpush1.msra.mxu0 %v91
        %4386 = vmatprep.subr.mxu0 0.0
        %4387 = vmatpush1.msra.mxu0 %v90
        %4388 = vmatprep.subr.mxu0 0.0
        %4389 = vmatpush2.msra.mxu0 0.0
        %4390 = vmatprep.subr.mxu0 0.0
        %4391 = vmatpush2.msra.mxu0 0.0
        %4392 = vmatprep.subr.mxu0 0.0
        %4393 = vmatpush2.msra.mxu0 0.0
        %4394 = vmatprep.subr.mxu0 0.0
        %4395 = vmatpush2.msra.mxu0 0.0
        %4396 = vmatprep.subr.mxu0 0.0
        %4397 = vmatpush2.msra.mxu0 0.0
        %4398 = vmatprep.subr.mxu0 0.0
        %4399 = vmatpush2.msra.mxu0 0.0
        %4400 = vmatprep.subr.mxu0 0.0
        %4401 = vmatpush2.msra.mxu0 0.0
        %4402 = vmatprep.subr.mxu0 0.0
        %4403 = vmatpush2.msra.mxu0 0.0
        %4404 = vmatprep.subr.mxu0 0.0
        %4405 = vmatpush2.msra.mxu0 0.0
        %4406 = vmatprep.subr.mxu0 0.0
        %4407 = vmatpush2.msra.mxu0 0.0
        %4408 = vmatprep.subr.mxu0 0.0
        %4409 = vmatpush2.msra.mxu0 0.0
        %4410 = vmatprep.subr.mxu0 0.0
        %4411 = vmatpush2.msra.mxu0 0.0
        %4412 = vmatprep.subr.mxu0 0.0
        %4413 = vmatpush2.msra.mxu0 0.0
        %4414 = vmatprep.subr.mxu0 0.0
        %4415 = vmatpush2.msra.mxu0 0.0
        %4416 = vmatprep.subr.mxu0 0.0
        %4417 = vmatpush2.msra.mxu0 0.0
        %4418 = vmatprep.subr.mxu0 0.0
        %4419 = vmatpush2.msra.mxu0 0.0
        %4420 = vmatprep.mubr.f32.mxu0 0.0
        %4421 = vmatmul.mubr.f32.gmra.mxu0 %v4354
        %v4422 = vpop.f32.mrf.mxu0
        %v4423 = vadd.f32 0.0, %v4422
        %v4424 = vpop.f32.mrf.mxu0
        %4425 = vdwg.mxu0
        %v4426 = vmul.f32 %v386, %v4423
        %v4427 = vadd.f32 %v4118, %v4426
        %v4428 = vadd.f32 %v4427, %v706
        %v4429 = vadd.f32 %v4119, %v4352
        %v4430 = vmax.f32 %v4428, 0.0
        %v4432 = vsel %vm394, %v4430, 0
        %4434 = vmatprep.subr.mxu0 0.0
        %4435 = vmatpush1.msra.mxu0 0.0
        %4436 = vmatprep.subr.mxu0 0.0
        %4437 = vmatpush1.msra.mxu0 0.0
        %4438 = vmatprep.subr.mxu0 0.0
        %4439 = vmatpush1.msra.mxu0 0.0
        %4440 = vmatprep.subr.mxu0 0.0
        %4441 = vmatpush1.msra.mxu0 0.0
        %4442 = vmatprep.subr.mxu0 0.0
        %4443 = vmatpush1.msra.mxu0 0.0
        %4444 = vmatprep.subr.mxu0 0.0
        %4445 = vmatpush1.msra.mxu0 0.0
        %4446 = vmatprep.subr.mxu0 0.0
        %4447 = vmatpush1.msra.mxu0 0.0
        %4448 = vmatprep.subr.mxu0 0.0
        %4449 = vmatpush1.msra.mxu0 0.0
        %4450 = vmatprep.subr.mxu0 0.0
        %4451 = vmatpush1.msra.mxu0 %v97
        %4452 = vmatprep.subr.mxu0 0.0
        %4453 = vmatpush1.msra.mxu0 %v96
        %4454 = vmatprep.subr.mxu0 0.0
        %4455 = vmatpush1.msra.mxu0 %v95
        %4456 = vmatprep.subr.mxu0 0.0
        %4457 = vmatpush1.msra.mxu0 %v94
        %4458 = vmatprep.subr.mxu0 0.0
        %4459 = vmatpush1.msra.mxu0 %v93
        %4460 = vmatprep.subr.mxu0 0.0
        %4461 = vmatpush1.msra.mxu0 %v92
        %4462 = vmatprep.subr.mxu0 0.0
        %4463 = vmatpush1.msra.mxu0 %v91
        %4464 = vmatprep.subr.mxu0 0.0
        %4465 = vmatpush1.msra.mxu0 %v90
        %4466 = vmatprep.subr.mxu0 0.0
        %4467 = vmatpush2.msra.mxu0 0.0
        %4468 = vmatprep.subr.mxu0 0.0
        %4469 = vmatpush2.msra.mxu0 0.0
        %4470 = vmatprep.subr.mxu0 0.0
        %4471 = vmatpush2.msra.mxu0 0.0
        %4472 = vmatprep.subr.mxu0 0.0
        %4473 = vmatpush2.msra.mxu0 0.0
        %4474 = vmatprep.subr.mxu0 0.0
        %4475 = vmatpush2.msra.mxu0 0.0
        %4476 = vmatprep.subr.mxu0 0.0
        %4477 = vmatpush2.msra.mxu0 0.0
        %4478 = vmatprep.subr.mxu0 0.0
        %4479 = vmatpush2.msra.mxu0 0.0
        %4480 = vmatprep.subr.mxu0 0.0
        %4481 = vmatpush2.msra.mxu0 0.0
        %4482 = vmatprep.subr.mxu0 0.0
        %4483 = vmatpush2.msra.mxu0 0.0
        %4484 = vmatprep.subr.mxu0 0.0
        %4485 = vmatpush2.msra.mxu0 0.0
        %4486 = vmatprep.subr.mxu0 0.0
        %4487 = vmatpush2.msra.mxu0 0.0
        %4488 = vmatprep.subr.mxu0 0.0
        %4489 = vmatpush2.msra.mxu0 0.0
        %4490 = vmatprep.subr.mxu0 0.0
        %4491 = vmatpush2.msra.mxu0 0.0
        %4492 = vmatprep.subr.mxu0 0.0
        %4493 = vmatpush2.msra.mxu0 0.0
        %4494 = vmatprep.subr.mxu0 0.0
        %4495 = vmatpush2.msra.mxu0 0.0
        %4496 = vmatprep.subr.mxu0 0.0
        %4497 = vmatpush2.msra.mxu0 0.0
        %4498 = vmatprep.mubr.f32.mxu0 0.0
        %4499 = vmatmul.mubr.f32.gmra.mxu0 %v4432
        %v4500 = vpop.f32.mrf.mxu0
        %v4501 = vadd.f32 %v392, %v4500
        %v4502 = vpop.f32.mrf.mxu0
        %4503 = vdwg.mxu0
        %v4504 = vmul.f32 %v385, %v4501
        %v4505 = vadd.f32 %v4428, %v4504
        %v4506 = vmax.f32 %v4505, 0.0
        %v4508 = vsel %vm394, %v4506, 0
        %4510 = vmatprep.subr.mxu0 0.0
        %4511 = vmatpush1.msra.mxu0 0.0
        %4512 = vmatprep.subr.mxu0 0.0
        %4513 = vmatpush1.msra.mxu0 0.0
        %4514 = vmatprep.subr.mxu0 0.0
        %4515 = vmatpush1.msra.mxu0 0.0
        %4516 = vmatprep.subr.mxu0 0.0
        %4517 = vmatpush1.msra.mxu0 0.0
        %4518 = vmatprep.subr.mxu0 0.0
        %4519 = vmatpush1.msra.mxu0 0.0
        %4520 = vmatprep.subr.mxu0 0.0
        %4521 = vmatpush1.msra.mxu0 0.0
        %4522 = vmatprep.subr.mxu0 0.0
        %4523 = vmatpush1.msra.mxu0 0.0
        %4524 = vmatprep.subr.mxu0 0.0
        %4525 = vmatpush1.msra.mxu0 0.0
        %4526 = vmatprep.subr.mxu0 0.0
        %4527 = vmatpush1.msra.mxu0 %v97
        %4528 = vmatprep.subr.mxu0 0.0
        %4529 = vmatpush1.msra.mxu0 %v96
        %4530 = vmatprep.subr.mxu0 0.0
        %4531 = vmatpush1.msra.mxu0 %v95
        %4532 = vmatprep.subr.mxu0 0.0
        %4533 = vmatpush1.msra.mxu0 %v94
        %4534 = vmatprep.subr.mxu0 0.0
        %4535 = vmatpush1.msra.mxu0 %v93
        %4536 = vmatprep.subr.mxu0 0.0
        %4537 = vmatpush1.msra.mxu0 %v92
        %4538 = vmatprep.subr.mxu0 0.0
        %4539 = vmatpush1.msra.mxu0 %v91
        %4540 = vmatprep.subr.mxu0 0.0
        %4541 = vmatpush1.msra.mxu0 %v90
        %4542 = vmatprep.subr.mxu0 0.0
        %4543 = vmatpush2.msra.mxu0 0.0
        %4544 = vmatprep.subr.mxu0 0.0
        %4545 = vmatpush2.msra.mxu0 0.0
        %4546 = vmatprep.subr.mxu0 0.0
        %4547 = vmatpush2.msra.mxu0 0.0
        %4548 = vmatprep.subr.mxu0 0.0
        %4549 = vmatpush2.msra.mxu0 0.0
        %4550 = vmatprep.subr.mxu0 0.0
        %4551 = vmatpush2.msra.mxu0 0.0
        %4552 = vmatprep.subr.mxu0 0.0
        %4553 = vmatpush2.msra.mxu0 0.0
        %4554 = vmatprep.subr.mxu0 0.0
        %4555 = vmatpush2.msra.mxu0 0.0
        %4556 = vmatprep.subr.mxu0 0.0
        %4557 = vmatpush2.msra.mxu0 0.0
        %4558 = vmatprep.subr.mxu0 0.0
        %4559 = vmatpush2.msra.mxu0 0.0
        %4560 = vmatprep.subr.mxu0 0.0
        %4561 = vmatpush2.msra.mxu0 0.0
        %4562 = vmatprep.subr.mxu0 0.0
        %4563 = vmatpush2.msra.mxu0 0.0
        %4564 = vmatprep.subr.mxu0 0.0
        %4565 = vmatpush2.msra.mxu0 0.0
        %4566 = vmatprep.subr.mxu0 0.0
        %4567 = vmatpush2.msra.mxu0 0.0
        %4568 = vmatprep.subr.mxu0 0.0
        %4569 = vmatpush2.msra.mxu0 0.0
        %4570 = vmatprep.subr.mxu0 0.0
        %4571 = vmatpush2.msra.mxu0 0.0
        %4572 = vmatprep.subr.mxu0 0.0
        %4573 = vmatpush2.msra.mxu0 0.0
        %4574 = vmatprep.mubr.f32.mxu0 0.0
        %4575 = vmatmul.mubr.f32.gmra.mxu0 %v4508
        %v4576 = vpop.f32.mrf.mxu0
        %v4577 = vadd.f32 %v392, %v4576
        %v4578 = vpop.f32.mrf.mxu0
        %4579 = vdwg.mxu0
        %v4580 = vmul.f32 %v385, %v4577
        %v4581 = vadd.f32 %v4428, %v4580
        %v4582 = vmax.f32 %v4581, 0.0
        %v4584 = vsel %vm394, %v4582, 0
        %4586 = vmatprep.subr.mxu0 0.0
        %4587 = vmatpush1.msra.mxu0 0.0
        %4588 = vmatprep.subr.mxu0 0.0
        %4589 = vmatpush1.msra.mxu0 0.0
        %4590 = vmatprep.subr.mxu0 0.0
        %4591 = vmatpush1.msra.mxu0 0.0
        %4592 = vmatprep.subr.mxu0 0.0
        %4593 = vmatpush1.msra.mxu0 0.0
        %4594 = vmatprep.subr.mxu0 0.0
        %4595 = vmatpush1.msra.mxu0 0.0
        %4596 = vmatprep.subr.mxu0 0.0
        %4597 = vmatpush1.msra.mxu0 0.0
        %4598 = vmatprep.subr.mxu0 0.0
        %4599 = vmatpush1.msra.mxu0 0.0
        %4600 = vmatprep.subr.mxu0 0.0
        %4601 = vmatpush1.msra.mxu0 0.0
        %4602 = vmatprep.subr.mxu0 0.0
        %4603 = vmatpush1.msra.mxu0 %v97
        %4604 = vmatprep.subr.mxu0 0.0
        %4605 = vmatpush1.msra.mxu0 %v96
        %4606 = vmatprep.subr.mxu0 0.0
        %4607 = vmatpush1.msra.mxu0 %v95
        %4608 = vmatprep.subr.mxu0 0.0
        %4609 = vmatpush1.msra.mxu0 %v94
        %4610 = vmatprep.subr.mxu0 0.0
        %4611 = vmatpush1.msra.mxu0 %v93
        %4612 = vmatprep.subr.mxu0 0.0
        %4613 = vmatpush1.msra.mxu0 %v92
        %4614 = vmatprep.subr.mxu0 0.0
        %4615 = vmatpush1.msra.mxu0 %v91
        %4616 = vmatprep.subr.mxu0 0.0
        %4617 = vmatpush1.msra.mxu0 %v90
        %4618 = vmatprep.subr.mxu0 0.0
        %4619 = vmatpush2.msra.mxu0 0.0
        %4620 = vmatprep.subr.mxu0 0.0
        %4621 = vmatpush2.msra.mxu0 0.0
        %4622 = vmatprep.subr.mxu0 0.0
        %4623 = vmatpush2.msra.mxu0 0.0
        %4624 = vmatprep.subr.mxu0 0.0
        %4625 = vmatpush2.msra.mxu0 0.0
        %4626 = vmatprep.subr.mxu0 0.0
        %4627 = vmatpush2.msra.mxu0 0.0
        %4628 = vmatprep.subr.mxu0 0.0
        %4629 = vmatpush2.msra.mxu0 0.0
        %4630 = vmatprep.subr.mxu0 0.0
        %4631 = vmatpush2.msra.mxu0 0.0
        %4632 = vmatprep.subr.mxu0 0.0
        %4633 = vmatpush2.msra.mxu0 0.0
        %4634 = vmatprep.subr.mxu0 0.0
        %4635 = vmatpush2.msra.mxu0 0.0
        %4636 = vmatprep.subr.mxu0 0.0
        %4637 = vmatpush2.msra.mxu0 0.0
        %4638 = vmatprep.subr.mxu0 0.0
        %4639 = vmatpush2.msra.mxu0 0.0
        %4640 = vmatprep.subr.mxu0 0.0
        %4641 = vmatpush2.msra.mxu0 0.0
        %4642 = vmatprep.subr.mxu0 0.0
        %4643 = vmatpush2.msra.mxu0 0.0
        %4644 = vmatprep.subr.mxu0 0.0
        %4645 = vmatpush2.msra.mxu0 0.0
        %4646 = vmatprep.subr.mxu0 0.0
        %4647 = vmatpush2.msra.mxu0 0.0
        %4648 = vmatprep.subr.mxu0 0.0
        %4649 = vmatpush2.msra.mxu0 0.0
        %4650 = vmatprep.mubr.f32.mxu0 0.0
        %4651 = vmatmul.mubr.f32.gmra.mxu0 %v4584
        %v4652 = vpop.f32.mrf.mxu0
        %v4653 = vadd.f32 %v392, %v4652
        %v4654 = vpop.f32.mrf.mxu0
        %4655 = vdwg.mxu0
        %v4656 = vmul.f32 %v382, %v4653
        %v4657 = vadd.f32 %v4428, %v4656
        %v4658 = vmax.f32 %v4657, 0.0
        %v4659 = vadd.f32 %v4506, %v4582
        %v4660 = vmul.f32 %v4659, 2.0
        %v4661 = vadd.f32 %v4430, %v4660
        %v4662 = vadd.f32 %v4661, %v4658
        %v4664 = vsel %vm394, %v4662, 0
        %4666 = vmatprep.subr.mxu0 0.0
        %4667 = vmatpush1.msra.mxu0 0.0
        %4668 = vmatprep.subr.mxu0 0.0
        %4669 = vmatpush1.msra.mxu0 0.0
        %4670 = vmatprep.subr.mxu0 0.0
        %4671 = vmatpush1.msra.mxu0 0.0
        %4672 = vmatprep.subr.mxu0 0.0
        %4673 = vmatpush1.msra.mxu0 0.0
        %4674 = vmatprep.subr.mxu0 0.0
        %4675 = vmatpush1.msra.mxu0 0.0
        %4676 = vmatprep.subr.mxu0 0.0
        %4677 = vmatpush1.msra.mxu0 0.0
        %4678 = vmatprep.subr.mxu0 0.0
        %4679 = vmatpush1.msra.mxu0 0.0
        %4680 = vmatprep.subr.mxu0 0.0
        %4681 = vmatpush1.msra.mxu0 0.0
        %4682 = vmatprep.subr.mxu0 0.0
        %4683 = vmatpush1.msra.mxu0 %v97
        %4684 = vmatprep.subr.mxu0 0.0
        %4685 = vmatpush1.msra.mxu0 %v96
        %4686 = vmatprep.subr.mxu0 0.0
        %4687 = vmatpush1.msra.mxu0 %v95
        %4688 = vmatprep.subr.mxu0 0.0
        %4689 = vmatpush1.msra.mxu0 %v94
        %4690 = vmatprep.subr.mxu0 0.0
        %4691 = vmatpush1.msra.mxu0 %v93
        %4692 = vmatprep.subr.mxu0 0.0
        %4693 = vmatpush1.msra.mxu0 %v92
        %4694 = vmatprep.subr.mxu0 0.0
        %4695 = vmatpush1.msra.mxu0 %v91
        %4696 = vmatprep.subr.mxu0 0.0
        %4697 = vmatpush1.msra.mxu0 %v90
        %4698 = vmatprep.subr.mxu0 0.0
        %4699 = vmatpush2.msra.mxu0 0.0
        %4700 = vmatprep.subr.mxu0 0.0
        %4701 = vmatpush2.msra.mxu0 0.0
        %4702 = vmatprep.subr.mxu0 0.0
        %4703 = vmatpush2.msra.mxu0 0.0
        %4704 = vmatprep.subr.mxu0 0.0
        %4705 = vmatpush2.msra.mxu0 0.0
        %4706 = vmatprep.subr.mxu0 0.0
        %4707 = vmatpush2.msra.mxu0 0.0
        %4708 = vmatprep.subr.mxu0 0.0
        %4709 = vmatpush2.msra.mxu0 0.0
        %4710 = vmatprep.subr.mxu0 0.0
        %4711 = vmatpush2.msra.mxu0 0.0
        %4712 = vmatprep.subr.mxu0 0.0
        %4713 = vmatpush2.msra.mxu0 0.0
        %4714 = vmatprep.subr.mxu0 0.0
        %4715 = vmatpush2.msra.mxu0 0.0
        %4716 = vmatprep.subr.mxu0 0.0
        %4717 = vmatpush2.msra.mxu0 0.0
        %4718 = vmatprep.subr.mxu0 0.0
        %4719 = vmatpush2.msra.mxu0 0.0
        %4720 = vmatprep.subr.mxu0 0.0
        %4721 = vmatpush2.msra.mxu0 0.0
        %4722 = vmatprep.subr.mxu0 0.0
        %4723 = vmatpush2.msra.mxu0 0.0
        %4724 = vmatprep.subr.mxu0 0.0
        %4725 = vmatpush2.msra.mxu0 0.0
        %4726 = vmatprep.subr.mxu0 0.0
        %4727 = vmatpush2.msra.mxu0 0.0
        %4728 = vmatprep.subr.mxu0 0.0
        %4729 = vmatpush2.msra.mxu0 0.0
        %4730 = vmatprep.mubr.f32.mxu0 0.0
        %4731 = vmatmul.mubr.f32.gmra.mxu0 %v4664
        %v4732 = vpop.f32.mrf.mxu0
        %v4733 = vadd.f32 0.0, %v4732
        %v4734 = vpop.f32.mrf.mxu0
        %4735 = vdwg.mxu0
        %v4736 = vmul.f32 %v386, %v4733
        %v4737 = vadd.f32 %v4428, %v4736
        %v4738 = vadd.f32 %v4737, %v706
        %v4739 = vadd.f32 %v4429, %v4662
        %v4740 = vmax.f32 %v4738, 0.0
        %v4742 = vsel %vm394, %v4740, 0
        %4744 = vmatprep.subr.mxu0 0.0
        %4745 = vmatpush1.msra.mxu0 0.0
        %4746 = vmatprep.subr.mxu0 0.0
        %4747 = vmatpush1.msra.mxu0 0.0
        %4748 = vmatprep.subr.mxu0 0.0
        %4749 = vmatpush1.msra.mxu0 0.0
        %4750 = vmatprep.subr.mxu0 0.0
        %4751 = vmatpush1.msra.mxu0 0.0
        %4752 = vmatprep.subr.mxu0 0.0
        %4753 = vmatpush1.msra.mxu0 0.0
        %4754 = vmatprep.subr.mxu0 0.0
        %4755 = vmatpush1.msra.mxu0 0.0
        %4756 = vmatprep.subr.mxu0 0.0
        %4757 = vmatpush1.msra.mxu0 0.0
        %4758 = vmatprep.subr.mxu0 0.0
        %4759 = vmatpush1.msra.mxu0 0.0
        %4760 = vmatprep.subr.mxu0 0.0
        %4761 = vmatpush1.msra.mxu0 %v97
        %4762 = vmatprep.subr.mxu0 0.0
        %4763 = vmatpush1.msra.mxu0 %v96
        %4764 = vmatprep.subr.mxu0 0.0
        %4765 = vmatpush1.msra.mxu0 %v95
        %4766 = vmatprep.subr.mxu0 0.0
        %4767 = vmatpush1.msra.mxu0 %v94
        %4768 = vmatprep.subr.mxu0 0.0
        %4769 = vmatpush1.msra.mxu0 %v93
        %4770 = vmatprep.subr.mxu0 0.0
        %4771 = vmatpush1.msra.mxu0 %v92
        %4772 = vmatprep.subr.mxu0 0.0
        %4773 = vmatpush1.msra.mxu0 %v91
        %4774 = vmatprep.subr.mxu0 0.0
        %4775 = vmatpush1.msra.mxu0 %v90
        %4776 = vmatprep.subr.mxu0 0.0
        %4777 = vmatpush2.msra.mxu0 0.0
        %4778 = vmatprep.subr.mxu0 0.0
        %4779 = vmatpush2.msra.mxu0 0.0
        %4780 = vmatprep.subr.mxu0 0.0
        %4781 = vmatpush2.msra.mxu0 0.0
        %4782 = vmatprep.subr.mxu0 0.0
        %4783 = vmatpush2.msra.mxu0 0.0
        %4784 = vmatprep.subr.mxu0 0.0
        %4785 = vmatpush2.msra.mxu0 0.0
        %4786 = vmatprep.subr.mxu0 0.0
        %4787 = vmatpush2.msra.mxu0 0.0
        %4788 = vmatprep.subr.mxu0 0.0
        %4789 = vmatpush2.msra.mxu0 0.0
        %4790 = vmatprep.subr.mxu0 0.0
        %4791 = vmatpush2.msra.mxu0 0.0
        %4792 = vmatprep.subr.mxu0 0.0
        %4793 = vmatpush2.msra.mxu0 0.0
        %4794 = vmatprep.subr.mxu0 0.0
        %4795 = vmatpush2.msra.mxu0 0.0
        %4796 = vmatprep.subr.mxu0 0.0
        %4797 = vmatpush2.msra.mxu0 0.0
        %4798 = vmatprep.subr.mxu0 0.0
        %4799 = vmatpush2.msra.mxu0 0.0
        %4800 = vmatprep.subr.mxu0 0.0
        %4801 = vmatpush2.msra.mxu0 0.0
        %4802 = vmatprep.subr.mxu0 0.0
        %4803 = vmatpush2.msra.mxu0 0.0
        %4804 = vmatprep.subr.mxu0 0.0
        %4805 = vmatpush2.msra.mxu0 0.0
        %4806 = vmatprep.subr.mxu0 0.0
        %4807 = vmatpush2.msra.mxu0 0.0
        %4808 = vmatprep.mubr.f32.mxu0 0.0
        %4809 = vmatmul.mubr.f32.gmra.mxu0 %v4742
        %v4810 = vpop.f32.mrf.mxu0
        %v4811 = vadd.f32 %v392, %v4810
        %v4812 = vpop.f32.mrf.mxu0
        %4813 = vdwg.mxu0
        %v4814 = vmul.f32 %v385, %v4811
        %v4815 = vadd.f32 %v4738, %v4814
        %v4816 = vmax.f32 %v4815, 0.0
        %v4818 = vsel %vm394, %v4816, 0
        %4820 = vmatprep.subr.mxu0 0.0
        %4821 = vmatpush1.msra.mxu0 0.0
        %4822 = vmatprep.subr.mxu0 0.0
        %4823 = vmatpush1.msra.mxu0 0.0
        %4824 = vmatprep.subr.mxu0 0.0
        %4825 = vmatpush1.msra.mxu0 0.0
        %4826 = vmatprep.subr.mxu0 0.0
        %4827 = vmatpush1.msra.mxu0 0.0
        %4828 = vmatprep.subr.mxu0 0.0
        %4829 = vmatpush1.msra.mxu0 0.0
        %4830 = vmatprep.subr.mxu0 0.0
        %4831 = vmatpush1.msra.mxu0 0.0
        %4832 = vmatprep.subr.mxu0 0.0
        %4833 = vmatpush1.msra.mxu0 0.0
        %4834 = vmatprep.subr.mxu0 0.0
        %4835 = vmatpush1.msra.mxu0 0.0
        %4836 = vmatprep.subr.mxu0 0.0
        %4837 = vmatpush1.msra.mxu0 %v97
        %4838 = vmatprep.subr.mxu0 0.0
        %4839 = vmatpush1.msra.mxu0 %v96
        %4840 = vmatprep.subr.mxu0 0.0
        %4841 = vmatpush1.msra.mxu0 %v95
        %4842 = vmatprep.subr.mxu0 0.0
        %4843 = vmatpush1.msra.mxu0 %v94
        %4844 = vmatprep.subr.mxu0 0.0
        %4845 = vmatpush1.msra.mxu0 %v93
        %4846 = vmatprep.subr.mxu0 0.0
        %4847 = vmatpush1.msra.mxu0 %v92
        %4848 = vmatprep.subr.mxu0 0.0
        %4849 = vmatpush1.msra.mxu0 %v91
        %4850 = vmatprep.subr.mxu0 0.0
        %4851 = vmatpush1.msra.mxu0 %v90
        %4852 = vmatprep.subr.mxu0 0.0
        %4853 = vmatpush2.msra.mxu0 0.0
        %4854 = vmatprep.subr.mxu0 0.0
        %4855 = vmatpush2.msra.mxu0 0.0
        %4856 = vmatprep.subr.mxu0 0.0
        %4857 = vmatpush2.msra.mxu0 0.0
        %4858 = vmatprep.subr.mxu0 0.0
        %4859 = vmatpush2.msra.mxu0 0.0
        %4860 = vmatprep.subr.mxu0 0.0
        %4861 = vmatpush2.msra.mxu0 0.0
        %4862 = vmatprep.subr.mxu0 0.0
        %4863 = vmatpush2.msra.mxu0 0.0
        %4864 = vmatprep.subr.mxu0 0.0
        %4865 = vmatpush2.msra.mxu0 0.0
        %4866 = vmatprep.subr.mxu0 0.0
        %4867 = vmatpush2.msra.mxu0 0.0
        %4868 = vmatprep.subr.mxu0 0.0
        %4869 = vmatpush2.msra.mxu0 0.0
        %4870 = vmatprep.subr.mxu0 0.0
        %4871 = vmatpush2.msra.mxu0 0.0
        %4872 = vmatprep.subr.mxu0 0.0
        %4873 = vmatpush2.msra.mxu0 0.0
        %4874 = vmatprep.subr.mxu0 0.0
        %4875 = vmatpush2.msra.mxu0 0.0
        %4876 = vmatprep.subr.mxu0 0.0
        %4877 = vmatpush2.msra.mxu0 0.0
        %4878 = vmatprep.subr.mxu0 0.0
        %4879 = vmatpush2.msra.mxu0 0.0
        %4880 = vmatprep.subr.mxu0 0.0
        %4881 = vmatpush2.msra.mxu0 0.0
        %4882 = vmatprep.subr.mxu0 0.0
        %4883 = vmatpush2.msra.mxu0 0.0
        %4884 = vmatprep.mubr.f32.mxu0 0.0
        %4885 = vmatmul.mubr.f32.gmra.mxu0 %v4818
        %v4886 = vpop.f32.mrf.mxu0
        %v4887 = vadd.f32 %v392, %v4886
        %v4888 = vpop.f32.mrf.mxu0
        %4889 = vdwg.mxu0
        %v4890 = vmul.f32 %v385, %v4887
        %v4891 = vadd.f32 %v4738, %v4890
        %v4892 = vmax.f32 %v4891, 0.0
        %v4894 = vsel %vm394, %v4892, 0
        %4896 = vmatprep.subr.mxu0 0.0
        %4897 = vmatpush1.msra.mxu0 0.0
        %4898 = vmatprep.subr.mxu0 0.0
        %4899 = vmatpush1.msra.mxu0 0.0
        %4900 = vmatprep.subr.mxu0 0.0
        %4901 = vmatpush1.msra.mxu0 0.0
        %4902 = vmatprep.subr.mxu0 0.0
        %4903 = vmatpush1.msra.mxu0 0.0
        %4904 = vmatprep.subr.mxu0 0.0
        %4905 = vmatpush1.msra.mxu0 0.0
        %4906 = vmatprep.subr.mxu0 0.0
        %4907 = vmatpush1.msra.mxu0 0.0
        %4908 = vmatprep.subr.mxu0 0.0
        %4909 = vmatpush1.msra.mxu0 0.0
        %4910 = vmatprep.subr.mxu0 0.0
        %4911 = vmatpush1.msra.mxu0 0.0
        %4912 = vmatprep.subr.mxu0 0.0
        %4913 = vmatpush1.msra.mxu0 %v97
        %4914 = vmatprep.subr.mxu0 0.0
        %4915 = vmatpush1.msra.mxu0 %v96
        %4916 = vmatprep.subr.mxu0 0.0
        %4917 = vmatpush1.msra.mxu0 %v95
        %4918 = vmatprep.subr.mxu0 0.0
        %4919 = vmatpush1.msra.mxu0 %v94
        %4920 = vmatprep.subr.mxu0 0.0
        %4921 = vmatpush1.msra.mxu0 %v93
        %4922 = vmatprep.subr.mxu0 0.0
        %4923 = vmatpush1.msra.mxu0 %v92
        %4924 = vmatprep.subr.mxu0 0.0
        %4925 = vmatpush1.msra.mxu0 %v91
        %4926 = vmatprep.subr.mxu0 0.0
        %4927 = vmatpush1.msra.mxu0 %v90
        %4928 = vmatprep.subr.mxu0 0.0
        %4929 = vmatpush2.msra.mxu0 0.0
        %4930 = vmatprep.subr.mxu0 0.0
        %4931 = vmatpush2.msra.mxu0 0.0
        %4932 = vmatprep.subr.mxu0 0.0
        %4933 = vmatpush2.msra.mxu0 0.0
        %4934 = vmatprep.subr.mxu0 0.0
        %4935 = vmatpush2.msra.mxu0 0.0
        %4936 = vmatprep.subr.mxu0 0.0
        %4937 = vmatpush2.msra.mxu0 0.0
        %4938 = vmatprep.subr.mxu0 0.0
        %4939 = vmatpush2.msra.mxu0 0.0
        %4940 = vmatprep.subr.mxu0 0.0
        %4941 = vmatpush2.msra.mxu0 0.0
        %4942 = vmatprep.subr.mxu0 0.0
        %4943 = vmatpush2.msra.mxu0 0.0
        %4944 = vmatprep.subr.mxu0 0.0
        %4945 = vmatpush2.msra.mxu0 0.0
        %4946 = vmatprep.subr.mxu0 0.0
        %4947 = vmatpush2.msra.mxu0 0.0
        %4948 = vmatprep.subr.mxu0 0.0
        %4949 = vmatpush2.msra.mxu0 0.0
        %4950 = vmatprep.subr.mxu0 0.0
        %4951 = vmatpush2.msra.mxu0 0.0
        %4952 = vmatprep.subr.mxu0 0.0
        %4953 = vmatpush2.msra.mxu0 0.0
        %4954 = vmatprep.subr.mxu0 0.0
        %4955 = vmatpush2.msra.mxu0 0.0
        %4956 = vmatprep.subr.mxu0 0.0
        %4957 = vmatpush2.msra.mxu0 0.0
        %4958 = vmatprep.subr.mxu0 0.0
        %4959 = vmatpush2.msra.mxu0 0.0
        %4960 = vmatprep.mubr.f32.mxu0 0.0
        %4961 = vmatmul.mubr.f32.gmra.mxu0 %v4894
        %v4962 = vpop.f32.mrf.mxu0
        %v4963 = vadd.f32 %v392, %v4962
        %v4964 = vpop.f32.mrf.mxu0
        %4965 = vdwg.mxu0
        %v4966 = vmul.f32 %v382, %v4963
        %v4967 = vadd.f32 %v4738, %v4966
        %v4968 = vmax.f32 %v4967, 0.0
        %v4969 = vadd.f32 %v4816, %v4892
        %v4970 = vmul.f32 %v4969, 2.0
        %v4971 = vadd.f32 %v4740, %v4970
        %v4972 = vadd.f32 %v4971, %v4968
        %v4974 = vsel %vm394, %v4972, 0
        %4976 = vmatprep.subr.mxu0 0.0
        %4977 = vmatpush1.msra.mxu0 0.0
        %4978 = vmatprep.subr.mxu0 0.0
        %4979 = vmatpush1.msra.mxu0 0.0
        %4980 = vmatprep.subr.mxu0 0.0
        %4981 = vmatpush1.msra.mxu0 0.0
        %4982 = vmatprep.subr.mxu0 0.0
        %4983 = vmatpush1.msra.mxu0 0.0
        %4984 = vmatprep.subr.mxu0 0.0
        %4985 = vmatpush1.msra.mxu0 0.0
        %4986 = vmatprep.subr.mxu0 0.0
        %4987 = vmatpush1.msra.mxu0 0.0
        %4988 = vmatprep.subr.mxu0 0.0
        %4989 = vmatpush1.msra.mxu0 0.0
        %4990 = vmatprep.subr.mxu0 0.0
        %4991 = vmatpush1.msra.mxu0 0.0
        %4992 = vmatprep.subr.mxu0 0.0
        %4993 = vmatpush1.msra.mxu0 %v97
        %4994 = vmatprep.subr.mxu0 0.0
        %4995 = vmatpush1.msra.mxu0 %v96
        %4996 = vmatprep.subr.mxu0 0.0
        %4997 = vmatpush1.msra.mxu0 %v95
        %4998 = vmatprep.subr.mxu0 0.0
        %4999 = vmatpush1.msra.mxu0 %v94
        %5000 = vmatprep.subr.mxu0 0.0
        %5001 = vmatpush1.msra.mxu0 %v93
        %5002 = vmatprep.subr.mxu0 0.0
        %5003 = vmatpush1.msra.mxu0 %v92
        %5004 = vmatprep.subr.mxu0 0.0
        %5005 = vmatpush1.msra.mxu0 %v91
        %5006 = vmatprep.subr.mxu0 0.0
        %5007 = vmatpush1.msra.mxu0 %v90
        %5008 = vmatprep.subr.mxu0 0.0
        %5009 = vmatpush2.msra.mxu0 0.0
        %5010 = vmatprep.subr.mxu0 0.0
        %5011 = vmatpush2.msra.mxu0 0.0
        %5012 = vmatprep.subr.mxu0 0.0
        %5013 = vmatpush2.msra.mxu0 0.0
        %5014 = vmatprep.subr.mxu0 0.0
        %5015 = vmatpush2.msra.mxu0 0.0
        %5016 = vmatprep.subr.mxu0 0.0
        %5017 = vmatpush2.msra.mxu0 0.0
        %5018 = vmatprep.subr.mxu0 0.0
        %5019 = vmatpush2.msra.mxu0 0.0
        %5020 = vmatprep.subr.mxu0 0.0
        %5021 = vmatpush2.msra.mxu0 0.0
        %5022 = vmatprep.subr.mxu0 0.0
        %5023 = vmatpush2.msra.mxu0 0.0
        %5024 = vmatprep.subr.mxu0 0.0
        %5025 = vmatpush2.msra.mxu0 0.0
        %5026 = vmatprep.subr.mxu0 0.0
        %5027 = vmatpush2.msra.mxu0 0.0
        %5028 = vmatprep.subr.mxu0 0.0
        %5029 = vmatpush2.msra.mxu0 0.0
        %5030 = vmatprep.subr.mxu0 0.0
        %5031 = vmatpush2.msra.mxu0 0.0
        %5032 = vmatprep.subr.mxu0 0.0
        %5033 = vmatpush2.msra.mxu0 0.0
        %5034 = vmatprep.subr.mxu0 0.0
        %5035 = vmatpush2.msra.mxu0 0.0
        %5036 = vmatprep.subr.mxu0 0.0
        %5037 = vmatpush2.msra.mxu0 0.0
        %5038 = vmatprep.subr.mxu0 0.0
        %5039 = vmatpush2.msra.mxu0 0.0
        %5040 = vmatprep.mubr.f32.mxu0 0.0
        %5041 = vmatmul.mubr.f32.gmra.mxu0 %v4974
        %v5042 = vpop.f32.mrf.mxu0
        %v5043 = vadd.f32 0.0, %v5042
        %v5044 = vpop.f32.mrf.mxu0
        %5045 = vdwg.mxu0
        %v5046 = vmul.f32 %v386, %v5043
        %v5047 = vadd.f32 %v4738, %v5046
        %v5048 = vadd.f32 %v5047, %v706
        %v5049 = vadd.f32 %v4739, %v4972
        %v5050 = vmax.f32 %v5048, 0.0
        %v5052 = vsel %vm394, %v5050, 0
        %5054 = vmatprep.subr.mxu0 0.0
        %5055 = vmatpush1.msra.mxu0 0.0
        %5056 = vmatprep.subr.mxu0 0.0
        %5057 = vmatpush1.msra.mxu0 0.0
        %5058 = vmatprep.subr.mxu0 0.0
        %5059 = vmatpush1.msra.mxu0 0.0
        %5060 = vmatprep.subr.mxu0 0.0
        %5061 = vmatpush1.msra.mxu0 0.0
        %5062 = vmatprep.subr.mxu0 0.0
        %5063 = vmatpush1.msra.mxu0 0.0
        %5064 = vmatprep.subr.mxu0 0.0
        %5065 = vmatpush1.msra.mxu0 0.0
        %5066 = vmatprep.subr.mxu0 0.0
        %5067 = vmatpush1.msra.mxu0 0.0
        %5068 = vmatprep.subr.mxu0 0.0
        %5069 = vmatpush1.msra.mxu0 0.0
        %5070 = vmatprep.subr.mxu0 0.0
        %5071 = vmatpush1.msra.mxu0 %v97
        %5072 = vmatprep.subr.mxu0 0.0
        %5073 = vmatpush1.msra.mxu0 %v96
        %5074 = vmatprep.subr.mxu0 0.0
        %5075 = vmatpush1.msra.mxu0 %v95
        %5076 = vmatprep.subr.mxu0 0.0
        %5077 = vmatpush1.msra.mxu0 %v94
        %5078 = vmatprep.subr.mxu0 0.0
        %5079 = vmatpush1.msra.mxu0 %v93
        %5080 = vmatprep.subr.mxu0 0.0
        %5081 = vmatpush1.msra.mxu0 %v92
        %5082 = vmatprep.subr.mxu0 0.0
        %5083 = vmatpush1.msra.mxu0 %v91
        %5084 = vmatprep.subr.mxu0 0.0
        %5085 = vmatpush1.msra.mxu0 %v90
        %5086 = vmatprep.subr.mxu0 0.0
        %5087 = vmatpush2.msra.mxu0 0.0
        %5088 = vmatprep.subr.mxu0 0.0
        %5089 = vmatpush2.msra.mxu0 0.0
        %5090 = vmatprep.subr.mxu0 0.0
        %5091 = vmatpush2.msra.mxu0 0.0
        %5092 = vmatprep.subr.mxu0 0.0
        %5093 = vmatpush2.msra.mxu0 0.0
        %5094 = vmatprep.subr.mxu0 0.0
        %5095 = vmatpush2.msra.mxu0 0.0
        %5096 = vmatprep.subr.mxu0 0.0
        %5097 = vmatpush2.msra.mxu0 0.0
        %5098 = vmatprep.subr.mxu0 0.0
        %5099 = vmatpush2.msra.mxu0 0.0
        %5100 = vmatprep.subr.mxu0 0.0
        %5101 = vmatpush2.msra.mxu0 0.0
        %5102 = vmatprep.subr.mxu0 0.0
        %5103 = vmatpush2.msra.mxu0 0.0
        %5104 = vmatprep.subr.mxu0 0.0
        %5105 = vmatpush2.msra.mxu0 0.0
        %5106 = vmatprep.subr.mxu0 0.0
        %5107 = vmatpush2.msra.mxu0 0.0
        %5108 = vmatprep.subr.mxu0 0.0
        %5109 = vmatpush2.msra.mxu0 0.0
        %5110 = vmatprep.subr.mxu0 0.0
        %5111 = vmatpush2.msra.mxu0 0.0
        %5112 = vmatprep.subr.mxu0 0.0
        %5113 = vmatpush2.msra.mxu0 0.0
        %5114 = vmatprep.subr.mxu0 0.0
        %5115 = vmatpush2.msra.mxu0 0.0
        %5116 = vmatprep.subr.mxu0 0.0
        %5117 = vmatpush2.msra.mxu0 0.0
        %5118 = vmatprep.mubr.f32.mxu0 0.0
        %5119 = vmatmul.mubr.f32.gmra.mxu0 %v5052
        %v5120 = vpop.f32.mrf.mxu0
        %v5121 = vadd.f32 %v392, %v5120
        %v5122 = vpop.f32.mrf.mxu0
        %5123 = vdwg.mxu0
        %v5124 = vmul.f32 %v385, %v5121
        %v5125 = vadd.f32 %v5048, %v5124
        %v5126 = vmax.f32 %v5125, 0.0
        %v5128 = vsel %vm394, %v5126, 0
        %5130 = vmatprep.subr.mxu0 0.0
        %5131 = vmatpush1.msra.mxu0 0.0
        %5132 = vmatprep.subr.mxu0 0.0
        %5133 = vmatpush1.msra.mxu0 0.0
        %5134 = vmatprep.subr.mxu0 0.0
        %5135 = vmatpush1.msra.mxu0 0.0
        %5136 = vmatprep.subr.mxu0 0.0
        %5137 = vmatpush1.msra.mxu0 0.0
        %5138 = vmatprep.subr.mxu0 0.0
        %5139 = vmatpush1.msra.mxu0 0.0
        %5140 = vmatprep.subr.mxu0 0.0
        %5141 = vmatpush1.msra.mxu0 0.0
        %5142 = vmatprep.subr.mxu0 0.0
        %5143 = vmatpush1.msra.mxu0 0.0
        %5144 = vmatprep.subr.mxu0 0.0
        %5145 = vmatpush1.msra.mxu0 0.0
        %5146 = vmatprep.subr.mxu0 0.0
        %5147 = vmatpush1.msra.mxu0 %v97
        %5148 = vmatprep.subr.mxu0 0.0
        %5149 = vmatpush1.msra.mxu0 %v96
        %5150 = vmatprep.subr.mxu0 0.0
        %5151 = vmatpush1.msra.mxu0 %v95
        %5152 = vmatprep.subr.mxu0 0.0
        %5153 = vmatpush1.msra.mxu0 %v94
        %5154 = vmatprep.subr.mxu0 0.0
        %5155 = vmatpush1.msra.mxu0 %v93
        %5156 = vmatprep.subr.mxu0 0.0
        %5157 = vmatpush1.msra.mxu0 %v92
        %5158 = vmatprep.subr.mxu0 0.0
        %5159 = vmatpush1.msra.mxu0 %v91
        %5160 = vmatprep.subr.mxu0 0.0
        %5161 = vmatpush1.msra.mxu0 %v90
        %5162 = vmatprep.subr.mxu0 0.0
        %5163 = vmatpush2.msra.mxu0 0.0
        %5164 = vmatprep.subr.mxu0 0.0
        %5165 = vmatpush2.msra.mxu0 0.0
        %5166 = vmatprep.subr.mxu0 0.0
        %5167 = vmatpush2.msra.mxu0 0.0
        %5168 = vmatprep.subr.mxu0 0.0
        %5169 = vmatpush2.msra.mxu0 0.0
        %5170 = vmatprep.subr.mxu0 0.0
        %5171 = vmatpush2.msra.mxu0 0.0
        %5172 = vmatprep.subr.mxu0 0.0
        %5173 = vmatpush2.msra.mxu0 0.0
        %5174 = vmatprep.subr.mxu0 0.0
        %5175 = vmatpush2.msra.mxu0 0.0
        %5176 = vmatprep.subr.mxu0 0.0
        %5177 = vmatpush2.msra.mxu0 0.0
        %5178 = vmatprep.subr.mxu0 0.0
        %5179 = vmatpush2.msra.mxu0 0.0
        %5180 = vmatprep.subr.mxu0 0.0
        %5181 = vmatpush2.msra.mxu0 0.0
        %5182 = vmatprep.subr.mxu0 0.0
        %5183 = vmatpush2.msra.mxu0 0.0
        %5184 = vmatprep.subr.mxu0 0.0
        %5185 = vmatpush2.msra.mxu0 0.0
        %5186 = vmatprep.subr.mxu0 0.0
        %5187 = vmatpush2.msra.mxu0 0.0
        %5188 = vmatprep.subr.mxu0 0.0
        %5189 = vmatpush2.msra.mxu0 0.0
        %5190 = vmatprep.subr.mxu0 0.0
        %5191 = vmatpush2.msra.mxu0 0.0
        %5192 = vmatprep.subr.mxu0 0.0
        %5193 = vmatpush2.msra.mxu0 0.0
        %5194 = vmatprep.mubr.f32.mxu0 0.0
        %5195 = vmatmul.mubr.f32.gmra.mxu0 %v5128
        %v5196 = vpop.f32.mrf.mxu0
        %v5197 = vadd.f32 %v392, %v5196
        %v5198 = vpop.f32.mrf.mxu0
        %5199 = vdwg.mxu0
        %v5200 = vmul.f32 %v385, %v5197
        %v5201 = vadd.f32 %v5048, %v5200
        %v5202 = vmax.f32 %v5201, 0.0
        %v5204 = vsel %vm394, %v5202, 0
        %5206 = vmatprep.subr.mxu0 0.0
        %5207 = vmatpush1.msra.mxu0 0.0
        %5208 = vmatprep.subr.mxu0 0.0
        %5209 = vmatpush1.msra.mxu0 0.0
        %5210 = vmatprep.subr.mxu0 0.0
        %5211 = vmatpush1.msra.mxu0 0.0
        %5212 = vmatprep.subr.mxu0 0.0
        %5213 = vmatpush1.msra.mxu0 0.0
        %5214 = vmatprep.subr.mxu0 0.0
        %5215 = vmatpush1.msra.mxu0 0.0
        %5216 = vmatprep.subr.mxu0 0.0
        %5217 = vmatpush1.msra.mxu0 0.0
        %5218 = vmatprep.subr.mxu0 0.0
        %5219 = vmatpush1.msra.mxu0 0.0
        %5220 = vmatprep.subr.mxu0 0.0
        %5221 = vmatpush1.msra.mxu0 0.0
        %5222 = vmatprep.subr.mxu0 0.0
        %5223 = vmatpush1.msra.mxu0 %v97
        %5224 = vmatprep.subr.mxu0 0.0
        %5225 = vmatpush1.msra.mxu0 %v96
        %5226 = vmatprep.subr.mxu0 0.0
        %5227 = vmatpush1.msra.mxu0 %v95
        %5228 = vmatprep.subr.mxu0 0.0
        %5229 = vmatpush1.msra.mxu0 %v94
        %5230 = vmatprep.subr.mxu0 0.0
        %5231 = vmatpush1.msra.mxu0 %v93
        %5232 = vmatprep.subr.mxu0 0.0
        %5233 = vmatpush1.msra.mxu0 %v92
        %5234 = vmatprep.subr.mxu0 0.0
        %5235 = vmatpush1.msra.mxu0 %v91
        %5236 = vmatprep.subr.mxu0 0.0
        %5237 = vmatpush1.msra.mxu0 %v90
        %5238 = vmatprep.subr.mxu0 0.0
        %5239 = vmatpush2.msra.mxu0 0.0
        %5240 = vmatprep.subr.mxu0 0.0
        %5241 = vmatpush2.msra.mxu0 0.0
        %5242 = vmatprep.subr.mxu0 0.0
        %5243 = vmatpush2.msra.mxu0 0.0
        %5244 = vmatprep.subr.mxu0 0.0
        %5245 = vmatpush2.msra.mxu0 0.0
        %5246 = vmatprep.subr.mxu0 0.0
        %5247 = vmatpush2.msra.mxu0 0.0
        %5248 = vmatprep.subr.mxu0 0.0
        %5249 = vmatpush2.msra.mxu0 0.0
        %5250 = vmatprep.subr.mxu0 0.0
        %5251 = vmatpush2.msra.mxu0 0.0
        %5252 = vmatprep.subr.mxu0 0.0
        %5253 = vmatpush2.msra.mxu0 0.0
        %5254 = vmatprep.subr.mxu0 0.0
        %5255 = vmatpush2.msra.mxu0 0.0
        %5256 = vmatprep.subr.mxu0 0.0
        %5257 = vmatpush2.msra.mxu0 0.0
        %5258 = vmatprep.subr.mxu0 0.0
        %5259 = vmatpush2.msra.mxu0 0.0
        %5260 = vmatprep.subr.mxu0 0.0
        %5261 = vmatpush2.msra.mxu0 0.0
        %5262 = vmatprep.subr.mxu0 0.0
        %5263 = vmatpush2.msra.mxu0 0.0
        %5264 = vmatprep.subr.mxu0 0.0
        %5265 = vmatpush2.msra.mxu0 0.0
        %5266 = vmatprep.subr.mxu0 0.0
        %5267 = vmatpush2.msra.mxu0 0.0
        %5268 = vmatprep.subr.mxu0 0.0
        %5269 = vmatpush2.msra.mxu0 0.0
        %5270 = vmatprep.mubr.f32.mxu0 0.0
        %5271 = vmatmul.mubr.f32.gmra.mxu0 %v5204
        %v5272 = vpop.f32.mrf.mxu0
        %v5273 = vadd.f32 %v392, %v5272
        %v5274 = vpop.f32.mrf.mxu0
        %5275 = vdwg.mxu0
        %v5276 = vmul.f32 %v382, %v5273
        %v5277 = vadd.f32 %v5048, %v5276
        %v5278 = vmax.f32 %v5277, 0.0
        %v5279 = vadd.f32 %v5126, %v5202
        %v5280 = vmul.f32 %v5279, 2.0
        %v5281 = vadd.f32 %v5050, %v5280
        %v5282 = vadd.f32 %v5281, %v5278
        %v5284 = vsel %vm394, %v5282, 0
        %5286 = vmatprep.subr.mxu0 0.0
        %5287 = vmatpush1.msra.mxu0 0.0
        %5288 = vmatprep.subr.mxu0 0.0
        %5289 = vmatpush1.msra.mxu0 0.0
        %5290 = vmatprep.subr.mxu0 0.0
        %5291 = vmatpush1.msra.mxu0 0.0
        %5292 = vmatprep.subr.mxu0 0.0
        %5293 = vmatpush1.msra.mxu0 0.0
        %5294 = vmatprep.subr.mxu0 0.0
        %5295 = vmatpush1.msra.mxu0 0.0
        %5296 = vmatprep.subr.mxu0 0.0
        %5297 = vmatpush1.msra.mxu0 0.0
        %5298 = vmatprep.subr.mxu0 0.0
        %5299 = vmatpush1.msra.mxu0 0.0
        %5300 = vmatprep.subr.mxu0 0.0
        %5301 = vmatpush1.msra.mxu0 0.0
        %5302 = vmatprep.subr.mxu0 0.0
        %5303 = vmatpush1.msra.mxu0 %v97
        %5304 = vmatprep.subr.mxu0 0.0
        %5305 = vmatpush1.msra.mxu0 %v96
        %5306 = vmatprep.subr.mxu0 0.0
        %5307 = vmatpush1.msra.mxu0 %v95
        %5308 = vmatprep.subr.mxu0 0.0
        %5309 = vmatpush1.msra.mxu0 %v94
        %5310 = vmatprep.subr.mxu0 0.0
        %5311 = vmatpush1.msra.mxu0 %v93
        %5312 = vmatprep.subr.mxu0 0.0
        %5313 = vmatpush1.msra.mxu0 %v92
        %5314 = vmatprep.subr.mxu0 0.0
        %5315 = vmatpush1.msra.mxu0 %v91
        %5316 = vmatprep.subr.mxu0 0.0
        %5317 = vmatpush1.msra.mxu0 %v90
        %5318 = vmatprep.subr.mxu0 0.0
        %5319 = vmatpush2.msra.mxu0 0.0
        %5320 = vmatprep.subr.mxu0 0.0
        %5321 = vmatpush2.msra.mxu0 0.0
        %5322 = vmatprep.subr.mxu0 0.0
        %5323 = vmatpush2.msra.mxu0 0.0
        %5324 = vmatprep.subr.mxu0 0.0
        %5325 = vmatpush2.msra.mxu0 0.0
        %5326 = vmatprep.subr.mxu0 0.0
        %5327 = vmatpush2.msra.mxu0 0.0
        %5328 = vmatprep.subr.mxu0 0.0
        %5329 = vmatpush2.msra.mxu0 0.0
        %5330 = vmatprep.subr.mxu0 0.0
        %5331 = vmatpush2.msra.mxu0 0.0
        %5332 = vmatprep.subr.mxu0 0.0
        %5333 = vmatpush2.msra.mxu0 0.0
        %5334 = vmatprep.subr.mxu0 0.0
        %5335 = vmatpush2.msra.mxu0 0.0
        %5336 = vmatprep.subr.mxu0 0.0
        %5337 = vmatpush2.msra.mxu0 0.0
        %5338 = vmatprep.subr.mxu0 0.0
        %5339 = vmatpush2.msra.mxu0 0.0
        %5340 = vmatprep.subr.mxu0 0.0
        %5341 = vmatpush2.msra.mxu0 0.0
        %5342 = vmatprep.subr.mxu0 0.0
        %5343 = vmatpush2.msra.mxu0 0.0
        %5344 = vmatprep.subr.mxu0 0.0
        %5345 = vmatpush2.msra.mxu0 0.0
        %5346 = vmatprep.subr.mxu0 0.0
        %5347 = vmatpush2.msra.mxu0 0.0
        %5348 = vmatprep.subr.mxu0 0.0
        %5349 = vmatpush2.msra.mxu0 0.0
        %5350 = vmatprep.mubr.f32.mxu0 0.0
        %5351 = vmatmul.mubr.f32.gmra.mxu0 %v5284
        %v5352 = vpop.f32.mrf.mxu0
        %v5353 = vadd.f32 0.0, %v5352
        %v5354 = vpop.f32.mrf.mxu0
        %5355 = vdwg.mxu0
        %v5356 = vmul.f32 %v386, %v5353
        %v5357 = vadd.f32 %v5048, %v5356
        %v5358 = vadd.f32 %v5357, %v706
        %v5359 = vadd.f32 %v5049, %v5282
        %v5360 = vmax.f32 %v5358, 0.0
        %v5362 = vsel %vm394, %v5360, 0
        %5364 = vmatprep.subr.mxu0 0.0
        %5365 = vmatpush1.msra.mxu0 0.0
        %5366 = vmatprep.subr.mxu0 0.0
        %5367 = vmatpush1.msra.mxu0 0.0
        %5368 = vmatprep.subr.mxu0 0.0
        %5369 = vmatpush1.msra.mxu0 0.0
        %5370 = vmatprep.subr.mxu0 0.0
        %5371 = vmatpush1.msra.mxu0 0.0
        %5372 = vmatprep.subr.mxu0 0.0
        %5373 = vmatpush1.msra.mxu0 0.0
        %5374 = vmatprep.subr.mxu0 0.0
        %5375 = vmatpush1.msra.mxu0 0.0
        %5376 = vmatprep.subr.mxu0 0.0
        %5377 = vmatpush1.msra.mxu0 0.0
        %5378 = vmatprep.subr.mxu0 0.0
        %5379 = vmatpush1.msra.mxu0 0.0
        %5380 = vmatprep.subr.mxu0 0.0
        %5381 = vmatpush1.msra.mxu0 %v97
        %5382 = vmatprep.subr.mxu0 0.0
        %5383 = vmatpush1.msra.mxu0 %v96
        %5384 = vmatprep.subr.mxu0 0.0
        %5385 = vmatpush1.msra.mxu0 %v95
        %5386 = vmatprep.subr.mxu0 0.0
        %5387 = vmatpush1.msra.mxu0 %v94
        %5388 = vmatprep.subr.mxu0 0.0
        %5389 = vmatpush1.msra.mxu0 %v93
        %5390 = vmatprep.subr.mxu0 0.0
        %5391 = vmatpush1.msra.mxu0 %v92
        %5392 = vmatprep.subr.mxu0 0.0
        %5393 = vmatpush1.msra.mxu0 %v91
        %5394 = vmatprep.subr.mxu0 0.0
        %5395 = vmatpush1.msra.mxu0 %v90
        %5396 = vmatprep.subr.mxu0 0.0
        %5397 = vmatpush2.msra.mxu0 0.0
        %5398 = vmatprep.subr.mxu0 0.0
        %5399 = vmatpush2.msra.mxu0 0.0
        %5400 = vmatprep.subr.mxu0 0.0
        %5401 = vmatpush2.msra.mxu0 0.0
        %5402 = vmatprep.subr.mxu0 0.0
        %5403 = vmatpush2.msra.mxu0 0.0
        %5404 = vmatprep.subr.mxu0 0.0
        %5405 = vmatpush2.msra.mxu0 0.0
        %5406 = vmatprep.subr.mxu0 0.0
        %5407 = vmatpush2.msra.mxu0 0.0
        %5408 = vmatprep.subr.mxu0 0.0
        %5409 = vmatpush2.msra.mxu0 0.0
        %5410 = vmatprep.subr.mxu0 0.0
        %5411 = vmatpush2.msra.mxu0 0.0
        %5412 = vmatprep.subr.mxu0 0.0
        %5413 = vmatpush2.msra.mxu0 0.0
        %5414 = vmatprep.subr.mxu0 0.0
        %5415 = vmatpush2.msra.mxu0 0.0
        %5416 = vmatprep.subr.mxu0 0.0
        %5417 = vmatpush2.msra.mxu0 0.0
        %5418 = vmatprep.subr.mxu0 0.0
        %5419 = vmatpush2.msra.mxu0 0.0
        %5420 = vmatprep.subr.mxu0 0.0
        %5421 = vmatpush2.msra.mxu0 0.0
        %5422 = vmatprep.subr.mxu0 0.0
        %5423 = vmatpush2.msra.mxu0 0.0
        %5424 = vmatprep.subr.mxu0 0.0
        %5425 = vmatpush2.msra.mxu0 0.0
        %5426 = vmatprep.subr.mxu0 0.0
        %5427 = vmatpush2.msra.mxu0 0.0
        %5428 = vmatprep.mubr.f32.mxu0 0.0
        %5429 = vmatmul.mubr.f32.gmra.mxu0 %v5362
        %v5430 = vpop.f32.mrf.mxu0
        %v5431 = vadd.f32 %v392, %v5430
        %v5432 = vpop.f32.mrf.mxu0
        %5433 = vdwg.mxu0
        %v5434 = vmul.f32 %v385, %v5431
        %v5435 = vadd.f32 %v5358, %v5434
        %v5436 = vmax.f32 %v5435, 0.0
        %v5438 = vsel %vm394, %v5436, 0
        %5440 = vmatprep.subr.mxu0 0.0
        %5441 = vmatpush1.msra.mxu0 0.0
        %5442 = vmatprep.subr.mxu0 0.0
        %5443 = vmatpush1.msra.mxu0 0.0
        %5444 = vmatprep.subr.mxu0 0.0
        %5445 = vmatpush1.msra.mxu0 0.0
        %5446 = vmatprep.subr.mxu0 0.0
        %5447 = vmatpush1.msra.mxu0 0.0
        %5448 = vmatprep.subr.mxu0 0.0
        %5449 = vmatpush1.msra.mxu0 0.0
        %5450 = vmatprep.subr.mxu0 0.0
        %5451 = vmatpush1.msra.mxu0 0.0
        %5452 = vmatprep.subr.mxu0 0.0
        %5453 = vmatpush1.msra.mxu0 0.0
        %5454 = vmatprep.subr.mxu0 0.0
        %5455 = vmatpush1.msra.mxu0 0.0
        %5456 = vmatprep.subr.mxu0 0.0
        %5457 = vmatpush1.msra.mxu0 %v97
        %5458 = vmatprep.subr.mxu0 0.0
        %5459 = vmatpush1.msra.mxu0 %v96
        %5460 = vmatprep.subr.mxu0 0.0
        %5461 = vmatpush1.msra.mxu0 %v95
        %5462 = vmatprep.subr.mxu0 0.0
        %5463 = vmatpush1.msra.mxu0 %v94
        %5464 = vmatprep.subr.mxu0 0.0
        %5465 = vmatpush1.msra.mxu0 %v93
        %5466 = vmatprep.subr.mxu0 0.0
        %5467 = vmatpush1.msra.mxu0 %v92
        %5468 = vmatprep.subr.mxu0 0.0
        %5469 = vmatpush1.msra.mxu0 %v91
        %5470 = vmatprep.subr.mxu0 0.0
        %5471 = vmatpush1.msra.mxu0 %v90
        %5472 = vmatprep.subr.mxu0 0.0
        %5473 = vmatpush2.msra.mxu0 0.0
        %5474 = vmatprep.subr.mxu0 0.0
        %5475 = vmatpush2.msra.mxu0 0.0
        %5476 = vmatprep.subr.mxu0 0.0
        %5477 = vmatpush2.msra.mxu0 0.0
        %5478 = vmatprep.subr.mxu0 0.0
        %5479 = vmatpush2.msra.mxu0 0.0
        %5480 = vmatprep.subr.mxu0 0.0
        %5481 = vmatpush2.msra.mxu0 0.0
        %5482 = vmatprep.subr.mxu0 0.0
        %5483 = vmatpush2.msra.mxu0 0.0
        %5484 = vmatprep.subr.mxu0 0.0
        %5485 = vmatpush2.msra.mxu0 0.0
        %5486 = vmatprep.subr.mxu0 0.0
        %5487 = vmatpush2.msra.mxu0 0.0
        %5488 = vmatprep.subr.mxu0 0.0
        %5489 = vmatpush2.msra.mxu0 0.0
        %5490 = vmatprep.subr.mxu0 0.0
        %5491 = vmatpush2.msra.mxu0 0.0
        %5492 = vmatprep.subr.mxu0 0.0
        %5493 = vmatpush2.msra.mxu0 0.0
        %5494 = vmatprep.subr.mxu0 0.0
        %5495 = vmatpush2.msra.mxu0 0.0
        %5496 = vmatprep.subr.mxu0 0.0
        %5497 = vmatpush2.msra.mxu0 0.0
        %5498 = vmatprep.subr.mxu0 0.0
        %5499 = vmatpush2.msra.mxu0 0.0
        %5500 = vmatprep.subr.mxu0 0.0
        %5501 = vmatpush2.msra.mxu0 0.0
        %5502 = vmatprep.subr.mxu0 0.0
        %5503 = vmatpush2.msra.mxu0 0.0
        %5504 = vmatprep.mubr.f32.mxu0 0.0
        %5505 = vmatmul.mubr.f32.gmra.mxu0 %v5438
        %v5506 = vpop.f32.mrf.mxu0
        %v5507 = vadd.f32 %v392, %v5506
        %v5508 = vpop.f32.mrf.mxu0
        %5509 = vdwg.mxu0
        %v5510 = vmul.f32 %v385, %v5507
        %v5511 = vadd.f32 %v5358, %v5510
        %v5512 = vmax.f32 %v5511, 0.0
        %v5514 = vsel %vm394, %v5512, 0
        %5516 = vmatprep.subr.mxu0 0.0
        %5517 = vmatpush1.msra.mxu0 0.0
        %5518 = vmatprep.subr.mxu0 0.0
        %5519 = vmatpush1.msra.mxu0 0.0
        %5520 = vmatprep.subr.mxu0 0.0
        %5521 = vmatpush1.msra.mxu0 0.0
        %5522 = vmatprep.subr.mxu0 0.0
        %5523 = vmatpush1.msra.mxu0 0.0
        %5524 = vmatprep.subr.mxu0 0.0
        %5525 = vmatpush1.msra.mxu0 0.0
        %5526 = vmatprep.subr.mxu0 0.0
        %5527 = vmatpush1.msra.mxu0 0.0
        %5528 = vmatprep.subr.mxu0 0.0
        %5529 = vmatpush1.msra.mxu0 0.0
        %5530 = vmatprep.subr.mxu0 0.0
        %5531 = vmatpush1.msra.mxu0 0.0
        %5532 = vmatprep.subr.mxu0 0.0
        %5533 = vmatpush1.msra.mxu0 %v97
        %5534 = vmatprep.subr.mxu0 0.0
        %5535 = vmatpush1.msra.mxu0 %v96
        %5536 = vmatprep.subr.mxu0 0.0
        %5537 = vmatpush1.msra.mxu0 %v95
        %5538 = vmatprep.subr.mxu0 0.0
        %5539 = vmatpush1.msra.mxu0 %v94
        %5540 = vmatprep.subr.mxu0 0.0
        %5541 = vmatpush1.msra.mxu0 %v93
        %5542 = vmatprep.subr.mxu0 0.0
        %5543 = vmatpush1.msra.mxu0 %v92
        %5544 = vmatprep.subr.mxu0 0.0
        %5545 = vmatpush1.msra.mxu0 %v91
        %5546 = vmatprep.subr.mxu0 0.0
        %5547 = vmatpush1.msra.mxu0 %v90
        %5548 = vmatprep.subr.mxu0 0.0
        %5549 = vmatpush2.msra.mxu0 0.0
        %5550 = vmatprep.subr.mxu0 0.0
        %5551 = vmatpush2.msra.mxu0 0.0
        %5552 = vmatprep.subr.mxu0 0.0
        %5553 = vmatpush2.msra.mxu0 0.0
        %5554 = vmatprep.subr.mxu0 0.0
        %5555 = vmatpush2.msra.mxu0 0.0
        %5556 = vmatprep.subr.mxu0 0.0
        %5557 = vmatpush2.msra.mxu0 0.0
        %5558 = vmatprep.subr.mxu0 0.0
        %5559 = vmatpush2.msra.mxu0 0.0
        %5560 = vmatprep.subr.mxu0 0.0
        %5561 = vmatpush2.msra.mxu0 0.0
        %5562 = vmatprep.subr.mxu0 0.0
        %5563 = vmatpush2.msra.mxu0 0.0
        %5564 = vmatprep.subr.mxu0 0.0
        %5565 = vmatpush2.msra.mxu0 0.0
        %5566 = vmatprep.subr.mxu0 0.0
        %5567 = vmatpush2.msra.mxu0 0.0
        %5568 = vmatprep.subr.mxu0 0.0
        %5569 = vmatpush2.msra.mxu0 0.0
        %5570 = vmatprep.subr.mxu0 0.0
        %5571 = vmatpush2.msra.mxu0 0.0
        %5572 = vmatprep.subr.mxu0 0.0
        %5573 = vmatpush2.msra.mxu0 0.0
        %5574 = vmatprep.subr.mxu0 0.0
        %5575 = vmatpush2.msra.mxu0 0.0
        %5576 = vmatprep.subr.mxu0 0.0
        %5577 = vmatpush2.msra.mxu0 0.0
        %5578 = vmatprep.subr.mxu0 0.0
        %5579 = vmatpush2.msra.mxu0 0.0
        %5580 = vmatprep.mubr.f32.mxu0 0.0
        %5581 = vmatmul.mubr.f32.gmra.mxu0 %v5514
        %v5582 = vpop.f32.mrf.mxu0
        %v5583 = vadd.f32 %v392, %v5582
        %v5584 = vpop.f32.mrf.mxu0
        %5585 = vdwg.mxu0
        %v5586 = vmul.f32 %v382, %v5583
        %v5587 = vadd.f32 %v5358, %v5586
        %v5588 = vmax.f32 %v5587, 0.0
        %v5589 = vadd.f32 %v5436, %v5512
        %v5590 = vmul.f32 %v5589, 2.0
        %v5591 = vadd.f32 %v5360, %v5590
        %v5592 = vadd.f32 %v5591, %v5588
        %v5594 = vsel %vm394, %v5592, 0
        %5596 = vmatprep.subr.mxu0 0.0
        %5597 = vmatpush1.msra.mxu0 0.0
        %5598 = vmatprep.subr.mxu0 0.0
        %5599 = vmatpush1.msra.mxu0 0.0
        %5600 = vmatprep.subr.mxu0 0.0
        %5601 = vmatpush1.msra.mxu0 0.0
        %5602 = vmatprep.subr.mxu0 0.0
        %5603 = vmatpush1.msra.mxu0 0.0
        %5604 = vmatprep.subr.mxu0 0.0
        %5605 = vmatpush1.msra.mxu0 0.0
        %5606 = vmatprep.subr.mxu0 0.0
        %5607 = vmatpush1.msra.mxu0 0.0
        %5608 = vmatprep.subr.mxu0 0.0
        %5609 = vmatpush1.msra.mxu0 0.0
        %5610 = vmatprep.subr.mxu0 0.0
        %5611 = vmatpush1.msra.mxu0 0.0
        %5612 = vmatprep.subr.mxu0 0.0
        %5613 = vmatpush1.msra.mxu0 %v97
        %5614 = vmatprep.subr.mxu0 0.0
        %5615 = vmatpush1.msra.mxu0 %v96
        %5616 = vmatprep.subr.mxu0 0.0
        %5617 = vmatpush1.msra.mxu0 %v95
        %5618 = vmatprep.subr.mxu0 0.0
        %5619 = vmatpush1.msra.mxu0 %v94
        %5620 = vmatprep.subr.mxu0 0.0
        %5621 = vmatpush1.msra.mxu0 %v93
        %5622 = vmatprep.subr.mxu0 0.0
        %5623 = vmatpush1.msra.mxu0 %v92
        %5624 = vmatprep.subr.mxu0 0.0
        %5625 = vmatpush1.msra.mxu0 %v91
        %5626 = vmatprep.subr.mxu0 0.0
        %5627 = vmatpush1.msra.mxu0 %v90
        %5628 = vmatprep.subr.mxu0 0.0
        %5629 = vmatpush2.msra.mxu0 0.0
        %5630 = vmatprep.subr.mxu0 0.0
        %5631 = vmatpush2.msra.mxu0 0.0
        %5632 = vmatprep.subr.mxu0 0.0
        %5633 = vmatpush2.msra.mxu0 0.0
        %5634 = vmatprep.subr.mxu0 0.0
        %5635 = vmatpush2.msra.mxu0 0.0
        %5636 = vmatprep.subr.mxu0 0.0
        %5637 = vmatpush2.msra.mxu0 0.0
        %5638 = vmatprep.subr.mxu0 0.0
        %5639 = vmatpush2.msra.mxu0 0.0
        %5640 = vmatprep.subr.mxu0 0.0
        %5641 = vmatpush2.msra.mxu0 0.0
        %5642 = vmatprep.subr.mxu0 0.0
        %5643 = vmatpush2.msra.mxu0 0.0
        %5644 = vmatprep.subr.mxu0 0.0
        %5645 = vmatpush2.msra.mxu0 0.0
        %5646 = vmatprep.subr.mxu0 0.0
        %5647 = vmatpush2.msra.mxu0 0.0
        %5648 = vmatprep.subr.mxu0 0.0
        %5649 = vmatpush2.msra.mxu0 0.0
        %5650 = vmatprep.subr.mxu0 0.0
        %5651 = vmatpush2.msra.mxu0 0.0
        %5652 = vmatprep.subr.mxu0 0.0
        %5653 = vmatpush2.msra.mxu0 0.0
        %5654 = vmatprep.subr.mxu0 0.0
        %5655 = vmatpush2.msra.mxu0 0.0
        %5656 = vmatprep.subr.mxu0 0.0
        %5657 = vmatpush2.msra.mxu0 0.0
        %5658 = vmatprep.subr.mxu0 0.0
        %5659 = vmatpush2.msra.mxu0 0.0
        %5660 = vmatprep.mubr.f32.mxu0 0.0
        %5661 = vmatmul.mubr.f32.gmra.mxu0 %v5594
        %v5662 = vpop.f32.mrf.mxu0
        %v5663 = vadd.f32 0.0, %v5662
        %v5664 = vpop.f32.mrf.mxu0
        %5665 = vdwg.mxu0
        %v5666 = vmul.f32 %v386, %v5663
        %v5667 = vadd.f32 %v5358, %v5666
        %v5668 = vadd.f32 %v5667, %v706
        %v5669 = vadd.f32 %v5359, %v5592
        %v5670 = vmax.f32 %v5668, 0.0
        %v5672 = vsel %vm394, %v5670, 0
        %5674 = vmatprep.subr.mxu0 0.0
        %5675 = vmatpush1.msra.mxu0 0.0
        %5676 = vmatprep.subr.mxu0 0.0
        %5677 = vmatpush1.msra.mxu0 0.0
        %5678 = vmatprep.subr.mxu0 0.0
        %5679 = vmatpush1.msra.mxu0 0.0
        %5680 = vmatprep.subr.mxu0 0.0
        %5681 = vmatpush1.msra.mxu0 0.0
        %5682 = vmatprep.subr.mxu0 0.0
        %5683 = vmatpush1.msra.mxu0 0.0
        %5684 = vmatprep.subr.mxu0 0.0
        %5685 = vmatpush1.msra.mxu0 0.0
        %5686 = vmatprep.subr.mxu0 0.0
        %5687 = vmatpush1.msra.mxu0 0.0
        %5688 = vmatprep.subr.mxu0 0.0
        %5689 = vmatpush1.msra.mxu0 0.0
        %5690 = vmatprep.subr.mxu0 0.0
        %5691 = vmatpush1.msra.mxu0 %v97
        %5692 = vmatprep.subr.mxu0 0.0
        %5693 = vmatpush1.msra.mxu0 %v96
        %5694 = vmatprep.subr.mxu0 0.0
        %5695 = vmatpush1.msra.mxu0 %v95
        %5696 = vmatprep.subr.mxu0 0.0
        %5697 = vmatpush1.msra.mxu0 %v94
        %5698 = vmatprep.subr.mxu0 0.0
        %5699 = vmatpush1.msra.mxu0 %v93
        %5700 = vmatprep.subr.mxu0 0.0
        %5701 = vmatpush1.msra.mxu0 %v92
        %5702 = vmatprep.subr.mxu0 0.0
        %5703 = vmatpush1.msra.mxu0 %v91
        %5704 = vmatprep.subr.mxu0 0.0
        %5705 = vmatpush1.msra.mxu0 %v90
        %5706 = vmatprep.subr.mxu0 0.0
        %5707 = vmatpush2.msra.mxu0 0.0
        %5708 = vmatprep.subr.mxu0 0.0
        %5709 = vmatpush2.msra.mxu0 0.0
        %5710 = vmatprep.subr.mxu0 0.0
        %5711 = vmatpush2.msra.mxu0 0.0
        %5712 = vmatprep.subr.mxu0 0.0
        %5713 = vmatpush2.msra.mxu0 0.0
        %5714 = vmatprep.subr.mxu0 0.0
        %5715 = vmatpush2.msra.mxu0 0.0
        %5716 = vmatprep.subr.mxu0 0.0
        %5717 = vmatpush2.msra.mxu0 0.0
        %5718 = vmatprep.subr.mxu0 0.0
        %5719 = vmatpush2.msra.mxu0 0.0
        %5720 = vmatprep.subr.mxu0 0.0
        %5721 = vmatpush2.msra.mxu0 0.0
        %5722 = vmatprep.subr.mxu0 0.0
        %5723 = vmatpush2.msra.mxu0 0.0
        %5724 = vmatprep.subr.mxu0 0.0
        %5725 = vmatpush2.msra.mxu0 0.0
        %5726 = vmatprep.subr.mxu0 0.0
        %5727 = vmatpush2.msra.mxu0 0.0
        %5728 = vmatprep.subr.mxu0 0.0
        %5729 = vmatpush2.msra.mxu0 0.0
        %5730 = vmatprep.subr.mxu0 0.0
        %5731 = vmatpush2.msra.mxu0 0.0
        %5732 = vmatprep.subr.mxu0 0.0
        %5733 = vmatpush2.msra.mxu0 0.0
        %5734 = vmatprep.subr.mxu0 0.0
        %5735 = vmatpush2.msra.mxu0 0.0
        %5736 = vmatprep.subr.mxu0 0.0
        %5737 = vmatpush2.msra.mxu0 0.0
        %5738 = vmatprep.mubr.f32.mxu0 0.0
        %5739 = vmatmul.mubr.f32.gmra.mxu0 %v5672
        %v5740 = vpop.f32.mrf.mxu0
        %v5741 = vadd.f32 %v392, %v5740
        %v5742 = vpop.f32.mrf.mxu0
        %5743 = vdwg.mxu0
        %v5744 = vmul.f32 %v385, %v5741
        %v5745 = vadd.f32 %v5668, %v5744
        %v5746 = vmax.f32 %v5745, 0.0
        %v5748 = vsel %vm394, %v5746, 0
        %5750 = vmatprep.subr.mxu0 0.0
        %5751 = vmatpush1.msra.mxu0 0.0
        %5752 = vmatprep.subr.mxu0 0.0
        %5753 = vmatpush1.msra.mxu0 0.0
        %5754 = vmatprep.subr.mxu0 0.0
        %5755 = vmatpush1.msra.mxu0 0.0
        %5756 = vmatprep.subr.mxu0 0.0
        %5757 = vmatpush1.msra.mxu0 0.0
        %5758 = vmatprep.subr.mxu0 0.0
        %5759 = vmatpush1.msra.mxu0 0.0
        %5760 = vmatprep.subr.mxu0 0.0
        %5761 = vmatpush1.msra.mxu0 0.0
        %5762 = vmatprep.subr.mxu0 0.0
        %5763 = vmatpush1.msra.mxu0 0.0
        %5764 = vmatprep.subr.mxu0 0.0
        %5765 = vmatpush1.msra.mxu0 0.0
        %5766 = vmatprep.subr.mxu0 0.0
        %5767 = vmatpush1.msra.mxu0 %v97
        %5768 = vmatprep.subr.mxu0 0.0
        %5769 = vmatpush1.msra.mxu0 %v96
        %5770 = vmatprep.subr.mxu0 0.0
        %5771 = vmatpush1.msra.mxu0 %v95
        %5772 = vmatprep.subr.mxu0 0.0
        %5773 = vmatpush1.msra.mxu0 %v94
        %5774 = vmatprep.subr.mxu0 0.0
        %5775 = vmatpush1.msra.mxu0 %v93
        %5776 = vmatprep.subr.mxu0 0.0
        %5777 = vmatpush1.msra.mxu0 %v92
        %5778 = vmatprep.subr.mxu0 0.0
        %5779 = vmatpush1.msra.mxu0 %v91
        %5780 = vmatprep.subr.mxu0 0.0
        %5781 = vmatpush1.msra.mxu0 %v90
        %5782 = vmatprep.subr.mxu0 0.0
        %5783 = vmatpush2.msra.mxu0 0.0
        %5784 = vmatprep.subr.mxu0 0.0
        %5785 = vmatpush2.msra.mxu0 0.0
        %5786 = vmatprep.subr.mxu0 0.0
        %5787 = vmatpush2.msra.mxu0 0.0
        %5788 = vmatprep.subr.mxu0 0.0
        %5789 = vmatpush2.msra.mxu0 0.0
        %5790 = vmatprep.subr.mxu0 0.0
        %5791 = vmatpush2.msra.mxu0 0.0
        %5792 = vmatprep.subr.mxu0 0.0
        %5793 = vmatpush2.msra.mxu0 0.0
        %5794 = vmatprep.subr.mxu0 0.0
        %5795 = vmatpush2.msra.mxu0 0.0
        %5796 = vmatprep.subr.mxu0 0.0
        %5797 = vmatpush2.msra.mxu0 0.0
        %5798 = vmatprep.subr.mxu0 0.0
        %5799 = vmatpush2.msra.mxu0 0.0
        %5800 = vmatprep.subr.mxu0 0.0
        %5801 = vmatpush2.msra.mxu0 0.0
        %5802 = vmatprep.subr.mxu0 0.0
        %5803 = vmatpush2.msra.mxu0 0.0
        %5804 = vmatprep.subr.mxu0 0.0
        %5805 = vmatpush2.msra.mxu0 0.0
        %5806 = vmatprep.subr.mxu0 0.0
        %5807 = vmatpush2.msra.mxu0 0.0
        %5808 = vmatprep.subr.mxu0 0.0
        %5809 = vmatpush2.msra.mxu0 0.0
        %5810 = vmatprep.subr.mxu0 0.0
        %5811 = vmatpush2.msra.mxu0 0.0
        %5812 = vmatprep.subr.mxu0 0.0
        %5813 = vmatpush2.msra.mxu0 0.0
        %5814 = vmatprep.mubr.f32.mxu0 0.0
        %5815 = vmatmul.mubr.f32.gmra.mxu0 %v5748
        %v5816 = vpop.f32.mrf.mxu0
        %v5817 = vadd.f32 %v392, %v5816
        %v5818 = vpop.f32.mrf.mxu0
        %5819 = vdwg.mxu0
        %v5820 = vmul.f32 %v385, %v5817
        %v5821 = vadd.f32 %v5668, %v5820
        %v5822 = vmax.f32 %v5821, 0.0
        %v5824 = vsel %vm394, %v5822, 0
        %5826 = vmatprep.subr.mxu0 0.0
        %5827 = vmatpush1.msra.mxu0 0.0
        %5828 = vmatprep.subr.mxu0 0.0
        %5829 = vmatpush1.msra.mxu0 0.0
        %5830 = vmatprep.subr.mxu0 0.0
        %5831 = vmatpush1.msra.mxu0 0.0
        %5832 = vmatprep.subr.mxu0 0.0
        %5833 = vmatpush1.msra.mxu0 0.0
        %5834 = vmatprep.subr.mxu0 0.0
        %5835 = vmatpush1.msra.mxu0 0.0
        %5836 = vmatprep.subr.mxu0 0.0
        %5837 = vmatpush1.msra.mxu0 0.0
        %5838 = vmatprep.subr.mxu0 0.0
        %5839 = vmatpush1.msra.mxu0 0.0
        %5840 = vmatprep.subr.mxu0 0.0
        %5841 = vmatpush1.msra.mxu0 0.0
        %5842 = vmatprep.subr.mxu0 0.0
        %5843 = vmatpush1.msra.mxu0 %v97
        %5844 = vmatprep.subr.mxu0 0.0
        %5845 = vmatpush1.msra.mxu0 %v96
        %5846 = vmatprep.subr.mxu0 0.0
        %5847 = vmatpush1.msra.mxu0 %v95
        %5848 = vmatprep.subr.mxu0 0.0
        %5849 = vmatpush1.msra.mxu0 %v94
        %5850 = vmatprep.subr.mxu0 0.0
        %5851 = vmatpush1.msra.mxu0 %v93
        %5852 = vmatprep.subr.mxu0 0.0
        %5853 = vmatpush1.msra.mxu0 %v92
        %5854 = vmatprep.subr.mxu0 0.0
        %5855 = vmatpush1.msra.mxu0 %v91
        %5856 = vmatprep.subr.mxu0 0.0
        %5857 = vmatpush1.msra.mxu0 %v90
        %5858 = vmatprep.subr.mxu0 0.0
        %5859 = vmatpush2.msra.mxu0 0.0
        %5860 = vmatprep.subr.mxu0 0.0
        %5861 = vmatpush2.msra.mxu0 0.0
        %5862 = vmatprep.subr.mxu0 0.0
        %5863 = vmatpush2.msra.mxu0 0.0
        %5864 = vmatprep.subr.mxu0 0.0
        %5865 = vmatpush2.msra.mxu0 0.0
        %5866 = vmatprep.subr.mxu0 0.0
        %5867 = vmatpush2.msra.mxu0 0.0
        %5868 = vmatprep.subr.mxu0 0.0
        %5869 = vmatpush2.msra.mxu0 0.0
        %5870 = vmatprep.subr.mxu0 0.0
        %5871 = vmatpush2.msra.mxu0 0.0
        %5872 = vmatprep.subr.mxu0 0.0
        %5873 = vmatpush2.msra.mxu0 0.0
        %5874 = vmatprep.subr.mxu0 0.0
        %5875 = vmatpush2.msra.mxu0 0.0
        %5876 = vmatprep.subr.mxu0 0.0
        %5877 = vmatpush2.msra.mxu0 0.0
        %5878 = vmatprep.subr.mxu0 0.0
        %5879 = vmatpush2.msra.mxu0 0.0
        %5880 = vmatprep.subr.mxu0 0.0
        %5881 = vmatpush2.msra.mxu0 0.0
        %5882 = vmatprep.subr.mxu0 0.0
        %5883 = vmatpush2.msra.mxu0 0.0
        %5884 = vmatprep.subr.mxu0 0.0
        %5885 = vmatpush2.msra.mxu0 0.0
        %5886 = vmatprep.subr.mxu0 0.0
        %5887 = vmatpush2.msra.mxu0 0.0
        %5888 = vmatprep.subr.mxu0 0.0
        %5889 = vmatpush2.msra.mxu0 0.0
        %5890 = vmatprep.mubr.f32.mxu0 0.0
        %5891 = vmatmul.mubr.f32.gmra.mxu0 %v5824
        %v5892 = vpop.f32.mrf.mxu0
        %v5893 = vadd.f32 %v392, %v5892
        %v5894 = vpop.f32.mrf.mxu0
        %5895 = vdwg.mxu0
        %v5896 = vmul.f32 %v382, %v5893
        %v5897 = vadd.f32 %v5668, %v5896
        %v5898 = vmax.f32 %v5897, 0.0
        %v5899 = vadd.f32 %v5746, %v5822
        %v5900 = vmul.f32 %v5899, 2.0
        %v5901 = vadd.f32 %v5670, %v5900
        %v5902 = vadd.f32 %v5901, %v5898
        %v5904 = vsel %vm394, %v5902, 0
        %5906 = vmatprep.subr.mxu0 0.0
        %5907 = vmatpush1.msra.mxu0 0.0
        %5908 = vmatprep.subr.mxu0 0.0
        %5909 = vmatpush1.msra.mxu0 0.0
        %5910 = vmatprep.subr.mxu0 0.0
        %5911 = vmatpush1.msra.mxu0 0.0
        %5912 = vmatprep.subr.mxu0 0.0
        %5913 = vmatpush1.msra.mxu0 0.0
        %5914 = vmatprep.subr.mxu0 0.0
        %5915 = vmatpush1.msra.mxu0 0.0
        %5916 = vmatprep.subr.mxu0 0.0
        %5917 = vmatpush1.msra.mxu0 0.0
        %5918 = vmatprep.subr.mxu0 0.0
        %5919 = vmatpush1.msra.mxu0 0.0
        %5920 = vmatprep.subr.mxu0 0.0
        %5921 = vmatpush1.msra.mxu0 0.0
        %5922 = vmatprep.subr.mxu0 0.0
        %5923 = vmatpush1.msra.mxu0 %v97
        %5924 = vmatprep.subr.mxu0 0.0
        %5925 = vmatpush1.msra.mxu0 %v96
        %5926 = vmatprep.subr.mxu0 0.0
        %5927 = vmatpush1.msra.mxu0 %v95
        %5928 = vmatprep.subr.mxu0 0.0
        %5929 = vmatpush1.msra.mxu0 %v94
        %5930 = vmatprep.subr.mxu0 0.0
        %5931 = vmatpush1.msra.mxu0 %v93
        %5932 = vmatprep.subr.mxu0 0.0
        %5933 = vmatpush1.msra.mxu0 %v92
        %5934 = vmatprep.subr.mxu0 0.0
        %5935 = vmatpush1.msra.mxu0 %v91
        %5936 = vmatprep.subr.mxu0 0.0
        %5937 = vmatpush1.msra.mxu0 %v90
        %5938 = vmatprep.subr.mxu0 0.0
        %5939 = vmatpush2.msra.mxu0 0.0
        %5940 = vmatprep.subr.mxu0 0.0
        %5941 = vmatpush2.msra.mxu0 0.0
        %5942 = vmatprep.subr.mxu0 0.0
        %5943 = vmatpush2.msra.mxu0 0.0
        %5944 = vmatprep.subr.mxu0 0.0
        %5945 = vmatpush2.msra.mxu0 0.0
        %5946 = vmatprep.subr.mxu0 0.0
        %5947 = vmatpush2.msra.mxu0 0.0
        %5948 = vmatprep.subr.mxu0 0.0
        %5949 = vmatpush2.msra.mxu0 0.0
        %5950 = vmatprep.subr.mxu0 0.0
        %5951 = vmatpush2.msra.mxu0 0.0
        %5952 = vmatprep.subr.mxu0 0.0
        %5953 = vmatpush2.msra.mxu0 0.0
        %5954 = vmatprep.subr.mxu0 0.0
        %5955 = vmatpush2.msra.mxu0 0.0
        %5956 = vmatprep.subr.mxu0 0.0
        %5957 = vmatpush2.msra.mxu0 0.0
        %5958 = vmatprep.subr.mxu0 0.0
        %5959 = vmatpush2.msra.mxu0 0.0
        %5960 = vmatprep.subr.mxu0 0.0
        %5961 = vmatpush2.msra.mxu0 0.0
        %5962 = vmatprep.subr.mxu0 0.0
        %5963 = vmatpush2.msra.mxu0 0.0
        %5964 = vmatprep.subr.mxu0 0.0
        %5965 = vmatpush2.msra.mxu0 0.0
        %5966 = vmatprep.subr.mxu0 0.0
        %5967 = vmatpush2.msra.mxu0 0.0
        %5968 = vmatprep.subr.mxu0 0.0
        %5969 = vmatpush2.msra.mxu0 0.0
        %5970 = vmatprep.mubr.f32.mxu0 0.0
        %5971 = vmatmul.mubr.f32.gmra.mxu0 %v5904
        %v5972 = vpop.f32.mrf.mxu0
        %v5973 = vadd.f32 0.0, %v5972
        %v5974 = vpop.f32.mrf.mxu0
        %5975 = vdwg.mxu0
        %v5976 = vmul.f32 %v386, %v5973
        %v5977 = vadd.f32 %v5668, %v5976
        %v5978 = vadd.f32 %v5977, %v706
        %v5979 = vadd.f32 %v5669, %v5902
        %v5980 = vmax.f32 %v5978, 0.0
        %v5982 = vsel %vm394, %v5980, 0
        %5984 = vmatprep.subr.mxu0 0.0
        %5985 = vmatpush1.msra.mxu0 0.0
        %5986 = vmatprep.subr.mxu0 0.0
        %5987 = vmatpush1.msra.mxu0 0.0
        %5988 = vmatprep.subr.mxu0 0.0
        %5989 = vmatpush1.msra.mxu0 0.0
        %5990 = vmatprep.subr.mxu0 0.0
        %5991 = vmatpush1.msra.mxu0 0.0
        %5992 = vmatprep.subr.mxu0 0.0
        %5993 = vmatpush1.msra.mxu0 0.0
        %5994 = vmatprep.subr.mxu0 0.0
        %5995 = vmatpush1.msra.mxu0 0.0
        %5996 = vmatprep.subr.mxu0 0.0
        %5997 = vmatpush1.msra.mxu0 0.0
        %5998 = vmatprep.subr.mxu0 0.0
        %5999 = vmatpush1.msra.mxu0 0.0
        %6000 = vmatprep.subr.mxu0 0.0
        %6001 = vmatpush1.msra.mxu0 %v97
        %6002 = vmatprep.subr.mxu0 0.0
        %6003 = vmatpush1.msra.mxu0 %v96
        %6004 = vmatprep.subr.mxu0 0.0
        %6005 = vmatpush1.msra.mxu0 %v95
        %6006 = vmatprep.subr.mxu0 0.0
        %6007 = vmatpush1.msra.mxu0 %v94
        %6008 = vmatprep.subr.mxu0 0.0
        %6009 = vmatpush1.msra.mxu0 %v93
        %6010 = vmatprep.subr.mxu0 0.0
        %6011 = vmatpush1.msra.mxu0 %v92
        %6012 = vmatprep.subr.mxu0 0.0
        %6013 = vmatpush1.msra.mxu0 %v91
        %6014 = vmatprep.subr.mxu0 0.0
        %6015 = vmatpush1.msra.mxu0 %v90
        %6016 = vmatprep.subr.mxu0 0.0
        %6017 = vmatpush2.msra.mxu0 0.0
        %6018 = vmatprep.subr.mxu0 0.0
        %6019 = vmatpush2.msra.mxu0 0.0
        %6020 = vmatprep.subr.mxu0 0.0
        %6021 = vmatpush2.msra.mxu0 0.0
        %6022 = vmatprep.subr.mxu0 0.0
        %6023 = vmatpush2.msra.mxu0 0.0
        %6024 = vmatprep.subr.mxu0 0.0
        %6025 = vmatpush2.msra.mxu0 0.0
        %6026 = vmatprep.subr.mxu0 0.0
        %6027 = vmatpush2.msra.mxu0 0.0
        %6028 = vmatprep.subr.mxu0 0.0
        %6029 = vmatpush2.msra.mxu0 0.0
        %6030 = vmatprep.subr.mxu0 0.0
        %6031 = vmatpush2.msra.mxu0 0.0
        %6032 = vmatprep.subr.mxu0 0.0
        %6033 = vmatpush2.msra.mxu0 0.0
        %6034 = vmatprep.subr.mxu0 0.0
        %6035 = vmatpush2.msra.mxu0 0.0
        %6036 = vmatprep.subr.mxu0 0.0
        %6037 = vmatpush2.msra.mxu0 0.0
        %6038 = vmatprep.subr.mxu0 0.0
        %6039 = vmatpush2.msra.mxu0 0.0
        %6040 = vmatprep.subr.mxu0 0.0
        %6041 = vmatpush2.msra.mxu0 0.0
        %6042 = vmatprep.subr.mxu0 0.0
        %6043 = vmatpush2.msra.mxu0 0.0
        %6044 = vmatprep.subr.mxu0 0.0
        %6045 = vmatpush2.msra.mxu0 0.0
        %6046 = vmatprep.subr.mxu0 0.0
        %6047 = vmatpush2.msra.mxu0 0.0
        %6048 = vmatprep.mubr.f32.mxu0 0.0
        %6049 = vmatmul.mubr.f32.gmra.mxu0 %v5982
        %v6050 = vpop.f32.mrf.mxu0
        %v6051 = vadd.f32 %v392, %v6050
        %v6052 = vpop.f32.mrf.mxu0
        %6053 = vdwg.mxu0
        %v6054 = vmul.f32 %v385, %v6051
        %v6055 = vadd.f32 %v5978, %v6054
        %v6056 = vmax.f32 %v6055, 0.0
        %v6058 = vsel %vm394, %v6056, 0
        %6060 = vmatprep.subr.mxu0 0.0
        %6061 = vmatpush1.msra.mxu0 0.0
        %6062 = vmatprep.subr.mxu0 0.0
        %6063 = vmatpush1.msra.mxu0 0.0
        %6064 = vmatprep.subr.mxu0 0.0
        %6065 = vmatpush1.msra.mxu0 0.0
        %6066 = vmatprep.subr.mxu0 0.0
        %6067 = vmatpush1.msra.mxu0 0.0
        %6068 = vmatprep.subr.mxu0 0.0
        %6069 = vmatpush1.msra.mxu0 0.0
        %6070 = vmatprep.subr.mxu0 0.0
        %6071 = vmatpush1.msra.mxu0 0.0
        %6072 = vmatprep.subr.mxu0 0.0
        %6073 = vmatpush1.msra.mxu0 0.0
        %6074 = vmatprep.subr.mxu0 0.0
        %6075 = vmatpush1.msra.mxu0 0.0
        %6076 = vmatprep.subr.mxu0 0.0
        %6077 = vmatpush1.msra.mxu0 %v97
        %6078 = vmatprep.subr.mxu0 0.0
        %6079 = vmatpush1.msra.mxu0 %v96
        %6080 = vmatprep.subr.mxu0 0.0
        %6081 = vmatpush1.msra.mxu0 %v95
        %6082 = vmatprep.subr.mxu0 0.0
        %6083 = vmatpush1.msra.mxu0 %v94
        %6084 = vmatprep.subr.mxu0 0.0
        %6085 = vmatpush1.msra.mxu0 %v93
        %6086 = vmatprep.subr.mxu0 0.0
        %6087 = vmatpush1.msra.mxu0 %v92
        %6088 = vmatprep.subr.mxu0 0.0
        %6089 = vmatpush1.msra.mxu0 %v91
        %6090 = vmatprep.subr.mxu0 0.0
        %6091 = vmatpush1.msra.mxu0 %v90
        %6092 = vmatprep.subr.mxu0 0.0
        %6093 = vmatpush2.msra.mxu0 0.0
        %6094 = vmatprep.subr.mxu0 0.0
        %6095 = vmatpush2.msra.mxu0 0.0
        %6096 = vmatprep.subr.mxu0 0.0
        %6097 = vmatpush2.msra.mxu0 0.0
        %6098 = vmatprep.subr.mxu0 0.0
        %6099 = vmatpush2.msra.mxu0 0.0
        %6100 = vmatprep.subr.mxu0 0.0
        %6101 = vmatpush2.msra.mxu0 0.0
        %6102 = vmatprep.subr.mxu0 0.0
        %6103 = vmatpush2.msra.mxu0 0.0
        %6104 = vmatprep.subr.mxu0 0.0
        %6105 = vmatpush2.msra.mxu0 0.0
        %6106 = vmatprep.subr.mxu0 0.0
        %6107 = vmatpush2.msra.mxu0 0.0
        %6108 = vmatprep.subr.mxu0 0.0
        %6109 = vmatpush2.msra.mxu0 0.0
        %6110 = vmatprep.subr.mxu0 0.0
        %6111 = vmatpush2.msra.mxu0 0.0
        %6112 = vmatprep.subr.mxu0 0.0
        %6113 = vmatpush2.msra.mxu0 0.0
        %6114 = vmatprep.subr.mxu0 0.0
        %6115 = vmatpush2.msra.mxu0 0.0
        %6116 = vmatprep.subr.mxu0 0.0
        %6117 = vmatpush2.msra.mxu0 0.0
        %6118 = vmatprep.subr.mxu0 0.0
        %6119 = vmatpush2.msra.mxu0 0.0
        %6120 = vmatprep.subr.mxu0 0.0
        %6121 = vmatpush2.msra.mxu0 0.0
        %6122 = vmatprep.subr.mxu0 0.0
        %6123 = vmatpush2.msra.mxu0 0.0
        %6124 = vmatprep.mubr.f32.mxu0 0.0
        %6125 = vmatmul.mubr.f32.gmra.mxu0 %v6058
        %v6126 = vpop.f32.mrf.mxu0
        %v6127 = vadd.f32 %v392, %v6126
        %v6128 = vpop.f32.mrf.mxu0
        %6129 = vdwg.mxu0
        %v6130 = vmul.f32 %v385, %v6127
        %v6131 = vadd.f32 %v5978, %v6130
        %v6132 = vmax.f32 %v6131, 0.0
        %v6134 = vsel %vm394, %v6132, 0
        %6136 = vmatprep.subr.mxu0 0.0
        %6137 = vmatpush1.msra.mxu0 0.0
        %6138 = vmatprep.subr.mxu0 0.0
        %6139 = vmatpush1.msra.mxu0 0.0
        %6140 = vmatprep.subr.mxu0 0.0
        %6141 = vmatpush1.msra.mxu0 0.0
        %6142 = vmatprep.subr.mxu0 0.0
        %6143 = vmatpush1.msra.mxu0 0.0
        %6144 = vmatprep.subr.mxu0 0.0
        %6145 = vmatpush1.msra.mxu0 0.0
        %6146 = vmatprep.subr.mxu0 0.0
        %6147 = vmatpush1.msra.mxu0 0.0
        %6148 = vmatprep.subr.mxu0 0.0
        %6149 = vmatpush1.msra.mxu0 0.0
        %6150 = vmatprep.subr.mxu0 0.0
        %6151 = vmatpush1.msra.mxu0 0.0
        %6152 = vmatprep.subr.mxu0 0.0
        %6153 = vmatpush1.msra.mxu0 %v97
        %6154 = vmatprep.subr.mxu0 0.0
        %6155 = vmatpush1.msra.mxu0 %v96
        %6156 = vmatprep.subr.mxu0 0.0
        %6157 = vmatpush1.msra.mxu0 %v95
        %6158 = vmatprep.subr.mxu0 0.0
        %6159 = vmatpush1.msra.mxu0 %v94
        %6160 = vmatprep.subr.mxu0 0.0
        %6161 = vmatpush1.msra.mxu0 %v93
        %6162 = vmatprep.subr.mxu0 0.0
        %6163 = vmatpush1.msra.mxu0 %v92
        %6164 = vmatprep.subr.mxu0 0.0
        %6165 = vmatpush1.msra.mxu0 %v91
        %6166 = vmatprep.subr.mxu0 0.0
        %6167 = vmatpush1.msra.mxu0 %v90
        %6168 = vmatprep.subr.mxu0 0.0
        %6169 = vmatpush2.msra.mxu0 0.0
        %6170 = vmatprep.subr.mxu0 0.0
        %6171 = vmatpush2.msra.mxu0 0.0
        %6172 = vmatprep.subr.mxu0 0.0
        %6173 = vmatpush2.msra.mxu0 0.0
        %6174 = vmatprep.subr.mxu0 0.0
        %6175 = vmatpush2.msra.mxu0 0.0
        %6176 = vmatprep.subr.mxu0 0.0
        %6177 = vmatpush2.msra.mxu0 0.0
        %6178 = vmatprep.subr.mxu0 0.0
        %6179 = vmatpush2.msra.mxu0 0.0
        %6180 = vmatprep.subr.mxu0 0.0
        %6181 = vmatpush2.msra.mxu0 0.0
        %6182 = vmatprep.subr.mxu0 0.0
        %6183 = vmatpush2.msra.mxu0 0.0
        %6184 = vmatprep.subr.mxu0 0.0
        %6185 = vmatpush2.msra.mxu0 0.0
        %6186 = vmatprep.subr.mxu0 0.0
        %6187 = vmatpush2.msra.mxu0 0.0
        %6188 = vmatprep.subr.mxu0 0.0
        %6189 = vmatpush2.msra.mxu0 0.0
        %6190 = vmatprep.subr.mxu0 0.0
        %6191 = vmatpush2.msra.mxu0 0.0
        %6192 = vmatprep.subr.mxu0 0.0
        %6193 = vmatpush2.msra.mxu0 0.0
        %6194 = vmatprep.subr.mxu0 0.0
        %6195 = vmatpush2.msra.mxu0 0.0
        %6196 = vmatprep.subr.mxu0 0.0
        %6197 = vmatpush2.msra.mxu0 0.0
        %6198 = vmatprep.subr.mxu0 0.0
        %6199 = vmatpush2.msra.mxu0 0.0
        %6200 = vmatprep.mubr.f32.mxu0 0.0
        %6201 = vmatmul.mubr.f32.gmra.mxu0 %v6134
        %v6202 = vpop.f32.mrf.mxu0
        %v6203 = vadd.f32 %v392, %v6202
        %v6204 = vpop.f32.mrf.mxu0
        %6205 = vdwg.mxu0
        %v6206 = vmul.f32 %v382, %v6203
        %v6207 = vadd.f32 %v5978, %v6206
        %v6208 = vmax.f32 %v6207, 0.0
        %v6209 = vadd.f32 %v6056, %v6132
        %v6210 = vmul.f32 %v6209, 2.0
        %v6211 = vadd.f32 %v5980, %v6210
        %v6212 = vadd.f32 %v6211, %v6208
        %v6214 = vsel %vm394, %v6212, 0
        %6216 = vmatprep.subr.mxu0 0.0
        %6217 = vmatpush1.msra.mxu0 0.0
        %6218 = vmatprep.subr.mxu0 0.0
        %6219 = vmatpush1.msra.mxu0 0.0
        %6220 = vmatprep.subr.mxu0 0.0
        %6221 = vmatpush1.msra.mxu0 0.0
        %6222 = vmatprep.subr.mxu0 0.0
        %6223 = vmatpush1.msra.mxu0 0.0
        %6224 = vmatprep.subr.mxu0 0.0
        %6225 = vmatpush1.msra.mxu0 0.0
        %6226 = vmatprep.subr.mxu0 0.0
        %6227 = vmatpush1.msra.mxu0 0.0
        %6228 = vmatprep.subr.mxu0 0.0
        %6229 = vmatpush1.msra.mxu0 0.0
        %6230 = vmatprep.subr.mxu0 0.0
        %6231 = vmatpush1.msra.mxu0 0.0
        %6232 = vmatprep.subr.mxu0 0.0
        %6233 = vmatpush1.msra.mxu0 %v97
        %6234 = vmatprep.subr.mxu0 0.0
        %6235 = vmatpush1.msra.mxu0 %v96
        %6236 = vmatprep.subr.mxu0 0.0
        %6237 = vmatpush1.msra.mxu0 %v95
        %6238 = vmatprep.subr.mxu0 0.0
        %6239 = vmatpush1.msra.mxu0 %v94
        %6240 = vmatprep.subr.mxu0 0.0
        %6241 = vmatpush1.msra.mxu0 %v93
        %6242 = vmatprep.subr.mxu0 0.0
        %6243 = vmatpush1.msra.mxu0 %v92
        %6244 = vmatprep.subr.mxu0 0.0
        %6245 = vmatpush1.msra.mxu0 %v91
        %6246 = vmatprep.subr.mxu0 0.0
        %6247 = vmatpush1.msra.mxu0 %v90
        %6248 = vmatprep.subr.mxu0 0.0
        %6249 = vmatpush2.msra.mxu0 0.0
        %6250 = vmatprep.subr.mxu0 0.0
        %6251 = vmatpush2.msra.mxu0 0.0
        %6252 = vmatprep.subr.mxu0 0.0
        %6253 = vmatpush2.msra.mxu0 0.0
        %6254 = vmatprep.subr.mxu0 0.0
        %6255 = vmatpush2.msra.mxu0 0.0
        %6256 = vmatprep.subr.mxu0 0.0
        %6257 = vmatpush2.msra.mxu0 0.0
        %6258 = vmatprep.subr.mxu0 0.0
        %6259 = vmatpush2.msra.mxu0 0.0
        %6260 = vmatprep.subr.mxu0 0.0
        %6261 = vmatpush2.msra.mxu0 0.0
        %6262 = vmatprep.subr.mxu0 0.0
        %6263 = vmatpush2.msra.mxu0 0.0
        %6264 = vmatprep.subr.mxu0 0.0
        %6265 = vmatpush2.msra.mxu0 0.0
        %6266 = vmatprep.subr.mxu0 0.0
        %6267 = vmatpush2.msra.mxu0 0.0
        %6268 = vmatprep.subr.mxu0 0.0
        %6269 = vmatpush2.msra.mxu0 0.0
        %6270 = vmatprep.subr.mxu0 0.0
        %6271 = vmatpush2.msra.mxu0 0.0
        %6272 = vmatprep.subr.mxu0 0.0
        %6273 = vmatpush2.msra.mxu0 0.0
        %6274 = vmatprep.subr.mxu0 0.0
        %6275 = vmatpush2.msra.mxu0 0.0
        %6276 = vmatprep.subr.mxu0 0.0
        %6277 = vmatpush2.msra.mxu0 0.0
        %6278 = vmatprep.subr.mxu0 0.0
        %6279 = vmatpush2.msra.mxu0 0.0
        %6280 = vmatprep.mubr.f32.mxu0 0.0
        %6281 = vmatmul.mubr.f32.gmra.mxu0 %v6214
        %v6282 = vpop.f32.mrf.mxu0
        %v6283 = vadd.f32 0.0, %v6282
        %v6284 = vpop.f32.mrf.mxu0
        %6285 = vdwg.mxu0
        %v6286 = vmul.f32 %v386, %v6283
        %v6287 = vadd.f32 %v5978, %v6286
        %v6288 = vadd.f32 %v6287, %v706
        %v6289 = vadd.f32 %v5979, %v6212
        %v6290 = vmax.f32 %v6288, 0.0
        %v6292 = vsel %vm394, %v6290, 0
        %6294 = vmatprep.subr.mxu0 0.0
        %6295 = vmatpush1.msra.mxu0 0.0
        %6296 = vmatprep.subr.mxu0 0.0
        %6297 = vmatpush1.msra.mxu0 0.0
        %6298 = vmatprep.subr.mxu0 0.0
        %6299 = vmatpush1.msra.mxu0 0.0
        %6300 = vmatprep.subr.mxu0 0.0
        %6301 = vmatpush1.msra.mxu0 0.0
        %6302 = vmatprep.subr.mxu0 0.0
        %6303 = vmatpush1.msra.mxu0 0.0
        %6304 = vmatprep.subr.mxu0 0.0
        %6305 = vmatpush1.msra.mxu0 0.0
        %6306 = vmatprep.subr.mxu0 0.0
        %6307 = vmatpush1.msra.mxu0 0.0
        %6308 = vmatprep.subr.mxu0 0.0
        %6309 = vmatpush1.msra.mxu0 0.0
        %6310 = vmatprep.subr.mxu0 0.0
        %6311 = vmatpush1.msra.mxu0 %v97
        %6312 = vmatprep.subr.mxu0 0.0
        %6313 = vmatpush1.msra.mxu0 %v96
        %6314 = vmatprep.subr.mxu0 0.0
        %6315 = vmatpush1.msra.mxu0 %v95
        %6316 = vmatprep.subr.mxu0 0.0
        %6317 = vmatpush1.msra.mxu0 %v94
        %6318 = vmatprep.subr.mxu0 0.0
        %6319 = vmatpush1.msra.mxu0 %v93
        %6320 = vmatprep.subr.mxu0 0.0
        %6321 = vmatpush1.msra.mxu0 %v92
        %6322 = vmatprep.subr.mxu0 0.0
        %6323 = vmatpush1.msra.mxu0 %v91
        %6324 = vmatprep.subr.mxu0 0.0
        %6325 = vmatpush1.msra.mxu0 %v90
        %6326 = vmatprep.subr.mxu0 0.0
        %6327 = vmatpush2.msra.mxu0 0.0
        %6328 = vmatprep.subr.mxu0 0.0
        %6329 = vmatpush2.msra.mxu0 0.0
        %6330 = vmatprep.subr.mxu0 0.0
        %6331 = vmatpush2.msra.mxu0 0.0
        %6332 = vmatprep.subr.mxu0 0.0
        %6333 = vmatpush2.msra.mxu0 0.0
        %6334 = vmatprep.subr.mxu0 0.0
        %6335 = vmatpush2.msra.mxu0 0.0
        %6336 = vmatprep.subr.mxu0 0.0
        %6337 = vmatpush2.msra.mxu0 0.0
        %6338 = vmatprep.subr.mxu0 0.0
        %6339 = vmatpush2.msra.mxu0 0.0
        %6340 = vmatprep.subr.mxu0 0.0
        %6341 = vmatpush2.msra.mxu0 0.0
        %6342 = vmatprep.subr.mxu0 0.0
        %6343 = vmatpush2.msra.mxu0 0.0
        %6344 = vmatprep.subr.mxu0 0.0
        %6345 = vmatpush2.msra.mxu0 0.0
        %6346 = vmatprep.subr.mxu0 0.0
        %6347 = vmatpush2.msra.mxu0 0.0
        %6348 = vmatprep.subr.mxu0 0.0
        %6349 = vmatpush2.msra.mxu0 0.0
        %6350 = vmatprep.subr.mxu0 0.0
        %6351 = vmatpush2.msra.mxu0 0.0
        %6352 = vmatprep.subr.mxu0 0.0
        %6353 = vmatpush2.msra.mxu0 0.0
        %6354 = vmatprep.subr.mxu0 0.0
        %6355 = vmatpush2.msra.mxu0 0.0
        %6356 = vmatprep.subr.mxu0 0.0
        %6357 = vmatpush2.msra.mxu0 0.0
        %6358 = vmatprep.mubr.f32.mxu0 0.0
        %6359 = vmatmul.mubr.f32.gmra.mxu0 %v6292
        %v6360 = vpop.f32.mrf.mxu0
        %v6361 = vadd.f32 %v392, %v6360
        %v6362 = vpop.f32.mrf.mxu0
        %6363 = vdwg.mxu0
        %v6364 = vmul.f32 %v385, %v6361
        %v6365 = vadd.f32 %v6288, %v6364
        %v6366 = vmax.f32 %v6365, 0.0
        %v6368 = vsel %vm394, %v6366, 0
        %6370 = vmatprep.subr.mxu0 0.0
        %6371 = vmatpush1.msra.mxu0 0.0
        %6372 = vmatprep.subr.mxu0 0.0
        %6373 = vmatpush1.msra.mxu0 0.0
        %6374 = vmatprep.subr.mxu0 0.0
        %6375 = vmatpush1.msra.mxu0 0.0
        %6376 = vmatprep.subr.mxu0 0.0
        %6377 = vmatpush1.msra.mxu0 0.0
        %6378 = vmatprep.subr.mxu0 0.0
        %6379 = vmatpush1.msra.mxu0 0.0
        %6380 = vmatprep.subr.mxu0 0.0
        %6381 = vmatpush1.msra.mxu0 0.0
        %6382 = vmatprep.subr.mxu0 0.0
        %6383 = vmatpush1.msra.mxu0 0.0
        %6384 = vmatprep.subr.mxu0 0.0
        %6385 = vmatpush1.msra.mxu0 0.0
        %6386 = vmatprep.subr.mxu0 0.0
        %6387 = vmatpush1.msra.mxu0 %v97
        %6388 = vmatprep.subr.mxu0 0.0
        %6389 = vmatpush1.msra.mxu0 %v96
        %6390 = vmatprep.subr.mxu0 0.0
        %6391 = vmatpush1.msra.mxu0 %v95
        %6392 = vmatprep.subr.mxu0 0.0
        %6393 = vmatpush1.msra.mxu0 %v94
        %6394 = vmatprep.subr.mxu0 0.0
        %6395 = vmatpush1.msra.mxu0 %v93
        %6396 = vmatprep.subr.mxu0 0.0
        %6397 = vmatpush1.msra.mxu0 %v92
        %6398 = vmatprep.subr.mxu0 0.0
        %6399 = vmatpush1.msra.mxu0 %v91
        %6400 = vmatprep.subr.mxu0 0.0
        %6401 = vmatpush1.msra.mxu0 %v90
        %6402 = vmatprep.subr.mxu0 0.0
        %6403 = vmatpush2.msra.mxu0 0.0
        %6404 = vmatprep.subr.mxu0 0.0
        %6405 = vmatpush2.msra.mxu0 0.0
        %6406 = vmatprep.subr.mxu0 0.0
        %6407 = vmatpush2.msra.mxu0 0.0
        %6408 = vmatprep.subr.mxu0 0.0
        %6409 = vmatpush2.msra.mxu0 0.0
        %6410 = vmatprep.subr.mxu0 0.0
        %6411 = vmatpush2.msra.mxu0 0.0
        %6412 = vmatprep.subr.mxu0 0.0
        %6413 = vmatpush2.msra.mxu0 0.0
        %6414 = vmatprep.subr.mxu0 0.0
        %6415 = vmatpush2.msra.mxu0 0.0
        %6416 = vmatprep.subr.mxu0 0.0
        %6417 = vmatpush2.msra.mxu0 0.0
        %6418 = vmatprep.subr.mxu0 0.0
        %6419 = vmatpush2.msra.mxu0 0.0
        %6420 = vmatprep.subr.mxu0 0.0
        %6421 = vmatpush2.msra.mxu0 0.0
        %6422 = vmatprep.subr.mxu0 0.0
        %6423 = vmatpush2.msra.mxu0 0.0
        %6424 = vmatprep.subr.mxu0 0.0
        %6425 = vmatpush2.msra.mxu0 0.0
        %6426 = vmatprep.subr.mxu0 0.0
        %6427 = vmatpush2.msra.mxu0 0.0
        %6428 = vmatprep.subr.mxu0 0.0
        %6429 = vmatpush2.msra.mxu0 0.0
        %6430 = vmatprep.subr.mxu0 0.0
        %6431 = vmatpush2.msra.mxu0 0.0
        %6432 = vmatprep.subr.mxu0 0.0
        %6433 = vmatpush2.msra.mxu0 0.0
        %6434 = vmatprep.mubr.f32.mxu0 0.0
        %6435 = vmatmul.mubr.f32.gmra.mxu0 %v6368
        %v6436 = vpop.f32.mrf.mxu0
        %v6437 = vadd.f32 %v392, %v6436
        %v6438 = vpop.f32.mrf.mxu0
        %6439 = vdwg.mxu0
        %v6440 = vmul.f32 %v385, %v6437
        %v6441 = vadd.f32 %v6288, %v6440
        %v6442 = vmax.f32 %v6441, 0.0
        %v6444 = vsel %vm394, %v6442, 0
        %6446 = vmatprep.subr.mxu0 0.0
        %6447 = vmatpush1.msra.mxu0 0.0
        %6448 = vmatprep.subr.mxu0 0.0
        %6449 = vmatpush1.msra.mxu0 0.0
        %6450 = vmatprep.subr.mxu0 0.0
        %6451 = vmatpush1.msra.mxu0 0.0
        %6452 = vmatprep.subr.mxu0 0.0
        %6453 = vmatpush1.msra.mxu0 0.0
        %6454 = vmatprep.subr.mxu0 0.0
        %6455 = vmatpush1.msra.mxu0 0.0
        %6456 = vmatprep.subr.mxu0 0.0
        %6457 = vmatpush1.msra.mxu0 0.0
        %6458 = vmatprep.subr.mxu0 0.0
        %6459 = vmatpush1.msra.mxu0 0.0
        %6460 = vmatprep.subr.mxu0 0.0
        %6461 = vmatpush1.msra.mxu0 0.0
        %6462 = vmatprep.subr.mxu0 0.0
        %6463 = vmatpush1.msra.mxu0 %v97
        %6464 = vmatprep.subr.mxu0 0.0
        %6465 = vmatpush1.msra.mxu0 %v96
        %6466 = vmatprep.subr.mxu0 0.0
        %6467 = vmatpush1.msra.mxu0 %v95
        %6468 = vmatprep.subr.mxu0 0.0
        %6469 = vmatpush1.msra.mxu0 %v94
        %6470 = vmatprep.subr.mxu0 0.0
        %6471 = vmatpush1.msra.mxu0 %v93
        %6472 = vmatprep.subr.mxu0 0.0
        %6473 = vmatpush1.msra.mxu0 %v92
        %6474 = vmatprep.subr.mxu0 0.0
        %6475 = vmatpush1.msra.mxu0 %v91
        %6476 = vmatprep.subr.mxu0 0.0
        %6477 = vmatpush1.msra.mxu0 %v90
        %6478 = vmatprep.subr.mxu0 0.0
        %6479 = vmatpush2.msra.mxu0 0.0
        %6480 = vmatprep.subr.mxu0 0.0
        %6481 = vmatpush2.msra.mxu0 0.0
        %6482 = vmatprep.subr.mxu0 0.0
        %6483 = vmatpush2.msra.mxu0 0.0
        %6484 = vmatprep.subr.mxu0 0.0
        %6485 = vmatpush2.msra.mxu0 0.0
        %6486 = vmatprep.subr.mxu0 0.0
        %6487 = vmatpush2.msra.mxu0 0.0
        %6488 = vmatprep.subr.mxu0 0.0
        %6489 = vmatpush2.msra.mxu0 0.0
        %6490 = vmatprep.subr.mxu0 0.0
        %6491 = vmatpush2.msra.mxu0 0.0
        %6492 = vmatprep.subr.mxu0 0.0
        %6493 = vmatpush2.msra.mxu0 0.0
        %6494 = vmatprep.subr.mxu0 0.0
        %6495 = vmatpush2.msra.mxu0 0.0
        %6496 = vmatprep.subr.mxu0 0.0
        %6497 = vmatpush2.msra.mxu0 0.0
        %6498 = vmatprep.subr.mxu0 0.0
        %6499 = vmatpush2.msra.mxu0 0.0
        %6500 = vmatprep.subr.mxu0 0.0
        %6501 = vmatpush2.msra.mxu0 0.0
        %6502 = vmatprep.subr.mxu0 0.0
        %6503 = vmatpush2.msra.mxu0 0.0
        %6504 = vmatprep.subr.mxu0 0.0
        %6505 = vmatpush2.msra.mxu0 0.0
        %6506 = vmatprep.subr.mxu0 0.0
        %6507 = vmatpush2.msra.mxu0 0.0
        %6508 = vmatprep.subr.mxu0 0.0
        %6509 = vmatpush2.msra.mxu0 0.0
        %6510 = vmatprep.mubr.f32.mxu0 0.0
        %6511 = vmatmul.mubr.f32.gmra.mxu0 %v6444
        %v6512 = vpop.f32.mrf.mxu0
        %v6513 = vadd.f32 %v392, %v6512
        %v6514 = vpop.f32.mrf.mxu0
        %6515 = vdwg.mxu0
        %v6516 = vmul.f32 %v382, %v6513
        %v6517 = vadd.f32 %v6288, %v6516
        %v6518 = vmax.f32 %v6517, 0.0
        %v6519 = vadd.f32 %v6366, %v6442
        %v6520 = vmul.f32 %v6519, 2.0
        %v6521 = vadd.f32 %v6290, %v6520
        %v6522 = vadd.f32 %v6521, %v6518
        %v6523 = vadd.f32 %v6289, %v6522
        %v6524 = vld [vmem:[%s12] sm:$0xff]
        %v6525 = vld [vmem:[%s12 + $0x8] sm:$0xff]
        %v6526 = vld [vmem:[%s12 + $0x10] sm:$0xff]
        %v6527 = vld [vmem:[%s12 + $0x18] sm:$0xff]
        %v6528 = vld [vmem:[%s12 + $0x20] sm:$0xff]
        %v6529 = vld [vmem:[%s12 + $0x28] sm:$0xff]
        %v6530 = vld [vmem:[%s12 + $0x30] sm:$0xff]
        %v6531 = vld [vmem:[%s12 + $0x38] sm:$0xff]
        %v6533 = vsel %vm394, %v6523, 0
        %6535 = vmatprep.subr.mxu0 0.0
        %6536 = vmatpush1.msra.mxu0 0.0
        %6537 = vmatprep.subr.mxu0 0.0
        %6538 = vmatpush1.msra.mxu0 0.0
        %6539 = vmatprep.subr.mxu0 0.0
        %6540 = vmatpush1.msra.mxu0 0.0
        %6541 = vmatprep.subr.mxu0 0.0
        %6542 = vmatpush1.msra.mxu0 0.0
        %6543 = vmatprep.subr.mxu0 0.0
        %6544 = vmatpush1.msra.mxu0 0.0
        %6545 = vmatprep.subr.mxu0 0.0
        %6546 = vmatpush1.msra.mxu0 0.0
        %6547 = vmatprep.subr.mxu0 0.0
        %6548 = vmatpush1.msra.mxu0 0.0
        %6549 = vmatprep.subr.mxu0 0.0
        %6550 = vmatpush1.msra.mxu0 0.0
        %6551 = vmatprep.subr.mxu0 0.0
        %6552 = vmatpush1.msra.mxu0 %v6531
        %6553 = vmatprep.subr.mxu0 0.0
        %6554 = vmatpush1.msra.mxu0 %v6530
        %6555 = vmatprep.subr.mxu0 0.0
        %6556 = vmatpush1.msra.mxu0 %v6529
        %6557 = vmatprep.subr.mxu0 0.0
        %6558 = vmatpush1.msra.mxu0 %v6528
        %6559 = vmatprep.subr.mxu0 0.0
        %6560 = vmatpush1.msra.mxu0 %v6527
        %6561 = vmatprep.subr.mxu0 0.0
        %6562 = vmatpush1.msra.mxu0 %v6526
        %6563 = vmatprep.subr.mxu0 0.0
        %6564 = vmatpush1.msra.mxu0 %v6525
        %6565 = vmatprep.subr.mxu0 0.0
        %6566 = vmatpush1.msra.mxu0 %v6524
        %6567 = vmatprep.subr.mxu0 0.0
        %6568 = vmatpush2.msra.mxu0 0.0
        %6569 = vmatprep.subr.mxu0 0.0
        %6570 = vmatpush2.msra.mxu0 0.0
        %6571 = vmatprep.subr.mxu0 0.0
        %6572 = vmatpush2.msra.mxu0 0.0
        %6573 = vmatprep.subr.mxu0 0.0
        %6574 = vmatpush2.msra.mxu0 0.0
        %6575 = vmatprep.subr.mxu0 0.0
        %6576 = vmatpush2.msra.mxu0 0.0
        %6577 = vmatprep.subr.mxu0 0.0
        %6578 = vmatpush2.msra.mxu0 0.0
        %6579 = vmatprep.subr.mxu0 0.0
        %6580 = vmatpush2.msra.mxu0 0.0
        %6581 = vmatprep.subr.mxu0 0.0
        %6582 = vmatpush2.msra.mxu0 0.0
        %6583 = vmatprep.subr.mxu0 0.0
        %6584 = vmatpush2.msra.mxu0 0.0
        %6585 = vmatprep.subr.mxu0 0.0
        %6586 = vmatpush2.msra.mxu0 0.0
        %6587 = vmatprep.subr.mxu0 0.0
        %6588 = vmatpush2.msra.mxu0 0.0
        %6589 = vmatprep.subr.mxu0 0.0
        %6590 = vmatpush2.msra.mxu0 0.0
        %6591 = vmatprep.subr.mxu0 0.0
        %6592 = vmatpush2.msra.mxu0 0.0
        %6593 = vmatprep.subr.mxu0 0.0
        %6594 = vmatpush2.msra.mxu0 0.0
        %6595 = vmatprep.subr.mxu0 0.0
        %6596 = vmatpush2.msra.mxu0 0.0
        %6597 = vmatprep.subr.mxu0 0.0
        %6598 = vmatpush2.msra.mxu0 0.0
        %6599 = vmatprep.mubr.f32.mxu0 0.0
        %6600 = vmatmul.mubr.f32.gmra.mxu0 %v6533
        %v6601 = vpop.f32.mrf.mxu0
        %v6602 = vadd.f32 0.0, %v6601
        %v6603 = vpop.f32.mrf.mxu0
        %6604 = vdwg.mxu0
        %v6605 = vmul.f32 %v386, %v6602
        %v6606 = vadd.f32 %v296, %v6605
        %s6607 = smul.f32 %s291, 20.0
        %v6608 = vld [vmem:[%s13] sm:$0x1]
        %v6609 = vstv %s6607
        %v6610 = vmul.f32 %v6609, %v6608
        %v6612 = vlaneseq
        %v6613 = vshrl.u32 %v6612, 7
        %v6614 = vsub.s32 0, %v6613
        %v6615 = vrot.slane %v6610, %v6614
        %v6617 = vadd.f32 %v6606, %v6615
        %6618 = vst.msk [vmem:[#allocation2] sm:$0x3] %vm99, %v6617
      $region88: #{ode_rnn_encoder.1} parent=81 // pred_fallthru
        _
      %v6619 = vld [vmem:[#allocation2] sm:$0x3]
      %v6620 = vld [vmem:[%s6] sm:$0xff]
      %v6621 = vld [vmem:[%s6 + $0x8] sm:$0xff]
      %v6622 = vld [vmem:[%s6 + $0x10] sm:$0xff]
      %v6623 = vld [vmem:[%s6 + $0x18] sm:$0xff]
      %v6624 = vld [vmem:[%s7] sm:$0x1]
      %v6626 = vlaneseq
      %v6627 = vshrl.u32 %v6626, 7
      %v6628 = vsub.s32 0, %v6627
      %v6629 = vrot.slane %v6624, %v6628
      %v6632 = vsel %vm207, %v6619, 0
      %6634 = vmatprep.subr.mxu0 0.0
      %6635 = vmatpush1.msra.mxu0 0.0
      %6636 = vmatprep.subr.mxu0 0.0
      %6637 = vmatpush1.msra.mxu0 0.0
      %6638 = vmatprep.subr.mxu0 0.0
      %6639 = vmatpush1.msra.mxu0 0.0
      %6640 = vmatprep.subr.mxu0 0.0
      %6641 = vmatpush1.msra.mxu0 0.0
      %6642 = vmatprep.subr.mxu0 0.0
      %6643 = vmatpush1.msra.mxu0 0.0
      %6644 = vmatprep.subr.mxu0 0.0
      %6645 = vmatpush1.msra.mxu0 0.0
      %6646 = vmatprep.subr.mxu0 0.0
      %6647 = vmatpush1.msra.mxu0 0.0
      %6648 = vmatprep.subr.mxu0 0.0
      %6649 = vmatpush1.msra.mxu0 0.0
      %6650 = vmatprep.subr.mxu0 0.0
      %6651 = vmatpush1.msra.mxu0 0.0
      %6652 = vmatprep.subr.mxu0 0.0
      %6653 = vmatpush1.msra.mxu0 0.0
      %6654 = vmatprep.subr.mxu0 0.0
      %6655 = vmatpush1.msra.mxu0 0.0
      %6656 = vmatprep.subr.mxu0 0.0
      %6657 = vmatpush1.msra.mxu0 0.0
      %6658 = vmatprep.subr.mxu0 0.0
      %6659 = vmatpush1.msra.mxu0 %v6623
      %6660 = vmatprep.subr.mxu0 0.0
      %6661 = vmatpush1.msra.mxu0 %v6622
      %6662 = vmatprep.subr.mxu0 0.0
      %6663 = vmatpush1.msra.mxu0 %v6621
      %6664 = vmatprep.subr.mxu0 0.0
      %6665 = vmatpush1.msra.mxu0 %v6620
      %6666 = vmatprep.subr.mxu0 0.0
      %6667 = vmatpush2.msra.mxu0 0.0
      %6668 = vmatprep.subr.mxu0 0.0
      %6669 = vmatpush2.msra.mxu0 0.0
      %6670 = vmatprep.subr.mxu0 0.0
      %6671 = vmatpush2.msra.mxu0 0.0
      %6672 = vmatprep.subr.mxu0 0.0
      %6673 = vmatpush2.msra.mxu0 0.0
      %6674 = vmatprep.subr.mxu0 0.0
      %6675 = vmatpush2.msra.mxu0 0.0
      %6676 = vmatprep.subr.mxu0 0.0
      %6677 = vmatpush2.msra.mxu0 0.0
      %6678 = vmatprep.subr.mxu0 0.0
      %6679 = vmatpush2.msra.mxu0 0.0
      %6680 = vmatprep.subr.mxu0 0.0
      %6681 = vmatpush2.msra.mxu0 0.0
      %6682 = vmatprep.subr.mxu0 0.0
      %6683 = vmatpush2.msra.mxu0 0.0
      %6684 = vmatprep.subr.mxu0 0.0
      %6685 = vmatpush2.msra.mxu0 0.0
      %6686 = vmatprep.subr.mxu0 0.0
      %6687 = vmatpush2.msra.mxu0 0.0
      %6688 = vmatprep.subr.mxu0 0.0
      %6689 = vmatpush2.msra.mxu0 0.0
      %6690 = vmatprep.subr.mxu0 0.0
      %6691 = vmatpush2.msra.mxu0 0.0
      %6692 = vmatprep.subr.mxu0 0.0
      %6693 = vmatpush2.msra.mxu0 0.0
      %6694 = vmatprep.subr.mxu0 0.0
      %6695 = vmatpush2.msra.mxu0 0.0
      %6696 = vmatprep.subr.mxu0 0.0
      %6697 = vmatpush2.msra.mxu0 0.0
      %6698 = vmatprep.mubr.f32.mxu0 0.0
      %6699 = vmatmul.mubr.f32.gmra.mxu0 %v6632
      %v6700 = vpop.f32.mrf.mxu0
      %v6701 = vadd.f32 %v6629, %v6700
      %v6702 = vpop.f32.mrf.mxu0
      %6703 = vdwg.mxu0
      %v6704 = vadd.f32 %v278, %v6701
      %v6705 = vxor.u32 %v6704, 2147483648
      %v6706 = vmul.f32 %v6705, 1.442695
      %v6707 = vpow.pop %v6706
      %v6708 = vadd.f32 %v6707, 1.0
      %v6709 = vrcp.pop %v6708
      %v6710 = vmul.f32 1.0, %v6709
      %6712 = vrot.lane.b32.xlu0 %v6701, 64
      %v6713 = vpop.permute.xlu0 %6712
      %v6715 = vmul.f32 %v6710, %v6713
      %6717 = vrot.lane.b32.xlu0 %v6715, 64
      %v6718 = vpop.permute.xlu0 %6717
      %v6720 = vadd.f32 %v278, %v6718
      %v6721 = vtanh.pop %v6720
      %v6722 = vsub.f32 1.0, %v6710
      %6724 = vrot.lane.b32.xlu0 %v6721, 96
      %v6725 = vpop.permute.xlu0 %6724
      %v6727 = vmul.f32 %v6722, %v6725
      %6728 = vrot.lane.b32.xlu0 %v6619, 32
      %v6729 = vpop.permute.xlu0 %6728
      %v6731 = vmul.f32 %v6710, %v6729
      %v6732 = vadd.f32 %v6727, %v6731
      %6734 = vrot.lane.b32.xlu0 %v6732, 96
      %v6735 = vpop.permute.xlu0 %6734
      %6737 = vst.msk [vmem:[#allocation2] sm:$0x3] %vm99, %v6735
    $region82: #{ode_rnn_encoder.1} parent=1 // loop_footer
      %s106 = sadd.s32 1, %s102
    $region83: #{ode_rnn_encoder.1} parent=1 // loop_footer_branch
      %101 = sbr.rel target = $region79
    $region84: #{ode_rnn_encoder.1} parent=1 // loop_exit
      _
    %v6738 = vld [vmem:[#allocation2] sm:$0x3]
    %v6739 = vld [vmem:[%s14] sm:$0xff]
    %v6740 = vld [vmem:[%s14 + $0x8] sm:$0xff]
    %v6741 = vld [vmem:[%s14 + $0x10] sm:$0xff]
    %v6742 = vld [vmem:[%s14 + $0x18] sm:$0xff]
    %v6743 = vld [vmem:[%s15] sm:$0x1]
    %v6745 = vlaneseq
    %v6746 = vshrl.u32 %v6745, 7
    %v6747 = vsub.s32 0, %v6746
    %v6748 = vrot.slane %v6743, %v6747
    %vm6750 = vcmask 261120
    %v6752 = vsel %vm6750, %v6738, 0
    %6754 = vmatprep.subr.mxu0 0.0
    %6755 = vmatpush1.msra.mxu0 0.0
    %6756 = vmatprep.subr.mxu0 0.0
    %6757 = vmatpush1.msra.mxu0 0.0
    %6758 = vmatprep.subr.mxu0 0.0
    %6759 = vmatpush1.msra.mxu0 0.0
    %6760 = vmatprep.subr.mxu0 0.0
    %6761 = vmatpush1.msra.mxu0 0.0
    %6762 = vmatprep.subr.mxu0 0.0
    %6763 = vmatpush1.msra.mxu0 0.0
    %6764 = vmatprep.subr.mxu0 0.0
    %6765 = vmatpush1.msra.mxu0 0.0
    %6766 = vmatprep.subr.mxu0 0.0
    %6767 = vmatpush1.msra.mxu0 0.0
    %6768 = vmatprep.subr.mxu0 0.0
    %6769 = vmatpush1.msra.mxu0 0.0
    %6770 = vmatprep.subr.mxu0 0.0
    %6771 = vmatpush1.msra.mxu0 0.0
    %6772 = vmatprep.subr.mxu0 0.0
    %6773 = vmatpush1.msra.mxu0 0.0
    %6774 = vmatprep.subr.mxu0 0.0
    %6775 = vmatpush1.msra.mxu0 0.0
    %6776 = vmatprep.subr.mxu0 0.0
    %6777 = vmatpush1.msra.mxu0 0.0
    %6778 = vmatprep.subr.mxu0 0.0
    %6779 = vmatpush1.msra.mxu0 %v6742
    %6780 = vmatprep.subr.mxu0 0.0
    %6781 = vmatpush1.msra.mxu0 %v6741
    %6782 = vmatprep.subr.mxu0 0.0
    %6783 = vmatpush1.msra.mxu0 %v6740
    %6784 = vmatprep.subr.mxu0 0.0
    %6785 = vmatpush1.msra.mxu0 %v6739
    %6786 = vmatprep.subr.mxu0 0.0
    %6787 = vmatpush2.msra.mxu0 0.0
    %6788 = vmatprep.subr.mxu0 0.0
    %6789 = vmatpush2.msra.mxu0 0.0
    %6790 = vmatprep.subr.mxu0 0.0
    %6791 = vmatpush2.msra.mxu0 0.0
    %6792 = vmatprep.subr.mxu0 0.0
    %6793 = vmatpush2.msra.mxu0 0.0
    %6794 = vmatprep.subr.mxu0 0.0
    %6795 = vmatpush2.msra.mxu0 0.0
    %6796 = vmatprep.subr.mxu0 0.0
    %6797 = vmatpush2.msra.mxu0 0.0
    %6798 = vmatprep.subr.mxu0 0.0
    %6799 = vmatpush2.msra.mxu0 0.0
    %6800 = vmatprep.subr.mxu0 0.0
    %6801 = vmatpush2.msra.mxu0 0.0
    %6802 = vmatprep.subr.mxu0 0.0
    %6803 = vmatpush2.msra.mxu0 0.0
    %6804 = vmatprep.subr.mxu0 0.0
    %6805 = vmatpush2.msra.mxu0 0.0
    %6806 = vmatprep.subr.mxu0 0.0
    %6807 = vmatpush2.msra.mxu0 0.0
    %6808 = vmatprep.subr.mxu0 0.0
    %6809 = vmatpush2.msra.mxu0 0.0
    %6810 = vmatprep.subr.mxu0 0.0
    %6811 = vmatpush2.msra.mxu0 0.0
    %6812 = vmatprep.subr.mxu0 0.0
    %6813 = vmatpush2.msra.mxu0 0.0
    %6814 = vmatprep.subr.mxu0 0.0
    %6815 = vmatpush2.msra.mxu0 0.0
    %6816 = vmatprep.subr.mxu0 0.0
    %6817 = vmatpush2.msra.mxu0 0.0
    %6818 = vmatprep.mubr.f32.mxu0 0.0
    %6819 = vmatmul.mubr.f32.gmra.mxu0 %v6752
    %v6820 = vpop.f32.mrf.mxu0
    %v6821 = vadd.f32 %v6748, %v6820
    %v6822 = vpop.f32.mrf.mxu0
    %6823 = vdwg.mxu0
    %vm6824 = vcmask 58368
    %6825 = vst.msk [vmem:[%s16] sm:$0x3] %vm6824, %v6821
    // Predicated region
    $region89: #{ode_rnn_encoder.1} parent=1 // pred_check
      _
    $region90: #{ode_rnn_encoder.1} parent=1 // pred_check_branch
      %6827 = sbr.rel (0) target = $region92
    $region91: #{ode_rnn_encoder.1} parent=1 // pred_region
      _
    $region92: #{ode_rnn_encoder.1} parent=1 // pred_fallthru
      _
    // Predicated region
    $region93: #{ode_rnn_encoder.1} parent=1 // pred_check
      _
    $region94: #{ode_rnn_encoder.1} parent=1 // pred_check_branch
      %6829 = sbr.rel (0) target = $region96
    $region95: #{ode_rnn_encoder.1} parent=1 // pred_region
      _
    $region96: #{ode_rnn_encoder.1} parent=1 // pred_fallthru
      _
    %6830 = vsyncpa [#allocation4], 1
    %6831 = vsyncpa [#allocation8], 1
    %6832 = vsyncpa [#allocation5], 1

</llo_original>
